<compile_context>
chip_gen: v7x
topology: tpu7x:2x2x1
jax: 0.10.0
libtpu: 0.0.40
codegen_flags: <defaults>
</compile_context>

<pallas_src>
import numpy as np
import jax
import jax.numpy as jnp
from jax.experimental import pallas as pl
from jax.experimental.pallas import tpu as pltpu

# ----- hyperparameters (the constants referenced by the PyTorch source) -------
HIDDEN_SIZE = 32
BERT_EMBEDDING_LENGTH = 48
NUM_LAYERS = 1                      # encoder LSTM layers (bidirectional, 1 layer)
NUMBER_OF_KEYS = 12
NUMBER_OF_MODES = 7
CHORD_PREDICTION_LENGTH = 9
MELODY_PREDICTION_LENGTH = 16
NOTES_PER_CHORD = 2
MAX_CHORD_LENGTH = 4

F32 = jnp.float32
BF16 = jnp.bfloat16
H = HIDDEN_SIZE
E = BERT_EMBEDDING_LENGTH
REST_WIDTH = 3 + NUMBER_OF_MODES                 # tempo | mode | valence | energy = 10
SLAB_WIDTH = 256                                 # lane width of packed slab (>=160)


# ----------------------------- parameter slab packing --------------------------
def _pad16(n):
    # bf16 packs 2 rows / sublane -> keep every block start 16-row aligned
    return ((n + 15) // 16) * 16


class _SlabPacker:
    """Packs every weight/bias into one [R, 256] bf16 slab (one DMA into VMEM)."""

    def __init__(self, width):
        self.width = width
        self.layout = {}
        self.blocks = []
        self.row = 0

    def add(self, name, arr):
        arr = np.asarray(arr, dtype=np.float32)
        if arr.ndim == 1:
            arr = arr[None, :]
        r, c = arr.shape
        assert c <= self.width, (name, arr.shape)
        rp = _pad16(r)
        blk = np.zeros((rp, self.width), np.float32)
        blk[:r, :c] = arr
        self.layout[name] = (self.row, r, c)
        self.blocks.append(blk)
        self.row += rp

    def finish(self):
        slab = np.concatenate(self.blocks, axis=0)
        return jnp.asarray(slab, dtype=BF16), self.layout


def init_packed_params(seed=0):
    rngs = iter(jax.random.split(jax.random.PRNGKey(seed), 100))

    def nrm(shape, scale=0.1):
        return np.asarray(jax.random.normal(next(rngs), shape, F32)) * scale

    def linear(n_in, n_out):
        # PyTorch Linear weight [out, in] kept pre-transposed as [in, out]
        return nrm((n_in, n_out)), nrm((n_out,))

    def lstm(n_in, hidden):
        # gate order i|f|g|o ; bias = (b_ih + b_hh) drawn as one vector
        return nrm((n_in, 4 * hidden)), nrm((hidden, 4 * hidden)), nrm((4 * hidden,))

    # ------------- encoder: bidirectional LSTM, per-direction (K<=128 everywhere) ---
    wih_f, whh_f, b_f = lstm(E, H)
    wih_b, whh_b, b_b = lstm(E, H)
    w_down, b_down = linear(2 * H, H)            # rows 0:H -> h[-1]=bwd, H:2H -> h[-2]=fwd
    w_mu, b_mu = linear(H, H)
    w_var, b_var = linear(H, H)
    w_muvar = np.concatenate([w_mu, w_var], axis=1)      # mean/variance fused (exact)
    b_muvar = np.concatenate([b_mu, b_var])

    # ------------- decoder attribute heads -------------
    wk1, bk1 = linear(H, H); wk2, bk2 = linear(H, NUMBER_OF_KEYS)
    wt1, bt1 = linear(H, H); wt2, bt2 = linear(H, 1)
    wmo1, bmo1 = linear(H, H); wmo2, bmo2 = linear(H, NUMBER_OF_MODES)
    wv1, bv1 = linear(H, H); wv2, be_v = linear(H, 1)
    we1, be1 = linear(H, H); we2, be2 = linear(H, 1)

    # first layers of all 5 head MLPs fused column-wise: [H, 5H]  (key|tempo|mode|val|ene)
    heads_w1 = np.concatenate([wk1, wt1, wmo1, wv1, we1], axis=1)
    heads_b1 = np.concatenate([bk1, bt1, bmo1, bv1, be1])
    # second layers: key separate (K=32), tempo/mode/val/ene block-diagonal (K=128)
    rest_w2 = np.zeros((4 * H, REST_WIDTH), np.float32)
    rest_b2 = np.zeros((REST_WIDTH,), np.float32)
    col = 0
    for blk, (w2, b2) in enumerate([(wt2, bt2), (wmo2, bmo2), (wv2, be_v), (we2, be2)]):
        width = w2.shape[1]
        rest_w2[blk * H:(blk + 1) * H, col:col + width] = w2
        rest_b2[col:col + width] = b2
        col += width

    wte, bte = linear(1, H)
    wme, bme = linear(NUMBER_OF_MODES, H)
    wve, bve = linear(1, H)
    wee, bee = linear(1, H)
    attr_emb_w = np.zeros((REST_WIDTH, 4 * H), np.float32)   # [10, 4H] block-diagonal
    attr_emb_w[0:1, 0:H] = wte
    attr_emb_w[1:1 + NUMBER_OF_MODES, H:2 * H] = wme
    attr_emb_w[1 + NUMBER_OF_MODES:2 + NUMBER_OF_MODES, 2 * H:3 * H] = wve
    attr_emb_w[2 + NUMBER_OF_MODES:3 + NUMBER_OF_MODES, 3 * H:4 * H] = wee
    attr_emb_b = np.concatenate([bte, bme, bve, bee])

    zds_w, zds_b = linear(5 * H, H)              # rows 0:H -> z part, H:5H -> emb part

    # ------------- chord branch -------------
    wih_c, whh_c, b_c = lstm(H, H)
    cp1_w, cp1_b = linear(H, H)
    cp2_w, cp2_b = linear(H, CHORD_PREDICTION_LENGTH)
    chord_table = nrm((CHORD_PREDICTION_LENGTH, H))
    cds_w, cds_b = linear(2 * H, H)              # rows 0:H -> cemb, H:2H -> z_ds

    # ------------- melody branch -------------
    wih_m, whh_m, b_m = lstm(H, H)
    mp1_w, mp1_b = linear(H, H)
    mp2_w, mp2_b = linear(H, MELODY_PREDICTION_LENGTH)
    melody_table = nrm((MELODY_PREDICTION_LENGTH, H))
    mds_w, mds_b = linear(3 * H, H)              # rows 0:H memb, H:2H chord_emb, 2H:3H z_ds

    packer = _SlabPacker(SLAB_WIDTH)
    for name, arr in [
        ("enc_wih_f", wih_f), ("enc_wih_b", wih_b),
        ("enc_whh_f", whh_f), ("enc_whh_b", whh_b),
        ("enc_b_f", b_f), ("enc_b_b", b_b),
        ("enc_down_w_b", w_down[:H]), ("enc_down_w_f", w_down[H:]),
        ("enc_down_b", b_down),
        ("muvar_w", w_muvar), ("muvar_b", b_muvar),
        ("heads_w1", heads_w1), ("heads_b1", heads_b1),
        ("key_w2", wk2), ("key_b2", bk2),
        ("rest_w2", rest_w2), ("rest_b2", rest_b2),
        ("attr_emb_w", attr_emb_w), ("attr_emb_b", attr_emb_b),
        ("zds_w_z", zds_w[:H]), ("zds_w_e", zds_w[H:]), ("zds_b", zds_b),
        ("chord_wih", wih_c), ("chord_whh", whh_c), ("chord_b", b_c),
        ("chord_p1_w", cp1_w), ("chord_p1_b", cp1_b),
        ("chord_p2_w", cp2_w), ("chord_p2_b", cp2_b),
        ("chord_table", chord_table),
        ("chord_ds_w_c", cds_w[:H]), ("chord_ds_w_z", cds_w[H:]), ("chord_ds_b", cds_b),
        ("melody_wih", wih_m), ("melody_whh", whh_m), ("melody_b", b_m),
        ("melody_p1_w", mp1_w), ("melody_p1_b", mp1_b),
        ("melody_p2_w", mp2_w), ("melody_p2_b", mp2_b),
        ("melody_table", melody_table),
        ("melody_ds_w_m", mds_w[:H]), ("melody_ds_w_c", mds_w[H:2 * H]),
        ("melody_ds_w_z", mds_w[2 * H:]), ("melody_ds_b", mds_b),
    ]:
        packer.add(name, arr)
    return packer.finish()


# ------------------------------- fused kernel ----------------------------------
def _make_kernel(layout, seq_len, block_batch, num_chords, out_width, offsets):
    CH_OFF, MEL_OFF, KEY_OFF, REST_OFF, KL_OFF = offsets
    T = seq_len
    B = block_batch
    CP = CHORD_PREDICTION_LENGTH
    MP = MELODY_PREDICTION_LENGTH

    def kernel(x_ref, w_ref, out_ref):
        def P(name):
            r0, r, c = layout[name]            # static python ints (closure)
            return w_ref[r0:r0 + r, 0:c]       # sliced at use site (bf16)

        def dot(a, b):
            # bf16 MXU operands, f32 accumulation
            return jnp.dot(a.astype(BF16), b, preferred_element_type=F32)

        def gates(g, c):                       # PyTorch gate order i, f, g, o (f32 math)
            i = jax.nn.sigmoid(g[:, 0:H])
            f = jax.nn.sigmoid(g[:, H:2 * H])
            gg = jnp.tanh(g[:, 2 * H:3 * H])
            o = jax.nn.sigmoid(g[:, 3 * H:4 * H])
            c_new = f * c + i * gg
            return o * jnp.tanh(c_new), c_new

        def argmax_onehot(logits):
            # torch argmax takes the first max; ties are measure-zero with continuous
            # logits, so the min-index tie-break is dropped (single XLU reduction).
            mx = jnp.max(logits, axis=1, keepdims=True)
            return (logits == mx).astype(F32)

        zeros = jnp.zeros((B, H), F32)
        out_ref[...] = jnp.zeros((B, out_width), F32)        # also covers padding lanes

        # ---------------- encoder: bidirectional LSTM ------------------------------
        # Hoisted input projection: one matmul per direction for all T timesteps.
        x2d = x_ref[...].reshape(T * B, E)                   # time-major rows
        gxf = dot(x2d, P("enc_wih_f")) + P("enc_b_f")        # [T*B, 4H] f32
        gxb = dot(x2d, P("enc_wih_b")) + P("enc_b_b")
        hf = cf = hb = cb = zeros
        for t in range(T):                                   # unrolled; K=32 recurrences only
            gf = gxf[t * B:(t + 1) * B, :] + dot(hf, P("enc_whh_f"))
            hf, cf = gates(gf, cf)
            tb = T - 1 - t
            gb = gxb[tb * B:(tb + 1) * B, :] + dot(hb, P("enc_whh_b"))
            hb, cb = gates(gb, cb)

        # torch.cat((h[-1], h[-2]), dim=1) == [backward_final | forward_final]
        h_enc = (dot(hb, P("enc_down_w_b")) + dot(hf, P("enc_down_w_f"))
                 + P("enc_down_b"))
        muvar = dot(h_enc, P("muvar_w")) + P("muvar_b")      # mean & variance fused
        mu, lv = muvar[:, 0:H], muvar[:, H:2 * H]
        # per-sample KL; wrapper averages over batch (== 0.5*mean over dims [0,1])
        kl_row = 0.5 * jnp.mean(mu * mu + jnp.exp(lv) - lv - 1.0, axis=1, keepdims=True)
        out_ref[:, KL_OFF:KL_OFF + 1] = kl_row
        z = mu   # eval mode: sample(mu, logvar) returns mu
        # TODO(synk): training-mode reparameterization (mu + randn*exp(logvar/2)) and
        #             teacher forcing (host-side np.random.choice) are not emitted.

        # ---------------- attribute heads -------------------------------------------
        h1 = jnp.maximum(dot(z, P("heads_w1")) + P("heads_b1"), 0.0)      # [B, 5H]
        key = dot(h1[:, 0:H], P("key_w2")) + P("key_b2")                  # [B, 12]
        rest = dot(h1[:, H:5 * H], P("rest_w2")) + P("rest_b2")           # [B, 10]
        out_ref[:, KEY_OFF:KEY_OFF + NUMBER_OF_KEYS] = key
        out_ref[:, REST_OFF:REST_OFF + REST_WIDTH] = rest

        # 4 attribute embeddings in one matmul; downsample split (K=32 / K=128).
        emb = dot(rest, P("attr_emb_w")) + P("attr_emb_b")                # [B, 4H]
        z_ds = dot(z, P("zds_w_z")) + dot(emb, P("zds_w_e")) + P("zds_b")

        # loop-invariant downsample contributions (hoisted out of the decode loops)
        zc = dot(z_ds, P("chord_ds_w_z")) + P("chord_ds_b")
        zm = dot(z_ds, P("melody_ds_w_z")) + P("melody_ds_b")

        # ---------------- autoregressive chord / melody decode (unrolled) ----------
        def cell(v, hx, cx, wih, whh, b):
            return gates(dot(v, P(wih)) + dot(hx, P(whh)) + P(b), cx)

        def mlp(v, w1, b1, w2, b2):
            return dot(jnp.maximum(dot(v, P(w1)) + P(b1), 0.0), P(w2)) + P(b2)

        hxc = cxc = hxm = cxm = zeros
        chord_emb = z_ds
        melody_emb = None
        for i in range(num_chords):                          # fully unrolled (4)
            hxc, cxc = cell(chord_emb, hxc, cxc, "chord_wih", "chord_whh", "chord_b")
            cpred = mlp(hxc, "chord_p1_w", "chord_p1_b", "chord_p2_w", "chord_p2_b")
            out_ref[:, CH_OFF + i * CP:CH_OFF + (i + 1) * CP] = cpred
            cemb = dot(argmax_onehot(cpred), P("chord_table"))
            chord_emb = dot(cemb, P("chord_ds_w_c")) + zc
            if melody_emb is None:                           # "if melody_embeddings is None"
                melody_emb = chord_emb
            # chord-dependent downsample part, shared by this chord's 2 notes
            chord_part = dot(chord_emb, P("melody_ds_w_c")) + zm
            for j in range(NOTES_PER_CHORD):                 # fully unrolled (2)
                hxm, cxm = cell(melody_emb, hxm, cxm,
                                "melody_wih", "melody_whh", "melody_b")
                mpred = mlp(hxm, "melody_p1_w", "melody_p1_b",
                            "melody_p2_w", "melody_p2_b")
                n = i * NOTES_PER_CHORD + j
                out_ref[:, MEL_OFF + n * MP:MEL_OFF + (n + 1) * MP] = mpred
                memb = dot(argmax_onehot(mpred), P("melody_table"))
                melody_emb = dot(memb, P("melody_ds_w_m")) + chord_part

    return kernel


# --------------------------------- wrapper -------------------------------------
def make_lyrics2lofi_forward(layout, slab_rows, batch, seq_len,
                             num_chords=MAX_CHORD_LENGTH, block_batch=8):
    assert batch % block_batch == 0
    n_notes = num_chords * NOTES_PER_CHORD

    # lane layout of the single fused output slab
    CH_OFF = 0
    MEL_OFF = num_chords * CHORD_PREDICTION_LENGTH
    KEY_OFF = MEL_OFF + n_notes * MELODY_PREDICTION_LENGTH
    REST_OFF = KEY_OFF + NUMBER_OF_KEYS
    KL_OFF = REST_OFF + REST_WIDTH
    total = KL_OFF + 1
    out_width = ((total + 127) // 128) * 128
    offsets = (CH_OFF, MEL_OFF, KEY_OFF, REST_OFF, KL_OFF)

    kernel = _make_kernel(layout, seq_len, block_batch, num_chords, out_width, offsets)

    call = pl.pallas_call(
        kernel,
        out_shape=jax.ShapeDtypeStruct((batch, out_width), F32),
        grid_spec=pltpu.PrefetchScalarGridSpec(
            num_scalar_prefetch=0,
            grid=(batch // block_batch,),
            in_specs=[
                pl.BlockSpec((seq_len, block_batch, E), lambda b: (0, b, 0)),
                pl.BlockSpec((slab_rows, SLAB_WIDTH), lambda b: (0, 0)),
            ],
            out_specs=pl.BlockSpec((block_batch, out_width), lambda b: (b, 0)),
        ),
        compiler_params=pltpu.CompilerParams(
            dimension_semantics=("parallel",)),   # batch tiles -> both TCs on v7x
    )

    @jax.jit
    def forward(x, slab):
        # layout plumbing only: time-major input so the kernel's hoisted input
        # projection reads contiguous sublane rows per timestep.
        out = call(jnp.transpose(x, (1, 0, 2)), slab)
        chord_outputs = out[:, CH_OFF:MEL_OFF].reshape(
            batch, num_chords, CHORD_PREDICTION_LENGTH)
        melody_outputs = out[:, MEL_OFF:KEY_OFF].reshape(
            batch, n_notes, MELODY_PREDICTION_LENGTH)
        key_out = out[:, KEY_OFF:KEY_OFF + NUMBER_OF_KEYS]
        tempo_out = out[:, REST_OFF:REST_OFF + 1]
        mode_out = out[:, REST_OFF + 1:REST_OFF + 1 + NUMBER_OF_MODES]
        val_out = out[:, REST_OFF + 1 + NUMBER_OF_MODES:REST_OFF + 2 + NUMBER_OF_MODES]
        ene_out = out[:, REST_OFF + 2 + NUMBER_OF_MODES:REST_OFF + 3 + NUMBER_OF_MODES]
        kl = jnp.mean(out[:, KL_OFF])
        return (chord_outputs, melody_outputs, tempo_out, key_out,
                mode_out, val_out, ene_out, kl)

    return forward


# ---------------------------------- main ----------------------------------------
if __name__ == "__main__":
    B, T = 8, 8
    x = jax.random.normal(jax.random.PRNGKey(0), (B, T, BERT_EMBEDDING_LENGTH), F32)
    slab, layout = init_packed_params(seed=0)

    forward = make_lyrics2lofi_forward(layout, slab.shape[0], B, T,
                                       num_chords=MAX_CHORD_LENGTH, block_batch=8)
    outs = jax.block_until_ready(forward(x, slab))

    chord_outputs, melody_outputs = outs[0], outs[1]
    assert chord_outputs.shape == (B, MAX_CHORD_LENGTH, CHORD_PREDICTION_LENGTH)
    assert melody_outputs.shape == (B, MAX_CHORD_LENGTH * NOTES_PER_CHORD,
                                    MELODY_PREDICTION_LENGTH)
    assert outs[2].shape == (B, 1) and outs[3].shape == (B, NUMBER_OF_KEYS)
    assert outs[4].shape == (B, NUMBER_OF_MODES)
    assert outs[5].shape == (B, 1) and outs[6].shape == (B, 1)
    assert all(bool(jnp.all(jnp.isfinite(o))) for o in outs)
    print("KERNEL_OK")
</pallas_src>

<mosaic_0001>
module attributes {stable_mosaic.version = 11 : i64} {
  func.func @kernel(%arg0: i32, %arg1: memref<8x8x48xf32, #tpu.memory_space<vmem>>, %arg2: memref<1344x256xbf16, #tpu.memory_space<vmem>>, %arg3: memref<8x256xf32, #tpu.memory_space<vmem>>) attributes {dimension_semantics = [#tpu.dimension_semantics<parallel>], iteration_bounds = array<i64: 1>, scalar_prefetch = 0 : i64, scratch_operands = 0 : i64, tpu.core_type = #tpu.core_type<tc>, window_params = [{transform_indices = @transform_0, window_bounds = array<i64: 8, 8, 48>}, {pipeline_mode = #tpu.pipeline_mode<synchronous>, transform_indices = @transform_1, window_bounds = array<i64: 1344, 256>}, {transform_indices = @transform_2, window_bounds = array<i64: 8, 256>}]} {
    %cst = arith.constant 0.000000e+00 : f32
    %0 = vector.broadcast %cst : f32 to vector<8x32xf32>
    %cst_0 = arith.constant 0.000000e+00 : f32
    %1 = vector.broadcast %cst_0 : f32 to vector<8x256xf32>
    %c0 = arith.constant 0 : index
    %c0_1 = arith.constant 0 : index
    %2 = vector.load %arg3[%c0, %c0_1] : memref<8x256xf32, #tpu.memory_space<vmem>>, vector<8x256xf32>
    tpu.vector_store %arg3[%c0, %c0_1], %1 {strides = array<i32>} : memref<8x256xf32, #tpu.memory_space<vmem>>, vector<8x256xf32>,
    %c0_2 = arith.constant 0 : index
    %c0_3 = arith.constant 0 : index
    %c0_4 = arith.constant 0 : index
    %3 = vector.load %arg1[%c0_2, %c0_3, %c0_4] : memref<8x8x48xf32, #tpu.memory_space<vmem>>, vector<8x8x48xf32>
    %4 = vector.shape_cast %3 : vector<8x8x48xf32> to vector<64x48xf32>
    %c0_5 = arith.constant 0 : index
    %c0_6 = arith.constant 0 : index
    %5 = vector.load %arg2[%c0_5, %c0_6] : memref<1344x256xbf16, #tpu.memory_space<vmem>>, vector<48x128xbf16>
    %6 = arith.truncf %4 : vector<64x48xf32> to vector<64x48xbf16>
    %cst_7 = arith.constant dense<0.000000e+00> : vector<64x128xf32>
    %7 = tpu.matmul %6, %5, %cst_7 {dimension_numbers = #tpu.dot_dimension_numbers<[1], [0], [0], [1], [0, 0, 1, 1], [], []>} : vector<64x48xbf16>, vector<48x128xbf16>, vector<64x128xf32> -> vector<64x128xf32>
    %c160 = arith.constant 160 : index
    %c0_8 = arith.constant 0 : index
    %8 = vector.load %arg2[%c160, %c0_8] : memref<1344x256xbf16, #tpu.memory_space<vmem>>, vector<1x128xbf16>
    %9 = arith.extf %8 : vector<1x128xbf16> to vector<1x128xf32>
    %10 = vector.broadcast %9 : vector<1x128xf32> to vector<64x128xf32>
    %11 = arith.addf %7, %10 : vector<64x128xf32>
    %c48 = arith.constant 48 : index
    %c0_9 = arith.constant 0 : index
    %12 = vector.load %arg2[%c48, %c0_9] : memref<1344x256xbf16, #tpu.memory_space<vmem>>, vector<48x128xbf16>
    %13 = arith.truncf %4 : vector<64x48xf32> to vector<64x48xbf16>
    %cst_10 = arith.constant dense<0.000000e+00> : vector<64x128xf32>
    %14 = tpu.matmul %13, %12, %cst_10 {dimension_numbers = #tpu.dot_dimension_numbers<[1], [0], [0], [1], [0, 0, 1, 1], [], []>} : vector<64x48xbf16>, vector<48x128xbf16>, vector<64x128xf32> -> vector<64x128xf32>
    %c176 = arith.constant 176 : index
    %c0_11 = arith.constant 0 : index
    %15 = vector.load %arg2[%c176, %c0_11] : memref<1344x256xbf16, #tpu.memory_space<vmem>>, vector<1x128xbf16>
    %16 = arith.extf %15 : vector<1x128xbf16> to vector<1x128xf32>
    %17 = vector.broadcast %16 : vector<1x128xf32> to vector<64x128xf32>
    %18 = arith.addf %14, %17 : vector<64x128xf32>
    %19 = vector.extract_strided_slice %11 {offsets = [0, 0], sizes = [8, 128], strides = [1, 1]} : vector<64x128xf32> to vector<8x128xf32>
    %c96 = arith.constant 96 : index
    %c0_12 = arith.constant 0 : index
    %20 = vector.load %arg2[%c96, %c0_12] : memref<1344x256xbf16, #tpu.memory_space<vmem>>, vector<32x128xbf16>
    %21 = arith.truncf %0 : vector<8x32xf32> to vector<8x32xbf16>
    %cst_13 = arith.constant dense<0.000000e+00> : vector<8x128xf32>
    %22 = tpu.matmul %21, %20, %cst_13 {dimension_numbers = #tpu.dot_dimension_numbers<[1], [0], [0], [1], [0, 0, 1, 1], [], []>} : vector<8x32xbf16>, vector<32x128xbf16>, vector<8x128xf32> -> vector<8x128xf32>
    %23 = arith.addf %19, %22 : vector<8x128xf32>
    %24 = vector.extract_strided_slice %23 {offsets = [0, 0], sizes = [8, 32], strides = [1, 1]} : vector<8x128xf32> to vector<8x32xf32>
    %25 = arith.negf %24 : vector<8x32xf32>
    %26 = math.exp %25 : vector<8x32xf32>
    %cst_14 = arith.constant 1.000000e+00 : f32
    %27 = vector.broadcast %cst_14 : f32 to vector<8x32xf32>
    %28 = arith.addf %27, %26 : vector<8x32xf32>
    %29 = arith.divf %27, %28 : vector<8x32xf32>
    %30 = vector.extract_strided_slice %23 {offsets = [0, 32], sizes = [8, 32], strides = [1, 1]} : vector<8x128xf32> to vector<8x32xf32>
    %31 = arith.negf %30 : vector<8x32xf32>
    %32 = math.exp %31 : vector<8x32xf32>
    %cst_15 = arith.constant 1.000000e+00 : f32
    %33 = vector.broadcast %cst_15 : f32 to vector<8x32xf32>
    %34 = arith.addf %33, %32 : vector<8x32xf32>
    %35 = arith.divf %33, %34 : vector<8x32xf32>
    %36 = vector.extract_strided_slice %23 {offsets = [0, 64], sizes = [8, 32], strides = [1, 1]} : vector<8x128xf32> to vector<8x32xf32>
    %37 = math.tanh %36 : vector<8x32xf32>
    %38 = vector.extract_strided_slice %23 {offsets = [0, 96], sizes = [8, 32], strides = [1, 1]} : vector<8x128xf32> to vector<8x32xf32>
    %39 = arith.negf %38 : vector<8x32xf32>
    %40 = math.exp %39 : vector<8x32xf32>
    %cst_16 = arith.constant 1.000000e+00 : f32
    %41 = vector.broadcast %cst_16 : f32 to vector<8x32xf32>
    %42 = arith.addf %41, %40 : vector<8x32xf32>
    %43 = arith.divf %41, %42 : vector<8x32xf32>
    %44 = arith.mulf %35, %0 : vector<8x32xf32>
    %45 = arith.mulf %29, %37 : vector<8x32xf32>
    %46 = arith.addf %44, %45 : vector<8x32xf32>
    %47 = math.tanh %46 : vector<8x32xf32>
    %48 = arith.mulf %43, %47 : vector<8x32xf32>
    %49 = vector.extract_strided_slice %18 {offsets = [56, 0], sizes = [8, 128], strides = [1, 1]} : vector<64x128xf32> to vector<8x128xf32>
    %c128 = arith.constant 128 : index
    %c0_17 = arith.constant 0 : index
    %50 = vector.load %arg2[%c128, %c0_17] : memref<1344x256xbf16, #tpu.memory_space<vmem>>, vector<32x128xbf16>
    %51 = arith.truncf %0 : vector<8x32xf32> to vector<8x32xbf16>
    %cst_18 = arith.constant dense<0.000000e+00> : vector<8x128xf32>
    %52 = tpu.matmul %51, %50, %cst_18 {dimension_numbers = #tpu.dot_dimension_numbers<[1], [0], [0], [1], [0, 0, 1, 1], [], []>} : vector<8x32xbf16>, vector<32x128xbf16>, vector<8x128xf32> -> vector<8x128xf32>
    %53 = arith.addf %49, %52 : vector<8x128xf32>
    %54 = vector.extract_strided_slice %53 {offsets = [0, 0], sizes = [8, 32], strides = [1, 1]} : vector<8x128xf32> to vector<8x32xf32>
    %55 = arith.negf %54 : vector<8x32xf32>
    %56 = math.exp %55 : vector<8x32xf32>
    %cst_19 = arith.constant 1.000000e+00 : f32
    %57 = vector.broadcast %cst_19 : f32 to vector<8x32xf32>
    %58 = arith.addf %57, %56 : vector<8x32xf32>
    %59 = arith.divf %57, %58 : vector<8x32xf32>
    %60 = vector.extract_strided_slice %53 {offsets = [0, 32], sizes = [8, 32], strides = [1, 1]} : vector<8x128xf32> to vector<8x32xf32>
    %61 = arith.negf %60 : vector<8x32xf32>
    %62 = math.exp %61 : vector<8x32xf32>
    %cst_20 = arith.constant 1.000000e+00 : f32
    %63 = vector.broadcast %cst_20 : f32 to vector<8x32xf32>
    %64 = arith.addf %63, %62 : vector<8x32xf32>
    %65 = arith.divf %63, %64 : vector<8x32xf32>
    %66 = vector.extract_strided_slice %53 {offsets = [0, 64], sizes = [8, 32], strides = [1, 1]} : vector<8x128xf32> to vector<8x32xf32>
    %67 = math.tanh %66 : vector<8x32xf32>
    %68 = vector.extract_strided_slice %53 {offsets = [0, 96], sizes = [8, 32], strides = [1, 1]} : vector<8x128xf32> to vector<8x32xf32>
    %69 = arith.negf %68 : vector<8x32xf32>
    %70 = math.exp %69 : vector<8x32xf32>
    %cst_21 = arith.constant 1.000000e+00 : f32
    %71 = vector.broadcast %cst_21 : f32 to vector<8x32xf32>
    %72 = arith.addf %71, %70 : vector<8x32xf32>
    %73 = arith.divf %71, %72 : vector<8x32xf32>
    %74 = arith.mulf %65, %0 : vector<8x32xf32>
    %75 = arith.mulf %59, %67 : vector<8x32xf32>
    %76 = arith.addf %74, %75 : vector<8x32xf32>
    %77 = math.tanh %76 : vector<8x32xf32>
    %78 = arith.mulf %73, %77 : vector<8x32xf32>
    %79 = vector.extract_strided_slice %11 {offsets = [8, 0], sizes = [8, 128], strides = [1, 1]} : vector<64x128xf32> to vector<8x128xf32>
    %c96_22 = arith.constant 96 : index
    %c0_23 = arith.constant 0 : index
    %80 = vector.load %arg2[%c96_22, %c0_23] : memref<1344x256xbf16, #tpu.memory_space<vmem>>, vector<32x128xbf16>
    %81 = arith.truncf %48 : vector<8x32xf32> to vector<8x32xbf16>
    %cst_24 = arith.constant dense<0.000000e+00> : vector<8x128xf32>
    %82 = tpu.matmul %81, %80, %cst_24 {dimension_numbers = #tpu.dot_dimension_numbers<[1], [0], [0], [1], [0, 0, 1, 1], [], []>} : vector<8x32xbf16>, vector<32x128xbf16>, vector<8x128xf32> -> vector<8x128xf32>
    %83 = arith.addf %79, %82 : vector<8x128xf32>
    %84 = vector.extract_strided_slice %83 {offsets = [0, 0], sizes = [8, 32], strides = [1, 1]} : vector<8x128xf32> to vector<8x32xf32>
    %85 = arith.negf %84 : vector<8x32xf32>
    %86 = math.exp %85 : vector<8x32xf32>
    %cst_25 = arith.constant 1.000000e+00 : f32
    %87 = vector.broadcast %cst_25 : f32 to vector<8x32xf32>
    %88 = arith.addf %87, %86 : vector<8x32xf32>
    %89 = arith.divf %87, %88 : vector<8x32xf32>
    %90 = vector.extract_strided_slice %83 {offsets = [0, 32], sizes = [8, 32], strides = [1, 1]} : vector<8x128xf32> to vector<8x32xf32>
    %91 = arith.negf %90 : vector<8x32xf32>
    %92 = math.exp %91 : vector<8x32xf32>
    %cst_26 = arith.constant 1.000000e+00 : f32
    %93 = vector.broadcast %cst_26 : f32 to vector<8x32xf32>
    %94 = arith.addf %93, %92 : vector<8x32xf32>
    %95 = arith.divf %93, %94 : vector<8x32xf32>
    %96 = vector.extract_strided_slice %83 {offsets = [0, 64], sizes = [8, 32], strides = [1, 1]} : vector<8x128xf32> to vector<8x32xf32>
    %97 = math.tanh %96 : vector<8x32xf32>
    %98 = vector.extract_strided_slice %83 {offsets = [0, 96], sizes = [8, 32], strides = [1, 1]} : vector<8x128xf32> to vector<8x32xf32>
    %99 = arith.negf %98 : vector<8x32xf32>
    %100 = math.exp %99 : vector<8x32xf32>
    %cst_27 = arith.constant 1.000000e+00 : f32
    %101 = vector.broadcast %cst_27 : f32 to vector<8x32xf32>
    %102 = arith.addf %101, %100 : vector<8x32xf32>
    %103 = arith.divf %101, %102 : vector<8x32xf32>
    %104 = arith.mulf %95, %46 : vector<8x32xf32>
    %105 = arith.mulf %89, %97 : vector<8x32xf32>
    %106 = arith.addf %104, %105 : vector<8x32xf32>
    %107 = math.tanh %106 : vector<8x32xf32>
    %108 = arith.mulf %103, %107 : vector<8x32xf32>
    %109 = vector.extract_strided_slice %18 {offsets = [48, 0], sizes = [8, 128], strides = [1, 1]} : vector<64x128xf32> to vector<8x128xf32>
    %c128_28 = arith.constant 128 : index
    %c0_29 = arith.constant 0 : index
    %110 = vector.load %arg2[%c128_28, %c0_29] : memref<1344x256xbf16, #tpu.memory_space<vmem>>, vector<32x128xbf16>
    %111 = arith.truncf %78 : vector<8x32xf32> to vector<8x32xbf16>
    %cst_30 = arith.constant dense<0.000000e+00> : vector<8x128xf32>
    %112 = tpu.matmul %111, %110, %cst_30 {dimension_numbers = #tpu.dot_dimension_numbers<[1], [0], [0], [1], [0, 0, 1, 1], [], []>} : vector<8x32xbf16>, vector<32x128xbf16>, vector<8x128xf32> -> vector<8x128xf32>
    %113 = arith.addf %109, %112 : vector<8x128xf32>
    %114 = vector.extract_strided_slice %113 {offsets = [0, 0], sizes = [8, 32], strides = [1, 1]} : vector<8x128xf32> to vector<8x32xf32>
    %115 = arith.negf %114 : vector<8x32xf32>
    %116 = math.exp %115 : vector<8x32xf32>
    %cst_31 = arith.constant 1.000000e+00 : f32
    %117 = vector.broadcast %cst_31 : f32 to vector<8x32xf32>
    %118 = arith.addf %117, %116 : vector<8x32xf32>
    %119 = arith.divf %117, %118 : vector<8x32xf32>
    %120 = vector.extract_strided_slice %113 {offsets = [0, 32], sizes = [8, 32], strides = [1, 1]} : vector<8x128xf32> to vector<8x32xf32>
    %121 = arith.negf %120 : vector<8x32xf32>
    %122 = math.exp %121 : vector<8x32xf32>
    %cst_32 = arith.constant 1.000000e+00 : f32
    %123 = vector.broadcast %cst_32 : f32 to vector<8x32xf32>
    %124 = arith.addf %123, %122 : vector<8x32xf32>
    %125 = arith.divf %123, %124 : vector<8x32xf32>
    %126 = vector.extract_strided_slice %113 {offsets = [0, 64], sizes = [8, 32], strides = [1, 1]} : vector<8x128xf32> to vector<8x32xf32>
    %127 = math.tanh %126 : vector<8x32xf32>
    %128 = vector.extract_strided_slice %113 {offsets = [0, 96], sizes = [8, 32], strides = [1, 1]} : vector<8x128xf32> to vector<8x32xf32>
    %129 = arith.negf %128 : vector<8x32xf32>
    %130 = math.exp %129 : vector<8x32xf32>
    %cst_33 = arith.constant 1.000000e+00 : f32
    %131 = vector.broadcast %cst_33 : f32 to vector<8x32xf32>
    %132 = arith.addf %131, %130 : vector<8x32xf32>
    %133 = arith.divf %131, %132 : vector<8x32xf32>
    %134 = arith.mulf %125, %76 : vector<8x32xf32>
    %135 = arith.mulf %119, %127 : vector<8x32xf32>
    %136 = arith.addf %134, %135 : vector<8x32xf32>
    %137 = math.tanh %136 : vector<8x32xf32>
    %138 = arith.mulf %133, %137 : vector<8x32xf32>
    %139 = vector.extract_strided_slice %11 {offsets = [16, 0], sizes = [8, 128], strides = [1, 1]} : vector<64x128xf32> to vector<8x128xf32>
    %c96_34 = arith.constant 96 : index
    %c0_35 = arith.constant 0 : index
    %140 = vector.load %arg2[%c96_34, %c0_35] : memref<1344x256xbf16, #tpu.memory_space<vmem>>, vector<32x128xbf16>
    %141 = arith.truncf %108 : vector<8x32xf32> to vector<8x32xbf16>
    %cst_36 = arith.constant dense<0.000000e+00> : vector<8x128xf32>
    %142 = tpu.matmul %141, %140, %cst_36 {dimension_numbers = #tpu.dot_dimension_numbers<[1], [0], [0], [1], [0, 0, 1, 1], [], []>} : vector<8x32xbf16>, vector<32x128xbf16>, vector<8x128xf32> -> vector<8x128xf32>
    %143 = arith.addf %139, %142 : vector<8x128xf32>
    %144 = vector.extract_strided_slice %143 {offsets = [0, 0], sizes = [8, 32], strides = [1, 1]} : vector<8x128xf32> to vector<8x32xf32>
    %145 = arith.negf %144 : vector<8x32xf32>
    %146 = math.exp %145 : vector<8x32xf32>
    %cst_37 = arith.constant 1.000000e+00 : f32
    %147 = vector.broadcast %cst_37 : f32 to vector<8x32xf32>
    %148 = arith.addf %147, %146 : vector<8x32xf32>
    %149 = arith.divf %147, %148 : vector<8x32xf32>
    %150 = vector.extract_strided_slice %143 {offsets = [0, 32], sizes = [8, 32], strides = [1, 1]} : vector<8x128xf32> to vector<8x32xf32>
    %151 = arith.negf %150 : vector<8x32xf32>
    %152 = math.exp %151 : vector<8x32xf32>
    %cst_38 = arith.constant 1.000000e+00 : f32
    %153 = vector.broadcast %cst_38 : f32 to vector<8x32xf32>
    %154 = arith.addf %153, %152 : vector<8x32xf32>
    %155 = arith.divf %153, %154 : vector<8x32xf32>
    %156 = vector.extract_strided_slice %143 {offsets = [0, 64], sizes = [8, 32], strides = [1, 1]} : vector<8x128xf32> to vector<8x32xf32>
    %157 = math.tanh %156 : vector<8x32xf32>
    %158 = vector.extract_strided_slice %143 {offsets = [0, 96], sizes = [8, 32], strides = [1, 1]} : vector<8x128xf32> to vector<8x32xf32>
    %159 = arith.negf %158 : vector<8x32xf32>
    %160 = math.exp %159 : vector<8x32xf32>
    %cst_39 = arith.constant 1.000000e+00 : f32
    %161 = vector.broadcast %cst_39 : f32 to vector<8x32xf32>
    %162 = arith.addf %161, %160 : vector<8x32xf32>
    %163 = arith.divf %161, %162 : vector<8x32xf32>
    %164 = arith.mulf %155, %106 : vector<8x32xf32>
    %165 = arith.mulf %149, %157 : vector<8x32xf32>
    %166 = arith.addf %164, %165 : vector<8x32xf32>
    %167 = math.tanh %166 : vector<8x32xf32>
    %168 = arith.mulf %163, %167 : vector<8x32xf32>
    %169 = vector.extract_strided_slice %18 {offsets = [40, 0], sizes = [8, 128], strides = [1, 1]} : vector<64x128xf32> to vector<8x128xf32>
    %c128_40 = arith.constant 128 : index
    %c0_41 = arith.constant 0 : index
    %170 = vector.load %arg2[%c128_40, %c0_41] : memref<1344x256xbf16, #tpu.memory_space<vmem>>, vector<32x128xbf16>
    %171 = arith.truncf %138 : vector<8x32xf32> to vector<8x32xbf16>
    %cst_42 = arith.constant dense<0.000000e+00> : vector<8x128xf32>
    %172 = tpu.matmul %171, %170, %cst_42 {dimension_numbers = #tpu.dot_dimension_numbers<[1], [0], [0], [1], [0, 0, 1, 1], [], []>} : vector<8x32xbf16>, vector<32x128xbf16>, vector<8x128xf32> -> vector<8x128xf32>
    %173 = arith.addf %169, %172 : vector<8x128xf32>
    %174 = vector.extract_strided_slice %173 {offsets = [0, 0], sizes = [8, 32], strides = [1, 1]} : vector<8x128xf32> to vector<8x32xf32>
    %175 = arith.negf %174 : vector<8x32xf32>
    %176 = math.exp %175 : vector<8x32xf32>
    %cst_43 = arith.constant 1.000000e+00 : f32
    %177 = vector.broadcast %cst_43 : f32 to vector<8x32xf32>
    %178 = arith.addf %177, %176 : vector<8x32xf32>
    %179 = arith.divf %177, %178 : vector<8x32xf32>
    %180 = vector.extract_strided_slice %173 {offsets = [0, 32], sizes = [8, 32], strides = [1, 1]} : vector<8x128xf32> to vector<8x32xf32>
    %181 = arith.negf %180 : vector<8x32xf32>
    %182 = math.exp %181 : vector<8x32xf32>
    %cst_44 = arith.constant 1.000000e+00 : f32
    %183 = vector.broadcast %cst_44 : f32 to vector<8x32xf32>
    %184 = arith.addf %183, %182 : vector<8x32xf32>
    %185 = arith.divf %183, %184 : vector<8x32xf32>
    %186 = vector.extract_strided_slice %173 {offsets = [0, 64], sizes = [8, 32], strides = [1, 1]} : vector<8x128xf32> to vector<8x32xf32>
    %187 = math.tanh %186 : vector<8x32xf32>
    %188 = vector.extract_strided_slice %173 {offsets = [0, 96], sizes = [8, 32], strides = [1, 1]} : vector<8x128xf32> to vector<8x32xf32>
    %189 = arith.negf %188 : vector<8x32xf32>
    %190 = math.exp %189 : vector<8x32xf32>
    %cst_45 = arith.constant 1.000000e+00 : f32
    %191 = vector.broadcast %cst_45 : f32 to vector<8x32xf32>
    %192 = arith.addf %191, %190 : vector<8x32xf32>
    %193 = arith.divf %191, %192 : vector<8x32xf32>
    %194 = arith.mulf %185, %136 : vector<8x32xf32>
    %195 = arith.mulf %179, %187 : vector<8x32xf32>
    %196 = arith.addf %194, %195 : vector<8x32xf32>
    %197 = math.tanh %196 : vector<8x32xf32>
    %198 = arith.mulf %193, %197 : vector<8x32xf32>
    %199 = vector.extract_strided_slice %11 {offsets = [24, 0], sizes = [8, 128], strides = [1, 1]} : vector<64x128xf32> to vector<8x128xf32>
    %c96_46 = arith.constant 96 : index
    %c0_47 = arith.constant 0 : index
    %200 = vector.load %arg2[%c96_46, %c0_47] : memref<1344x256xbf16, #tpu.memory_space<vmem>>, vector<32x128xbf16>
    %201 = arith.truncf %168 : vector<8x32xf32> to vector<8x32xbf16>
    %cst_48 = arith.constant dense<0.000000e+00> : vector<8x128xf32>
    %202 = tpu.matmul %201, %200, %cst_48 {dimension_numbers = #tpu.dot_dimension_numbers<[1], [0], [0], [1], [0, 0, 1, 1], [], []>} : vector<8x32xbf16>, vector<32x128xbf16>, vector<8x128xf32> -> vector<8x128xf32>
    %203 = arith.addf %199, %202 : vector<8x128xf32>
    %204 = vector.extract_strided_slice %203 {offsets = [0, 0], sizes = [8, 32], strides = [1, 1]} : vector<8x128xf32> to vector<8x32xf32>
    %205 = arith.negf %204 : vector<8x32xf32>
    %206 = math.exp %205 : vector<8x32xf32>
    %cst_49 = arith.constant 1.000000e+00 : f32
    %207 = vector.broadcast %cst_49 : f32 to vector<8x32xf32>
    %208 = arith.addf %207, %206 : vector<8x32xf32>
    %209 = arith.divf %207, %208 : vector<8x32xf32>
    %210 = vector.extract_strided_slice %203 {offsets = [0, 32], sizes = [8, 32], strides = [1, 1]} : vector<8x128xf32> to vector<8x32xf32>
    %211 = arith.negf %210 : vector<8x32xf32>
    %212 = math.exp %211 : vector<8x32xf32>
    %cst_50 = arith.constant 1.000000e+00 : f32
    %213 = vector.broadcast %cst_50 : f32 to vector<8x32xf32>
    %214 = arith.addf %213, %212 : vector<8x32xf32>
    %215 = arith.divf %213, %214 : vector<8x32xf32>
    %216 = vector.extract_strided_slice %203 {offsets = [0, 64], sizes = [8, 32], strides = [1, 1]} : vector<8x128xf32> to vector<8x32xf32>
    %217 = math.tanh %216 : vector<8x32xf32>
    %218 = vector.extract_strided_slice %203 {offsets = [0, 96], sizes = [8, 32], strides = [1, 1]} : vector<8x128xf32> to vector<8x32xf32>
    %219 = arith.negf %218 : vector<8x32xf32>
    %220 = math.exp %219 : vector<8x32xf32>
    %cst_51 = arith.constant 1.000000e+00 : f32
    %221 = vector.broadcast %cst_51 : f32 to vector<8x32xf32>
    %222 = arith.addf %221, %220 : vector<8x32xf32>
    %223 = arith.divf %221, %222 : vector<8x32xf32>
    %224 = arith.mulf %215, %166 : vector<8x32xf32>
    %225 = arith.mulf %209, %217 : vector<8x32xf32>
    %226 = arith.addf %224, %225 : vector<8x32xf32>
    %227 = math.tanh %226 : vector<8x32xf32>
    %228 = arith.mulf %223, %227 : vector<8x32xf32>
    %229 = vector.extract_strided_slice %18 {offsets = [32, 0], sizes = [8, 128], strides = [1, 1]} : vector<64x128xf32> to vector<8x128xf32>
    %c128_52 = arith.constant 128 : index
    %c0_53 = arith.constant 0 : index
    %230 = vector.load %arg2[%c128_52, %c0_53] : memref<1344x256xbf16, #tpu.memory_space<vmem>>, vector<32x128xbf16>
    %231 = arith.truncf %198 : vector<8x32xf32> to vector<8x32xbf16>
    %cst_54 = arith.constant dense<0.000000e+00> : vector<8x128xf32>
    %232 = tpu.matmul %231, %230, %cst_54 {dimension_numbers = #tpu.dot_dimension_numbers<[1], [0], [0], [1], [0, 0, 1, 1], [], []>} : vector<8x32xbf16>, vector<32x128xbf16>, vector<8x128xf32> -> vector<8x128xf32>
    %233 = arith.addf %229, %232 : vector<8x128xf32>
    %234 = vector.extract_strided_slice %233 {offsets = [0, 0], sizes = [8, 32], strides = [1, 1]} : vector<8x128xf32> to vector<8x32xf32>
    %235 = arith.negf %234 : vector<8x32xf32>
    %236 = math.exp %235 : vector<8x32xf32>
    %cst_55 = arith.constant 1.000000e+00 : f32
    %237 = vector.broadcast %cst_55 : f32 to vector<8x32xf32>
    %238 = arith.addf %237, %236 : vector<8x32xf32>
    %239 = arith.divf %237, %238 : vector<8x32xf32>
    %240 = vector.extract_strided_slice %233 {offsets = [0, 32], sizes = [8, 32], strides = [1, 1]} : vector<8x128xf32> to vector<8x32xf32>
    %241 = arith.negf %240 : vector<8x32xf32>
    %242 = math.exp %241 : vector<8x32xf32>
    %cst_56 = arith.constant 1.000000e+00 : f32
    %243 = vector.broadcast %cst_56 : f32 to vector<8x32xf32>
    %244 = arith.addf %243, %242 : vector<8x32xf32>
    %245 = arith.divf %243, %244 : vector<8x32xf32>
    %246 = vector.extract_strided_slice %233 {offsets = [0, 64], sizes = [8, 32], strides = [1, 1]} : vector<8x128xf32> to vector<8x32xf32>
    %247 = math.tanh %246 : vector<8x32xf32>
    %248 = vector.extract_strided_slice %233 {offsets = [0, 96], sizes = [8, 32], strides = [1, 1]} : vector<8x128xf32> to vector<8x32xf32>
    %249 = arith.negf %248 : vector<8x32xf32>
    %250 = math.exp %249 : vector<8x32xf32>
    %cst_57 = arith.constant 1.000000e+00 : f32
    %251 = vector.broadcast %cst_57 : f32 to vector<8x32xf32>
    %252 = arith.addf %251, %250 : vector<8x32xf32>
    %253 = arith.divf %251, %252 : vector<8x32xf32>
    %254 = arith.mulf %245, %196 : vector<8x32xf32>
    %255 = arith.mulf %239, %247 : vector<8x32xf32>
    %256 = arith.addf %254, %255 : vector<8x32xf32>
    %257 = math.tanh %256 : vector<8x32xf32>
    %258 = arith.mulf %253, %257 : vector<8x32xf32>
    %259 = vector.extract_strided_slice %11 {offsets = [32, 0], sizes = [8, 128], strides = [1, 1]} : vector<64x128xf32> to vector<8x128xf32>
    %c96_58 = arith.constant 96 : index
    %c0_59 = arith.constant 0 : index
    %260 = vector.load %arg2[%c96_58, %c0_59] : memref<1344x256xbf16, #tpu.memory_space<vmem>>, vector<32x128xbf16>
    %261 = arith.truncf %228 : vector<8x32xf32> to vector<8x32xbf16>
    %cst_60 = arith.constant dense<0.000000e+00> : vector<8x128xf32>
    %262 = tpu.matmul %261, %260, %cst_60 {dimension_numbers = #tpu.dot_dimension_numbers<[1], [0], [0], [1], [0, 0, 1, 1], [], []>} : vector<8x32xbf16>, vector<32x128xbf16>, vector<8x128xf32> -> vector<8x128xf32>
    %263 = arith.addf %259, %262 : vector<8x128xf32>
    %264 = vector.extract_strided_slice %263 {offsets = [0, 0], sizes = [8, 32], strides = [1, 1]} : vector<8x128xf32> to vector<8x32xf32>
    %265 = arith.negf %264 : vector<8x32xf32>
    %266 = math.exp %265 : vector<8x32xf32>
    %cst_61 = arith.constant 1.000000e+00 : f32
    %267 = vector.broadcast %cst_61 : f32 to vector<8x32xf32>
    %268 = arith.addf %267, %266 : vector<8x32xf32>
    %269 = arith.divf %267, %268 : vector<8x32xf32>
    %270 = vector.extract_strided_slice %263 {offsets = [0, 32], sizes = [8, 32], strides = [1, 1]} : vector<8x128xf32> to vector<8x32xf32>
    %271 = arith.negf %270 : vector<8x32xf32>
    %272 = math.exp %271 : vector<8x32xf32>
    %cst_62 = arith.constant 1.000000e+00 : f32
    %273 = vector.broadcast %cst_62 : f32 to vector<8x32xf32>
    %274 = arith.addf %273, %272 : vector<8x32xf32>
    %275 = arith.divf %273, %274 : vector<8x32xf32>
    %276 = vector.extract_strided_slice %263 {offsets = [0, 64], sizes = [8, 32], strides = [1, 1]} : vector<8x128xf32> to vector<8x32xf32>
    %277 = math.tanh %276 : vector<8x32xf32>
    %278 = vector.extract_strided_slice %263 {offsets = [0, 96], sizes = [8, 32], strides = [1, 1]} : vector<8x128xf32> to vector<8x32xf32>
    %279 = arith.negf %278 : vector<8x32xf32>
    %280 = math.exp %279 : vector<8x32xf32>
    %cst_63 = arith.constant 1.000000e+00 : f32
    %281 = vector.broadcast %cst_63 : f32 to vector<8x32xf32>
    %282 = arith.addf %281, %280 : vector<8x32xf32>
    %283 = arith.divf %281, %282 : vector<8x32xf32>
    %284 = arith.mulf %275, %226 : vector<8x32xf32>
    %285 = arith.mulf %269, %277 : vector<8x32xf32>
    %286 = arith.addf %284, %285 : vector<8x32xf32>
    %287 = math.tanh %286 : vector<8x32xf32>
    %288 = arith.mulf %283, %287 : vector<8x32xf32>
    %289 = vector.extract_strided_slice %18 {offsets = [24, 0], sizes = [8, 128], strides = [1, 1]} : vector<64x128xf32> to vector<8x128xf32>
    %c128_64 = arith.constant 128 : index
    %c0_65 = arith.constant 0 : index
    %290 = vector.load %arg2[%c128_64, %c0_65] : memref<1344x256xbf16, #tpu.memory_space<vmem>>, vector<32x128xbf16>
    %291 = arith.truncf %258 : vector<8x32xf32> to vector<8x32xbf16>
    %cst_66 = arith.constant dense<0.000000e+00> : vector<8x128xf32>
    %292 = tpu.matmul %291, %290, %cst_66 {dimension_numbers = #tpu.dot_dimension_numbers<[1], [0], [0], [1], [0, 0, 1, 1], [], []>} : vector<8x32xbf16>, vector<32x128xbf16>, vector<8x128xf32> -> vector<8x128xf32>
    %293 = arith.addf %289, %292 : vector<8x128xf32>
    %294 = vector.extract_strided_slice %293 {offsets = [0, 0], sizes = [8, 32], strides = [1, 1]} : vector<8x128xf32> to vector<8x32xf32>
    %295 = arith.negf %294 : vector<8x32xf32>
    %296 = math.exp %295 : vector<8x32xf32>
    %cst_67 = arith.constant 1.000000e+00 : f32
    %297 = vector.broadcast %cst_67 : f32 to vector<8x32xf32>
    %298 = arith.addf %297, %296 : vector<8x32xf32>
    %299 = arith.divf %297, %298 : vector<8x32xf32>
    %300 = vector.extract_strided_slice %293 {offsets = [0, 32], sizes = [8, 32], strides = [1, 1]} : vector<8x128xf32> to vector<8x32xf32>
    %301 = arith.negf %300 : vector<8x32xf32>
    %302 = math.exp %301 : vector<8x32xf32>
    %cst_68 = arith.constant 1.000000e+00 : f32
    %303 = vector.broadcast %cst_68 : f32 to vector<8x32xf32>
    %304 = arith.addf %303, %302 : vector<8x32xf32>
    %305 = arith.divf %303, %304 : vector<8x32xf32>
    %306 = vector.extract_strided_slice %293 {offsets = [0, 64], sizes = [8, 32], strides = [1, 1]} : vector<8x128xf32> to vector<8x32xf32>
    %307 = math.tanh %306 : vector<8x32xf32>
    %308 = vector.extract_strided_slice %293 {offsets = [0, 96], sizes = [8, 32], strides = [1, 1]} : vector<8x128xf32> to vector<8x32xf32>
    %309 = arith.negf %308 : vector<8x32xf32>
    %310 = math.exp %309 : vector<8x32xf32>
    %cst_69 = arith.constant 1.000000e+00 : f32
    %311 = vector.broadcast %cst_69 : f32 to vector<8x32xf32>
    %312 = arith.addf %311, %310 : vector<8x32xf32>
    %313 = arith.divf %311, %312 : vector<8x32xf32>
    %314 = arith.mulf %305, %256 : vector<8x32xf32>
    %315 = arith.mulf %299, %307 : vector<8x32xf32>
    %316 = arith.addf %314, %315 : vector<8x32xf32>
    %317 = math.tanh %316 : vector<8x32xf32>
    %318 = arith.mulf %313, %317 : vector<8x32xf32>
    %319 = vector.extract_strided_slice %11 {offsets = [40, 0], sizes = [8, 128], strides = [1, 1]} : vector<64x128xf32> to vector<8x128xf32>
    %c96_70 = arith.constant 96 : index
    %c0_71 = arith.constant 0 : index
    %320 = vector.load %arg2[%c96_70, %c0_71] : memref<1344x256xbf16, #tpu.memory_space<vmem>>, vector<32x128xbf16>
    %321 = arith.truncf %288 : vector<8x32xf32> to vector<8x32xbf16>
    %cst_72 = arith.constant dense<0.000000e+00> : vector<8x128xf32>
    %322 = tpu.matmul %321, %320, %cst_72 {dimension_numbers = #tpu.dot_dimension_numbers<[1], [0], [0], [1], [0, 0, 1, 1], [], []>} : vector<8x32xbf16>, vector<32x128xbf16>, vector<8x128xf32> -> vector<8x128xf32>
    %323 = arith.addf %319, %322 : vector<8x128xf32>
    %324 = vector.extract_strided_slice %323 {offsets = [0, 0], sizes = [8, 32], strides = [1, 1]} : vector<8x128xf32> to vector<8x32xf32>
    %325 = arith.negf %324 : vector<8x32xf32>
    %326 = math.exp %325 : vector<8x32xf32>
    %cst_73 = arith.constant 1.000000e+00 : f32
    %327 = vector.broadcast %cst_73 : f32 to vector<8x32xf32>
    %328 = arith.addf %327, %326 : vector<8x32xf32>
    %329 = arith.divf %327, %328 : vector<8x32xf32>
    %330 = vector.extract_strided_slice %323 {offsets = [0, 32], sizes = [8, 32], strides = [1, 1]} : vector<8x128xf32> to vector<8x32xf32>
    %331 = arith.negf %330 : vector<8x32xf32>
    %332 = math.exp %331 : vector<8x32xf32>
    %cst_74 = arith.constant 1.000000e+00 : f32
    %333 = vector.broadcast %cst_74 : f32 to vector<8x32xf32>
    %334 = arith.addf %333, %332 : vector<8x32xf32>
    %335 = arith.divf %333, %334 : vector<8x32xf32>
    %336 = vector.extract_strided_slice %323 {offsets = [0, 64], sizes = [8, 32], strides = [1, 1]} : vector<8x128xf32> to vector<8x32xf32>
    %337 = math.tanh %336 : vector<8x32xf32>
    %338 = vector.extract_strided_slice %323 {offsets = [0, 96], sizes = [8, 32], strides = [1, 1]} : vector<8x128xf32> to vector<8x32xf32>
    %339 = arith.negf %338 : vector<8x32xf32>
    %340 = math.exp %339 : vector<8x32xf32>
    %cst_75 = arith.constant 1.000000e+00 : f32
    %341 = vector.broadcast %cst_75 : f32 to vector<8x32xf32>
    %342 = arith.addf %341, %340 : vector<8x32xf32>
    %343 = arith.divf %341, %342 : vector<8x32xf32>
    %344 = arith.mulf %335, %286 : vector<8x32xf32>
    %345 = arith.mulf %329, %337 : vector<8x32xf32>
    %346 = arith.addf %344, %345 : vector<8x32xf32>
    %347 = math.tanh %346 : vector<8x32xf32>
    %348 = arith.mulf %343, %347 : vector<8x32xf32>
    %349 = vector.extract_strided_slice %18 {offsets = [16, 0], sizes = [8, 128], strides = [1, 1]} : vector<64x128xf32> to vector<8x128xf32>
    %c128_76 = arith.constant 128 : index
    %c0_77 = arith.constant 0 : index
    %350 = vector.load %arg2[%c128_76, %c0_77] : memref<1344x256xbf16, #tpu.memory_space<vmem>>, vector<32x128xbf16>
    %351 = arith.truncf %318 : vector<8x32xf32> to vector<8x32xbf16>
    %cst_78 = arith.constant dense<0.000000e+00> : vector<8x128xf32>
    %352 = tpu.matmul %351, %350, %cst_78 {dimension_numbers = #tpu.dot_dimension_numbers<[1], [0], [0], [1], [0, 0, 1, 1], [], []>} : vector<8x32xbf16>, vector<32x128xbf16>, vector<8x128xf32> -> vector<8x128xf32>
    %353 = arith.addf %349, %352 : vector<8x128xf32>
    %354 = vector.extract_strided_slice %353 {offsets = [0, 0], sizes = [8, 32], strides = [1, 1]} : vector<8x128xf32> to vector<8x32xf32>
    %355 = arith.negf %354 : vector<8x32xf32>
    %356 = math.exp %355 : vector<8x32xf32>
    %cst_79 = arith.constant 1.000000e+00 : f32
    %357 = vector.broadcast %cst_79 : f32 to vector<8x32xf32>
    %358 = arith.addf %357, %356 : vector<8x32xf32>
    %359 = arith.divf %357, %358 : vector<8x32xf32>
    %360 = vector.extract_strided_slice %353 {offsets = [0, 32], sizes = [8, 32], strides = [1, 1]} : vector<8x128xf32> to vector<8x32xf32>
    %361 = arith.negf %360 : vector<8x32xf32>
    %362 = math.exp %361 : vector<8x32xf32>
    %cst_80 = arith.constant 1.000000e+00 : f32
    %363 = vector.broadcast %cst_80 : f32 to vector<8x32xf32>
    %364 = arith.addf %363, %362 : vector<8x32xf32>
    %365 = arith.divf %363, %364 : vector<8x32xf32>
    %366 = vector.extract_strided_slice %353 {offsets = [0, 64], sizes = [8, 32], strides = [1, 1]} : vector<8x128xf32> to vector<8x32xf32>
    %367 = math.tanh %366 : vector<8x32xf32>
    %368 = vector.extract_strided_slice %353 {offsets = [0, 96], sizes = [8, 32], strides = [1, 1]} : vector<8x128xf32> to vector<8x32xf32>
    %369 = arith.negf %368 : vector<8x32xf32>
    %370 = math.exp %369 : vector<8x32xf32>
    %cst_81 = arith.constant 1.000000e+00 : f32
    %371 = vector.broadcast %cst_81 : f32 to vector<8x32xf32>
    %372 = arith.addf %371, %370 : vector<8x32xf32>
    %373 = arith.divf %371, %372 : vector<8x32xf32>
    %374 = arith.mulf %365, %316 : vector<8x32xf32>
    %375 = arith.mulf %359, %367 : vector<8x32xf32>
    %376 = arith.addf %374, %375 : vector<8x32xf32>
    %377 = math.tanh %376 : vector<8x32xf32>
    %378 = arith.mulf %373, %377 : vector<8x32xf32>
    %379 = vector.extract_strided_slice %11 {offsets = [48, 0], sizes = [8, 128], strides = [1, 1]} : vector<64x128xf32> to vector<8x128xf32>
    %c96_82 = arith.constant 96 : index
    %c0_83 = arith.constant 0 : index
    %380 = vector.load %arg2[%c96_82, %c0_83] : memref<1344x256xbf16, #tpu.memory_space<vmem>>, vector<32x128xbf16>
    %381 = arith.truncf %348 : vector<8x32xf32> to vector<8x32xbf16>
    %cst_84 = arith.constant dense<0.000000e+00> : vector<8x128xf32>
    %382 = tpu.matmul %381, %380, %cst_84 {dimension_numbers = #tpu.dot_dimension_numbers<[1], [0], [0], [1], [0, 0, 1, 1], [], []>} : vector<8x32xbf16>, vector<32x128xbf16>, vector<8x128xf32> -> vector<8x128xf32>
    %383 = arith.addf %379, %382 : vector<8x128xf32>
    %384 = vector.extract_strided_slice %383 {offsets = [0, 0], sizes = [8, 32], strides = [1, 1]} : vector<8x128xf32> to vector<8x32xf32>
    %385 = arith.negf %384 : vector<8x32xf32>
    %386 = math.exp %385 : vector<8x32xf32>
    %cst_85 = arith.constant 1.000000e+00 : f32
    %387 = vector.broadcast %cst_85 : f32 to vector<8x32xf32>
    %388 = arith.addf %387, %386 : vector<8x32xf32>
    %389 = arith.divf %387, %388 : vector<8x32xf32>
    %390 = vector.extract_strided_slice %383 {offsets = [0, 32], sizes = [8, 32], strides = [1, 1]} : vector<8x128xf32> to vector<8x32xf32>
    %391 = arith.negf %390 : vector<8x32xf32>
    %392 = math.exp %391 : vector<8x32xf32>
    %cst_86 = arith.constant 1.000000e+00 : f32
    %393 = vector.broadcast %cst_86 : f32 to vector<8x32xf32>
    %394 = arith.addf %393, %392 : vector<8x32xf32>
    %395 = arith.divf %393, %394 : vector<8x32xf32>
    %396 = vector.extract_strided_slice %383 {offsets = [0, 64], sizes = [8, 32], strides = [1, 1]} : vector<8x128xf32> to vector<8x32xf32>
    %397 = math.tanh %396 : vector<8x32xf32>
    %398 = vector.extract_strided_slice %383 {offsets = [0, 96], sizes = [8, 32], strides = [1, 1]} : vector<8x128xf32> to vector<8x32xf32>
    %399 = arith.negf %398 : vector<8x32xf32>
    %400 = math.exp %399 : vector<8x32xf32>
    %cst_87 = arith.constant 1.000000e+00 : f32
    %401 = vector.broadcast %cst_87 : f32 to vector<8x32xf32>
    %402 = arith.addf %401, %400 : vector<8x32xf32>
    %403 = arith.divf %401, %402 : vector<8x32xf32>
    %404 = arith.mulf %395, %346 : vector<8x32xf32>
    %405 = arith.mulf %389, %397 : vector<8x32xf32>
    %406 = arith.addf %404, %405 : vector<8x32xf32>
    %407 = math.tanh %406 : vector<8x32xf32>
    %408 = arith.mulf %403, %407 : vector<8x32xf32>
    %409 = vector.extract_strided_slice %18 {offsets = [8, 0], sizes = [8, 128], strides = [1, 1]} : vector<64x128xf32> to vector<8x128xf32>
    %c128_88 = arith.constant 128 : index
    %c0_89 = arith.constant 0 : index
    %410 = vector.load %arg2[%c128_88, %c0_89] : memref<1344x256xbf16, #tpu.memory_space<vmem>>, vector<32x128xbf16>
    %411 = arith.truncf %378 : vector<8x32xf32> to vector<8x32xbf16>
    %cst_90 = arith.constant dense<0.000000e+00> : vector<8x128xf32>
    %412 = tpu.matmul %411, %410, %cst_90 {dimension_numbers = #tpu.dot_dimension_numbers<[1], [0], [0], [1], [0, 0, 1, 1], [], []>} : vector<8x32xbf16>, vector<32x128xbf16>, vector<8x128xf32> -> vector<8x128xf32>
    %413 = arith.addf %409, %412 : vector<8x128xf32>
    %414 = vector.extract_strided_slice %413 {offsets = [0, 0], sizes = [8, 32], strides = [1, 1]} : vector<8x128xf32> to vector<8x32xf32>
    %415 = arith.negf %414 : vector<8x32xf32>
    %416 = math.exp %415 : vector<8x32xf32>
    %cst_91 = arith.constant 1.000000e+00 : f32
    %417 = vector.broadcast %cst_91 : f32 to vector<8x32xf32>
    %418 = arith.addf %417, %416 : vector<8x32xf32>
    %419 = arith.divf %417, %418 : vector<8x32xf32>
    %420 = vector.extract_strided_slice %413 {offsets = [0, 32], sizes = [8, 32], strides = [1, 1]} : vector<8x128xf32> to vector<8x32xf32>
    %421 = arith.negf %420 : vector<8x32xf32>
    %422 = math.exp %421 : vector<8x32xf32>
    %cst_92 = arith.constant 1.000000e+00 : f32
    %423 = vector.broadcast %cst_92 : f32 to vector<8x32xf32>
    %424 = arith.addf %423, %422 : vector<8x32xf32>
    %425 = arith.divf %423, %424 : vector<8x32xf32>
    %426 = vector.extract_strided_slice %413 {offsets = [0, 64], sizes = [8, 32], strides = [1, 1]} : vector<8x128xf32> to vector<8x32xf32>
    %427 = math.tanh %426 : vector<8x32xf32>
    %428 = vector.extract_strided_slice %413 {offsets = [0, 96], sizes = [8, 32], strides = [1, 1]} : vector<8x128xf32> to vector<8x32xf32>
    %429 = arith.negf %428 : vector<8x32xf32>
    %430 = math.exp %429 : vector<8x32xf32>
    %cst_93 = arith.constant 1.000000e+00 : f32
    %431 = vector.broadcast %cst_93 : f32 to vector<8x32xf32>
    %432 = arith.addf %431, %430 : vector<8x32xf32>
    %433 = arith.divf %431, %432 : vector<8x32xf32>
    %434 = arith.mulf %425, %376 : vector<8x32xf32>
    %435 = arith.mulf %419, %427 : vector<8x32xf32>
    %436 = arith.addf %434, %435 : vector<8x32xf32>
    %437 = math.tanh %436 : vector<8x32xf32>
    %438 = arith.mulf %433, %437 : vector<8x32xf32>
    %439 = vector.extract_strided_slice %11 {offsets = [56, 0], sizes = [8, 128], strides = [1, 1]} : vector<64x128xf32> to vector<8x128xf32>
    %c96_94 = arith.constant 96 : index
    %c0_95 = arith.constant 0 : index
    %440 = vector.load %arg2[%c96_94, %c0_95] : memref<1344x256xbf16, #tpu.memory_space<vmem>>, vector<32x128xbf16>
    %441 = arith.truncf %408 : vector<8x32xf32> to vector<8x32xbf16>
    %cst_96 = arith.constant dense<0.000000e+00> : vector<8x128xf32>
    %442 = tpu.matmul %441, %440, %cst_96 {dimension_numbers = #tpu.dot_dimension_numbers<[1], [0], [0], [1], [0, 0, 1, 1], [], []>} : vector<8x32xbf16>, vector<32x128xbf16>, vector<8x128xf32> -> vector<8x128xf32>
    %443 = arith.addf %439, %442 : vector<8x128xf32>
    %444 = vector.extract_strided_slice %443 {offsets = [0, 0], sizes = [8, 32], strides = [1, 1]} : vector<8x128xf32> to vector<8x32xf32>
    %445 = arith.negf %444 : vector<8x32xf32>
    %446 = math.exp %445 : vector<8x32xf32>
    %cst_97 = arith.constant 1.000000e+00 : f32
    %447 = vector.broadcast %cst_97 : f32 to vector<8x32xf32>
    %448 = arith.addf %447, %446 : vector<8x32xf32>
    %449 = arith.divf %447, %448 : vector<8x32xf32>
    %450 = vector.extract_strided_slice %443 {offsets = [0, 32], sizes = [8, 32], strides = [1, 1]} : vector<8x128xf32> to vector<8x32xf32>
    %451 = arith.negf %450 : vector<8x32xf32>
    %452 = math.exp %451 : vector<8x32xf32>
    %cst_98 = arith.constant 1.000000e+00 : f32
    %453 = vector.broadcast %cst_98 : f32 to vector<8x32xf32>
    %454 = arith.addf %453, %452 : vector<8x32xf32>
    %455 = arith.divf %453, %454 : vector<8x32xf32>
    %456 = vector.extract_strided_slice %443 {offsets = [0, 64], sizes = [8, 32], strides = [1, 1]} : vector<8x128xf32> to vector<8x32xf32>
    %457 = math.tanh %456 : vector<8x32xf32>
    %458 = vector.extract_strided_slice %443 {offsets = [0, 96], sizes = [8, 32], strides = [1, 1]} : vector<8x128xf32> to vector<8x32xf32>
    %459 = arith.negf %458 : vector<8x32xf32>
    %460 = math.exp %459 : vector<8x32xf32>
    %cst_99 = arith.constant 1.000000e+00 : f32
    %461 = vector.broadcast %cst_99 : f32 to vector<8x32xf32>
    %462 = arith.addf %461, %460 : vector<8x32xf32>
    %463 = arith.divf %461, %462 : vector<8x32xf32>
    %464 = arith.mulf %455, %406 : vector<8x32xf32>
    %465 = arith.mulf %449, %457 : vector<8x32xf32>
    %466 = arith.addf %464, %465 : vector<8x32xf32>
    %467 = math.tanh %466 : vector<8x32xf32>
    %468 = arith.mulf %463, %467 : vector<8x32xf32>
    %469 = vector.extract_strided_slice %18 {offsets = [0, 0], sizes = [8, 128], strides = [1, 1]} : vector<64x128xf32> to vector<8x128xf32>
    %c128_100 = arith.constant 128 : index
    %c0_101 = arith.constant 0 : index
    %470 = vector.load %arg2[%c128_100, %c0_101] : memref<1344x256xbf16, #tpu.memory_space<vmem>>, vector<32x128xbf16>
    %471 = arith.truncf %438 : vector<8x32xf32> to vector<8x32xbf16>
    %cst_102 = arith.constant dense<0.000000e+00> : vector<8x128xf32>
    %472 = tpu.matmul %471, %470, %cst_102 {dimension_numbers = #tpu.dot_dimension_numbers<[1], [0], [0], [1], [0, 0, 1, 1], [], []>} : vector<8x32xbf16>, vector<32x128xbf16>, vector<8x128xf32> -> vector<8x128xf32>
    %473 = arith.addf %469, %472 : vector<8x128xf32>
    %474 = vector.extract_strided_slice %473 {offsets = [0, 0], sizes = [8, 32], strides = [1, 1]} : vector<8x128xf32> to vector<8x32xf32>
    %475 = arith.negf %474 : vector<8x32xf32>
    %476 = math.exp %475 : vector<8x32xf32>
    %cst_103 = arith.constant 1.000000e+00 : f32
    %477 = vector.broadcast %cst_103 : f32 to vector<8x32xf32>
    %478 = arith.addf %477, %476 : vector<8x32xf32>
    %479 = arith.divf %477, %478 : vector<8x32xf32>
    %480 = vector.extract_strided_slice %473 {offsets = [0, 32], sizes = [8, 32], strides = [1, 1]} : vector<8x128xf32> to vector<8x32xf32>
    %481 = arith.negf %480 : vector<8x32xf32>
    %482 = math.exp %481 : vector<8x32xf32>
    %cst_104 = arith.constant 1.000000e+00 : f32
    %483 = vector.broadcast %cst_104 : f32 to vector<8x32xf32>
    %484 = arith.addf %483, %482 : vector<8x32xf32>
    %485 = arith.divf %483, %484 : vector<8x32xf32>
    %486 = vector.extract_strided_slice %473 {offsets = [0, 64], sizes = [8, 32], strides = [1, 1]} : vector<8x128xf32> to vector<8x32xf32>
    %487 = math.tanh %486 : vector<8x32xf32>
    %488 = vector.extract_strided_slice %473 {offsets = [0, 96], sizes = [8, 32], strides = [1, 1]} : vector<8x128xf32> to vector<8x32xf32>
    %489 = arith.negf %488 : vector<8x32xf32>
    %490 = math.exp %489 : vector<8x32xf32>
    %cst_105 = arith.constant 1.000000e+00 : f32
    %491 = vector.broadcast %cst_105 : f32 to vector<8x32xf32>
    %492 = arith.addf %491, %490 : vector<8x32xf32>
    %493 = arith.divf %491, %492 : vector<8x32xf32>
    %494 = arith.mulf %485, %436 : vector<8x32xf32>
    %495 = arith.mulf %479, %487 : vector<8x32xf32>
    %496 = arith.addf %494, %495 : vector<8x32xf32>
    %497 = math.tanh %496 : vector<8x32xf32>
    %498 = arith.mulf %493, %497 : vector<8x32xf32>
    %c192 = arith.constant 192 : index
    %c0_106 = arith.constant 0 : index
    %499 = vector.load %arg2[%c192, %c0_106] : memref<1344x256xbf16, #tpu.memory_space<vmem>>, vector<32x32xbf16>
    %500 = arith.truncf %498 : vector<8x32xf32> to vector<8x32xbf16>
    %cst_107 = arith.constant dense<0.000000e+00> : vector<8x32xf32>
    %501 = tpu.matmul %500, %499, %cst_107 {dimension_numbers = #tpu.dot_dimension_numbers<[1], [0], [0], [1], [0, 0, 1, 1], [], []>} : vector<8x32xbf16>, vector<32x32xbf16>, vector<8x32xf32> -> vector<8x32xf32>
    %c224 = arith.constant 224 : index
    %c0_108 = arith.constant 0 : index
    %502 = vector.load %arg2[%c224, %c0_108] : memref<1344x256xbf16, #tpu.memory_space<vmem>>, vector<32x32xbf16>
    %503 = arith.truncf %468 : vector<8x32xf32> to vector<8x32xbf16>
    %cst_109 = arith.constant dense<0.000000e+00> : vector<8x32xf32>
    %504 = tpu.matmul %503, %502, %cst_109 {dimension_numbers = #tpu.dot_dimension_numbers<[1], [0], [0], [1], [0, 0, 1, 1], [], []>} : vector<8x32xbf16>, vector<32x32xbf16>, vector<8x32xf32> -> vector<8x32xf32>
    %505 = arith.addf %501, %504 : vector<8x32xf32>
    %c256 = arith.constant 256 : index
    %c0_110 = arith.constant 0 : index
    %506 = vector.load %arg2[%c256, %c0_110] : memref<1344x256xbf16, #tpu.memory_space<vmem>>, vector<1x32xbf16>
    %507 = arith.extf %506 : vector<1x32xbf16> to vector<1x32xf32>
    %508 = vector.broadcast %507 : vector<1x32xf32> to vector<8x32xf32>
    %509 = arith.addf %505, %508 : vector<8x32xf32>
    %c272 = arith.constant 272 : index
    %c0_111 = arith.constant 0 : index
    %510 = vector.load %arg2[%c272, %c0_111] : memref<1344x256xbf16, #tpu.memory_space<vmem>>, vector<32x64xbf16>
    %511 = arith.truncf %509 : vector<8x32xf32> to vector<8x32xbf16>
    %cst_112 = arith.constant dense<0.000000e+00> : vector<8x64xf32>
    %512 = tpu.matmul %511, %510, %cst_112 {dimension_numbers = #tpu.dot_dimension_numbers<[1], [0], [0], [1], [0, 0, 1, 1], [], []>} : vector<8x32xbf16>, vector<32x64xbf16>, vector<8x64xf32> -> vector<8x64xf32>
    %c304 = arith.constant 304 : index
    %c0_113 = arith.constant 0 : index
    %513 = vector.load %arg2[%c304, %c0_113] : memref<1344x256xbf16, #tpu.memory_space<vmem>>, vector<1x64xbf16>
    %514 = arith.extf %513 : vector<1x64xbf16> to vector<1x64xf32>
    %515 = vector.broadcast %514 : vector<1x64xf32> to vector<8x64xf32>
    %516 = arith.addf %512, %515 : vector<8x64xf32>
    %517 = vector.extract_strided_slice %516 {offsets = [0, 0], sizes = [8, 32], strides = [1, 1]} : vector<8x64xf32> to vector<8x32xf32>
    %518 = vector.extract_strided_slice %516 {offsets = [0, 32], sizes = [8, 32], strides = [1, 1]} : vector<8x64xf32> to vector<8x32xf32>
    %519 = arith.mulf %517, %517 : vector<8x32xf32>
    %520 = math.exp %518 : vector<8x32xf32>
    %521 = arith.addf %519, %520 : vector<8x32xf32>
    %522 = arith.subf %521, %518 : vector<8x32xf32>
    %cst_114 = arith.constant 1.000000e+00 : f32
    %523 = vector.broadcast %cst_114 : f32 to vector<8x32xf32>
    %524 = arith.subf %522, %523 : vector<8x32xf32>
    %cst_115 = arith.constant dense<0.000000e+00> : vector<8xf32>
    %525 = vector.multi_reduction <add>, %524, %cst_115 [1] : vector<8x32xf32> to vector<8xf32>
    %526 = vector.shape_cast %525 : vector<8xf32> to vector<8x1xf32>
    %cst_116 = arith.constant 3.200000e+01 : f32
    %527 = vector.broadcast %cst_116 : f32 to vector<8x1xf32>
    %528 = arith.divf %526, %527 : vector<8x1xf32>
    %cst_117 = arith.constant 5.000000e-01 : f32
    %529 = vector.broadcast %cst_117 : f32 to vector<8x1xf32>
    %530 = arith.mulf %529, %528 : vector<8x1xf32>
    %c0_118 = arith.constant 0 : index
    %c186 = arith.constant 186 : index
    %531 = vector.load %arg3[%c0_118, %c186] : memref<8x256xf32, #tpu.memory_space<vmem>>, vector<8x1xf32>
    tpu.vector_store %arg3[%c0_118, %c186], %530 {strides = array<i32>} : memref<8x256xf32, #tpu.memory_space<vmem>>, vector<8x1xf32>,
    %c320 = arith.constant 320 : index
    %c0_119 = arith.constant 0 : index
    %532 = vector.load %arg2[%c320, %c0_119] : memref<1344x256xbf16, #tpu.memory_space<vmem>>, vector<32x160xbf16>
    %533 = arith.truncf %517 : vector<8x32xf32> to vector<8x32xbf16>
    %cst_120 = arith.constant dense<0.000000e+00> : vector<8x160xf32>
    %534 = tpu.matmul %533, %532, %cst_120 {dimension_numbers = #tpu.dot_dimension_numbers<[1], [0], [0], [1], [0, 0, 1, 1], [], []>} : vector<8x32xbf16>, vector<32x160xbf16>, vector<8x160xf32> -> vector<8x160xf32>
    %c352 = arith.constant 352 : index
    %c0_121 = arith.constant 0 : index
    %535 = vector.load %arg2[%c352, %c0_121] : memref<1344x256xbf16, #tpu.memory_space<vmem>>, vector<1x160xbf16>
    %536 = arith.extf %535 : vector<1x160xbf16> to vector<1x160xf32>
    %537 = vector.broadcast %536 : vector<1x160xf32> to vector<8x160xf32>
    %538 = arith.addf %534, %537 : vector<8x160xf32>
    %cst_122 = arith.constant 0.000000e+00 : f32
    %539 = vector.broadcast %cst_122 : f32 to vector<8x160xf32>
    %540 = arith.maximumf %538, %539 : vector<8x160xf32>
    %541 = vector.extract_strided_slice %540 {offsets = [0, 0], sizes = [8, 32], strides = [1, 1]} : vector<8x160xf32> to vector<8x32xf32>
    %c368 = arith.constant 368 : index
    %c0_123 = arith.constant 0 : index
    %542 = vector.load %arg2[%c368, %c0_123] : memref<1344x256xbf16, #tpu.memory_space<vmem>>, vector<32x12xbf16>
    %543 = arith.truncf %541 : vector<8x32xf32> to vector<8x32xbf16>
    %cst_124 = arith.constant dense<0.000000e+00> : vector<8x12xf32>
    %544 = tpu.matmul %543, %542, %cst_124 {dimension_numbers = #tpu.dot_dimension_numbers<[1], [0], [0], [1], [0, 0, 1, 1], [], []>} : vector<8x32xbf16>, vector<32x12xbf16>, vector<8x12xf32> -> vector<8x12xf32>
    %c400 = arith.constant 400 : index
    %c0_125 = arith.constant 0 : index
    %545 = vector.load %arg2[%c400, %c0_125] : memref<1344x256xbf16, #tpu.memory_space<vmem>>, vector<1x12xbf16>
    %546 = arith.extf %545 : vector<1x12xbf16> to vector<1x12xf32>
    %547 = vector.broadcast %546 : vector<1x12xf32> to vector<8x12xf32>
    %548 = arith.addf %544, %547 : vector<8x12xf32>
    %549 = vector.extract_strided_slice %540 {offsets = [0, 32], sizes = [8, 128], strides = [1, 1]} : vector<8x160xf32> to vector<8x128xf32>
    %c416 = arith.constant 416 : index
    %c0_126 = arith.constant 0 : index
    %550 = vector.load %arg2[%c416, %c0_126] : memref<1344x256xbf16, #tpu.memory_space<vmem>>, vector<128x10xbf16>
    %551 = arith.truncf %549 : vector<8x128xf32> to vector<8x128xbf16>
    %cst_127 = arith.constant dense<0.000000e+00> : vector<8x10xf32>
    %552 = tpu.matmul %551, %550, %cst_127 {dimension_numbers = #tpu.dot_dimension_numbers<[1], [0], [0], [1], [0, 0, 1, 1], [], []>} : vector<8x128xbf16>, vector<128x10xbf16>, vector<8x10xf32> -> vector<8x10xf32>
    %c544 = arith.constant 544 : index
    %c0_128 = arith.constant 0 : index
    %553 = vector.load %arg2[%c544, %c0_128] : memref<1344x256xbf16, #tpu.memory_space<vmem>>, vector<1x10xbf16>
    %554 = arith.extf %553 : vector<1x10xbf16> to vector<1x10xf32>
    %555 = vector.broadcast %554 : vector<1x10xf32> to vector<8x10xf32>
    %556 = arith.addf %552, %555 : vector<8x10xf32>
    %c0_129 = arith.constant 0 : index
    %c164 = arith.constant 164 : index
    %557 = vector.load %arg3[%c0_129, %c164] : memref<8x256xf32, #tpu.memory_space<vmem>>, vector<8x12xf32>
    tpu.vector_store %arg3[%c0_129, %c164], %548 {strides = array<i32>} : memref<8x256xf32, #tpu.memory_space<vmem>>, vector<8x12xf32>,
    %c0_130 = arith.constant 0 : index
    %c176_131 = arith.constant 176 : index
    %558 = vector.load %arg3[%c0_130, %c176_131] : memref<8x256xf32, #tpu.memory_space<vmem>>, vector<8x10xf32>
    tpu.vector_store %arg3[%c0_130, %c176_131], %556 {strides = array<i32>} : memref<8x256xf32, #tpu.memory_space<vmem>>, vector<8x10xf32>,
    %c560 = arith.constant 560 : index
    %c0_132 = arith.constant 0 : index
    %559 = vector.load %arg2[%c560, %c0_132] : memref<1344x256xbf16, #tpu.memory_space<vmem>>, vector<10x128xbf16>
    %560 = arith.truncf %556 : vector<8x10xf32> to vector<8x10xbf16>
    %cst_133 = arith.constant dense<0.000000e+00> : vector<8x128xf32>
    %561 = tpu.matmul %560, %559, %cst_133 {dimension_numbers = #tpu.dot_dimension_numbers<[1], [0], [0], [1], [0, 0, 1, 1], [], []>} : vector<8x10xbf16>, vector<10x128xbf16>, vector<8x128xf32> -> vector<8x128xf32>
    %c576 = arith.constant 576 : index
    %c0_134 = arith.constant 0 : index
    %562 = vector.load %arg2[%c576, %c0_134] : memref<1344x256xbf16, #tpu.memory_space<vmem>>, vector<1x128xbf16>
    %563 = arith.extf %562 : vector<1x128xbf16> to vector<1x128xf32>
    %564 = vector.broadcast %563 : vector<1x128xf32> to vector<8x128xf32>
    %565 = arith.addf %561, %564 : vector<8x128xf32>
    %c592 = arith.constant 592 : index
    %c0_135 = arith.constant 0 : index
    %566 = vector.load %arg2[%c592, %c0_135] : memref<1344x256xbf16, #tpu.memory_space<vmem>>, vector<32x32xbf16>
    %567 = arith.truncf %517 : vector<8x32xf32> to vector<8x32xbf16>
    %cst_136 = arith.constant dense<0.000000e+00> : vector<8x32xf32>
    %568 = tpu.matmul %567, %566, %cst_136 {dimension_numbers = #tpu.dot_dimension_numbers<[1], [0], [0], [1], [0, 0, 1, 1], [], []>} : vector<8x32xbf16>, vector<32x32xbf16>, vector<8x32xf32> -> vector<8x32xf32>
    %c624 = arith.constant 624 : index
    %c0_137 = arith.constant 0 : index
    %569 = vector.load %arg2[%c624, %c0_137] : memref<1344x256xbf16, #tpu.memory_space<vmem>>, vector<128x32xbf16>
    %570 = arith.truncf %565 : vector<8x128xf32> to vector<8x128xbf16>
    %cst_138 = arith.constant dense<0.000000e+00> : vector<8x32xf32>
    %571 = tpu.matmul %570, %569, %cst_138 {dimension_numbers = #tpu.dot_dimension_numbers<[1], [0], [0], [1], [0, 0, 1, 1], [], []>} : vector<8x128xbf16>, vector<128x32xbf16>, vector<8x32xf32> -> vector<8x32xf32>
    %572 = arith.addf %568, %571 : vector<8x32xf32>
    %c752 = arith.constant 752 : index
    %c0_139 = arith.constant 0 : index
    %573 = vector.load %arg2[%c752, %c0_139] : memref<1344x256xbf16, #tpu.memory_space<vmem>>, vector<1x32xbf16>
    %574 = arith.extf %573 : vector<1x32xbf16> to vector<1x32xf32>
    %575 = vector.broadcast %574 : vector<1x32xf32> to vector<8x32xf32>
    %576 = arith.addf %572, %575 : vector<8x32xf32>
    %c992 = arith.constant 992 : index
    %c0_140 = arith.constant 0 : index
    %577 = vector.load %arg2[%c992, %c0_140] : memref<1344x256xbf16, #tpu.memory_space<vmem>>, vector<32x32xbf16>
    %578 = arith.truncf %576 : vector<8x32xf32> to vector<8x32xbf16>
    %cst_141 = arith.constant dense<0.000000e+00> : vector<8x32xf32>
    %579 = tpu.matmul %578, %577, %cst_141 {dimension_numbers = #tpu.dot_dimension_numbers<[1], [0], [0], [1], [0, 0, 1, 1], [], []>} : vector<8x32xbf16>, vector<32x32xbf16>, vector<8x32xf32> -> vector<8x32xf32>
    %c1024 = arith.constant 1024 : index
    %c0_142 = arith.constant 0 : index
    %580 = vector.load %arg2[%c1024, %c0_142] : memref<1344x256xbf16, #tpu.memory_space<vmem>>, vector<1x32xbf16>
    %581 = arith.extf %580 : vector<1x32xbf16> to vector<1x32xf32>
    %582 = vector.broadcast %581 : vector<1x32xf32> to vector<8x32xf32>
    %583 = arith.addf %579, %582 : vector<8x32xf32>
    %c1296 = arith.constant 1296 : index
    %c0_143 = arith.constant 0 : index
    %584 = vector.load %arg2[%c1296, %c0_143] : memref<1344x256xbf16, #tpu.memory_space<vmem>>, vector<32x32xbf16>
    %585 = arith.truncf %576 : vector<8x32xf32> to vector<8x32xbf16>
    %cst_144 = arith.constant dense<0.000000e+00> : vector<8x32xf32>
    %586 = tpu.matmul %585, %584, %cst_144 {dimension_numbers = #tpu.dot_dimension_numbers<[1], [0], [0], [1], [0, 0, 1, 1], [], []>} : vector<8x32xbf16>, vector<32x32xbf16>, vector<8x32xf32> -> vector<8x32xf32>
    %c1328 = arith.constant 1328 : index
    %c0_145 = arith.constant 0 : index
    %587 = vector.load %arg2[%c1328, %c0_145] : memref<1344x256xbf16, #tpu.memory_space<vmem>>, vector<1x32xbf16>
    %588 = arith.extf %587 : vector<1x32xbf16> to vector<1x32xf32>
    %589 = vector.broadcast %588 : vector<1x32xf32> to vector<8x32xf32>
    %590 = arith.addf %586, %589 : vector<8x32xf32>
    %c768 = arith.constant 768 : index
    %c0_146 = arith.constant 0 : index
    %591 = vector.load %arg2[%c768, %c0_146] : memref<1344x256xbf16, #tpu.memory_space<vmem>>, vector<32x128xbf16>
    %592 = arith.truncf %576 : vector<8x32xf32> to vector<8x32xbf16>
    %cst_147 = arith.constant dense<0.000000e+00> : vector<8x128xf32>
    %593 = tpu.matmul %592, %591, %cst_147 {dimension_numbers = #tpu.dot_dimension_numbers<[1], [0], [0], [1], [0, 0, 1, 1], [], []>} : vector<8x32xbf16>, vector<32x128xbf16>, vector<8x128xf32> -> vector<8x128xf32>
    %c800 = arith.constant 800 : index
    %c0_148 = arith.constant 0 : index
    %594 = vector.load %arg2[%c800, %c0_148] : memref<1344x256xbf16, #tpu.memory_space<vmem>>, vector<32x128xbf16>
    %595 = arith.truncf %0 : vector<8x32xf32> to vector<8x32xbf16>
    %cst_149 = arith.constant dense<0.000000e+00> : vector<8x128xf32>
    %596 = tpu.matmul %595, %594, %cst_149 {dimension_numbers = #tpu.dot_dimension_numbers<[1], [0], [0], [1], [0, 0, 1, 1], [], []>} : vector<8x32xbf16>, vector<32x128xbf16>, vector<8x128xf32> -> vector<8x128xf32>
    %597 = arith.addf %593, %596 : vector<8x128xf32>
    %c832 = arith.constant 832 : index
    %c0_150 = arith.constant 0 : index
    %598 = vector.load %arg2[%c832, %c0_150] : memref<1344x256xbf16, #tpu.memory_space<vmem>>, vector<1x128xbf16>
    %599 = arith.extf %598 : vector<1x128xbf16> to vector<1x128xf32>
    %600 = vector.broadcast %599 : vector<1x128xf32> to vector<8x128xf32>
    %601 = arith.addf %597, %600 : vector<8x128xf32>
    %602 = vector.extract_strided_slice %601 {offsets = [0, 0], sizes = [8, 32], strides = [1, 1]} : vector<8x128xf32> to vector<8x32xf32>
    %603 = arith.negf %602 : vector<8x32xf32>
    %604 = math.exp %603 : vector<8x32xf32>
    %cst_151 = arith.constant 1.000000e+00 : f32
    %605 = vector.broadcast %cst_151 : f32 to vector<8x32xf32>
    %606 = arith.addf %605, %604 : vector<8x32xf32>
    %607 = arith.divf %605, %606 : vector<8x32xf32>
    %608 = vector.extract_strided_slice %601 {offsets = [0, 32], sizes = [8, 32], strides = [1, 1]} : vector<8x128xf32> to vector<8x32xf32>
    %609 = arith.negf %608 : vector<8x32xf32>
    %610 = math.exp %609 : vector<8x32xf32>
    %cst_152 = arith.constant 1.000000e+00 : f32
    %611 = vector.broadcast %cst_152 : f32 to vector<8x32xf32>
    %612 = arith.addf %611, %610 : vector<8x32xf32>
    %613 = arith.divf %611, %612 : vector<8x32xf32>
    %614 = vector.extract_strided_slice %601 {offsets = [0, 64], sizes = [8, 32], strides = [1, 1]} : vector<8x128xf32> to vector<8x32xf32>
    %615 = math.tanh %614 : vector<8x32xf32>
    %616 = vector.extract_strided_slice %601 {offsets = [0, 96], sizes = [8, 32], strides = [1, 1]} : vector<8x128xf32> to vector<8x32xf32>
    %617 = arith.negf %616 : vector<8x32xf32>
    %618 = math.exp %617 : vector<8x32xf32>
    %cst_153 = arith.constant 1.000000e+00 : f32
    %619 = vector.broadcast %cst_153 : f32 to vector<8x32xf32>
    %620 = arith.addf %619, %618 : vector<8x32xf32>
    %621 = arith.divf %619, %620 : vector<8x32xf32>
    %622 = arith.mulf %613, %0 : vector<8x32xf32>
    %623 = arith.mulf %607, %615 : vector<8x32xf32>
    %624 = arith.addf %622, %623 : vector<8x32xf32>
    %625 = math.tanh %624 : vector<8x32xf32>
    %626 = arith.mulf %621, %625 : vector<8x32xf32>
    %c848 = arith.constant 848 : index
    %c0_154 = arith.constant 0 : index
    %627 = vector.load %arg2[%c848, %c0_154] : memref<1344x256xbf16, #tpu.memory_space<vmem>>, vector<32x32xbf16>
    %628 = arith.truncf %626 : vector<8x32xf32> to vector<8x32xbf16>
    %cst_155 = arith.constant dense<0.000000e+00> : vector<8x32xf32>
    %629 = tpu.matmul %628, %627, %cst_155 {dimension_numbers = #tpu.dot_dimension_numbers<[1], [0], [0], [1], [0, 0, 1, 1], [], []>} : vector<8x32xbf16>, vector<32x32xbf16>, vector<8x32xf32> -> vector<8x32xf32>
    %c880 = arith.constant 880 : index
    %c0_156 = arith.constant 0 : index
    %630 = vector.load %arg2[%c880, %c0_156] : memref<1344x256xbf16, #tpu.memory_space<vmem>>, vector<1x32xbf16>
    %631 = arith.extf %630 : vector<1x32xbf16> to vector<1x32xf32>
    %632 = vector.broadcast %631 : vector<1x32xf32> to vector<8x32xf32>
    %633 = arith.addf %629, %632 : vector<8x32xf32>
    %cst_157 = arith.constant 0.000000e+00 : f32
    %634 = vector.broadcast %cst_157 : f32 to vector<8x32xf32>
    %635 = arith.maximumf %633, %634 : vector<8x32xf32>
    %c896 = arith.constant 896 : index
    %c0_158 = arith.constant 0 : index
    %636 = vector.load %arg2[%c896, %c0_158] : memref<1344x256xbf16, #tpu.memory_space<vmem>>, vector<32x9xbf16>
    %637 = arith.truncf %635 : vector<8x32xf32> to vector<8x32xbf16>
    %cst_159 = arith.constant dense<0.000000e+00> : vector<8x9xf32>
    %638 = tpu.matmul %637, %636, %cst_159 {dimension_numbers = #tpu.dot_dimension_numbers<[1], [0], [0], [1], [0, 0, 1, 1], [], []>} : vector<8x32xbf16>, vector<32x9xbf16>, vector<8x9xf32> -> vector<8x9xf32>
    %c928 = arith.constant 928 : index
    %c0_160 = arith.constant 0 : index
    %639 = vector.load %arg2[%c928, %c0_160] : memref<1344x256xbf16, #tpu.memory_space<vmem>>, vector<1x9xbf16>
    %640 = arith.extf %639 : vector<1x9xbf16> to vector<1x9xf32>
    %641 = vector.broadcast %640 : vector<1x9xf32> to vector<8x9xf32>
    %642 = arith.addf %638, %641 : vector<8x9xf32>
    %c0_161 = arith.constant 0 : index
    %c0_162 = arith.constant 0 : index
    %643 = vector.load %arg3[%c0_161, %c0_162] : memref<8x256xf32, #tpu.memory_space<vmem>>, vector<8x9xf32>
    tpu.vector_store %arg3[%c0_161, %c0_162], %642 {strides = array<i32>} : memref<8x256xf32, #tpu.memory_space<vmem>>, vector<8x9xf32>,
    %cst_163 = arith.constant dense<0xFF800000> : vector<8xf32>
    %644 = vector.multi_reduction <maximumf>, %642, %cst_163 [1] : vector<8x9xf32> to vector<8xf32>
    %645 = vector.shape_cast %644 : vector<8xf32> to vector<8x1xf32>
    %646 = vector.broadcast %645 : vector<8x1xf32> to vector<8x9xf32>
    %647 = arith.cmpf oeq, %642, %646 : vector<8x9xf32>
    %648 = arith.extui %647 : vector<8x9xi1> to vector<8x9xi32>
    %649 = arith.sitofp %648 : vector<8x9xi32> to vector<8x9xf32>
    %c944 = arith.constant 944 : index
    %c0_164 = arith.constant 0 : index
    %650 = vector.load %arg2[%c944, %c0_164] : memref<1344x256xbf16, #tpu.memory_space<vmem>>, vector<9x32xbf16>
    %651 = arith.truncf %649 : vector<8x9xf32> to vector<8x9xbf16>
    %cst_165 = arith.constant dense<0.000000e+00> : vector<8x32xf32>
    %652 = tpu.matmul %651, %650, %cst_165 {dimension_numbers = #tpu.dot_dimension_numbers<[1], [0], [0], [1], [0, 0, 1, 1], [], []>} : vector<8x9xbf16>, vector<9x32xbf16>, vector<8x32xf32> -> vector<8x32xf32>
    %c960 = arith.constant 960 : index
    %c0_166 = arith.constant 0 : index
    %653 = vector.load %arg2[%c960, %c0_166] : memref<1344x256xbf16, #tpu.memory_space<vmem>>, vector<32x32xbf16>
    %654 = arith.truncf %652 : vector<8x32xf32> to vector<8x32xbf16>
    %cst_167 = arith.constant dense<0.000000e+00> : vector<8x32xf32>
    %655 = tpu.matmul %654, %653, %cst_167 {dimension_numbers = #tpu.dot_dimension_numbers<[1], [0], [0], [1], [0, 0, 1, 1], [], []>} : vector<8x32xbf16>, vector<32x32xbf16>, vector<8x32xf32> -> vector<8x32xf32>
    %656 = arith.addf %655, %583 : vector<8x32xf32>
    %c1264 = arith.constant 1264 : index
    %c0_168 = arith.constant 0 : index
    %657 = vector.load %arg2[%c1264, %c0_168] : memref<1344x256xbf16, #tpu.memory_space<vmem>>, vector<32x32xbf16>
    %658 = arith.truncf %656 : vector<8x32xf32> to vector<8x32xbf16>
    %cst_169 = arith.constant dense<0.000000e+00> : vector<8x32xf32>
    %659 = tpu.matmul %658, %657, %cst_169 {dimension_numbers = #tpu.dot_dimension_numbers<[1], [0], [0], [1], [0, 0, 1, 1], [], []>} : vector<8x32xbf16>, vector<32x32xbf16>, vector<8x32xf32> -> vector<8x32xf32>
    %660 = arith.addf %659, %590 : vector<8x32xf32>
    %c1040 = arith.constant 1040 : index
    %c0_170 = arith.constant 0 : index
    %661 = vector.load %arg2[%c1040, %c0_170] : memref<1344x256xbf16, #tpu.memory_space<vmem>>, vector<32x128xbf16>
    %662 = arith.truncf %656 : vector<8x32xf32> to vector<8x32xbf16>
    %cst_171 = arith.constant dense<0.000000e+00> : vector<8x128xf32>
    %663 = tpu.matmul %662, %661, %cst_171 {dimension_numbers = #tpu.dot_dimension_numbers<[1], [0], [0], [1], [0, 0, 1, 1], [], []>} : vector<8x32xbf16>, vector<32x128xbf16>, vector<8x128xf32> -> vector<8x128xf32>
    %c1072 = arith.constant 1072 : index
    %c0_172 = arith.constant 0 : index
    %664 = vector.load %arg2[%c1072, %c0_172] : memref<1344x256xbf16, #tpu.memory_space<vmem>>, vector<32x128xbf16>
    %665 = arith.truncf %0 : vector<8x32xf32> to vector<8x32xbf16>
    %cst_173 = arith.constant dense<0.000000e+00> : vector<8x128xf32>
    %666 = tpu.matmul %665, %664, %cst_173 {dimension_numbers = #tpu.dot_dimension_numbers<[1], [0], [0], [1], [0, 0, 1, 1], [], []>} : vector<8x32xbf16>, vector<32x128xbf16>, vector<8x128xf32> -> vector<8x128xf32>
    %667 = arith.addf %663, %666 : vector<8x128xf32>
    %c1104 = arith.constant 1104 : index
    %c0_174 = arith.constant 0 : index
    %668 = vector.load %arg2[%c1104, %c0_174] : memref<1344x256xbf16, #tpu.memory_space<vmem>>, vector<1x128xbf16>
    %669 = arith.extf %668 : vector<1x128xbf16> to vector<1x128xf32>
    %670 = vector.broadcast %669 : vector<1x128xf32> to vector<8x128xf32>
    %671 = arith.addf %667, %670 : vector<8x128xf32>
    %672 = vector.extract_strided_slice %671 {offsets = [0, 0], sizes = [8, 32], strides = [1, 1]} : vector<8x128xf32> to vector<8x32xf32>
    %673 = arith.negf %672 : vector<8x32xf32>
    %674 = math.exp %673 : vector<8x32xf32>
    %cst_175 = arith.constant 1.000000e+00 : f32
    %675 = vector.broadcast %cst_175 : f32 to vector<8x32xf32>
    %676 = arith.addf %675, %674 : vector<8x32xf32>
    %677 = arith.divf %675, %676 : vector<8x32xf32>
    %678 = vector.extract_strided_slice %671 {offsets = [0, 32], sizes = [8, 32], strides = [1, 1]} : vector<8x128xf32> to vector<8x32xf32>
    %679 = arith.negf %678 : vector<8x32xf32>
    %680 = math.exp %679 : vector<8x32xf32>
    %cst_176 = arith.constant 1.000000e+00 : f32
    %681 = vector.broadcast %cst_176 : f32 to vector<8x32xf32>
    %682 = arith.addf %681, %680 : vector<8x32xf32>
    %683 = arith.divf %681, %682 : vector<8x32xf32>
    %684 = vector.extract_strided_slice %671 {offsets = [0, 64], sizes = [8, 32], strides = [1, 1]} : vector<8x128xf32> to vector<8x32xf32>
    %685 = math.tanh %684 : vector<8x32xf32>
    %686 = vector.extract_strided_slice %671 {offsets = [0, 96], sizes = [8, 32], strides = [1, 1]} : vector<8x128xf32> to vector<8x32xf32>
    %687 = arith.negf %686 : vector<8x32xf32>
    %688 = math.exp %687 : vector<8x32xf32>
    %cst_177 = arith.constant 1.000000e+00 : f32
    %689 = vector.broadcast %cst_177 : f32 to vector<8x32xf32>
    %690 = arith.addf %689, %688 : vector<8x32xf32>
    %691 = arith.divf %689, %690 : vector<8x32xf32>
    %692 = arith.mulf %683, %0 : vector<8x32xf32>
    %693 = arith.mulf %677, %685 : vector<8x32xf32>
    %694 = arith.addf %692, %693 : vector<8x32xf32>
    %695 = math.tanh %694 : vector<8x32xf32>
    %696 = arith.mulf %691, %695 : vector<8x32xf32>
    %c1120 = arith.constant 1120 : index
    %c0_178 = arith.constant 0 : index
    %697 = vector.load %arg2[%c1120, %c0_178] : memref<1344x256xbf16, #tpu.memory_space<vmem>>, vector<32x32xbf16>
    %698 = arith.truncf %696 : vector<8x32xf32> to vector<8x32xbf16>
    %cst_179 = arith.constant dense<0.000000e+00> : vector<8x32xf32>
    %699 = tpu.matmul %698, %697, %cst_179 {dimension_numbers = #tpu.dot_dimension_numbers<[1], [0], [0], [1], [0, 0, 1, 1], [], []>} : vector<8x32xbf16>, vector<32x32xbf16>, vector<8x32xf32> -> vector<8x32xf32>
    %c1152 = arith.constant 1152 : index
    %c0_180 = arith.constant 0 : index
    %700 = vector.load %arg2[%c1152, %c0_180] : memref<1344x256xbf16, #tpu.memory_space<vmem>>, vector<1x32xbf16>
    %701 = arith.extf %700 : vector<1x32xbf16> to vector<1x32xf32>
    %702 = vector.broadcast %701 : vector<1x32xf32> to vector<8x32xf32>
    %703 = arith.addf %699, %702 : vector<8x32xf32>
    %cst_181 = arith.constant 0.000000e+00 : f32
    %704 = vector.broadcast %cst_181 : f32 to vector<8x32xf32>
    %705 = arith.maximumf %703, %704 : vector<8x32xf32>
    %c1168 = arith.constant 1168 : index
    %c0_182 = arith.constant 0 : index
    %706 = vector.load %arg2[%c1168, %c0_182] : memref<1344x256xbf16, #tpu.memory_space<vmem>>, vector<32x16xbf16>
    %707 = arith.truncf %705 : vector<8x32xf32> to vector<8x32xbf16>
    %cst_183 = arith.constant dense<0.000000e+00> : vector<8x16xf32>
    %708 = tpu.matmul %707, %706, %cst_183 {dimension_numbers = #tpu.dot_dimension_numbers<[1], [0], [0], [1], [0, 0, 1, 1], [], []>} : vector<8x32xbf16>, vector<32x16xbf16>, vector<8x16xf32> -> vector<8x16xf32>
    %c1200 = arith.constant 1200 : index
    %c0_184 = arith.constant 0 : index
    %709 = vector.load %arg2[%c1200, %c0_184] : memref<1344x256xbf16, #tpu.memory_space<vmem>>, vector<1x16xbf16>
    %710 = arith.extf %709 : vector<1x16xbf16> to vector<1x16xf32>
    %711 = vector.broadcast %710 : vector<1x16xf32> to vector<8x16xf32>
    %712 = arith.addf %708, %711 : vector<8x16xf32>
    %c0_185 = arith.constant 0 : index
    %c36 = arith.constant 36 : index
    %713 = vector.load %arg3[%c0_185, %c36] : memref<8x256xf32, #tpu.memory_space<vmem>>, vector<8x16xf32>
    tpu.vector_store %arg3[%c0_185, %c36], %712 {strides = array<i32>} : memref<8x256xf32, #tpu.memory_space<vmem>>, vector<8x16xf32>,
    %cst_186 = arith.constant dense<0xFF800000> : vector<8xf32>
    %714 = vector.multi_reduction <maximumf>, %712, %cst_186 [1] : vector<8x16xf32> to vector<8xf32>
    %715 = vector.shape_cast %714 : vector<8xf32> to vector<8x1xf32>
    %716 = vector.broadcast %715 : vector<8x1xf32> to vector<8x16xf32>
    %717 = arith.cmpf oeq, %712, %716 : vector<8x16xf32>
    %718 = arith.extui %717 : vector<8x16xi1> to vector<8x16xi32>
    %719 = arith.sitofp %718 : vector<8x16xi32> to vector<8x16xf32>
    %c1216 = arith.constant 1216 : index
    %c0_187 = arith.constant 0 : index
    %720 = vector.load %arg2[%c1216, %c0_187] : memref<1344x256xbf16, #tpu.memory_space<vmem>>, vector<16x32xbf16>
    %721 = arith.truncf %719 : vector<8x16xf32> to vector<8x16xbf16>
    %cst_188 = arith.constant dense<0.000000e+00> : vector<8x32xf32>
    %722 = tpu.matmul %721, %720, %cst_188 {dimension_numbers = #tpu.dot_dimension_numbers<[1], [0], [0], [1], [0, 0, 1, 1], [], []>} : vector<8x16xbf16>, vector<16x32xbf16>, vector<8x32xf32> -> vector<8x32xf32>
    %c1232 = arith.constant 1232 : index
    %c0_189 = arith.constant 0 : index
    %723 = vector.load %arg2[%c1232, %c0_189] : memref<1344x256xbf16, #tpu.memory_space<vmem>>, vector<32x32xbf16>
    %724 = arith.truncf %722 : vector<8x32xf32> to vector<8x32xbf16>
    %cst_190 = arith.constant dense<0.000000e+00> : vector<8x32xf32>
    %725 = tpu.matmul %724, %723, %cst_190 {dimension_numbers = #tpu.dot_dimension_numbers<[1], [0], [0], [1], [0, 0, 1, 1], [], []>} : vector<8x32xbf16>, vector<32x32xbf16>, vector<8x32xf32> -> vector<8x32xf32>
    %726 = arith.addf %725, %660 : vector<8x32xf32>
    %c1040_191 = arith.constant 1040 : index
    %c0_192 = arith.constant 0 : index
    %727 = vector.load %arg2[%c1040_191, %c0_192] : memref<1344x256xbf16, #tpu.memory_space<vmem>>, vector<32x128xbf16>
    %728 = arith.truncf %726 : vector<8x32xf32> to vector<8x32xbf16>
    %cst_193 = arith.constant dense<0.000000e+00> : vector<8x128xf32>
    %729 = tpu.matmul %728, %727, %cst_193 {dimension_numbers = #tpu.dot_dimension_numbers<[1], [0], [0], [1], [0, 0, 1, 1], [], []>} : vector<8x32xbf16>, vector<32x128xbf16>, vector<8x128xf32> -> vector<8x128xf32>
    %c1072_194 = arith.constant 1072 : index
    %c0_195 = arith.constant 0 : index
    %730 = vector.load %arg2[%c1072_194, %c0_195] : memref<1344x256xbf16, #tpu.memory_space<vmem>>, vector<32x128xbf16>
    %731 = arith.truncf %696 : vector<8x32xf32> to vector<8x32xbf16>
    %cst_196 = arith.constant dense<0.000000e+00> : vector<8x128xf32>
    %732 = tpu.matmul %731, %730, %cst_196 {dimension_numbers = #tpu.dot_dimension_numbers<[1], [0], [0], [1], [0, 0, 1, 1], [], []>} : vector<8x32xbf16>, vector<32x128xbf16>, vector<8x128xf32> -> vector<8x128xf32>
    %733 = arith.addf %729, %732 : vector<8x128xf32>
    %c1104_197 = arith.constant 1104 : index
    %c0_198 = arith.constant 0 : index
    %734 = vector.load %arg2[%c1104_197, %c0_198] : memref<1344x256xbf16, #tpu.memory_space<vmem>>, vector<1x128xbf16>
    %735 = arith.extf %734 : vector<1x128xbf16> to vector<1x128xf32>
    %736 = vector.broadcast %735 : vector<1x128xf32> to vector<8x128xf32>
    %737 = arith.addf %733, %736 : vector<8x128xf32>
    %738 = vector.extract_strided_slice %737 {offsets = [0, 0], sizes = [8, 32], strides = [1, 1]} : vector<8x128xf32> to vector<8x32xf32>
    %739 = arith.negf %738 : vector<8x32xf32>
    %740 = math.exp %739 : vector<8x32xf32>
    %cst_199 = arith.constant 1.000000e+00 : f32
    %741 = vector.broadcast %cst_199 : f32 to vector<8x32xf32>
    %742 = arith.addf %741, %740 : vector<8x32xf32>
    %743 = arith.divf %741, %742 : vector<8x32xf32>
    %744 = vector.extract_strided_slice %737 {offsets = [0, 32], sizes = [8, 32], strides = [1, 1]} : vector<8x128xf32> to vector<8x32xf32>
    %745 = arith.negf %744 : vector<8x32xf32>
    %746 = math.exp %745 : vector<8x32xf32>
    %cst_200 = arith.constant 1.000000e+00 : f32
    %747 = vector.broadcast %cst_200 : f32 to vector<8x32xf32>
    %748 = arith.addf %747, %746 : vector<8x32xf32>
    %749 = arith.divf %747, %748 : vector<8x32xf32>
    %750 = vector.extract_strided_slice %737 {offsets = [0, 64], sizes = [8, 32], strides = [1, 1]} : vector<8x128xf32> to vector<8x32xf32>
    %751 = math.tanh %750 : vector<8x32xf32>
    %752 = vector.extract_strided_slice %737 {offsets = [0, 96], sizes = [8, 32], strides = [1, 1]} : vector<8x128xf32> to vector<8x32xf32>
    %753 = arith.negf %752 : vector<8x32xf32>
    %754 = math.exp %753 : vector<8x32xf32>
    %cst_201 = arith.constant 1.000000e+00 : f32
    %755 = vector.broadcast %cst_201 : f32 to vector<8x32xf32>
    %756 = arith.addf %755, %754 : vector<8x32xf32>
    %757 = arith.divf %755, %756 : vector<8x32xf32>
    %758 = arith.mulf %749, %694 : vector<8x32xf32>
    %759 = arith.mulf %743, %751 : vector<8x32xf32>
    %760 = arith.addf %758, %759 : vector<8x32xf32>
    %761 = math.tanh %760 : vector<8x32xf32>
    %762 = arith.mulf %757, %761 : vector<8x32xf32>
    %c1120_202 = arith.constant 1120 : index
    %c0_203 = arith.constant 0 : index
    %763 = vector.load %arg2[%c1120_202, %c0_203] : memref<1344x256xbf16, #tpu.memory_space<vmem>>, vector<32x32xbf16>
    %764 = arith.truncf %762 : vector<8x32xf32> to vector<8x32xbf16>
    %cst_204 = arith.constant dense<0.000000e+00> : vector<8x32xf32>
    %765 = tpu.matmul %764, %763, %cst_204 {dimension_numbers = #tpu.dot_dimension_numbers<[1], [0], [0], [1], [0, 0, 1, 1], [], []>} : vector<8x32xbf16>, vector<32x32xbf16>, vector<8x32xf32> -> vector<8x32xf32>
    %c1152_205 = arith.constant 1152 : index
    %c0_206 = arith.constant 0 : index
    %766 = vector.load %arg2[%c1152_205, %c0_206] : memref<1344x256xbf16, #tpu.memory_space<vmem>>, vector<1x32xbf16>
    %767 = arith.extf %766 : vector<1x32xbf16> to vector<1x32xf32>
    %768 = vector.broadcast %767 : vector<1x32xf32> to vector<8x32xf32>
    %769 = arith.addf %765, %768 : vector<8x32xf32>
    %cst_207 = arith.constant 0.000000e+00 : f32
    %770 = vector.broadcast %cst_207 : f32 to vector<8x32xf32>
    %771 = arith.maximumf %769, %770 : vector<8x32xf32>
    %c1168_208 = arith.constant 1168 : index
    %c0_209 = arith.constant 0 : index
    %772 = vector.load %arg2[%c1168_208, %c0_209] : memref<1344x256xbf16, #tpu.memory_space<vmem>>, vector<32x16xbf16>
    %773 = arith.truncf %771 : vector<8x32xf32> to vector<8x32xbf16>
    %cst_210 = arith.constant dense<0.000000e+00> : vector<8x16xf32>
    %774 = tpu.matmul %773, %772, %cst_210 {dimension_numbers = #tpu.dot_dimension_numbers<[1], [0], [0], [1], [0, 0, 1, 1], [], []>} : vector<8x32xbf16>, vector<32x16xbf16>, vector<8x16xf32> -> vector<8x16xf32>
    %c1200_211 = arith.constant 1200 : index
    %c0_212 = arith.constant 0 : index
    %775 = vector.load %arg2[%c1200_211, %c0_212] : memref<1344x256xbf16, #tpu.memory_space<vmem>>, vector<1x16xbf16>
    %776 = arith.extf %775 : vector<1x16xbf16> to vector<1x16xf32>
    %777 = vector.broadcast %776 : vector<1x16xf32> to vector<8x16xf32>
    %778 = arith.addf %774, %777 : vector<8x16xf32>
    %c0_213 = arith.constant 0 : index
    %c52 = arith.constant 52 : index
    %779 = vector.load %arg3[%c0_213, %c52] : memref<8x256xf32, #tpu.memory_space<vmem>>, vector<8x16xf32>
    tpu.vector_store %arg3[%c0_213, %c52], %778 {strides = array<i32>} : memref<8x256xf32, #tpu.memory_space<vmem>>, vector<8x16xf32>,
    %cst_214 = arith.constant dense<0xFF800000> : vector<8xf32>
    %780 = vector.multi_reduction <maximumf>, %778, %cst_214 [1] : vector<8x16xf32> to vector<8xf32>
    %781 = vector.shape_cast %780 : vector<8xf32> to vector<8x1xf32>
    %782 = vector.broadcast %781 : vector<8x1xf32> to vector<8x16xf32>
    %783 = arith.cmpf oeq, %778, %782 : vector<8x16xf32>
    %784 = arith.extui %783 : vector<8x16xi1> to vector<8x16xi32>
    %785 = arith.sitofp %784 : vector<8x16xi32> to vector<8x16xf32>
    %c1216_215 = arith.constant 1216 : index
    %c0_216 = arith.constant 0 : index
    %786 = vector.load %arg2[%c1216_215, %c0_216] : memref<1344x256xbf16, #tpu.memory_space<vmem>>, vector<16x32xbf16>
    %787 = arith.truncf %785 : vector<8x16xf32> to vector<8x16xbf16>
    %cst_217 = arith.constant dense<0.000000e+00> : vector<8x32xf32>
    %788 = tpu.matmul %787, %786, %cst_217 {dimension_numbers = #tpu.dot_dimension_numbers<[1], [0], [0], [1], [0, 0, 1, 1], [], []>} : vector<8x16xbf16>, vector<16x32xbf16>, vector<8x32xf32> -> vector<8x32xf32>
    %c1232_218 = arith.constant 1232 : index
    %c0_219 = arith.constant 0 : index
    %789 = vector.load %arg2[%c1232_218, %c0_219] : memref<1344x256xbf16, #tpu.memory_space<vmem>>, vector<32x32xbf16>
    %790 = arith.truncf %788 : vector<8x32xf32> to vector<8x32xbf16>
    %cst_220 = arith.constant dense<0.000000e+00> : vector<8x32xf32>
    %791 = tpu.matmul %790, %789, %cst_220 {dimension_numbers = #tpu.dot_dimension_numbers<[1], [0], [0], [1], [0, 0, 1, 1], [], []>} : vector<8x32xbf16>, vector<32x32xbf16>, vector<8x32xf32> -> vector<8x32xf32>
    %792 = arith.addf %791, %660 : vector<8x32xf32>
    %c768_221 = arith.constant 768 : index
    %c0_222 = arith.constant 0 : index
    %793 = vector.load %arg2[%c768_221, %c0_222] : memref<1344x256xbf16, #tpu.memory_space<vmem>>, vector<32x128xbf16>
    %794 = arith.truncf %656 : vector<8x32xf32> to vector<8x32xbf16>
    %cst_223 = arith.constant dense<0.000000e+00> : vector<8x128xf32>
    %795 = tpu.matmul %794, %793, %cst_223 {dimension_numbers = #tpu.dot_dimension_numbers<[1], [0], [0], [1], [0, 0, 1, 1], [], []>} : vector<8x32xbf16>, vector<32x128xbf16>, vector<8x128xf32> -> vector<8x128xf32>
    %c800_224 = arith.constant 800 : index
    %c0_225 = arith.constant 0 : index
    %796 = vector.load %arg2[%c800_224, %c0_225] : memref<1344x256xbf16, #tpu.memory_space<vmem>>, vector<32x128xbf16>
    %797 = arith.truncf %626 : vector<8x32xf32> to vector<8x32xbf16>
    %cst_226 = arith.constant dense<0.000000e+00> : vector<8x128xf32>
    %798 = tpu.matmul %797, %796, %cst_226 {dimension_numbers = #tpu.dot_dimension_numbers<[1], [0], [0], [1], [0, 0, 1, 1], [], []>} : vector<8x32xbf16>, vector<32x128xbf16>, vector<8x128xf32> -> vector<8x128xf32>
    %799 = arith.addf %795, %798 : vector<8x128xf32>
    %c832_227 = arith.constant 832 : index
    %c0_228 = arith.constant 0 : index
    %800 = vector.load %arg2[%c832_227, %c0_228] : memref<1344x256xbf16, #tpu.memory_space<vmem>>, vector<1x128xbf16>
    %801 = arith.extf %800 : vector<1x128xbf16> to vector<1x128xf32>
    %802 = vector.broadcast %801 : vector<1x128xf32> to vector<8x128xf32>
    %803 = arith.addf %799, %802 : vector<8x128xf32>
    %804 = vector.extract_strided_slice %803 {offsets = [0, 0], sizes = [8, 32], strides = [1, 1]} : vector<8x128xf32> to vector<8x32xf32>
    %805 = arith.negf %804 : vector<8x32xf32>
    %806 = math.exp %805 : vector<8x32xf32>
    %cst_229 = arith.constant 1.000000e+00 : f32
    %807 = vector.broadcast %cst_229 : f32 to vector<8x32xf32>
    %808 = arith.addf %807, %806 : vector<8x32xf32>
    %809 = arith.divf %807, %808 : vector<8x32xf32>
    %810 = vector.extract_strided_slice %803 {offsets = [0, 32], sizes = [8, 32], strides = [1, 1]} : vector<8x128xf32> to vector<8x32xf32>
    %811 = arith.negf %810 : vector<8x32xf32>
    %812 = math.exp %811 : vector<8x32xf32>
    %cst_230 = arith.constant 1.000000e+00 : f32
    %813 = vector.broadcast %cst_230 : f32 to vector<8x32xf32>
    %814 = arith.addf %813, %812 : vector<8x32xf32>
    %815 = arith.divf %813, %814 : vector<8x32xf32>
    %816 = vector.extract_strided_slice %803 {offsets = [0, 64], sizes = [8, 32], strides = [1, 1]} : vector<8x128xf32> to vector<8x32xf32>
    %817 = math.tanh %816 : vector<8x32xf32>
    %818 = vector.extract_strided_slice %803 {offsets = [0, 96], sizes = [8, 32], strides = [1, 1]} : vector<8x128xf32> to vector<8x32xf32>
    %819 = arith.negf %818 : vector<8x32xf32>
    %820 = math.exp %819 : vector<8x32xf32>
    %cst_231 = arith.constant 1.000000e+00 : f32
    %821 = vector.broadcast %cst_231 : f32 to vector<8x32xf32>
    %822 = arith.addf %821, %820 : vector<8x32xf32>
    %823 = arith.divf %821, %822 : vector<8x32xf32>
    %824 = arith.mulf %815, %624 : vector<8x32xf32>
    %825 = arith.mulf %809, %817 : vector<8x32xf32>
    %826 = arith.addf %824, %825 : vector<8x32xf32>
    %827 = math.tanh %826 : vector<8x32xf32>
    %828 = arith.mulf %823, %827 : vector<8x32xf32>
    %c848_232 = arith.constant 848 : index
    %c0_233 = arith.constant 0 : index
    %829 = vector.load %arg2[%c848_232, %c0_233] : memref<1344x256xbf16, #tpu.memory_space<vmem>>, vector<32x32xbf16>
    %830 = arith.truncf %828 : vector<8x32xf32> to vector<8x32xbf16>
    %cst_234 = arith.constant dense<0.000000e+00> : vector<8x32xf32>
    %831 = tpu.matmul %830, %829, %cst_234 {dimension_numbers = #tpu.dot_dimension_numbers<[1], [0], [0], [1], [0, 0, 1, 1], [], []>} : vector<8x32xbf16>, vector<32x32xbf16>, vector<8x32xf32> -> vector<8x32xf32>
    %c880_235 = arith.constant 880 : index
    %c0_236 = arith.constant 0 : index
    %832 = vector.load %arg2[%c880_235, %c0_236] : memref<1344x256xbf16, #tpu.memory_space<vmem>>, vector<1x32xbf16>
    %833 = arith.extf %832 : vector<1x32xbf16> to vector<1x32xf32>
    %834 = vector.broadcast %833 : vector<1x32xf32> to vector<8x32xf32>
    %835 = arith.addf %831, %834 : vector<8x32xf32>
    %cst_237 = arith.constant 0.000000e+00 : f32
    %836 = vector.broadcast %cst_237 : f32 to vector<8x32xf32>
    %837 = arith.maximumf %835, %836 : vector<8x32xf32>
    %c896_238 = arith.constant 896 : index
    %c0_239 = arith.constant 0 : index
    %838 = vector.load %arg2[%c896_238, %c0_239] : memref<1344x256xbf16, #tpu.memory_space<vmem>>, vector<32x9xbf16>
    %839 = arith.truncf %837 : vector<8x32xf32> to vector<8x32xbf16>
    %cst_240 = arith.constant dense<0.000000e+00> : vector<8x9xf32>
    %840 = tpu.matmul %839, %838, %cst_240 {dimension_numbers = #tpu.dot_dimension_numbers<[1], [0], [0], [1], [0, 0, 1, 1], [], []>} : vector<8x32xbf16>, vector<32x9xbf16>, vector<8x9xf32> -> vector<8x9xf32>
    %c928_241 = arith.constant 928 : index
    %c0_242 = arith.constant 0 : index
    %841 = vector.load %arg2[%c928_241, %c0_242] : memref<1344x256xbf16, #tpu.memory_space<vmem>>, vector<1x9xbf16>
    %842 = arith.extf %841 : vector<1x9xbf16> to vector<1x9xf32>
    %843 = vector.broadcast %842 : vector<1x9xf32> to vector<8x9xf32>
    %844 = arith.addf %840, %843 : vector<8x9xf32>
    %c0_243 = arith.constant 0 : index
    %c9 = arith.constant 9 : index
    %845 = vector.load %arg3[%c0_243, %c9] : memref<8x256xf32, #tpu.memory_space<vmem>>, vector<8x9xf32>
    tpu.vector_store %arg3[%c0_243, %c9], %844 {strides = array<i32>} : memref<8x256xf32, #tpu.memory_space<vmem>>, vector<8x9xf32>,
    %cst_244 = arith.constant dense<0xFF800000> : vector<8xf32>
    %846 = vector.multi_reduction <maximumf>, %844, %cst_244 [1] : vector<8x9xf32> to vector<8xf32>
    %847 = vector.shape_cast %846 : vector<8xf32> to vector<8x1xf32>
    %848 = vector.broadcast %847 : vector<8x1xf32> to vector<8x9xf32>
    %849 = arith.cmpf oeq, %844, %848 : vector<8x9xf32>
    %850 = arith.extui %849 : vector<8x9xi1> to vector<8x9xi32>
    %851 = arith.sitofp %850 : vector<8x9xi32> to vector<8x9xf32>
    %c944_245 = arith.constant 944 : index
    %c0_246 = arith.constant 0 : index
    %852 = vector.load %arg2[%c944_245, %c0_246] : memref<1344x256xbf16, #tpu.memory_space<vmem>>, vector<9x32xbf16>
    %853 = arith.truncf %851 : vector<8x9xf32> to vector<8x9xbf16>
    %cst_247 = arith.constant dense<0.000000e+00> : vector<8x32xf32>
    %854 = tpu.matmul %853, %852, %cst_247 {dimension_numbers = #tpu.dot_dimension_numbers<[1], [0], [0], [1], [0, 0, 1, 1], [], []>} : vector<8x9xbf16>, vector<9x32xbf16>, vector<8x32xf32> -> vector<8x32xf32>
    %c960_248 = arith.constant 960 : index
    %c0_249 = arith.constant 0 : index
    %855 = vector.load %arg2[%c960_248, %c0_249] : memref<1344x256xbf16, #tpu.memory_space<vmem>>, vector<32x32xbf16>
    %856 = arith.truncf %854 : vector<8x32xf32> to vector<8x32xbf16>
    %cst_250 = arith.constant dense<0.000000e+00> : vector<8x32xf32>
    %857 = tpu.matmul %856, %855, %cst_250 {dimension_numbers = #tpu.dot_dimension_numbers<[1], [0], [0], [1], [0, 0, 1, 1], [], []>} : vector<8x32xbf16>, vector<32x32xbf16>, vector<8x32xf32> -> vector<8x32xf32>
    %858 = arith.addf %857, %583 : vector<8x32xf32>
    %c1264_251 = arith.constant 1264 : index
    %c0_252 = arith.constant 0 : index
    %859 = vector.load %arg2[%c1264_251, %c0_252] : memref<1344x256xbf16, #tpu.memory_space<vmem>>, vector<32x32xbf16>
    %860 = arith.truncf %858 : vector<8x32xf32> to vector<8x32xbf16>
    %cst_253 = arith.constant dense<0.000000e+00> : vector<8x32xf32>
    %861 = tpu.matmul %860, %859, %cst_253 {dimension_numbers = #tpu.dot_dimension_numbers<[1], [0], [0], [1], [0, 0, 1, 1], [], []>} : vector<8x32xbf16>, vector<32x32xbf16>, vector<8x32xf32> -> vector<8x32xf32>
    %862 = arith.addf %861, %590 : vector<8x32xf32>
    %c1040_254 = arith.constant 1040 : index
    %c0_255 = arith.constant 0 : index
    %863 = vector.load %arg2[%c1040_254, %c0_255] : memref<1344x256xbf16, #tpu.memory_space<vmem>>, vector<32x128xbf16>
    %864 = arith.truncf %792 : vector<8x32xf32> to vector<8x32xbf16>
    %cst_256 = arith.constant dense<0.000000e+00> : vector<8x128xf32>
    %865 = tpu.matmul %864, %863, %cst_256 {dimension_numbers = #tpu.dot_dimension_numbers<[1], [0], [0], [1], [0, 0, 1, 1], [], []>} : vector<8x32xbf16>, vector<32x128xbf16>, vector<8x128xf32> -> vector<8x128xf32>
    %c1072_257 = arith.constant 1072 : index
    %c0_258 = arith.constant 0 : index
    %866 = vector.load %arg2[%c1072_257, %c0_258] : memref<1344x256xbf16, #tpu.memory_space<vmem>>, vector<32x128xbf16>
    %867 = arith.truncf %762 : vector<8x32xf32> to vector<8x32xbf16>
    %cst_259 = arith.constant dense<0.000000e+00> : vector<8x128xf32>
    %868 = tpu.matmul %867, %866, %cst_259 {dimension_numbers = #tpu.dot_dimension_numbers<[1], [0], [0], [1], [0, 0, 1, 1], [], []>} : vector<8x32xbf16>, vector<32x128xbf16>, vector<8x128xf32> -> vector<8x128xf32>
    %869 = arith.addf %865, %868 : vector<8x128xf32>
    %c1104_260 = arith.constant 1104 : index
    %c0_261 = arith.constant 0 : index
    %870 = vector.load %arg2[%c1104_260, %c0_261] : memref<1344x256xbf16, #tpu.memory_space<vmem>>, vector<1x128xbf16>
    %871 = arith.extf %870 : vector<1x128xbf16> to vector<1x128xf32>
    %872 = vector.broadcast %871 : vector<1x128xf32> to vector<8x128xf32>
    %873 = arith.addf %869, %872 : vector<8x128xf32>
    %874 = vector.extract_strided_slice %873 {offsets = [0, 0], sizes = [8, 32], strides = [1, 1]} : vector<8x128xf32> to vector<8x32xf32>
    %875 = arith.negf %874 : vector<8x32xf32>
    %876 = math.exp %875 : vector<8x32xf32>
    %cst_262 = arith.constant 1.000000e+00 : f32
    %877 = vector.broadcast %cst_262 : f32 to vector<8x32xf32>
    %878 = arith.addf %877, %876 : vector<8x32xf32>
    %879 = arith.divf %877, %878 : vector<8x32xf32>
    %880 = vector.extract_strided_slice %873 {offsets = [0, 32], sizes = [8, 32], strides = [1, 1]} : vector<8x128xf32> to vector<8x32xf32>
    %881 = arith.negf %880 : vector<8x32xf32>
    %882 = math.exp %881 : vector<8x32xf32>
    %cst_263 = arith.constant 1.000000e+00 : f32
    %883 = vector.broadcast %cst_263 : f32 to vector<8x32xf32>
    %884 = arith.addf %883, %882 : vector<8x32xf32>
    %885 = arith.divf %883, %884 : vector<8x32xf32>
    %886 = vector.extract_strided_slice %873 {offsets = [0, 64], sizes = [8, 32], strides = [1, 1]} : vector<8x128xf32> to vector<8x32xf32>
    %887 = math.tanh %886 : vector<8x32xf32>
    %888 = vector.extract_strided_slice %873 {offsets = [0, 96], sizes = [8, 32], strides = [1, 1]} : vector<8x128xf32> to vector<8x32xf32>
    %889 = arith.negf %888 : vector<8x32xf32>
    %890 = math.exp %889 : vector<8x32xf32>
    %cst_264 = arith.constant 1.000000e+00 : f32
    %891 = vector.broadcast %cst_264 : f32 to vector<8x32xf32>
    %892 = arith.addf %891, %890 : vector<8x32xf32>
    %893 = arith.divf %891, %892 : vector<8x32xf32>
    %894 = arith.mulf %885, %760 : vector<8x32xf32>
    %895 = arith.mulf %879, %887 : vector<8x32xf32>
    %896 = arith.addf %894, %895 : vector<8x32xf32>
    %897 = math.tanh %896 : vector<8x32xf32>
    %898 = arith.mulf %893, %897 : vector<8x32xf32>
    %c1120_265 = arith.constant 1120 : index
    %c0_266 = arith.constant 0 : index
    %899 = vector.load %arg2[%c1120_265, %c0_266] : memref<1344x256xbf16, #tpu.memory_space<vmem>>, vector<32x32xbf16>
    %900 = arith.truncf %898 : vector<8x32xf32> to vector<8x32xbf16>
    %cst_267 = arith.constant dense<0.000000e+00> : vector<8x32xf32>
    %901 = tpu.matmul %900, %899, %cst_267 {dimension_numbers = #tpu.dot_dimension_numbers<[1], [0], [0], [1], [0, 0, 1, 1], [], []>} : vector<8x32xbf16>, vector<32x32xbf16>, vector<8x32xf32> -> vector<8x32xf32>
    %c1152_268 = arith.constant 1152 : index
    %c0_269 = arith.constant 0 : index
    %902 = vector.load %arg2[%c1152_268, %c0_269] : memref<1344x256xbf16, #tpu.memory_space<vmem>>, vector<1x32xbf16>
    %903 = arith.extf %902 : vector<1x32xbf16> to vector<1x32xf32>
    %904 = vector.broadcast %903 : vector<1x32xf32> to vector<8x32xf32>
    %905 = arith.addf %901, %904 : vector<8x32xf32>
    %cst_270 = arith.constant 0.000000e+00 : f32
    %906 = vector.broadcast %cst_270 : f32 to vector<8x32xf32>
    %907 = arith.maximumf %905, %906 : vector<8x32xf32>
    %c1168_271 = arith.constant 1168 : index
    %c0_272 = arith.constant 0 : index
    %908 = vector.load %arg2[%c1168_271, %c0_272] : memref<1344x256xbf16, #tpu.memory_space<vmem>>, vector<32x16xbf16>
    %909 = arith.truncf %907 : vector<8x32xf32> to vector<8x32xbf16>
    %cst_273 = arith.constant dense<0.000000e+00> : vector<8x16xf32>
    %910 = tpu.matmul %909, %908, %cst_273 {dimension_numbers = #tpu.dot_dimension_numbers<[1], [0], [0], [1], [0, 0, 1, 1], [], []>} : vector<8x32xbf16>, vector<32x16xbf16>, vector<8x16xf32> -> vector<8x16xf32>
    %c1200_274 = arith.constant 1200 : index
    %c0_275 = arith.constant 0 : index
    %911 = vector.load %arg2[%c1200_274, %c0_275] : memref<1344x256xbf16, #tpu.memory_space<vmem>>, vector<1x16xbf16>
    %912 = arith.extf %911 : vector<1x16xbf16> to vector<1x16xf32>
    %913 = vector.broadcast %912 : vector<1x16xf32> to vector<8x16xf32>
    %914 = arith.addf %910, %913 : vector<8x16xf32>
    %c0_276 = arith.constant 0 : index
    %c68 = arith.constant 68 : index
    %915 = vector.load %arg3[%c0_276, %c68] : memref<8x256xf32, #tpu.memory_space<vmem>>, vector<8x16xf32>
    tpu.vector_store %arg3[%c0_276, %c68], %914 {strides = array<i32>} : memref<8x256xf32, #tpu.memory_space<vmem>>, vector<8x16xf32>,
    %cst_277 = arith.constant dense<0xFF800000> : vector<8xf32>
    %916 = vector.multi_reduction <maximumf>, %914, %cst_277 [1] : vector<8x16xf32> to vector<8xf32>
    %917 = vector.shape_cast %916 : vector<8xf32> to vector<8x1xf32>
    %918 = vector.broadcast %917 : vector<8x1xf32> to vector<8x16xf32>
    %919 = arith.cmpf oeq, %914, %918 : vector<8x16xf32>
    %920 = arith.extui %919 : vector<8x16xi1> to vector<8x16xi32>
    %921 = arith.sitofp %920 : vector<8x16xi32> to vector<8x16xf32>
    %c1216_278 = arith.constant 1216 : index
    %c0_279 = arith.constant 0 : index
    %922 = vector.load %arg2[%c1216_278, %c0_279] : memref<1344x256xbf16, #tpu.memory_space<vmem>>, vector<16x32xbf16>
    %923 = arith.truncf %921 : vector<8x16xf32> to vector<8x16xbf16>
    %cst_280 = arith.constant dense<0.000000e+00> : vector<8x32xf32>
    %924 = tpu.matmul %923, %922, %cst_280 {dimension_numbers = #tpu.dot_dimension_numbers<[1], [0], [0], [1], [0, 0, 1, 1], [], []>} : vector<8x16xbf16>, vector<16x32xbf16>, vector<8x32xf32> -> vector<8x32xf32>
    %c1232_281 = arith.constant 1232 : index
    %c0_282 = arith.constant 0 : index
    %925 = vector.load %arg2[%c1232_281, %c0_282] : memref<1344x256xbf16, #tpu.memory_space<vmem>>, vector<32x32xbf16>
    %926 = arith.truncf %924 : vector<8x32xf32> to vector<8x32xbf16>
    %cst_283 = arith.constant dense<0.000000e+00> : vector<8x32xf32>
    %927 = tpu.matmul %926, %925, %cst_283 {dimension_numbers = #tpu.dot_dimension_numbers<[1], [0], [0], [1], [0, 0, 1, 1], [], []>} : vector<8x32xbf16>, vector<32x32xbf16>, vector<8x32xf32> -> vector<8x32xf32>
    %928 = arith.addf %927, %862 : vector<8x32xf32>
    %c1040_284 = arith.constant 1040 : index
    %c0_285 = arith.constant 0 : index
    %929 = vector.load %arg2[%c1040_284, %c0_285] : memref<1344x256xbf16, #tpu.memory_space<vmem>>, vector<32x128xbf16>
    %930 = arith.truncf %928 : vector<8x32xf32> to vector<8x32xbf16>
    %cst_286 = arith.constant dense<0.000000e+00> : vector<8x128xf32>
    %931 = tpu.matmul %930, %929, %cst_286 {dimension_numbers = #tpu.dot_dimension_numbers<[1], [0], [0], [1], [0, 0, 1, 1], [], []>} : vector<8x32xbf16>, vector<32x128xbf16>, vector<8x128xf32> -> vector<8x128xf32>
    %c1072_287 = arith.constant 1072 : index
    %c0_288 = arith.constant 0 : index
    %932 = vector.load %arg2[%c1072_287, %c0_288] : memref<1344x256xbf16, #tpu.memory_space<vmem>>, vector<32x128xbf16>
    %933 = arith.truncf %898 : vector<8x32xf32> to vector<8x32xbf16>
    %cst_289 = arith.constant dense<0.000000e+00> : vector<8x128xf32>
    %934 = tpu.matmul %933, %932, %cst_289 {dimension_numbers = #tpu.dot_dimension_numbers<[1], [0], [0], [1], [0, 0, 1, 1], [], []>} : vector<8x32xbf16>, vector<32x128xbf16>, vector<8x128xf32> -> vector<8x128xf32>
    %935 = arith.addf %931, %934 : vector<8x128xf32>
    %c1104_290 = arith.constant 1104 : index
    %c0_291 = arith.constant 0 : index
    %936 = vector.load %arg2[%c1104_290, %c0_291] : memref<1344x256xbf16, #tpu.memory_space<vmem>>, vector<1x128xbf16>
    %937 = arith.extf %936 : vector<1x128xbf16> to vector<1x128xf32>
    %938 = vector.broadcast %937 : vector<1x128xf32> to vector<8x128xf32>
    %939 = arith.addf %935, %938 : vector<8x128xf32>
    %940 = vector.extract_strided_slice %939 {offsets = [0, 0], sizes = [8, 32], strides = [1, 1]} : vector<8x128xf32> to vector<8x32xf32>
    %941 = arith.negf %940 : vector<8x32xf32>
    %942 = math.exp %941 : vector<8x32xf32>
    %cst_292 = arith.constant 1.000000e+00 : f32
    %943 = vector.broadcast %cst_292 : f32 to vector<8x32xf32>
    %944 = arith.addf %943, %942 : vector<8x32xf32>
    %945 = arith.divf %943, %944 : vector<8x32xf32>
    %946 = vector.extract_strided_slice %939 {offsets = [0, 32], sizes = [8, 32], strides = [1, 1]} : vector<8x128xf32> to vector<8x32xf32>
    %947 = arith.negf %946 : vector<8x32xf32>
    %948 = math.exp %947 : vector<8x32xf32>
    %cst_293 = arith.constant 1.000000e+00 : f32
    %949 = vector.broadcast %cst_293 : f32 to vector<8x32xf32>
    %950 = arith.addf %949, %948 : vector<8x32xf32>
    %951 = arith.divf %949, %950 : vector<8x32xf32>
    %952 = vector.extract_strided_slice %939 {offsets = [0, 64], sizes = [8, 32], strides = [1, 1]} : vector<8x128xf32> to vector<8x32xf32>
    %953 = math.tanh %952 : vector<8x32xf32>
    %954 = vector.extract_strided_slice %939 {offsets = [0, 96], sizes = [8, 32], strides = [1, 1]} : vector<8x128xf32> to vector<8x32xf32>
    %955 = arith.negf %954 : vector<8x32xf32>
    %956 = math.exp %955 : vector<8x32xf32>
    %cst_294 = arith.constant 1.000000e+00 : f32
    %957 = vector.broadcast %cst_294 : f32 to vector<8x32xf32>
    %958 = arith.addf %957, %956 : vector<8x32xf32>
    %959 = arith.divf %957, %958 : vector<8x32xf32>
    %960 = arith.mulf %951, %896 : vector<8x32xf32>
    %961 = arith.mulf %945, %953 : vector<8x32xf32>
    %962 = arith.addf %960, %961 : vector<8x32xf32>
    %963 = math.tanh %962 : vector<8x32xf32>
    %964 = arith.mulf %959, %963 : vector<8x32xf32>
    %c1120_295 = arith.constant 1120 : index
    %c0_296 = arith.constant 0 : index
    %965 = vector.load %arg2[%c1120_295, %c0_296] : memref<1344x256xbf16, #tpu.memory_space<vmem>>, vector<32x32xbf16>
    %966 = arith.truncf %964 : vector<8x32xf32> to vector<8x32xbf16>
    %cst_297 = arith.constant dense<0.000000e+00> : vector<8x32xf32>
    %967 = tpu.matmul %966, %965, %cst_297 {dimension_numbers = #tpu.dot_dimension_numbers<[1], [0], [0], [1], [0, 0, 1, 1], [], []>} : vector<8x32xbf16>, vector<32x32xbf16>, vector<8x32xf32> -> vector<8x32xf32>
    %c1152_298 = arith.constant 1152 : index
    %c0_299 = arith.constant 0 : index
    %968 = vector.load %arg2[%c1152_298, %c0_299] : memref<1344x256xbf16, #tpu.memory_space<vmem>>, vector<1x32xbf16>
    %969 = arith.extf %968 : vector<1x32xbf16> to vector<1x32xf32>
    %970 = vector.broadcast %969 : vector<1x32xf32> to vector<8x32xf32>
    %971 = arith.addf %967, %970 : vector<8x32xf32>
    %cst_300 = arith.constant 0.000000e+00 : f32
    %972 = vector.broadcast %cst_300 : f32 to vector<8x32xf32>
    %973 = arith.maximumf %971, %972 : vector<8x32xf32>
    %c1168_301 = arith.constant 1168 : index
    %c0_302 = arith.constant 0 : index
    %974 = vector.load %arg2[%c1168_301, %c0_302] : memref<1344x256xbf16, #tpu.memory_space<vmem>>, vector<32x16xbf16>
    %975 = arith.truncf %973 : vector<8x32xf32> to vector<8x32xbf16>
    %cst_303 = arith.constant dense<0.000000e+00> : vector<8x16xf32>
    %976 = tpu.matmul %975, %974, %cst_303 {dimension_numbers = #tpu.dot_dimension_numbers<[1], [0], [0], [1], [0, 0, 1, 1], [], []>} : vector<8x32xbf16>, vector<32x16xbf16>, vector<8x16xf32> -> vector<8x16xf32>
    %c1200_304 = arith.constant 1200 : index
    %c0_305 = arith.constant 0 : index
    %977 = vector.load %arg2[%c1200_304, %c0_305] : memref<1344x256xbf16, #tpu.memory_space<vmem>>, vector<1x16xbf16>
    %978 = arith.extf %977 : vector<1x16xbf16> to vector<1x16xf32>
    %979 = vector.broadcast %978 : vector<1x16xf32> to vector<8x16xf32>
    %980 = arith.addf %976, %979 : vector<8x16xf32>
    %c0_306 = arith.constant 0 : index
    %c84 = arith.constant 84 : index
    %981 = vector.load %arg3[%c0_306, %c84] : memref<8x256xf32, #tpu.memory_space<vmem>>, vector<8x16xf32>
    tpu.vector_store %arg3[%c0_306, %c84], %980 {strides = array<i32>} : memref<8x256xf32, #tpu.memory_space<vmem>>, vector<8x16xf32>,
    %cst_307 = arith.constant dense<0xFF800000> : vector<8xf32>
    %982 = vector.multi_reduction <maximumf>, %980, %cst_307 [1] : vector<8x16xf32> to vector<8xf32>
    %983 = vector.shape_cast %982 : vector<8xf32> to vector<8x1xf32>
    %984 = vector.broadcast %983 : vector<8x1xf32> to vector<8x16xf32>
    %985 = arith.cmpf oeq, %980, %984 : vector<8x16xf32>
    %986 = arith.extui %985 : vector<8x16xi1> to vector<8x16xi32>
    %987 = arith.sitofp %986 : vector<8x16xi32> to vector<8x16xf32>
    %c1216_308 = arith.constant 1216 : index
    %c0_309 = arith.constant 0 : index
    %988 = vector.load %arg2[%c1216_308, %c0_309] : memref<1344x256xbf16, #tpu.memory_space<vmem>>, vector<16x32xbf16>
    %989 = arith.truncf %987 : vector<8x16xf32> to vector<8x16xbf16>
    %cst_310 = arith.constant dense<0.000000e+00> : vector<8x32xf32>
    %990 = tpu.matmul %989, %988, %cst_310 {dimension_numbers = #tpu.dot_dimension_numbers<[1], [0], [0], [1], [0, 0, 1, 1], [], []>} : vector<8x16xbf16>, vector<16x32xbf16>, vector<8x32xf32> -> vector<8x32xf32>
    %c1232_311 = arith.constant 1232 : index
    %c0_312 = arith.constant 0 : index
    %991 = vector.load %arg2[%c1232_311, %c0_312] : memref<1344x256xbf16, #tpu.memory_space<vmem>>, vector<32x32xbf16>
    %992 = arith.truncf %990 : vector<8x32xf32> to vector<8x32xbf16>
    %cst_313 = arith.constant dense<0.000000e+00> : vector<8x32xf32>
    %993 = tpu.matmul %992, %991, %cst_313 {dimension_numbers = #tpu.dot_dimension_numbers<[1], [0], [0], [1], [0, 0, 1, 1], [], []>} : vector<8x32xbf16>, vector<32x32xbf16>, vector<8x32xf32> -> vector<8x32xf32>
    %994 = arith.addf %993, %862 : vector<8x32xf32>
    %c768_314 = arith.constant 768 : index
    %c0_315 = arith.constant 0 : index
    %995 = vector.load %arg2[%c768_314, %c0_315] : memref<1344x256xbf16, #tpu.memory_space<vmem>>, vector<32x128xbf16>
    %996 = arith.truncf %858 : vector<8x32xf32> to vector<8x32xbf16>
    %cst_316 = arith.constant dense<0.000000e+00> : vector<8x128xf32>
    %997 = tpu.matmul %996, %995, %cst_316 {dimension_numbers = #tpu.dot_dimension_numbers<[1], [0], [0], [1], [0, 0, 1, 1], [], []>} : vector<8x32xbf16>, vector<32x128xbf16>, vector<8x128xf32> -> vector<8x128xf32>
    %c800_317 = arith.constant 800 : index
    %c0_318 = arith.constant 0 : index
    %998 = vector.load %arg2[%c800_317, %c0_318] : memref<1344x256xbf16, #tpu.memory_space<vmem>>, vector<32x128xbf16>
    %999 = arith.truncf %828 : vector<8x32xf32> to vector<8x32xbf16>
    %cst_319 = arith.constant dense<0.000000e+00> : vector<8x128xf32>
    %1000 = tpu.matmul %999, %998, %cst_319 {dimension_numbers = #tpu.dot_dimension_numbers<[1], [0], [0], [1], [0, 0, 1, 1], [], []>} : vector<8x32xbf16>, vector<32x128xbf16>, vector<8x128xf32> -> vector<8x128xf32>
    %1001 = arith.addf %997, %1000 : vector<8x128xf32>
    %c832_320 = arith.constant 832 : index
    %c0_321 = arith.constant 0 : index
    %1002 = vector.load %arg2[%c832_320, %c0_321] : memref<1344x256xbf16, #tpu.memory_space<vmem>>, vector<1x128xbf16>
    %1003 = arith.extf %1002 : vector<1x128xbf16> to vector<1x128xf32>
    %1004 = vector.broadcast %1003 : vector<1x128xf32> to vector<8x128xf32>
    %1005 = arith.addf %1001, %1004 : vector<8x128xf32>
    %1006 = vector.extract_strided_slice %1005 {offsets = [0, 0], sizes = [8, 32], strides = [1, 1]} : vector<8x128xf32> to vector<8x32xf32>
    %1007 = arith.negf %1006 : vector<8x32xf32>
    %1008 = math.exp %1007 : vector<8x32xf32>
    %cst_322 = arith.constant 1.000000e+00 : f32
    %1009 = vector.broadcast %cst_322 : f32 to vector<8x32xf32>
    %1010 = arith.addf %1009, %1008 : vector<8x32xf32>
    %1011 = arith.divf %1009, %1010 : vector<8x32xf32>
    %1012 = vector.extract_strided_slice %1005 {offsets = [0, 32], sizes = [8, 32], strides = [1, 1]} : vector<8x128xf32> to vector<8x32xf32>
    %1013 = arith.negf %1012 : vector<8x32xf32>
    %1014 = math.exp %1013 : vector<8x32xf32>
    %cst_323 = arith.constant 1.000000e+00 : f32
    %1015 = vector.broadcast %cst_323 : f32 to vector<8x32xf32>
    %1016 = arith.addf %1015, %1014 : vector<8x32xf32>
    %1017 = arith.divf %1015, %1016 : vector<8x32xf32>
    %1018 = vector.extract_strided_slice %1005 {offsets = [0, 64], sizes = [8, 32], strides = [1, 1]} : vector<8x128xf32> to vector<8x32xf32>
    %1019 = math.tanh %1018 : vector<8x32xf32>
    %1020 = vector.extract_strided_slice %1005 {offsets = [0, 96], sizes = [8, 32], strides = [1, 1]} : vector<8x128xf32> to vector<8x32xf32>
    %1021 = arith.negf %1020 : vector<8x32xf32>
    %1022 = math.exp %1021 : vector<8x32xf32>
    %cst_324 = arith.constant 1.000000e+00 : f32
    %1023 = vector.broadcast %cst_324 : f32 to vector<8x32xf32>
    %1024 = arith.addf %1023, %1022 : vector<8x32xf32>
    %1025 = arith.divf %1023, %1024 : vector<8x32xf32>
    %1026 = arith.mulf %1017, %826 : vector<8x32xf32>
    %1027 = arith.mulf %1011, %1019 : vector<8x32xf32>
    %1028 = arith.addf %1026, %1027 : vector<8x32xf32>
    %1029 = math.tanh %1028 : vector<8x32xf32>
    %1030 = arith.mulf %1025, %1029 : vector<8x32xf32>
    %c848_325 = arith.constant 848 : index
    %c0_326 = arith.constant 0 : index
    %1031 = vector.load %arg2[%c848_325, %c0_326] : memref<1344x256xbf16, #tpu.memory_space<vmem>>, vector<32x32xbf16>
    %1032 = arith.truncf %1030 : vector<8x32xf32> to vector<8x32xbf16>
    %cst_327 = arith.constant dense<0.000000e+00> : vector<8x32xf32>
    %1033 = tpu.matmul %1032, %1031, %cst_327 {dimension_numbers = #tpu.dot_dimension_numbers<[1], [0], [0], [1], [0, 0, 1, 1], [], []>} : vector<8x32xbf16>, vector<32x32xbf16>, vector<8x32xf32> -> vector<8x32xf32>
    %c880_328 = arith.constant 880 : index
    %c0_329 = arith.constant 0 : index
    %1034 = vector.load %arg2[%c880_328, %c0_329] : memref<1344x256xbf16, #tpu.memory_space<vmem>>, vector<1x32xbf16>
    %1035 = arith.extf %1034 : vector<1x32xbf16> to vector<1x32xf32>
    %1036 = vector.broadcast %1035 : vector<1x32xf32> to vector<8x32xf32>
    %1037 = arith.addf %1033, %1036 : vector<8x32xf32>
    %cst_330 = arith.constant 0.000000e+00 : f32
    %1038 = vector.broadcast %cst_330 : f32 to vector<8x32xf32>
    %1039 = arith.maximumf %1037, %1038 : vector<8x32xf32>
    %c896_331 = arith.constant 896 : index
    %c0_332 = arith.constant 0 : index
    %1040 = vector.load %arg2[%c896_331, %c0_332] : memref<1344x256xbf16, #tpu.memory_space<vmem>>, vector<32x9xbf16>
    %1041 = arith.truncf %1039 : vector<8x32xf32> to vector<8x32xbf16>
    %cst_333 = arith.constant dense<0.000000e+00> : vector<8x9xf32>
    %1042 = tpu.matmul %1041, %1040, %cst_333 {dimension_numbers = #tpu.dot_dimension_numbers<[1], [0], [0], [1], [0, 0, 1, 1], [], []>} : vector<8x32xbf16>, vector<32x9xbf16>, vector<8x9xf32> -> vector<8x9xf32>
    %c928_334 = arith.constant 928 : index
    %c0_335 = arith.constant 0 : index
    %1043 = vector.load %arg2[%c928_334, %c0_335] : memref<1344x256xbf16, #tpu.memory_space<vmem>>, vector<1x9xbf16>
    %1044 = arith.extf %1043 : vector<1x9xbf16> to vector<1x9xf32>
    %1045 = vector.broadcast %1044 : vector<1x9xf32> to vector<8x9xf32>
    %1046 = arith.addf %1042, %1045 : vector<8x9xf32>
    %c0_336 = arith.constant 0 : index
    %c18 = arith.constant 18 : index
    %1047 = vector.load %arg3[%c0_336, %c18] : memref<8x256xf32, #tpu.memory_space<vmem>>, vector<8x9xf32>
    tpu.vector_store %arg3[%c0_336, %c18], %1046 {strides = array<i32>} : memref<8x256xf32, #tpu.memory_space<vmem>>, vector<8x9xf32>,
    %cst_337 = arith.constant dense<0xFF800000> : vector<8xf32>
    %1048 = vector.multi_reduction <maximumf>, %1046, %cst_337 [1] : vector<8x9xf32> to vector<8xf32>
    %1049 = vector.shape_cast %1048 : vector<8xf32> to vector<8x1xf32>
    %1050 = vector.broadcast %1049 : vector<8x1xf32> to vector<8x9xf32>
    %1051 = arith.cmpf oeq, %1046, %1050 : vector<8x9xf32>
    %1052 = arith.extui %1051 : vector<8x9xi1> to vector<8x9xi32>
    %1053 = arith.sitofp %1052 : vector<8x9xi32> to vector<8x9xf32>
    %c944_338 = arith.constant 944 : index
    %c0_339 = arith.constant 0 : index
    %1054 = vector.load %arg2[%c944_338, %c0_339] : memref<1344x256xbf16, #tpu.memory_space<vmem>>, vector<9x32xbf16>
    %1055 = arith.truncf %1053 : vector<8x9xf32> to vector<8x9xbf16>
    %cst_340 = arith.constant dense<0.000000e+00> : vector<8x32xf32>
    %1056 = tpu.matmul %1055, %1054, %cst_340 {dimension_numbers = #tpu.dot_dimension_numbers<[1], [0], [0], [1], [0, 0, 1, 1], [], []>} : vector<8x9xbf16>, vector<9x32xbf16>, vector<8x32xf32> -> vector<8x32xf32>
    %c960_341 = arith.constant 960 : index
    %c0_342 = arith.constant 0 : index
    %1057 = vector.load %arg2[%c960_341, %c0_342] : memref<1344x256xbf16, #tpu.memory_space<vmem>>, vector<32x32xbf16>
    %1058 = arith.truncf %1056 : vector<8x32xf32> to vector<8x32xbf16>
    %cst_343 = arith.constant dense<0.000000e+00> : vector<8x32xf32>
    %1059 = tpu.matmul %1058, %1057, %cst_343 {dimension_numbers = #tpu.dot_dimension_numbers<[1], [0], [0], [1], [0, 0, 1, 1], [], []>} : vector<8x32xbf16>, vector<32x32xbf16>, vector<8x32xf32> -> vector<8x32xf32>
    %1060 = arith.addf %1059, %583 : vector<8x32xf32>
    %c1264_344 = arith.constant 1264 : index
    %c0_345 = arith.constant 0 : index
    %1061 = vector.load %arg2[%c1264_344, %c0_345] : memref<1344x256xbf16, #tpu.memory_space<vmem>>, vector<32x32xbf16>
    %1062 = arith.truncf %1060 : vector<8x32xf32> to vector<8x32xbf16>
    %cst_346 = arith.constant dense<0.000000e+00> : vector<8x32xf32>
    %1063 = tpu.matmul %1062, %1061, %cst_346 {dimension_numbers = #tpu.dot_dimension_numbers<[1], [0], [0], [1], [0, 0, 1, 1], [], []>} : vector<8x32xbf16>, vector<32x32xbf16>, vector<8x32xf32> -> vector<8x32xf32>
    %1064 = arith.addf %1063, %590 : vector<8x32xf32>
    %c1040_347 = arith.constant 1040 : index
    %c0_348 = arith.constant 0 : index
    %1065 = vector.load %arg2[%c1040_347, %c0_348] : memref<1344x256xbf16, #tpu.memory_space<vmem>>, vector<32x128xbf16>
    %1066 = arith.truncf %994 : vector<8x32xf32> to vector<8x32xbf16>
    %cst_349 = arith.constant dense<0.000000e+00> : vector<8x128xf32>
    %1067 = tpu.matmul %1066, %1065, %cst_349 {dimension_numbers = #tpu.dot_dimension_numbers<[1], [0], [0], [1], [0, 0, 1, 1], [], []>} : vector<8x32xbf16>, vector<32x128xbf16>, vector<8x128xf32> -> vector<8x128xf32>
    %c1072_350 = arith.constant 1072 : index
    %c0_351 = arith.constant 0 : index
    %1068 = vector.load %arg2[%c1072_350, %c0_351] : memref<1344x256xbf16, #tpu.memory_space<vmem>>, vector<32x128xbf16>
    %1069 = arith.truncf %964 : vector<8x32xf32> to vector<8x32xbf16>
    %cst_352 = arith.constant dense<0.000000e+00> : vector<8x128xf32>
    %1070 = tpu.matmul %1069, %1068, %cst_352 {dimension_numbers = #tpu.dot_dimension_numbers<[1], [0], [0], [1], [0, 0, 1, 1], [], []>} : vector<8x32xbf16>, vector<32x128xbf16>, vector<8x128xf32> -> vector<8x128xf32>
    %1071 = arith.addf %1067, %1070 : vector<8x128xf32>
    %c1104_353 = arith.constant 1104 : index
    %c0_354 = arith.constant 0 : index
    %1072 = vector.load %arg2[%c1104_353, %c0_354] : memref<1344x256xbf16, #tpu.memory_space<vmem>>, vector<1x128xbf16>
    %1073 = arith.extf %1072 : vector<1x128xbf16> to vector<1x128xf32>
    %1074 = vector.broadcast %1073 : vector<1x128xf32> to vector<8x128xf32>
    %1075 = arith.addf %1071, %1074 : vector<8x128xf32>
    %1076 = vector.extract_strided_slice %1075 {offsets = [0, 0], sizes = [8, 32], strides = [1, 1]} : vector<8x128xf32> to vector<8x32xf32>
    %1077 = arith.negf %1076 : vector<8x32xf32>
    %1078 = math.exp %1077 : vector<8x32xf32>
    %cst_355 = arith.constant 1.000000e+00 : f32
    %1079 = vector.broadcast %cst_355 : f32 to vector<8x32xf32>
    %1080 = arith.addf %1079, %1078 : vector<8x32xf32>
    %1081 = arith.divf %1079, %1080 : vector<8x32xf32>
    %1082 = vector.extract_strided_slice %1075 {offsets = [0, 32], sizes = [8, 32], strides = [1, 1]} : vector<8x128xf32> to vector<8x32xf32>
    %1083 = arith.negf %1082 : vector<8x32xf32>
    %1084 = math.exp %1083 : vector<8x32xf32>
    %cst_356 = arith.constant 1.000000e+00 : f32
    %1085 = vector.broadcast %cst_356 : f32 to vector<8x32xf32>
    %1086 = arith.addf %1085, %1084 : vector<8x32xf32>
    %1087 = arith.divf %1085, %1086 : vector<8x32xf32>
    %1088 = vector.extract_strided_slice %1075 {offsets = [0, 64], sizes = [8, 32], strides = [1, 1]} : vector<8x128xf32> to vector<8x32xf32>
    %1089 = math.tanh %1088 : vector<8x32xf32>
    %1090 = vector.extract_strided_slice %1075 {offsets = [0, 96], sizes = [8, 32], strides = [1, 1]} : vector<8x128xf32> to vector<8x32xf32>
    %1091 = arith.negf %1090 : vector<8x32xf32>
    %1092 = math.exp %1091 : vector<8x32xf32>
    %cst_357 = arith.constant 1.000000e+00 : f32
    %1093 = vector.broadcast %cst_357 : f32 to vector<8x32xf32>
    %1094 = arith.addf %1093, %1092 : vector<8x32xf32>
    %1095 = arith.divf %1093, %1094 : vector<8x32xf32>
    %1096 = arith.mulf %1087, %962 : vector<8x32xf32>
    %1097 = arith.mulf %1081, %1089 : vector<8x32xf32>
    %1098 = arith.addf %1096, %1097 : vector<8x32xf32>
    %1099 = math.tanh %1098 : vector<8x32xf32>
    %1100 = arith.mulf %1095, %1099 : vector<8x32xf32>
    %c1120_358 = arith.constant 1120 : index
    %c0_359 = arith.constant 0 : index
    %1101 = vector.load %arg2[%c1120_358, %c0_359] : memref<1344x256xbf16, #tpu.memory_space<vmem>>, vector<32x32xbf16>
    %1102 = arith.truncf %1100 : vector<8x32xf32> to vector<8x32xbf16>
    %cst_360 = arith.constant dense<0.000000e+00> : vector<8x32xf32>
    %1103 = tpu.matmul %1102, %1101, %cst_360 {dimension_numbers = #tpu.dot_dimension_numbers<[1], [0], [0], [1], [0, 0, 1, 1], [], []>} : vector<8x32xbf16>, vector<32x32xbf16>, vector<8x32xf32> -> vector<8x32xf32>
    %c1152_361 = arith.constant 1152 : index
    %c0_362 = arith.constant 0 : index
    %1104 = vector.load %arg2[%c1152_361, %c0_362] : memref<1344x256xbf16, #tpu.memory_space<vmem>>, vector<1x32xbf16>
    %1105 = arith.extf %1104 : vector<1x32xbf16> to vector<1x32xf32>
    %1106 = vector.broadcast %1105 : vector<1x32xf32> to vector<8x32xf32>
    %1107 = arith.addf %1103, %1106 : vector<8x32xf32>
    %cst_363 = arith.constant 0.000000e+00 : f32
    %1108 = vector.broadcast %cst_363 : f32 to vector<8x32xf32>
    %1109 = arith.maximumf %1107, %1108 : vector<8x32xf32>
    %c1168_364 = arith.constant 1168 : index
    %c0_365 = arith.constant 0 : index
    %1110 = vector.load %arg2[%c1168_364, %c0_365] : memref<1344x256xbf16, #tpu.memory_space<vmem>>, vector<32x16xbf16>
    %1111 = arith.truncf %1109 : vector<8x32xf32> to vector<8x32xbf16>
    %cst_366 = arith.constant dense<0.000000e+00> : vector<8x16xf32>
    %1112 = tpu.matmul %1111, %1110, %cst_366 {dimension_numbers = #tpu.dot_dimension_numbers<[1], [0], [0], [1], [0, 0, 1, 1], [], []>} : vector<8x32xbf16>, vector<32x16xbf16>, vector<8x16xf32> -> vector<8x16xf32>
    %c1200_367 = arith.constant 1200 : index
    %c0_368 = arith.constant 0 : index
    %1113 = vector.load %arg2[%c1200_367, %c0_368] : memref<1344x256xbf16, #tpu.memory_space<vmem>>, vector<1x16xbf16>
    %1114 = arith.extf %1113 : vector<1x16xbf16> to vector<1x16xf32>
    %1115 = vector.broadcast %1114 : vector<1x16xf32> to vector<8x16xf32>
    %1116 = arith.addf %1112, %1115 : vector<8x16xf32>
    %c0_369 = arith.constant 0 : index
    %c100 = arith.constant 100 : index
    %1117 = vector.load %arg3[%c0_369, %c100] : memref<8x256xf32, #tpu.memory_space<vmem>>, vector<8x16xf32>
    tpu.vector_store %arg3[%c0_369, %c100], %1116 {strides = array<i32>} : memref<8x256xf32, #tpu.memory_space<vmem>>, vector<8x16xf32>,
    %cst_370 = arith.constant dense<0xFF800000> : vector<8xf32>
    %1118 = vector.multi_reduction <maximumf>, %1116, %cst_370 [1] : vector<8x16xf32> to vector<8xf32>
    %1119 = vector.shape_cast %1118 : vector<8xf32> to vector<8x1xf32>
    %1120 = vector.broadcast %1119 : vector<8x1xf32> to vector<8x16xf32>
    %1121 = arith.cmpf oeq, %1116, %1120 : vector<8x16xf32>
    %1122 = arith.extui %1121 : vector<8x16xi1> to vector<8x16xi32>
    %1123 = arith.sitofp %1122 : vector<8x16xi32> to vector<8x16xf32>
    %c1216_371 = arith.constant 1216 : index
    %c0_372 = arith.constant 0 : index
    %1124 = vector.load %arg2[%c1216_371, %c0_372] : memref<1344x256xbf16, #tpu.memory_space<vmem>>, vector<16x32xbf16>
    %1125 = arith.truncf %1123 : vector<8x16xf32> to vector<8x16xbf16>
    %cst_373 = arith.constant dense<0.000000e+00> : vector<8x32xf32>
    %1126 = tpu.matmul %1125, %1124, %cst_373 {dimension_numbers = #tpu.dot_dimension_numbers<[1], [0], [0], [1], [0, 0, 1, 1], [], []>} : vector<8x16xbf16>, vector<16x32xbf16>, vector<8x32xf32> -> vector<8x32xf32>
    %c1232_374 = arith.constant 1232 : index
    %c0_375 = arith.constant 0 : index
    %1127 = vector.load %arg2[%c1232_374, %c0_375] : memref<1344x256xbf16, #tpu.memory_space<vmem>>, vector<32x32xbf16>
    %1128 = arith.truncf %1126 : vector<8x32xf32> to vector<8x32xbf16>
    %cst_376 = arith.constant dense<0.000000e+00> : vector<8x32xf32>
    %1129 = tpu.matmul %1128, %1127, %cst_376 {dimension_numbers = #tpu.dot_dimension_numbers<[1], [0], [0], [1], [0, 0, 1, 1], [], []>} : vector<8x32xbf16>, vector<32x32xbf16>, vector<8x32xf32> -> vector<8x32xf32>
    %1130 = arith.addf %1129, %1064 : vector<8x32xf32>
    %c1040_377 = arith.constant 1040 : index
    %c0_378 = arith.constant 0 : index
    %1131 = vector.load %arg2[%c1040_377, %c0_378] : memref<1344x256xbf16, #tpu.memory_space<vmem>>, vector<32x128xbf16>
    %1132 = arith.truncf %1130 : vector<8x32xf32> to vector<8x32xbf16>
    %cst_379 = arith.constant dense<0.000000e+00> : vector<8x128xf32>
    %1133 = tpu.matmul %1132, %1131, %cst_379 {dimension_numbers = #tpu.dot_dimension_numbers<[1], [0], [0], [1], [0, 0, 1, 1], [], []>} : vector<8x32xbf16>, vector<32x128xbf16>, vector<8x128xf32> -> vector<8x128xf32>
    %c1072_380 = arith.constant 1072 : index
    %c0_381 = arith.constant 0 : index
    %1134 = vector.load %arg2[%c1072_380, %c0_381] : memref<1344x256xbf16, #tpu.memory_space<vmem>>, vector<32x128xbf16>
    %1135 = arith.truncf %1100 : vector<8x32xf32> to vector<8x32xbf16>
    %cst_382 = arith.constant dense<0.000000e+00> : vector<8x128xf32>
    %1136 = tpu.matmul %1135, %1134, %cst_382 {dimension_numbers = #tpu.dot_dimension_numbers<[1], [0], [0], [1], [0, 0, 1, 1], [], []>} : vector<8x32xbf16>, vector<32x128xbf16>, vector<8x128xf32> -> vector<8x128xf32>
    %1137 = arith.addf %1133, %1136 : vector<8x128xf32>
    %c1104_383 = arith.constant 1104 : index
    %c0_384 = arith.constant 0 : index
    %1138 = vector.load %arg2[%c1104_383, %c0_384] : memref<1344x256xbf16, #tpu.memory_space<vmem>>, vector<1x128xbf16>
    %1139 = arith.extf %1138 : vector<1x128xbf16> to vector<1x128xf32>
    %1140 = vector.broadcast %1139 : vector<1x128xf32> to vector<8x128xf32>
    %1141 = arith.addf %1137, %1140 : vector<8x128xf32>
    %1142 = vector.extract_strided_slice %1141 {offsets = [0, 0], sizes = [8, 32], strides = [1, 1]} : vector<8x128xf32> to vector<8x32xf32>
    %1143 = arith.negf %1142 : vector<8x32xf32>
    %1144 = math.exp %1143 : vector<8x32xf32>
    %cst_385 = arith.constant 1.000000e+00 : f32
    %1145 = vector.broadcast %cst_385 : f32 to vector<8x32xf32>
    %1146 = arith.addf %1145, %1144 : vector<8x32xf32>
    %1147 = arith.divf %1145, %1146 : vector<8x32xf32>
    %1148 = vector.extract_strided_slice %1141 {offsets = [0, 32], sizes = [8, 32], strides = [1, 1]} : vector<8x128xf32> to vector<8x32xf32>
    %1149 = arith.negf %1148 : vector<8x32xf32>
    %1150 = math.exp %1149 : vector<8x32xf32>
    %cst_386 = arith.constant 1.000000e+00 : f32
    %1151 = vector.broadcast %cst_386 : f32 to vector<8x32xf32>
    %1152 = arith.addf %1151, %1150 : vector<8x32xf32>
    %1153 = arith.divf %1151, %1152 : vector<8x32xf32>
    %1154 = vector.extract_strided_slice %1141 {offsets = [0, 64], sizes = [8, 32], strides = [1, 1]} : vector<8x128xf32> to vector<8x32xf32>
    %1155 = math.tanh %1154 : vector<8x32xf32>
    %1156 = vector.extract_strided_slice %1141 {offsets = [0, 96], sizes = [8, 32], strides = [1, 1]} : vector<8x128xf32> to vector<8x32xf32>
    %1157 = arith.negf %1156 : vector<8x32xf32>
    %1158 = math.exp %1157 : vector<8x32xf32>
    %cst_387 = arith.constant 1.000000e+00 : f32
    %1159 = vector.broadcast %cst_387 : f32 to vector<8x32xf32>
    %1160 = arith.addf %1159, %1158 : vector<8x32xf32>
    %1161 = arith.divf %1159, %1160 : vector<8x32xf32>
    %1162 = arith.mulf %1153, %1098 : vector<8x32xf32>
    %1163 = arith.mulf %1147, %1155 : vector<8x32xf32>
    %1164 = arith.addf %1162, %1163 : vector<8x32xf32>
    %1165 = math.tanh %1164 : vector<8x32xf32>
    %1166 = arith.mulf %1161, %1165 : vector<8x32xf32>
    %c1120_388 = arith.constant 1120 : index
    %c0_389 = arith.constant 0 : index
    %1167 = vector.load %arg2[%c1120_388, %c0_389] : memref<1344x256xbf16, #tpu.memory_space<vmem>>, vector<32x32xbf16>
    %1168 = arith.truncf %1166 : vector<8x32xf32> to vector<8x32xbf16>
    %cst_390 = arith.constant dense<0.000000e+00> : vector<8x32xf32>
    %1169 = tpu.matmul %1168, %1167, %cst_390 {dimension_numbers = #tpu.dot_dimension_numbers<[1], [0], [0], [1], [0, 0, 1, 1], [], []>} : vector<8x32xbf16>, vector<32x32xbf16>, vector<8x32xf32> -> vector<8x32xf32>
    %c1152_391 = arith.constant 1152 : index
    %c0_392 = arith.constant 0 : index
    %1170 = vector.load %arg2[%c1152_391, %c0_392] : memref<1344x256xbf16, #tpu.memory_space<vmem>>, vector<1x32xbf16>
    %1171 = arith.extf %1170 : vector<1x32xbf16> to vector<1x32xf32>
    %1172 = vector.broadcast %1171 : vector<1x32xf32> to vector<8x32xf32>
    %1173 = arith.addf %1169, %1172 : vector<8x32xf32>
    %cst_393 = arith.constant 0.000000e+00 : f32
    %1174 = vector.broadcast %cst_393 : f32 to vector<8x32xf32>
    %1175 = arith.maximumf %1173, %1174 : vector<8x32xf32>
    %c1168_394 = arith.constant 1168 : index
    %c0_395 = arith.constant 0 : index
    %1176 = vector.load %arg2[%c1168_394, %c0_395] : memref<1344x256xbf16, #tpu.memory_space<vmem>>, vector<32x16xbf16>
    %1177 = arith.truncf %1175 : vector<8x32xf32> to vector<8x32xbf16>
    %cst_396 = arith.constant dense<0.000000e+00> : vector<8x16xf32>
    %1178 = tpu.matmul %1177, %1176, %cst_396 {dimension_numbers = #tpu.dot_dimension_numbers<[1], [0], [0], [1], [0, 0, 1, 1], [], []>} : vector<8x32xbf16>, vector<32x16xbf16>, vector<8x16xf32> -> vector<8x16xf32>
    %c1200_397 = arith.constant 1200 : index
    %c0_398 = arith.constant 0 : index
    %1179 = vector.load %arg2[%c1200_397, %c0_398] : memref<1344x256xbf16, #tpu.memory_space<vmem>>, vector<1x16xbf16>
    %1180 = arith.extf %1179 : vector<1x16xbf16> to vector<1x16xf32>
    %1181 = vector.broadcast %1180 : vector<1x16xf32> to vector<8x16xf32>
    %1182 = arith.addf %1178, %1181 : vector<8x16xf32>
    %c0_399 = arith.constant 0 : index
    %c116 = arith.constant 116 : index
    %1183 = vector.load %arg3[%c0_399, %c116] : memref<8x256xf32, #tpu.memory_space<vmem>>, vector<8x16xf32>
    tpu.vector_store %arg3[%c0_399, %c116], %1182 {strides = array<i32>} : memref<8x256xf32, #tpu.memory_space<vmem>>, vector<8x16xf32>,
    %cst_400 = arith.constant dense<0xFF800000> : vector<8xf32>
    %1184 = vector.multi_reduction <maximumf>, %1182, %cst_400 [1] : vector<8x16xf32> to vector<8xf32>
    %1185 = vector.shape_cast %1184 : vector<8xf32> to vector<8x1xf32>
    %1186 = vector.broadcast %1185 : vector<8x1xf32> to vector<8x16xf32>
    %1187 = arith.cmpf oeq, %1182, %1186 : vector<8x16xf32>
    %1188 = arith.extui %1187 : vector<8x16xi1> to vector<8x16xi32>
    %1189 = arith.sitofp %1188 : vector<8x16xi32> to vector<8x16xf32>
    %c1216_401 = arith.constant 1216 : index
    %c0_402 = arith.constant 0 : index
    %1190 = vector.load %arg2[%c1216_401, %c0_402] : memref<1344x256xbf16, #tpu.memory_space<vmem>>, vector<16x32xbf16>
    %1191 = arith.truncf %1189 : vector<8x16xf32> to vector<8x16xbf16>
    %cst_403 = arith.constant dense<0.000000e+00> : vector<8x32xf32>
    %1192 = tpu.matmul %1191, %1190, %cst_403 {dimension_numbers = #tpu.dot_dimension_numbers<[1], [0], [0], [1], [0, 0, 1, 1], [], []>} : vector<8x16xbf16>, vector<16x32xbf16>, vector<8x32xf32> -> vector<8x32xf32>
    %c1232_404 = arith.constant 1232 : index
    %c0_405 = arith.constant 0 : index
    %1193 = vector.load %arg2[%c1232_404, %c0_405] : memref<1344x256xbf16, #tpu.memory_space<vmem>>, vector<32x32xbf16>
    %1194 = arith.truncf %1192 : vector<8x32xf32> to vector<8x32xbf16>
    %cst_406 = arith.constant dense<0.000000e+00> : vector<8x32xf32>
    %1195 = tpu.matmul %1194, %1193, %cst_406 {dimension_numbers = #tpu.dot_dimension_numbers<[1], [0], [0], [1], [0, 0, 1, 1], [], []>} : vector<8x32xbf16>, vector<32x32xbf16>, vector<8x32xf32> -> vector<8x32xf32>
    %1196 = arith.addf %1195, %1064 : vector<8x32xf32>
    %c768_407 = arith.constant 768 : index
    %c0_408 = arith.constant 0 : index
    %1197 = vector.load %arg2[%c768_407, %c0_408] : memref<1344x256xbf16, #tpu.memory_space<vmem>>, vector<32x128xbf16>
    %1198 = arith.truncf %1060 : vector<8x32xf32> to vector<8x32xbf16>
    %cst_409 = arith.constant dense<0.000000e+00> : vector<8x128xf32>
    %1199 = tpu.matmul %1198, %1197, %cst_409 {dimension_numbers = #tpu.dot_dimension_numbers<[1], [0], [0], [1], [0, 0, 1, 1], [], []>} : vector<8x32xbf16>, vector<32x128xbf16>, vector<8x128xf32> -> vector<8x128xf32>
    %c800_410 = arith.constant 800 : index
    %c0_411 = arith.constant 0 : index
    %1200 = vector.load %arg2[%c800_410, %c0_411] : memref<1344x256xbf16, #tpu.memory_space<vmem>>, vector<32x128xbf16>
    %1201 = arith.truncf %1030 : vector<8x32xf32> to vector<8x32xbf16>
    %cst_412 = arith.constant dense<0.000000e+00> : vector<8x128xf32>
    %1202 = tpu.matmul %1201, %1200, %cst_412 {dimension_numbers = #tpu.dot_dimension_numbers<[1], [0], [0], [1], [0, 0, 1, 1], [], []>} : vector<8x32xbf16>, vector<32x128xbf16>, vector<8x128xf32> -> vector<8x128xf32>
    %1203 = arith.addf %1199, %1202 : vector<8x128xf32>
    %c832_413 = arith.constant 832 : index
    %c0_414 = arith.constant 0 : index
    %1204 = vector.load %arg2[%c832_413, %c0_414] : memref<1344x256xbf16, #tpu.memory_space<vmem>>, vector<1x128xbf16>
    %1205 = arith.extf %1204 : vector<1x128xbf16> to vector<1x128xf32>
    %1206 = vector.broadcast %1205 : vector<1x128xf32> to vector<8x128xf32>
    %1207 = arith.addf %1203, %1206 : vector<8x128xf32>
    %1208 = vector.extract_strided_slice %1207 {offsets = [0, 0], sizes = [8, 32], strides = [1, 1]} : vector<8x128xf32> to vector<8x32xf32>
    %1209 = arith.negf %1208 : vector<8x32xf32>
    %1210 = math.exp %1209 : vector<8x32xf32>
    %cst_415 = arith.constant 1.000000e+00 : f32
    %1211 = vector.broadcast %cst_415 : f32 to vector<8x32xf32>
    %1212 = arith.addf %1211, %1210 : vector<8x32xf32>
    %1213 = arith.divf %1211, %1212 : vector<8x32xf32>
    %1214 = vector.extract_strided_slice %1207 {offsets = [0, 32], sizes = [8, 32], strides = [1, 1]} : vector<8x128xf32> to vector<8x32xf32>
    %1215 = arith.negf %1214 : vector<8x32xf32>
    %1216 = math.exp %1215 : vector<8x32xf32>
    %cst_416 = arith.constant 1.000000e+00 : f32
    %1217 = vector.broadcast %cst_416 : f32 to vector<8x32xf32>
    %1218 = arith.addf %1217, %1216 : vector<8x32xf32>
    %1219 = arith.divf %1217, %1218 : vector<8x32xf32>
    %1220 = vector.extract_strided_slice %1207 {offsets = [0, 64], sizes = [8, 32], strides = [1, 1]} : vector<8x128xf32> to vector<8x32xf32>
    %1221 = math.tanh %1220 : vector<8x32xf32>
    %1222 = vector.extract_strided_slice %1207 {offsets = [0, 96], sizes = [8, 32], strides = [1, 1]} : vector<8x128xf32> to vector<8x32xf32>
    %1223 = arith.negf %1222 : vector<8x32xf32>
    %1224 = math.exp %1223 : vector<8x32xf32>
    %cst_417 = arith.constant 1.000000e+00 : f32
    %1225 = vector.broadcast %cst_417 : f32 to vector<8x32xf32>
    %1226 = arith.addf %1225, %1224 : vector<8x32xf32>
    %1227 = arith.divf %1225, %1226 : vector<8x32xf32>
    %1228 = arith.mulf %1219, %1028 : vector<8x32xf32>
    %1229 = arith.mulf %1213, %1221 : vector<8x32xf32>
    %1230 = arith.addf %1228, %1229 : vector<8x32xf32>
    %1231 = math.tanh %1230 : vector<8x32xf32>
    %1232 = arith.mulf %1227, %1231 : vector<8x32xf32>
    %c848_418 = arith.constant 848 : index
    %c0_419 = arith.constant 0 : index
    %1233 = vector.load %arg2[%c848_418, %c0_419] : memref<1344x256xbf16, #tpu.memory_space<vmem>>, vector<32x32xbf16>
    %1234 = arith.truncf %1232 : vector<8x32xf32> to vector<8x32xbf16>
    %cst_420 = arith.constant dense<0.000000e+00> : vector<8x32xf32>
    %1235 = tpu.matmul %1234, %1233, %cst_420 {dimension_numbers = #tpu.dot_dimension_numbers<[1], [0], [0], [1], [0, 0, 1, 1], [], []>} : vector<8x32xbf16>, vector<32x32xbf16>, vector<8x32xf32> -> vector<8x32xf32>
    %c880_421 = arith.constant 880 : index
    %c0_422 = arith.constant 0 : index
    %1236 = vector.load %arg2[%c880_421, %c0_422] : memref<1344x256xbf16, #tpu.memory_space<vmem>>, vector<1x32xbf16>
    %1237 = arith.extf %1236 : vector<1x32xbf16> to vector<1x32xf32>
    %1238 = vector.broadcast %1237 : vector<1x32xf32> to vector<8x32xf32>
    %1239 = arith.addf %1235, %1238 : vector<8x32xf32>
    %cst_423 = arith.constant 0.000000e+00 : f32
    %1240 = vector.broadcast %cst_423 : f32 to vector<8x32xf32>
    %1241 = arith.maximumf %1239, %1240 : vector<8x32xf32>
    %c896_424 = arith.constant 896 : index
    %c0_425 = arith.constant 0 : index
    %1242 = vector.load %arg2[%c896_424, %c0_425] : memref<1344x256xbf16, #tpu.memory_space<vmem>>, vector<32x9xbf16>
    %1243 = arith.truncf %1241 : vector<8x32xf32> to vector<8x32xbf16>
    %cst_426 = arith.constant dense<0.000000e+00> : vector<8x9xf32>
    %1244 = tpu.matmul %1243, %1242, %cst_426 {dimension_numbers = #tpu.dot_dimension_numbers<[1], [0], [0], [1], [0, 0, 1, 1], [], []>} : vector<8x32xbf16>, vector<32x9xbf16>, vector<8x9xf32> -> vector<8x9xf32>
    %c928_427 = arith.constant 928 : index
    %c0_428 = arith.constant 0 : index
    %1245 = vector.load %arg2[%c928_427, %c0_428] : memref<1344x256xbf16, #tpu.memory_space<vmem>>, vector<1x9xbf16>
    %1246 = arith.extf %1245 : vector<1x9xbf16> to vector<1x9xf32>
    %1247 = vector.broadcast %1246 : vector<1x9xf32> to vector<8x9xf32>
    %1248 = arith.addf %1244, %1247 : vector<8x9xf32>
    %c0_429 = arith.constant 0 : index
    %c27 = arith.constant 27 : index
    %1249 = vector.load %arg3[%c0_429, %c27] : memref<8x256xf32, #tpu.memory_space<vmem>>, vector<8x9xf32>
    tpu.vector_store %arg3[%c0_429, %c27], %1248 {strides = array<i32>} : memref<8x256xf32, #tpu.memory_space<vmem>>, vector<8x9xf32>,
    %cst_430 = arith.constant dense<0xFF800000> : vector<8xf32>
    %1250 = vector.multi_reduction <maximumf>, %1248, %cst_430 [1] : vector<8x9xf32> to vector<8xf32>
    %1251 = vector.shape_cast %1250 : vector<8xf32> to vector<8x1xf32>
    %1252 = vector.broadcast %1251 : vector<8x1xf32> to vector<8x9xf32>
    %1253 = arith.cmpf oeq, %1248, %1252 : vector<8x9xf32>
    %1254 = arith.extui %1253 : vector<8x9xi1> to vector<8x9xi32>
    %1255 = arith.sitofp %1254 : vector<8x9xi32> to vector<8x9xf32>
    %c944_431 = arith.constant 944 : index
    %c0_432 = arith.constant 0 : index
    %1256 = vector.load %arg2[%c944_431, %c0_432] : memref<1344x256xbf16, #tpu.memory_space<vmem>>, vector<9x32xbf16>
    %1257 = arith.truncf %1255 : vector<8x9xf32> to vector<8x9xbf16>
    %cst_433 = arith.constant dense<0.000000e+00> : vector<8x32xf32>
    %1258 = tpu.matmul %1257, %1256, %cst_433 {dimension_numbers = #tpu.dot_dimension_numbers<[1], [0], [0], [1], [0, 0, 1, 1], [], []>} : vector<8x9xbf16>, vector<9x32xbf16>, vector<8x32xf32> -> vector<8x32xf32>
    %c960_434 = arith.constant 960 : index
    %c0_435 = arith.constant 0 : index
    %1259 = vector.load %arg2[%c960_434, %c0_435] : memref<1344x256xbf16, #tpu.memory_space<vmem>>, vector<32x32xbf16>
    %1260 = arith.truncf %1258 : vector<8x32xf32> to vector<8x32xbf16>
    %cst_436 = arith.constant dense<0.000000e+00> : vector<8x32xf32>
    %1261 = tpu.matmul %1260, %1259, %cst_436 {dimension_numbers = #tpu.dot_dimension_numbers<[1], [0], [0], [1], [0, 0, 1, 1], [], []>} : vector<8x32xbf16>, vector<32x32xbf16>, vector<8x32xf32> -> vector<8x32xf32>
    %1262 = arith.addf %1261, %583 : vector<8x32xf32>
    %c1264_437 = arith.constant 1264 : index
    %c0_438 = arith.constant 0 : index
    %1263 = vector.load %arg2[%c1264_437, %c0_438] : memref<1344x256xbf16, #tpu.memory_space<vmem>>, vector<32x32xbf16>
    %1264 = arith.truncf %1262 : vector<8x32xf32> to vector<8x32xbf16>
    %cst_439 = arith.constant dense<0.000000e+00> : vector<8x32xf32>
    %1265 = tpu.matmul %1264, %1263, %cst_439 {dimension_numbers = #tpu.dot_dimension_numbers<[1], [0], [0], [1], [0, 0, 1, 1], [], []>} : vector<8x32xbf16>, vector<32x32xbf16>, vector<8x32xf32> -> vector<8x32xf32>
    %1266 = arith.addf %1265, %590 : vector<8x32xf32>
    %c1040_440 = arith.constant 1040 : index
    %c0_441 = arith.constant 0 : index
    %1267 = vector.load %arg2[%c1040_440, %c0_441] : memref<1344x256xbf16, #tpu.memory_space<vmem>>, vector<32x128xbf16>
    %1268 = arith.truncf %1196 : vector<8x32xf32> to vector<8x32xbf16>
    %cst_442 = arith.constant dense<0.000000e+00> : vector<8x128xf32>
    %1269 = tpu.matmul %1268, %1267, %cst_442 {dimension_numbers = #tpu.dot_dimension_numbers<[1], [0], [0], [1], [0, 0, 1, 1], [], []>} : vector<8x32xbf16>, vector<32x128xbf16>, vector<8x128xf32> -> vector<8x128xf32>
    %c1072_443 = arith.constant 1072 : index
    %c0_444 = arith.constant 0 : index
    %1270 = vector.load %arg2[%c1072_443, %c0_444] : memref<1344x256xbf16, #tpu.memory_space<vmem>>, vector<32x128xbf16>
    %1271 = arith.truncf %1166 : vector<8x32xf32> to vector<8x32xbf16>
    %cst_445 = arith.constant dense<0.000000e+00> : vector<8x128xf32>
    %1272 = tpu.matmul %1271, %1270, %cst_445 {dimension_numbers = #tpu.dot_dimension_numbers<[1], [0], [0], [1], [0, 0, 1, 1], [], []>} : vector<8x32xbf16>, vector<32x128xbf16>, vector<8x128xf32> -> vector<8x128xf32>
    %1273 = arith.addf %1269, %1272 : vector<8x128xf32>
    %c1104_446 = arith.constant 1104 : index
    %c0_447 = arith.constant 0 : index
    %1274 = vector.load %arg2[%c1104_446, %c0_447] : memref<1344x256xbf16, #tpu.memory_space<vmem>>, vector<1x128xbf16>
    %1275 = arith.extf %1274 : vector<1x128xbf16> to vector<1x128xf32>
    %1276 = vector.broadcast %1275 : vector<1x128xf32> to vector<8x128xf32>
    %1277 = arith.addf %1273, %1276 : vector<8x128xf32>
    %1278 = vector.extract_strided_slice %1277 {offsets = [0, 0], sizes = [8, 32], strides = [1, 1]} : vector<8x128xf32> to vector<8x32xf32>
    %1279 = arith.negf %1278 : vector<8x32xf32>
    %1280 = math.exp %1279 : vector<8x32xf32>
    %cst_448 = arith.constant 1.000000e+00 : f32
    %1281 = vector.broadcast %cst_448 : f32 to vector<8x32xf32>
    %1282 = arith.addf %1281, %1280 : vector<8x32xf32>
    %1283 = arith.divf %1281, %1282 : vector<8x32xf32>
    %1284 = vector.extract_strided_slice %1277 {offsets = [0, 32], sizes = [8, 32], strides = [1, 1]} : vector<8x128xf32> to vector<8x32xf32>
    %1285 = arith.negf %1284 : vector<8x32xf32>
    %1286 = math.exp %1285 : vector<8x32xf32>
    %cst_449 = arith.constant 1.000000e+00 : f32
    %1287 = vector.broadcast %cst_449 : f32 to vector<8x32xf32>
    %1288 = arith.addf %1287, %1286 : vector<8x32xf32>
    %1289 = arith.divf %1287, %1288 : vector<8x32xf32>
    %1290 = vector.extract_strided_slice %1277 {offsets = [0, 64], sizes = [8, 32], strides = [1, 1]} : vector<8x128xf32> to vector<8x32xf32>
    %1291 = math.tanh %1290 : vector<8x32xf32>
    %1292 = vector.extract_strided_slice %1277 {offsets = [0, 96], sizes = [8, 32], strides = [1, 1]} : vector<8x128xf32> to vector<8x32xf32>
    %1293 = arith.negf %1292 : vector<8x32xf32>
    %1294 = math.exp %1293 : vector<8x32xf32>
    %cst_450 = arith.constant 1.000000e+00 : f32
    %1295 = vector.broadcast %cst_450 : f32 to vector<8x32xf32>
    %1296 = arith.addf %1295, %1294 : vector<8x32xf32>
    %1297 = arith.divf %1295, %1296 : vector<8x32xf32>
    %1298 = arith.mulf %1289, %1164 : vector<8x32xf32>
    %1299 = arith.mulf %1283, %1291 : vector<8x32xf32>
    %1300 = arith.addf %1298, %1299 : vector<8x32xf32>
    %1301 = math.tanh %1300 : vector<8x32xf32>
    %1302 = arith.mulf %1297, %1301 : vector<8x32xf32>
    %c1120_451 = arith.constant 1120 : index
    %c0_452 = arith.constant 0 : index
    %1303 = vector.load %arg2[%c1120_451, %c0_452] : memref<1344x256xbf16, #tpu.memory_space<vmem>>, vector<32x32xbf16>
    %1304 = arith.truncf %1302 : vector<8x32xf32> to vector<8x32xbf16>
    %cst_453 = arith.constant dense<0.000000e+00> : vector<8x32xf32>
    %1305 = tpu.matmul %1304, %1303, %cst_453 {dimension_numbers = #tpu.dot_dimension_numbers<[1], [0], [0], [1], [0, 0, 1, 1], [], []>} : vector<8x32xbf16>, vector<32x32xbf16>, vector<8x32xf32> -> vector<8x32xf32>
    %c1152_454 = arith.constant 1152 : index
    %c0_455 = arith.constant 0 : index
    %1306 = vector.load %arg2[%c1152_454, %c0_455] : memref<1344x256xbf16, #tpu.memory_space<vmem>>, vector<1x32xbf16>
    %1307 = arith.extf %1306 : vector<1x32xbf16> to vector<1x32xf32>
    %1308 = vector.broadcast %1307 : vector<1x32xf32> to vector<8x32xf32>
    %1309 = arith.addf %1305, %1308 : vector<8x32xf32>
    %cst_456 = arith.constant 0.000000e+00 : f32
    %1310 = vector.broadcast %cst_456 : f32 to vector<8x32xf32>
    %1311 = arith.maximumf %1309, %1310 : vector<8x32xf32>
    %c1168_457 = arith.constant 1168 : index
    %c0_458 = arith.constant 0 : index
    %1312 = vector.load %arg2[%c1168_457, %c0_458] : memref<1344x256xbf16, #tpu.memory_space<vmem>>, vector<32x16xbf16>
    %1313 = arith.truncf %1311 : vector<8x32xf32> to vector<8x32xbf16>
    %cst_459 = arith.constant dense<0.000000e+00> : vector<8x16xf32>
    %1314 = tpu.matmul %1313, %1312, %cst_459 {dimension_numbers = #tpu.dot_dimension_numbers<[1], [0], [0], [1], [0, 0, 1, 1], [], []>} : vector<8x32xbf16>, vector<32x16xbf16>, vector<8x16xf32> -> vector<8x16xf32>
    %c1200_460 = arith.constant 1200 : index
    %c0_461 = arith.constant 0 : index
    %1315 = vector.load %arg2[%c1200_460, %c0_461] : memref<1344x256xbf16, #tpu.memory_space<vmem>>, vector<1x16xbf16>
    %1316 = arith.extf %1315 : vector<1x16xbf16> to vector<1x16xf32>
    %1317 = vector.broadcast %1316 : vector<1x16xf32> to vector<8x16xf32>
    %1318 = arith.addf %1314, %1317 : vector<8x16xf32>
    %c0_462 = arith.constant 0 : index
    %c132 = arith.constant 132 : index
    %1319 = vector.load %arg3[%c0_462, %c132] : memref<8x256xf32, #tpu.memory_space<vmem>>, vector<8x16xf32>
    tpu.vector_store %arg3[%c0_462, %c132], %1318 {strides = array<i32>} : memref<8x256xf32, #tpu.memory_space<vmem>>, vector<8x16xf32>,
    %cst_463 = arith.constant dense<0xFF800000> : vector<8xf32>
    %1320 = vector.multi_reduction <maximumf>, %1318, %cst_463 [1] : vector<8x16xf32> to vector<8xf32>
    %1321 = vector.shape_cast %1320 : vector<8xf32> to vector<8x1xf32>
    %1322 = vector.broadcast %1321 : vector<8x1xf32> to vector<8x16xf32>
    %1323 = arith.cmpf oeq, %1318, %1322 : vector<8x16xf32>
    %1324 = arith.extui %1323 : vector<8x16xi1> to vector<8x16xi32>
    %1325 = arith.sitofp %1324 : vector<8x16xi32> to vector<8x16xf32>
    %c1216_464 = arith.constant 1216 : index
    %c0_465 = arith.constant 0 : index
    %1326 = vector.load %arg2[%c1216_464, %c0_465] : memref<1344x256xbf16, #tpu.memory_space<vmem>>, vector<16x32xbf16>
    %1327 = arith.truncf %1325 : vector<8x16xf32> to vector<8x16xbf16>
    %cst_466 = arith.constant dense<0.000000e+00> : vector<8x32xf32>
    %1328 = tpu.matmul %1327, %1326, %cst_466 {dimension_numbers = #tpu.dot_dimension_numbers<[1], [0], [0], [1], [0, 0, 1, 1], [], []>} : vector<8x16xbf16>, vector<16x32xbf16>, vector<8x32xf32> -> vector<8x32xf32>
    %c1232_467 = arith.constant 1232 : index
    %c0_468 = arith.constant 0 : index
    %1329 = vector.load %arg2[%c1232_467, %c0_468] : memref<1344x256xbf16, #tpu.memory_space<vmem>>, vector<32x32xbf16>
    %1330 = arith.truncf %1328 : vector<8x32xf32> to vector<8x32xbf16>
    %cst_469 = arith.constant dense<0.000000e+00> : vector<8x32xf32>
    %1331 = tpu.matmul %1330, %1329, %cst_469 {dimension_numbers = #tpu.dot_dimension_numbers<[1], [0], [0], [1], [0, 0, 1, 1], [], []>} : vector<8x32xbf16>, vector<32x32xbf16>, vector<8x32xf32> -> vector<8x32xf32>
    %1332 = arith.addf %1331, %1266 : vector<8x32xf32>
    %c1040_470 = arith.constant 1040 : index
    %c0_471 = arith.constant 0 : index
    %1333 = vector.load %arg2[%c1040_470, %c0_471] : memref<1344x256xbf16, #tpu.memory_space<vmem>>, vector<32x128xbf16>
    %1334 = arith.truncf %1332 : vector<8x32xf32> to vector<8x32xbf16>
    %cst_472 = arith.constant dense<0.000000e+00> : vector<8x128xf32>
    %1335 = tpu.matmul %1334, %1333, %cst_472 {dimension_numbers = #tpu.dot_dimension_numbers<[1], [0], [0], [1], [0, 0, 1, 1], [], []>} : vector<8x32xbf16>, vector<32x128xbf16>, vector<8x128xf32> -> vector<8x128xf32>
    %c1072_473 = arith.constant 1072 : index
    %c0_474 = arith.constant 0 : index
    %1336 = vector.load %arg2[%c1072_473, %c0_474] : memref<1344x256xbf16, #tpu.memory_space<vmem>>, vector<32x128xbf16>
    %1337 = arith.truncf %1302 : vector<8x32xf32> to vector<8x32xbf16>
    %cst_475 = arith.constant dense<0.000000e+00> : vector<8x128xf32>
    %1338 = tpu.matmul %1337, %1336, %cst_475 {dimension_numbers = #tpu.dot_dimension_numbers<[1], [0], [0], [1], [0, 0, 1, 1], [], []>} : vector<8x32xbf16>, vector<32x128xbf16>, vector<8x128xf32> -> vector<8x128xf32>
    %1339 = arith.addf %1335, %1338 : vector<8x128xf32>
    %c1104_476 = arith.constant 1104 : index
    %c0_477 = arith.constant 0 : index
    %1340 = vector.load %arg2[%c1104_476, %c0_477] : memref<1344x256xbf16, #tpu.memory_space<vmem>>, vector<1x128xbf16>
    %1341 = arith.extf %1340 : vector<1x128xbf16> to vector<1x128xf32>
    %1342 = vector.broadcast %1341 : vector<1x128xf32> to vector<8x128xf32>
    %1343 = arith.addf %1339, %1342 : vector<8x128xf32>
    %1344 = vector.extract_strided_slice %1343 {offsets = [0, 0], sizes = [8, 32], strides = [1, 1]} : vector<8x128xf32> to vector<8x32xf32>
    %1345 = arith.negf %1344 : vector<8x32xf32>
    %1346 = math.exp %1345 : vector<8x32xf32>
    %cst_478 = arith.constant 1.000000e+00 : f32
    %1347 = vector.broadcast %cst_478 : f32 to vector<8x32xf32>
    %1348 = arith.addf %1347, %1346 : vector<8x32xf32>
    %1349 = arith.divf %1347, %1348 : vector<8x32xf32>
    %1350 = vector.extract_strided_slice %1343 {offsets = [0, 32], sizes = [8, 32], strides = [1, 1]} : vector<8x128xf32> to vector<8x32xf32>
    %1351 = arith.negf %1350 : vector<8x32xf32>
    %1352 = math.exp %1351 : vector<8x32xf32>
    %cst_479 = arith.constant 1.000000e+00 : f32
    %1353 = vector.broadcast %cst_479 : f32 to vector<8x32xf32>
    %1354 = arith.addf %1353, %1352 : vector<8x32xf32>
    %1355 = arith.divf %1353, %1354 : vector<8x32xf32>
    %1356 = vector.extract_strided_slice %1343 {offsets = [0, 64], sizes = [8, 32], strides = [1, 1]} : vector<8x128xf32> to vector<8x32xf32>
    %1357 = math.tanh %1356 : vector<8x32xf32>
    %1358 = vector.extract_strided_slice %1343 {offsets = [0, 96], sizes = [8, 32], strides = [1, 1]} : vector<8x128xf32> to vector<8x32xf32>
    %1359 = arith.negf %1358 : vector<8x32xf32>
    %1360 = math.exp %1359 : vector<8x32xf32>
    %cst_480 = arith.constant 1.000000e+00 : f32
    %1361 = vector.broadcast %cst_480 : f32 to vector<8x32xf32>
    %1362 = arith.addf %1361, %1360 : vector<8x32xf32>
    %1363 = arith.divf %1361, %1362 : vector<8x32xf32>
    %1364 = arith.mulf %1355, %1300 : vector<8x32xf32>
    %1365 = arith.mulf %1349, %1357 : vector<8x32xf32>
    %1366 = arith.addf %1364, %1365 : vector<8x32xf32>
    %1367 = math.tanh %1366 : vector<8x32xf32>
    %1368 = arith.mulf %1363, %1367 : vector<8x32xf32>
    %c1120_481 = arith.constant 1120 : index
    %c0_482 = arith.constant 0 : index
    %1369 = vector.load %arg2[%c1120_481, %c0_482] : memref<1344x256xbf16, #tpu.memory_space<vmem>>, vector<32x32xbf16>
    %1370 = arith.truncf %1368 : vector<8x32xf32> to vector<8x32xbf16>
    %cst_483 = arith.constant dense<0.000000e+00> : vector<8x32xf32>
    %1371 = tpu.matmul %1370, %1369, %cst_483 {dimension_numbers = #tpu.dot_dimension_numbers<[1], [0], [0], [1], [0, 0, 1, 1], [], []>} : vector<8x32xbf16>, vector<32x32xbf16>, vector<8x32xf32> -> vector<8x32xf32>
    %c1152_484 = arith.constant 1152 : index
    %c0_485 = arith.constant 0 : index
    %1372 = vector.load %arg2[%c1152_484, %c0_485] : memref<1344x256xbf16, #tpu.memory_space<vmem>>, vector<1x32xbf16>
    %1373 = arith.extf %1372 : vector<1x32xbf16> to vector<1x32xf32>
    %1374 = vector.broadcast %1373 : vector<1x32xf32> to vector<8x32xf32>
    %1375 = arith.addf %1371, %1374 : vector<8x32xf32>
    %cst_486 = arith.constant 0.000000e+00 : f32
    %1376 = vector.broadcast %cst_486 : f32 to vector<8x32xf32>
    %1377 = arith.maximumf %1375, %1376 : vector<8x32xf32>
    %c1168_487 = arith.constant 1168 : index
    %c0_488 = arith.constant 0 : index
    %1378 = vector.load %arg2[%c1168_487, %c0_488] : memref<1344x256xbf16, #tpu.memory_space<vmem>>, vector<32x16xbf16>
    %1379 = arith.truncf %1377 : vector<8x32xf32> to vector<8x32xbf16>
    %cst_489 = arith.constant dense<0.000000e+00> : vector<8x16xf32>
    %1380 = tpu.matmul %1379, %1378, %cst_489 {dimension_numbers = #tpu.dot_dimension_numbers<[1], [0], [0], [1], [0, 0, 1, 1], [], []>} : vector<8x32xbf16>, vector<32x16xbf16>, vector<8x16xf32> -> vector<8x16xf32>
    %c1200_490 = arith.constant 1200 : index
    %c0_491 = arith.constant 0 : index
    %1381 = vector.load %arg2[%c1200_490, %c0_491] : memref<1344x256xbf16, #tpu.memory_space<vmem>>, vector<1x16xbf16>
    %1382 = arith.extf %1381 : vector<1x16xbf16> to vector<1x16xf32>
    %1383 = vector.broadcast %1382 : vector<1x16xf32> to vector<8x16xf32>
    %1384 = arith.addf %1380, %1383 : vector<8x16xf32>
    %c0_492 = arith.constant 0 : index
    %c148 = arith.constant 148 : index
    %1385 = vector.load %arg3[%c0_492, %c148] : memref<8x256xf32, #tpu.memory_space<vmem>>, vector<8x16xf32>
    tpu.vector_store %arg3[%c0_492, %c148], %1384 {strides = array<i32>} : memref<8x256xf32, #tpu.memory_space<vmem>>, vector<8x16xf32>,
    return
  }
  func.func @transform_0(%arg0: i32) -> (i32, i32, i32) {
    %c0_i32 = arith.constant 0 : i32
    %c0_i32_0 = arith.constant 0 : i32
    %c0_i32_1 = arith.constant 0 : i32
    return %c0_i32, %arg0, %c0_i32_0 : i32, i32, i32
  }
  func.func @transform_1(%arg0: i32) -> (i32, i32) {
    %c0_i32 = arith.constant 0 : i32
    %c0_i32_0 = arith.constant 0 : i32
    %c0_i32_1 = arith.constant 0 : i32
    return %c0_i32, %c0_i32_0 : i32, i32
  }
  func.func @transform_2(%arg0: i32) -> (i32, i32) {
    %c0_i32 = arith.constant 0 : i32
    %c0_i32_0 = arith.constant 0 : i32
    return %arg0, %c0_i32 : i32, i32
  }
}

</mosaic_0001>

<llo_original>
// kernel: forward.1
$region0: #{forward.1}
  #allocation0 [shape = 'u32[]', space=smem, size = 0x4, offset = 0x4, fixed_abs, tag = 'smem constant byte address 0x4 - core index']
  #allocation1 [shape = 'u32[144,128]{1,0:T(1,128)}', space=vmem, size = 0x12000, scoped, tag = 'internal scratch']
  %s0 = inlined_call_operand.vmem [shape: f32[8,8,48], index: 0, kind: input, shape index: {}]
  %s1 = inlined_call_operand.hbm [shape: bf16[1344,256], index: 1, kind: input, shape index: {}]
  %s2 = inlined_call_operand.vmem [shape: f32[8,256], index: 2, kind: output, shape index: {}]
  %s3 = sld [smem:[#allocation0]]
  $region22: #{forward.1} parent=0
    _
  %s5 = ssub.s32 1, %s3
  %s6 = scalar_select 0, %s5, %s3
  $region1: #{forward.1} parent=0
    #allocation2 [shape = 'u8[688128]{0}', space=vmem, size = 0xa8000, scoped, tag = 'input window, operand 1, single buffered']
    #allocation3 [shape = 's32[1]{0}', space=sflag, size = 0x4, scoped, tag = 'scoped memory for forward.1']
    %7 = vsyncpa [#allocation3], 0
    // Predicated region
    $region2: #{forward.1} parent=1 // pred_check
      _
    $region3: #{forward.1} parent=1 // pred_check_branch
      %9 = sbr.rel (0) target = $region5
    $region4: #{forward.1} parent=1 // pred_region
      _
    $region5: #{forward.1} parent=1 // pred_fallthru
      _
    // Predicated region
    $region6: #{forward.1} parent=1 // pred_check
      _
    $region7: #{forward.1} parent=1 // pred_check_branch
      %11 = sbr.rel (0) target = $region9
    $region8: #{forward.1} parent=1 // pred_region
      %s13 = ssub.s32 21504, 21504
      %14 = vsyncadd [#allocation3], %s13
      %s15 = sshll.u32 [#allocation2], 4
      %s16 = int_to_ptr.vmem [resolvable:$true] %s15
      %21 = dma.hbm_to_vmem [thread:$0]  %s1, 21504, %s16, [#allocation3], 128, 128, 8
    $region9: #{forward.1} parent=1 // pred_fallthru
      _
    // Predicated region
    $region10: #{forward.1} parent=1 // pred_check
      _
    $region11: #{forward.1} parent=1 // pred_check_branch
      %23 = sbr.rel (0) target = $region13
    $region12: #{forward.1} parent=1 // pred_region
      %24 = dma.done [#allocation3], 21504
    $region13: #{forward.1} parent=1 // pred_fallthru
      _
    %26 = vst [vmem:[%s2] sm:$0xff] 0.0
    %27 = vst [vmem:[%s2 + $0x8] sm:$0xff] 0.0
    %v28 = vld [vmem:[%s0] sm:$0xff]
    %v29 = vld [vmem:[%s0 + $0x8] sm:$0xff]
    %v30 = vld [vmem:[%s0 + $0x10] sm:$0xff]
    %v31 = vld [vmem:[%s0 + $0x18] sm:$0xff]
    %v32 = vld [vmem:[%s0 + $0x20] sm:$0xff]
    %v33 = vld [vmem:[%s0 + $0x28] sm:$0xff]
    %v34 = vld [vmem:[%s0 + $0x30] sm:$0xff]
    %v35 = vld [vmem:[%s0 + $0x38] sm:$0xff]
    %v36 = vld [vmem:[#allocation2] sm:$0xf]
    %v37 = vld [vmem:[#allocation2 + $0x8] sm:$0xf]
    %v38 = vld [vmem:[#allocation2 + $0x10] sm:$0xf]
    %v39 = vld [vmem:[#allocation2 + $0x18] sm:$0xf]
    %v40 = vld [vmem:[#allocation2 + $0x20] sm:$0xf]
    %v41 = vld [vmem:[#allocation2 + $0x28] sm:$0xf]
    %v42 = vpack.c.bf16 %v29, %v28
    %v43 = vpack.c.bf16 %v31, %v30
    %v44 = vpack.c.bf16 %v33, %v32
    %v45 = vpack.c.bf16 %v35, %v34
    %v46 = vld [vmem:[#allocation2 + $0xa0] sm:$0x1]
    %v47 = vunpack.c.l.bf16 %v46
    %v48 = vlaneseq
    %v49 = vshrl.u32 %v48, 7
    %v50 = vsub.s32 0, %v49
    %v51 = vrot.slane %v47, %v50
    %v58 = vunpack.c.l.b16 %v36
    %v59 = vunpack.c.l.b16 %v37
    %v60 = vunpack.c.l.b16 %v38
    %v61 = vunpack.c.l.b16 %v39
    %v62 = vunpack.c.l.b16 %v40
    %v63 = vunpack.c.l.b16 %v41
    %v64 = vpack.c.b16 %v59, %v58
    %v65 = vpack.c.b16 %v61, %v60
    %v66 = vpack.c.b16 %v63, %v62
    %vm70 = vcmask 392192
    %v72 = vsel %vm70, %v42, 0
    %v75 = vsel %vm70, %v43, 0
    %v78 = vsel %vm70, %v44, 0
    %v81 = vsel %vm70, %v45, 0
    %83 = vmatprep.subr.bf16.mxu0 0
    %84 = vmatpush1.bf16.msra.mxu0 %v64
    %85 = vmatprep.subr.bf16.mxu0 0
    %86 = vmatpush1.bf16.msra.mxu0 %v65
    %87 = vmatprep.subr.bf16.mxu0 0
    %88 = vmatpush1.bf16.msra.mxu0 %v66
    %89 = vmatprep.subr.bf16.mxu0 0
    %90 = vmatpush1.bf16.msra.mxu0 0
    %91 = vmatprep.subr.bf16.mxu0 0
    %92 = vmatpush1.bf16.msra.mxu0 0
    %93 = vmatprep.subr.bf16.mxu0 0
    %94 = vmatpush1.bf16.msra.mxu0 0
    %95 = vmatprep.subr.bf16.mxu0 0
    %96 = vmatpush1.bf16.msra.mxu0 0
    %97 = vmatprep.subr.bf16.mxu0 0
    %98 = vmatpush1.bf16.msra.mxu0 0
    %99 = vmatprep.subr.bf16.mxu0 0
    %100 = vmatpush1.bf16.msra.mxu0 0
    %101 = vmatprep.subr.bf16.mxu0 0
    %102 = vmatpush1.bf16.msra.mxu0 0
    %103 = vmatprep.subr.bf16.mxu0 0
    %104 = vmatpush1.bf16.msra.mxu0 0
    %105 = vmatprep.subr.bf16.mxu0 0
    %106 = vmatpush1.bf16.msra.mxu0 0
    %107 = vmatprep.subr.bf16.mxu0 0
    %108 = vmatpush1.bf16.msra.mxu0 0
    %109 = vmatprep.subr.bf16.mxu0 0
    %110 = vmatpush1.bf16.msra.mxu0 0
    %111 = vmatprep.subr.bf16.mxu0 0
    %112 = vmatpush1.bf16.msra.mxu0 0
    %113 = vmatprep.subr.bf16.mxu0 0
    %114 = vmatpush1.bf16.msra.mxu0 0
    %115 = vmatprep.mubr.bf16.mxu0 0
    %116 = vmatmul.mubr.bf16.gmra.mrb[0].mxu0 %v72
    %v117 = vpop.f32.mrb[0].mxu0
    %v118 = vadd.f32 %v51, %v117
    %v119 = vpop.f32.mrb[0].mxu0
    %v120 = vpop.f32.mrb[0].mxu0
    %v121 = vadd.f32 %v51, %v120
    %v122 = vpop.f32.mrb[0].mxu0
    %123 = vmatprep.mubr.bf16.mxu0 0
    %124 = vmatmul.mubr.bf16.gmra.mrb[0].mxu0 %v75
    %v125 = vpop.f32.mrb[0].mxu0
    %v126 = vadd.f32 %v51, %v125
    %v127 = vpop.f32.mrb[0].mxu0
    %v128 = vpop.f32.mrb[0].mxu0
    %v129 = vadd.f32 %v51, %v128
    %v130 = vpop.f32.mrb[0].mxu0
    %131 = vmatprep.mubr.bf16.mxu0 0
    %132 = vmatmul.mubr.bf16.gmra.mrb[0].mxu0 %v78
    %v133 = vpop.f32.mrb[0].mxu0
    %v134 = vadd.f32 %v51, %v133
    %v135 = vpop.f32.mrb[0].mxu0
    %v136 = vpop.f32.mrb[0].mxu0
    %v137 = vadd.f32 %v51, %v136
    %v138 = vpop.f32.mrb[0].mxu0
    %139 = vmatprep.mubr.bf16.mxu0 0
    %140 = vmatmul.mubr.bf16.gmra.mrb[0].mxu0 %v81
    %v141 = vpop.f32.mrb[0].mxu0
    %v142 = vadd.f32 %v51, %v141
    %v143 = vpop.f32.mrb[0].mxu0
    %v144 = vpop.f32.mrb[0].mxu0
    %v145 = vadd.f32 %v51, %v144
    %v146 = vpop.f32.mrb[0].mxu0
    %147 = vdwg.mxu0
    %v148 = vld [vmem:[#allocation2 + $0x30] sm:$0xf]
    %v149 = vld [vmem:[#allocation2 + $0x38] sm:$0xf]
    %v150 = vld [vmem:[#allocation2 + $0x40] sm:$0xf]
    %v151 = vld [vmem:[#allocation2 + $0x48] sm:$0xf]
    %v152 = vld [vmem:[#allocation2 + $0x50] sm:$0xf]
    %v153 = vld [vmem:[#allocation2 + $0x58] sm:$0xf]
    %v154 = vld [vmem:[#allocation2 + $0xb0] sm:$0x1]
    %v155 = vunpack.c.l.bf16 %v154
    %v156 = vlaneseq
    %v157 = vshrl.u32 %v156, 7
    %v158 = vsub.s32 0, %v157
    %v159 = vrot.slane %v155, %v158
    %v166 = vunpack.c.l.b16 %v148
    %v167 = vunpack.c.l.b16 %v149
    %v168 = vunpack.c.l.b16 %v150
    %v169 = vunpack.c.l.b16 %v151
    %v170 = vunpack.c.l.b16 %v152
    %v171 = vunpack.c.l.b16 %v153
    %v172 = vpack.c.b16 %v167, %v166
    %v173 = vpack.c.b16 %v169, %v168
    %v174 = vpack.c.b16 %v171, %v170
    %178 = vmatprep.subr.bf16.mxu0 0
    %179 = vmatpush1.bf16.msra.mxu0 %v172
    %180 = vmatprep.subr.bf16.mxu0 0
    %181 = vmatpush1.bf16.msra.mxu0 %v173
    %182 = vmatprep.subr.bf16.mxu0 0
    %183 = vmatpush1.bf16.msra.mxu0 %v174
    %184 = vmatprep.subr.bf16.mxu0 0
    %185 = vmatpush1.bf16.msra.mxu0 0
    %186 = vmatprep.subr.bf16.mxu0 0
    %187 = vmatpush1.bf16.msra.mxu0 0
    %188 = vmatprep.subr.bf16.mxu0 0
    %189 = vmatpush1.bf16.msra.mxu0 0
    %190 = vmatprep.subr.bf16.mxu0 0
    %191 = vmatpush1.bf16.msra.mxu0 0
    %192 = vmatprep.subr.bf16.mxu0 0
    %193 = vmatpush1.bf16.msra.mxu0 0
    %194 = vmatprep.subr.bf16.mxu0 0
    %195 = vmatpush1.bf16.msra.mxu0 0
    %196 = vmatprep.subr.bf16.mxu0 0
    %197 = vmatpush1.bf16.msra.mxu0 0
    %198 = vmatprep.subr.bf16.mxu0 0
    %199 = vmatpush1.bf16.msra.mxu0 0
    %200 = vmatprep.subr.bf16.mxu0 0
    %201 = vmatpush1.bf16.msra.mxu0 0
    %202 = vmatprep.subr.bf16.mxu0 0
    %203 = vmatpush1.bf16.msra.mxu0 0
    %204 = vmatprep.subr.bf16.mxu0 0
    %205 = vmatpush1.bf16.msra.mxu0 0
    %206 = vmatprep.subr.bf16.mxu0 0
    %207 = vmatpush1.bf16.msra.mxu0 0
    %208 = vmatprep.subr.bf16.mxu0 0
    %209 = vmatpush1.bf16.msra.mxu0 0
    %210 = vmatprep.mubr.bf16.mxu0 0
    %211 = vmatmul.mubr.bf16.gmra.mrb[0].mxu0 %v72
    %v212 = vpop.f32.mrb[0].mxu0
    %v213 = vadd.f32 %v159, %v212
    %v214 = vpop.f32.mrb[0].mxu0
    %v215 = vpop.f32.mrb[0].mxu0
    %v216 = vadd.f32 %v159, %v215
    %v217 = vpop.f32.mrb[0].mxu0
    %218 = vmatprep.mubr.bf16.mxu0 0
    %219 = vmatmul.mubr.bf16.gmra.mrb[0].mxu0 %v75
    %v220 = vpop.f32.mrb[0].mxu0
    %v221 = vadd.f32 %v159, %v220
    %v222 = vpop.f32.mrb[0].mxu0
    %v223 = vpop.f32.mrb[0].mxu0
    %v224 = vadd.f32 %v159, %v223
    %v225 = vpop.f32.mrb[0].mxu0
    %226 = vmatprep.mubr.bf16.mxu0 0
    %227 = vmatmul.mubr.bf16.gmra.mrb[0].mxu0 %v78
    %v228 = vpop.f32.mrb[0].mxu0
    %v229 = vadd.f32 %v159, %v228
    %v230 = vpop.f32.mrb[0].mxu0
    %v231 = vpop.f32.mrb[0].mxu0
    %v232 = vadd.f32 %v159, %v231
    %v233 = vpop.f32.mrb[0].mxu0
    %234 = vmatprep.mubr.bf16.mxu0 0
    %235 = vmatmul.mubr.bf16.gmra.mrb[0].mxu0 %v81
    %v236 = vpop.f32.mrb[0].mxu0
    %v237 = vadd.f32 %v159, %v236
    %v238 = vpop.f32.mrb[0].mxu0
    %v239 = vpop.f32.mrb[0].mxu0
    %v240 = vadd.f32 %v159, %v239
    %v241 = vpop.f32.mrb[0].mxu0
    %242 = vdwg.mxu0
    %v243 = vld [vmem:[#allocation2 + $0x60] sm:$0xf]
    %v244 = vld [vmem:[#allocation2 + $0x68] sm:$0xf]
    %v245 = vld [vmem:[#allocation2 + $0x70] sm:$0xf]
    %v246 = vld [vmem:[#allocation2 + $0x78] sm:$0xf]
    %v251 = vunpack.c.l.b16 %v243
    %v252 = vunpack.c.l.b16 %v244
    %v253 = vunpack.c.l.b16 %v245
    %v254 = vunpack.c.l.b16 %v246
    %v255 = vpack.c.b16 %v252, %v251
    %v256 = vpack.c.b16 %v254, %v253
    %vm259 = vcmask 261120
    %v261 = vsel %vm259, 0, 0
    %263 = vmatprep.subr.bf16.mxu0 0
    %264 = vmatpush1.bf16.msra.mxu0 %v255
    %265 = vmatprep.subr.bf16.mxu0 0
    %266 = vmatpush1.bf16.msra.mxu0 %v256
    %267 = vmatprep.subr.bf16.mxu0 0
    %268 = vmatpush1.bf16.msra.mxu0 0
    %269 = vmatprep.subr.bf16.mxu0 0
    %270 = vmatpush1.bf16.msra.mxu0 0
    %271 = vmatprep.subr.bf16.mxu0 0
    %272 = vmatpush1.bf16.msra.mxu0 0
    %273 = vmatprep.subr.bf16.mxu0 0
    %274 = vmatpush1.bf16.msra.mxu0 0
    %275 = vmatprep.subr.bf16.mxu0 0
    %276 = vmatpush1.bf16.msra.mxu0 0
    %277 = vmatprep.subr.bf16.mxu0 0
    %278 = vmatpush1.bf16.msra.mxu0 0
    %279 = vmatprep.subr.bf16.mxu0 0
    %280 = vmatpush1.bf16.msra.mxu0 0
    %281 = vmatprep.subr.bf16.mxu0 0
    %282 = vmatpush1.bf16.msra.mxu0 0
    %283 = vmatprep.subr.bf16.mxu0 0
    %284 = vmatpush1.bf16.msra.mxu0 0
    %285 = vmatprep.subr.bf16.mxu0 0
    %286 = vmatpush1.bf16.msra.mxu0 0
    %287 = vmatprep.subr.bf16.mxu0 0
    %288 = vmatpush1.bf16.msra.mxu0 0
    %289 = vmatprep.subr.bf16.mxu0 0
    %290 = vmatpush1.bf16.msra.mxu0 0
    %291 = vmatprep.subr.bf16.mxu0 0
    %292 = vmatpush1.bf16.msra.mxu0 0
    %293 = vmatprep.subr.bf16.mxu0 0
    %294 = vmatpush1.bf16.msra.mxu0 0
    %295 = vmatprep.mubr.bf16.mxu0 0
    %296 = vmatmul.mubr.bf16.gmra.mrb[0].mxu0 %v261
    %v297 = vpop.f32.mrb[0].mxu0
    %v298 = vadd.f32 0.0, %v297
    %v299 = vpop.f32.mrb[0].mxu0
    %v300 = vpop.f32.mrb[0].mxu0
    %v301 = vpop.f32.mrb[0].mxu0
    %302 = vdwg.mxu0
    %v303 = vadd.f32 %v118, %v298
    %v304 = vxor.u32 %v303, 2147483648
    %v305 = vmul.f32 %v304, 1.442695
    %v306 = vpow.pop %v305
    %v307 = vadd.f32 %v306, 1.0
    %v308 = vrcp.pop %v307
    %v309 = vmul.f32 1.0, %v308
    %v310 = vtanh.pop %v303
    %v311 = vmul.f32 %v309, 0.0
    %313 = vrot.lane.b32.xlu0 %v310, 64
    %v314 = vpop.permute.xlu0 %313
    %v316 = vmul.f32 %v309, %v314
    %318 = vrot.lane.b32.xlu0 %v316, 32
    %v319 = vpop.permute.xlu0 %318
    %v321 = vadd.f32 %v311, %v319
    %v322 = vtanh.pop %v321
    %324 = vrot.lane.b32.xlu0 %v322, 64
    %v325 = vpop.permute.xlu0 %324
    %v327 = vmul.f32 %v309, %v325
    %v328 = vld [vmem:[#allocation2 + $0x80] sm:$0xf]
    %v329 = vld [vmem:[#allocation2 + $0x88] sm:$0xf]
    %v330 = vld [vmem:[#allocation2 + $0x90] sm:$0xf]
    %v331 = vld [vmem:[#allocation2 + $0x98] sm:$0xf]
    %v336 = vunpack.c.l.b16 %v328
    %v337 = vunpack.c.l.b16 %v329
    %v338 = vunpack.c.l.b16 %v330
    %v339 = vunpack.c.l.b16 %v331
    %v340 = vpack.c.b16 %v337, %v336
    %v341 = vpack.c.b16 %v339, %v338
    %344 = vmatprep.subr.bf16.mxu0 0
    %345 = vmatpush1.bf16.msra.mxu0 %v340
    %346 = vmatprep.subr.bf16.mxu0 0
    %347 = vmatpush1.bf16.msra.mxu0 %v341
    %348 = vmatprep.subr.bf16.mxu0 0
    %349 = vmatpush1.bf16.msra.mxu0 0
    %350 = vmatprep.subr.bf16.mxu0 0
    %351 = vmatpush1.bf16.msra.mxu0 0
    %352 = vmatprep.subr.bf16.mxu0 0
    %353 = vmatpush1.bf16.msra.mxu0 0
    %354 = vmatprep.subr.bf16.mxu0 0
    %355 = vmatpush1.bf16.msra.mxu0 0
    %356 = vmatprep.subr.bf16.mxu0 0
    %357 = vmatpush1.bf16.msra.mxu0 0
    %358 = vmatprep.subr.bf16.mxu0 0
    %359 = vmatpush1.bf16.msra.mxu0 0
    %360 = vmatprep.subr.bf16.mxu0 0
    %361 = vmatpush1.bf16.msra.mxu0 0
    %362 = vmatprep.subr.bf16.mxu0 0
    %363 = vmatpush1.bf16.msra.mxu0 0
    %364 = vmatprep.subr.bf16.mxu0 0
    %365 = vmatpush1.bf16.msra.mxu0 0
    %366 = vmatprep.subr.bf16.mxu0 0
    %367 = vmatpush1.bf16.msra.mxu0 0
    %368 = vmatprep.subr.bf16.mxu0 0
    %369 = vmatpush1.bf16.msra.mxu0 0
    %370 = vmatprep.subr.bf16.mxu0 0
    %371 = vmatpush1.bf16.msra.mxu0 0
    %372 = vmatprep.subr.bf16.mxu0 0
    %373 = vmatpush1.bf16.msra.mxu0 0
    %374 = vmatprep.subr.bf16.mxu0 0
    %375 = vmatpush1.bf16.msra.mxu0 0
    %376 = vmatprep.mubr.bf16.mxu0 0
    %377 = vmatmul.mubr.bf16.gmra.mrb[0].mxu0 %v261
    %v378 = vpop.f32.mrb[0].mxu0
    %v379 = vadd.f32 0.0, %v378
    %v380 = vpop.f32.mrb[0].mxu0
    %v381 = vpop.f32.mrb[0].mxu0
    %v382 = vpop.f32.mrb[0].mxu0
    %383 = vdwg.mxu0
    %v384 = vadd.f32 %v240, %v379
    %v385 = vxor.u32 %v384, 2147483648
    %v386 = vmul.f32 %v385, 1.442695
    %v387 = vpow.pop %v386
    %v388 = vadd.f32 %v387, 1.0
    %v389 = vrcp.pop %v388
    %v390 = vmul.f32 1.0, %v389
    %v391 = vtanh.pop %v384
    %v392 = vmul.f32 %v390, 0.0
    %394 = vrot.lane.b32.xlu0 %v391, 64
    %v395 = vpop.permute.xlu0 %394
    %v397 = vmul.f32 %v390, %v395
    %399 = vrot.lane.b32.xlu0 %v397, 32
    %v400 = vpop.permute.xlu0 %399
    %v402 = vadd.f32 %v392, %v400
    %v403 = vtanh.pop %v402
    %405 = vrot.lane.b32.xlu0 %v403, 64
    %v406 = vpop.permute.xlu0 %405
    %v408 = vmul.f32 %v390, %v406
    %v409 = vpack.c.bf16 %v327, %v327
    %411 = vrot.lane.b32.xlu0 %v409, 32
    %v412 = vpop.permute.xlu0 %411
    %v414 = vsel %vm259, %v412, 0
    %416 = vmatprep.subr.bf16.mxu0 0
    %417 = vmatpush1.bf16.msra.mxu0 %v255
    %418 = vmatprep.subr.bf16.mxu0 0
    %419 = vmatpush1.bf16.msra.mxu0 %v256
    %420 = vmatprep.subr.bf16.mxu0 0
    %421 = vmatpush1.bf16.msra.mxu0 0
    %422 = vmatprep.subr.bf16.mxu0 0
    %423 = vmatpush1.bf16.msra.mxu0 0
    %424 = vmatprep.subr.bf16.mxu0 0
    %425 = vmatpush1.bf16.msra.mxu0 0
    %426 = vmatprep.subr.bf16.mxu0 0
    %427 = vmatpush1.bf16.msra.mxu0 0
    %428 = vmatprep.subr.bf16.mxu0 0
    %429 = vmatpush1.bf16.msra.mxu0 0
    %430 = vmatprep.subr.bf16.mxu0 0
    %431 = vmatpush1.bf16.msra.mxu0 0
    %432 = vmatprep.subr.bf16.mxu0 0
    %433 = vmatpush1.bf16.msra.mxu0 0
    %434 = vmatprep.subr.bf16.mxu0 0
    %435 = vmatpush1.bf16.msra.mxu0 0
    %436 = vmatprep.subr.bf16.mxu0 0
    %437 = vmatpush1.bf16.msra.mxu0 0
    %438 = vmatprep.subr.bf16.mxu0 0
    %439 = vmatpush1.bf16.msra.mxu0 0
    %440 = vmatprep.subr.bf16.mxu0 0
    %441 = vmatpush1.bf16.msra.mxu0 0
    %442 = vmatprep.subr.bf16.mxu0 0
    %443 = vmatpush1.bf16.msra.mxu0 0
    %444 = vmatprep.subr.bf16.mxu0 0
    %445 = vmatpush1.bf16.msra.mxu0 0
    %446 = vmatprep.subr.bf16.mxu0 0
    %447 = vmatpush1.bf16.msra.mxu0 0
    %448 = vmatprep.mubr.bf16.mxu0 0
    %449 = vmatmul.mubr.bf16.gmra.mrb[0].mxu0 %v414
    %v450 = vpop.f32.mrb[0].mxu0
    %v451 = vadd.f32 0.0, %v450
    %v452 = vpop.f32.mrb[0].mxu0
    %v453 = vpop.f32.mrb[0].mxu0
    %v454 = vpop.f32.mrb[0].mxu0
    %455 = vdwg.mxu0
    %v456 = vadd.f32 %v121, %v451
    %v457 = vxor.u32 %v456, 2147483648
    %v458 = vmul.f32 %v457, 1.442695
    %v459 = vpow.pop %v458
    %v460 = vadd.f32 %v459, 1.0
    %v461 = vrcp.pop %v460
    %v462 = vmul.f32 1.0, %v461
    %v463 = vtanh.pop %v456
    %v464 = vmul.f32 %v462, %v321
    %466 = vrot.lane.b32.xlu0 %v463, 64
    %v467 = vpop.permute.xlu0 %466
    %v469 = vmul.f32 %v462, %v467
    %471 = vrot.lane.b32.xlu0 %v469, 32
    %v472 = vpop.permute.xlu0 %471
    %v474 = vadd.f32 %v464, %v472
    %v475 = vtanh.pop %v474
    %477 = vrot.lane.b32.xlu0 %v475, 64
    %v478 = vpop.permute.xlu0 %477
    %v480 = vmul.f32 %v462, %v478
    %v481 = vpack.c.bf16 %v408, %v408
    %483 = vrot.lane.b32.xlu0 %v481, 32
    %v484 = vpop.permute.xlu0 %483
    %v486 = vsel %vm259, %v484, 0
    %488 = vmatprep.subr.bf16.mxu0 0
    %489 = vmatpush1.bf16.msra.mxu0 %v340
    %490 = vmatprep.subr.bf16.mxu0 0
    %491 = vmatpush1.bf16.msra.mxu0 %v341
    %492 = vmatprep.subr.bf16.mxu0 0
    %493 = vmatpush1.bf16.msra.mxu0 0
    %494 = vmatprep.subr.bf16.mxu0 0
    %495 = vmatpush1.bf16.msra.mxu0 0
    %496 = vmatprep.subr.bf16.mxu0 0
    %497 = vmatpush1.bf16.msra.mxu0 0
    %498 = vmatprep.subr.bf16.mxu0 0
    %499 = vmatpush1.bf16.msra.mxu0 0
    %500 = vmatprep.subr.bf16.mxu0 0
    %501 = vmatpush1.bf16.msra.mxu0 0
    %502 = vmatprep.subr.bf16.mxu0 0
    %503 = vmatpush1.bf16.msra.mxu0 0
    %504 = vmatprep.subr.bf16.mxu0 0
    %505 = vmatpush1.bf16.msra.mxu0 0
    %506 = vmatprep.subr.bf16.mxu0 0
    %507 = vmatpush1.bf16.msra.mxu0 0
    %508 = vmatprep.subr.bf16.mxu0 0
    %509 = vmatpush1.bf16.msra.mxu0 0
    %510 = vmatprep.subr.bf16.mxu0 0
    %511 = vmatpush1.bf16.msra.mxu0 0
    %512 = vmatprep.subr.bf16.mxu0 0
    %513 = vmatpush1.bf16.msra.mxu0 0
    %514 = vmatprep.subr.bf16.mxu0 0
    %515 = vmatpush1.bf16.msra.mxu0 0
    %516 = vmatprep.subr.bf16.mxu0 0
    %517 = vmatpush1.bf16.msra.mxu0 0
    %518 = vmatprep.subr.bf16.mxu0 0
    %519 = vmatpush1.bf16.msra.mxu0 0
    %520 = vmatprep.mubr.bf16.mxu0 0
    %521 = vmatmul.mubr.bf16.gmra.mrb[0].mxu0 %v486
    %v522 = vpop.f32.mrb[0].mxu0
    %v523 = vadd.f32 0.0, %v522
    %v524 = vpop.f32.mrb[0].mxu0
    %v525 = vpop.f32.mrb[0].mxu0
    %v526 = vpop.f32.mrb[0].mxu0
    %527 = vdwg.mxu0
    %v528 = vadd.f32 %v237, %v523
    %v529 = vxor.u32 %v528, 2147483648
    %v530 = vmul.f32 %v529, 1.442695
    %v531 = vpow.pop %v530
    %v532 = vadd.f32 %v531, 1.0
    %v533 = vrcp.pop %v532
    %v534 = vmul.f32 1.0, %v533
    %v535 = vtanh.pop %v528
    %v536 = vmul.f32 %v534, %v402
    %538 = vrot.lane.b32.xlu0 %v535, 64
    %v539 = vpop.permute.xlu0 %538
    %v541 = vmul.f32 %v534, %v539
    %543 = vrot.lane.b32.xlu0 %v541, 32
    %v544 = vpop.permute.xlu0 %543
    %v546 = vadd.f32 %v536, %v544
    %v547 = vtanh.pop %v546
    %549 = vrot.lane.b32.xlu0 %v547, 64
    %v550 = vpop.permute.xlu0 %549
    %v552 = vmul.f32 %v534, %v550
    %v553 = vpack.c.bf16 %v480, %v480
    %555 = vrot.lane.b32.xlu0 %v553, 32
    %v556 = vpop.permute.xlu0 %555
    %v558 = vsel %vm259, %v556, 0
    %560 = vmatprep.subr.bf16.mxu0 0
    %561 = vmatpush1.bf16.msra.mxu0 %v255
    %562 = vmatprep.subr.bf16.mxu0 0
    %563 = vmatpush1.bf16.msra.mxu0 %v256
    %564 = vmatprep.subr.bf16.mxu0 0
    %565 = vmatpush1.bf16.msra.mxu0 0
    %566 = vmatprep.subr.bf16.mxu0 0
    %567 = vmatpush1.bf16.msra.mxu0 0
    %568 = vmatprep.subr.bf16.mxu0 0
    %569 = vmatpush1.bf16.msra.mxu0 0
    %570 = vmatprep.subr.bf16.mxu0 0
    %571 = vmatpush1.bf16.msra.mxu0 0
    %572 = vmatprep.subr.bf16.mxu0 0
    %573 = vmatpush1.bf16.msra.mxu0 0
    %574 = vmatprep.subr.bf16.mxu0 0
    %575 = vmatpush1.bf16.msra.mxu0 0
    %576 = vmatprep.subr.bf16.mxu0 0
    %577 = vmatpush1.bf16.msra.mxu0 0
    %578 = vmatprep.subr.bf16.mxu0 0
    %579 = vmatpush1.bf16.msra.mxu0 0
    %580 = vmatprep.subr.bf16.mxu0 0
    %581 = vmatpush1.bf16.msra.mxu0 0
    %582 = vmatprep.subr.bf16.mxu0 0
    %583 = vmatpush1.bf16.msra.mxu0 0
    %584 = vmatprep.subr.bf16.mxu0 0
    %585 = vmatpush1.bf16.msra.mxu0 0
    %586 = vmatprep.subr.bf16.mxu0 0
    %587 = vmatpush1.bf16.msra.mxu0 0
    %588 = vmatprep.subr.bf16.mxu0 0
    %589 = vmatpush1.bf16.msra.mxu0 0
    %590 = vmatprep.subr.bf16.mxu0 0
    %591 = vmatpush1.bf16.msra.mxu0 0
    %592 = vmatprep.mubr.bf16.mxu0 0
    %593 = vmatmul.mubr.bf16.gmra.mrb[0].mxu0 %v558
    %v594 = vpop.f32.mrb[0].mxu0
    %v595 = vadd.f32 0.0, %v594
    %v596 = vpop.f32.mrb[0].mxu0
    %v597 = vpop.f32.mrb[0].mxu0
    %v598 = vpop.f32.mrb[0].mxu0
    %599 = vdwg.mxu0
    %v600 = vadd.f32 %v126, %v595
    %v601 = vxor.u32 %v600, 2147483648
    %v602 = vmul.f32 %v601, 1.442695
    %v603 = vpow.pop %v602
    %v604 = vadd.f32 %v603, 1.0
    %v605 = vrcp.pop %v604
    %v606 = vmul.f32 1.0, %v605
    %v607 = vtanh.pop %v600
    %v608 = vmul.f32 %v606, %v474
    %610 = vrot.lane.b32.xlu0 %v607, 64
    %v611 = vpop.permute.xlu0 %610
    %v613 = vmul.f32 %v606, %v611
    %615 = vrot.lane.b32.xlu0 %v613, 32
    %v616 = vpop.permute.xlu0 %615
    %v618 = vadd.f32 %v608, %v616
    %v619 = vtanh.pop %v618
    %621 = vrot.lane.b32.xlu0 %v619, 64
    %v622 = vpop.permute.xlu0 %621
    %v624 = vmul.f32 %v606, %v622
    %v625 = vpack.c.bf16 %v552, %v552
    %627 = vrot.lane.b32.xlu0 %v625, 32
    %v628 = vpop.permute.xlu0 %627
    %v630 = vsel %vm259, %v628, 0
    %632 = vmatprep.subr.bf16.mxu0 0
    %633 = vmatpush1.bf16.msra.mxu0 %v340
    %634 = vmatprep.subr.bf16.mxu0 0
    %635 = vmatpush1.bf16.msra.mxu0 %v341
    %636 = vmatprep.subr.bf16.mxu0 0
    %637 = vmatpush1.bf16.msra.mxu0 0
    %638 = vmatprep.subr.bf16.mxu0 0
    %639 = vmatpush1.bf16.msra.mxu0 0
    %640 = vmatprep.subr.bf16.mxu0 0
    %641 = vmatpush1.bf16.msra.mxu0 0
    %642 = vmatprep.subr.bf16.mxu0 0
    %643 = vmatpush1.bf16.msra.mxu0 0
    %644 = vmatprep.subr.bf16.mxu0 0
    %645 = vmatpush1.bf16.msra.mxu0 0
    %646 = vmatprep.subr.bf16.mxu0 0
    %647 = vmatpush1.bf16.msra.mxu0 0
    %648 = vmatprep.subr.bf16.mxu0 0
    %649 = vmatpush1.bf16.msra.mxu0 0
    %650 = vmatprep.subr.bf16.mxu0 0
    %651 = vmatpush1.bf16.msra.mxu0 0
    %652 = vmatprep.subr.bf16.mxu0 0
    %653 = vmatpush1.bf16.msra.mxu0 0
    %654 = vmatprep.subr.bf16.mxu0 0
    %655 = vmatpush1.bf16.msra.mxu0 0
    %656 = vmatprep.subr.bf16.mxu0 0
    %657 = vmatpush1.bf16.msra.mxu0 0
    %658 = vmatprep.subr.bf16.mxu0 0
    %659 = vmatpush1.bf16.msra.mxu0 0
    %660 = vmatprep.subr.bf16.mxu0 0
    %661 = vmatpush1.bf16.msra.mxu0 0
    %662 = vmatprep.subr.bf16.mxu0 0
    %663 = vmatpush1.bf16.msra.mxu0 0
    %664 = vmatprep.mubr.bf16.mxu0 0
    %665 = vmatmul.mubr.bf16.gmra.mrb[0].mxu0 %v630
    %v666 = vpop.f32.mrb[0].mxu0
    %v667 = vadd.f32 0.0, %v666
    %v668 = vpop.f32.mrb[0].mxu0
    %v669 = vpop.f32.mrb[0].mxu0
    %v670 = vpop.f32.mrb[0].mxu0
    %671 = vdwg.mxu0
    %v672 = vadd.f32 %v232, %v667
    %v673 = vxor.u32 %v672, 2147483648
    %v674 = vmul.f32 %v673, 1.442695
    %v675 = vpow.pop %v674
    %v676 = vadd.f32 %v675, 1.0
    %v677 = vrcp.pop %v676
    %v678 = vmul.f32 1.0, %v677
    %v679 = vtanh.pop %v672
    %v680 = vmul.f32 %v678, %v546
    %682 = vrot.lane.b32.xlu0 %v679, 64
    %v683 = vpop.permute.xlu0 %682
    %v685 = vmul.f32 %v678, %v683
    %687 = vrot.lane.b32.xlu0 %v685, 32
    %v688 = vpop.permute.xlu0 %687
    %v690 = vadd.f32 %v680, %v688
    %v691 = vtanh.pop %v690
    %693 = vrot.lane.b32.xlu0 %v691, 64
    %v694 = vpop.permute.xlu0 %693
    %v696 = vmul.f32 %v678, %v694
    %v697 = vpack.c.bf16 %v624, %v624
    %699 = vrot.lane.b32.xlu0 %v697, 32
    %v700 = vpop.permute.xlu0 %699
    %v702 = vsel %vm259, %v700, 0
    %704 = vmatprep.subr.bf16.mxu0 0
    %705 = vmatpush1.bf16.msra.mxu0 %v255
    %706 = vmatprep.subr.bf16.mxu0 0
    %707 = vmatpush1.bf16.msra.mxu0 %v256
    %708 = vmatprep.subr.bf16.mxu0 0
    %709 = vmatpush1.bf16.msra.mxu0 0
    %710 = vmatprep.subr.bf16.mxu0 0
    %711 = vmatpush1.bf16.msra.mxu0 0
    %712 = vmatprep.subr.bf16.mxu0 0
    %713 = vmatpush1.bf16.msra.mxu0 0
    %714 = vmatprep.subr.bf16.mxu0 0
    %715 = vmatpush1.bf16.msra.mxu0 0
    %716 = vmatprep.subr.bf16.mxu0 0
    %717 = vmatpush1.bf16.msra.mxu0 0
    %718 = vmatprep.subr.bf16.mxu0 0
    %719 = vmatpush1.bf16.msra.mxu0 0
    %720 = vmatprep.subr.bf16.mxu0 0
    %721 = vmatpush1.bf16.msra.mxu0 0
    %722 = vmatprep.subr.bf16.mxu0 0
    %723 = vmatpush1.bf16.msra.mxu0 0
    %724 = vmatprep.subr.bf16.mxu0 0
    %725 = vmatpush1.bf16.msra.mxu0 0
    %726 = vmatprep.subr.bf16.mxu0 0
    %727 = vmatpush1.bf16.msra.mxu0 0
    %728 = vmatprep.subr.bf16.mxu0 0
    %729 = vmatpush1.bf16.msra.mxu0 0
    %730 = vmatprep.subr.bf16.mxu0 0
    %731 = vmatpush1.bf16.msra.mxu0 0
    %732 = vmatprep.subr.bf16.mxu0 0
    %733 = vmatpush1.bf16.msra.mxu0 0
    %734 = vmatprep.subr.bf16.mxu0 0
    %735 = vmatpush1.bf16.msra.mxu0 0
    %736 = vmatprep.mubr.bf16.mxu0 0
    %737 = vmatmul.mubr.bf16.gmra.mrb[0].mxu0 %v702
    %v738 = vpop.f32.mrb[0].mxu0
    %v739 = vadd.f32 0.0, %v738
    %v740 = vpop.f32.mrb[0].mxu0
    %v741 = vpop.f32.mrb[0].mxu0
    %v742 = vpop.f32.mrb[0].mxu0
    %743 = vdwg.mxu0
    %v744 = vadd.f32 %v129, %v739
    %v745 = vxor.u32 %v744, 2147483648
    %v746 = vmul.f32 %v745, 1.442695
    %v747 = vpow.pop %v746
    %v748 = vadd.f32 %v747, 1.0
    %v749 = vrcp.pop %v748
    %v750 = vmul.f32 1.0, %v749
    %v751 = vtanh.pop %v744
    %v752 = vmul.f32 %v750, %v618
    %754 = vrot.lane.b32.xlu0 %v751, 64
    %v755 = vpop.permute.xlu0 %754
    %v757 = vmul.f32 %v750, %v755
    %759 = vrot.lane.b32.xlu0 %v757, 32
    %v760 = vpop.permute.xlu0 %759
    %v762 = vadd.f32 %v752, %v760
    %v763 = vtanh.pop %v762
    %765 = vrot.lane.b32.xlu0 %v763, 64
    %v766 = vpop.permute.xlu0 %765
    %v768 = vmul.f32 %v750, %v766
    %v769 = vpack.c.bf16 %v696, %v696
    %771 = vrot.lane.b32.xlu0 %v769, 32
    %v772 = vpop.permute.xlu0 %771
    %v774 = vsel %vm259, %v772, 0
    %776 = vmatprep.subr.bf16.mxu0 0
    %777 = vmatpush1.bf16.msra.mxu0 %v340
    %778 = vmatprep.subr.bf16.mxu0 0
    %779 = vmatpush1.bf16.msra.mxu0 %v341
    %780 = vmatprep.subr.bf16.mxu0 0
    %781 = vmatpush1.bf16.msra.mxu0 0
    %782 = vmatprep.subr.bf16.mxu0 0
    %783 = vmatpush1.bf16.msra.mxu0 0
    %784 = vmatprep.subr.bf16.mxu0 0
    %785 = vmatpush1.bf16.msra.mxu0 0
    %786 = vmatprep.subr.bf16.mxu0 0
    %787 = vmatpush1.bf16.msra.mxu0 0
    %788 = vmatprep.subr.bf16.mxu0 0
    %789 = vmatpush1.bf16.msra.mxu0 0
    %790 = vmatprep.subr.bf16.mxu0 0
    %791 = vmatpush1.bf16.msra.mxu0 0
    %792 = vmatprep.subr.bf16.mxu0 0
    %793 = vmatpush1.bf16.msra.mxu0 0
    %794 = vmatprep.subr.bf16.mxu0 0
    %795 = vmatpush1.bf16.msra.mxu0 0
    %796 = vmatprep.subr.bf16.mxu0 0
    %797 = vmatpush1.bf16.msra.mxu0 0
    %798 = vmatprep.subr.bf16.mxu0 0
    %799 = vmatpush1.bf16.msra.mxu0 0
    %800 = vmatprep.subr.bf16.mxu0 0
    %801 = vmatpush1.bf16.msra.mxu0 0
    %802 = vmatprep.subr.bf16.mxu0 0
    %803 = vmatpush1.bf16.msra.mxu0 0
    %804 = vmatprep.subr.bf16.mxu0 0
    %805 = vmatpush1.bf16.msra.mxu0 0
    %806 = vmatprep.subr.bf16.mxu0 0
    %807 = vmatpush1.bf16.msra.mxu0 0
    %808 = vmatprep.mubr.bf16.mxu0 0
    %809 = vmatmul.mubr.bf16.gmra.mrb[0].mxu0 %v774
    %v810 = vpop.f32.mrb[0].mxu0
    %v811 = vadd.f32 0.0, %v810
    %v812 = vpop.f32.mrb[0].mxu0
    %v813 = vpop.f32.mrb[0].mxu0
    %v814 = vpop.f32.mrb[0].mxu0
    %815 = vdwg.mxu0
    %v816 = vadd.f32 %v229, %v811
    %v817 = vxor.u32 %v816, 2147483648
    %v818 = vmul.f32 %v817, 1.442695
    %v819 = vpow.pop %v818
    %v820 = vadd.f32 %v819, 1.0
    %v821 = vrcp.pop %v820
    %v822 = vmul.f32 1.0, %v821
    %v823 = vtanh.pop %v816
    %v824 = vmul.f32 %v822, %v690
    %826 = vrot.lane.b32.xlu0 %v823, 64
    %v827 = vpop.permute.xlu0 %826
    %v829 = vmul.f32 %v822, %v827
    %831 = vrot.lane.b32.xlu0 %v829, 32
    %v832 = vpop.permute.xlu0 %831
    %v834 = vadd.f32 %v824, %v832
    %v835 = vtanh.pop %v834
    %837 = vrot.lane.b32.xlu0 %v835, 64
    %v838 = vpop.permute.xlu0 %837
    %v840 = vmul.f32 %v822, %v838
    %v841 = vpack.c.bf16 %v768, %v768
    %843 = vrot.lane.b32.xlu0 %v841, 32
    %v844 = vpop.permute.xlu0 %843
    %v846 = vsel %vm259, %v844, 0
    %848 = vmatprep.subr.bf16.mxu0 0
    %849 = vmatpush1.bf16.msra.mxu0 %v255
    %850 = vmatprep.subr.bf16.mxu0 0
    %851 = vmatpush1.bf16.msra.mxu0 %v256
    %852 = vmatprep.subr.bf16.mxu0 0
    %853 = vmatpush1.bf16.msra.mxu0 0
    %854 = vmatprep.subr.bf16.mxu0 0
    %855 = vmatpush1.bf16.msra.mxu0 0
    %856 = vmatprep.subr.bf16.mxu0 0
    %857 = vmatpush1.bf16.msra.mxu0 0
    %858 = vmatprep.subr.bf16.mxu0 0
    %859 = vmatpush1.bf16.msra.mxu0 0
    %860 = vmatprep.subr.bf16.mxu0 0
    %861 = vmatpush1.bf16.msra.mxu0 0
    %862 = vmatprep.subr.bf16.mxu0 0
    %863 = vmatpush1.bf16.msra.mxu0 0
    %864 = vmatprep.subr.bf16.mxu0 0
    %865 = vmatpush1.bf16.msra.mxu0 0
    %866 = vmatprep.subr.bf16.mxu0 0
    %867 = vmatpush1.bf16.msra.mxu0 0
    %868 = vmatprep.subr.bf16.mxu0 0
    %869 = vmatpush1.bf16.msra.mxu0 0
    %870 = vmatprep.subr.bf16.mxu0 0
    %871 = vmatpush1.bf16.msra.mxu0 0
    %872 = vmatprep.subr.bf16.mxu0 0
    %873 = vmatpush1.bf16.msra.mxu0 0
    %874 = vmatprep.subr.bf16.mxu0 0
    %875 = vmatpush1.bf16.msra.mxu0 0
    %876 = vmatprep.subr.bf16.mxu0 0
    %877 = vmatpush1.bf16.msra.mxu0 0
    %878 = vmatprep.subr.bf16.mxu0 0
    %879 = vmatpush1.bf16.msra.mxu0 0
    %880 = vmatprep.mubr.bf16.mxu0 0
    %881 = vmatmul.mubr.bf16.gmra.mrb[0].mxu0 %v846
    %v882 = vpop.f32.mrb[0].mxu0
    %v883 = vadd.f32 0.0, %v882
    %v884 = vpop.f32.mrb[0].mxu0
    %v885 = vpop.f32.mrb[0].mxu0
    %v886 = vpop.f32.mrb[0].mxu0
    %887 = vdwg.mxu0
    %v888 = vadd.f32 %v134, %v883
    %v889 = vxor.u32 %v888, 2147483648
    %v890 = vmul.f32 %v889, 1.442695
    %v891 = vpow.pop %v890
    %v892 = vadd.f32 %v891, 1.0
    %v893 = vrcp.pop %v892
    %v894 = vmul.f32 1.0, %v893
    %v895 = vtanh.pop %v888
    %v896 = vmul.f32 %v894, %v762
    %898 = vrot.lane.b32.xlu0 %v895, 64
    %v899 = vpop.permute.xlu0 %898
    %v901 = vmul.f32 %v894, %v899
    %903 = vrot.lane.b32.xlu0 %v901, 32
    %v904 = vpop.permute.xlu0 %903
    %v906 = vadd.f32 %v896, %v904
    %v907 = vtanh.pop %v906
    %909 = vrot.lane.b32.xlu0 %v907, 64
    %v910 = vpop.permute.xlu0 %909
    %v912 = vmul.f32 %v894, %v910
    %v913 = vpack.c.bf16 %v840, %v840
    %915 = vrot.lane.b32.xlu0 %v913, 32
    %v916 = vpop.permute.xlu0 %915
    %v918 = vsel %vm259, %v916, 0
    %920 = vmatprep.subr.bf16.mxu0 0
    %921 = vmatpush1.bf16.msra.mxu0 %v340
    %922 = vmatprep.subr.bf16.mxu0 0
    %923 = vmatpush1.bf16.msra.mxu0 %v341
    %924 = vmatprep.subr.bf16.mxu0 0
    %925 = vmatpush1.bf16.msra.mxu0 0
    %926 = vmatprep.subr.bf16.mxu0 0
    %927 = vmatpush1.bf16.msra.mxu0 0
    %928 = vmatprep.subr.bf16.mxu0 0
    %929 = vmatpush1.bf16.msra.mxu0 0
    %930 = vmatprep.subr.bf16.mxu0 0
    %931 = vmatpush1.bf16.msra.mxu0 0
    %932 = vmatprep.subr.bf16.mxu0 0
    %933 = vmatpush1.bf16.msra.mxu0 0
    %934 = vmatprep.subr.bf16.mxu0 0
    %935 = vmatpush1.bf16.msra.mxu0 0
    %936 = vmatprep.subr.bf16.mxu0 0
    %937 = vmatpush1.bf16.msra.mxu0 0
    %938 = vmatprep.subr.bf16.mxu0 0
    %939 = vmatpush1.bf16.msra.mxu0 0
    %940 = vmatprep.subr.bf16.mxu0 0
    %941 = vmatpush1.bf16.msra.mxu0 0
    %942 = vmatprep.subr.bf16.mxu0 0
    %943 = vmatpush1.bf16.msra.mxu0 0
    %944 = vmatprep.subr.bf16.mxu0 0
    %945 = vmatpush1.bf16.msra.mxu0 0
    %946 = vmatprep.subr.bf16.mxu0 0
    %947 = vmatpush1.bf16.msra.mxu0 0
    %948 = vmatprep.subr.bf16.mxu0 0
    %949 = vmatpush1.bf16.msra.mxu0 0
    %950 = vmatprep.subr.bf16.mxu0 0
    %951 = vmatpush1.bf16.msra.mxu0 0
    %952 = vmatprep.mubr.bf16.mxu0 0
    %953 = vmatmul.mubr.bf16.gmra.mrb[0].mxu0 %v918
    %v954 = vpop.f32.mrb[0].mxu0
    %v955 = vadd.f32 0.0, %v954
    %v956 = vpop.f32.mrb[0].mxu0
    %v957 = vpop.f32.mrb[0].mxu0
    %v958 = vpop.f32.mrb[0].mxu0
    %959 = vdwg.mxu0
    %v960 = vadd.f32 %v224, %v955
    %v961 = vxor.u32 %v960, 2147483648
    %v962 = vmul.f32 %v961, 1.442695
    %v963 = vpow.pop %v962
    %v964 = vadd.f32 %v963, 1.0
    %v965 = vrcp.pop %v964
    %v966 = vmul.f32 1.0, %v965
    %v967 = vtanh.pop %v960
    %v968 = vmul.f32 %v966, %v834
    %970 = vrot.lane.b32.xlu0 %v967, 64
    %v971 = vpop.permute.xlu0 %970
    %v973 = vmul.f32 %v966, %v971
    %975 = vrot.lane.b32.xlu0 %v973, 32
    %v976 = vpop.permute.xlu0 %975
    %v978 = vadd.f32 %v968, %v976
    %v979 = vtanh.pop %v978
    %981 = vrot.lane.b32.xlu0 %v979, 64
    %v982 = vpop.permute.xlu0 %981
    %v984 = vmul.f32 %v966, %v982
    %v985 = vpack.c.bf16 %v912, %v912
    %987 = vrot.lane.b32.xlu0 %v985, 32
    %v988 = vpop.permute.xlu0 %987
    %v990 = vsel %vm259, %v988, 0
    %992 = vmatprep.subr.bf16.mxu0 0
    %993 = vmatpush1.bf16.msra.mxu0 %v255
    %994 = vmatprep.subr.bf16.mxu0 0
    %995 = vmatpush1.bf16.msra.mxu0 %v256
    %996 = vmatprep.subr.bf16.mxu0 0
    %997 = vmatpush1.bf16.msra.mxu0 0
    %998 = vmatprep.subr.bf16.mxu0 0
    %999 = vmatpush1.bf16.msra.mxu0 0
    %1000 = vmatprep.subr.bf16.mxu0 0
    %1001 = vmatpush1.bf16.msra.mxu0 0
    %1002 = vmatprep.subr.bf16.mxu0 0
    %1003 = vmatpush1.bf16.msra.mxu0 0
    %1004 = vmatprep.subr.bf16.mxu0 0
    %1005 = vmatpush1.bf16.msra.mxu0 0
    %1006 = vmatprep.subr.bf16.mxu0 0
    %1007 = vmatpush1.bf16.msra.mxu0 0
    %1008 = vmatprep.subr.bf16.mxu0 0
    %1009 = vmatpush1.bf16.msra.mxu0 0
    %1010 = vmatprep.subr.bf16.mxu0 0
    %1011 = vmatpush1.bf16.msra.mxu0 0
    %1012 = vmatprep.subr.bf16.mxu0 0
    %1013 = vmatpush1.bf16.msra.mxu0 0
    %1014 = vmatprep.subr.bf16.mxu0 0
    %1015 = vmatpush1.bf16.msra.mxu0 0
    %1016 = vmatprep.subr.bf16.mxu0 0
    %1017 = vmatpush1.bf16.msra.mxu0 0
    %1018 = vmatprep.subr.bf16.mxu0 0
    %1019 = vmatpush1.bf16.msra.mxu0 0
    %1020 = vmatprep.subr.bf16.mxu0 0
    %1021 = vmatpush1.bf16.msra.mxu0 0
    %1022 = vmatprep.subr.bf16.mxu0 0
    %1023 = vmatpush1.bf16.msra.mxu0 0
    %1024 = vmatprep.mubr.bf16.mxu0 0
    %1025 = vmatmul.mubr.bf16.gmra.mrb[0].mxu0 %v990
    %v1026 = vpop.f32.mrb[0].mxu0
    %v1027 = vadd.f32 0.0, %v1026
    %v1028 = vpop.f32.mrb[0].mxu0
    %v1029 = vpop.f32.mrb[0].mxu0
    %v1030 = vpop.f32.mrb[0].mxu0
    %1031 = vdwg.mxu0
    %v1032 = vadd.f32 %v137, %v1027
    %v1033 = vxor.u32 %v1032, 2147483648
    %v1034 = vmul.f32 %v1033, 1.442695
    %v1035 = vpow.pop %v1034
    %v1036 = vadd.f32 %v1035, 1.0
    %v1037 = vrcp.pop %v1036
    %v1038 = vmul.f32 1.0, %v1037
    %v1039 = vtanh.pop %v1032
    %v1040 = vmul.f32 %v1038, %v906
    %1042 = vrot.lane.b32.xlu0 %v1039, 64
    %v1043 = vpop.permute.xlu0 %1042
    %v1045 = vmul.f32 %v1038, %v1043
    %1047 = vrot.lane.b32.xlu0 %v1045, 32
    %v1048 = vpop.permute.xlu0 %1047
    %v1050 = vadd.f32 %v1040, %v1048
    %v1051 = vtanh.pop %v1050
    %1053 = vrot.lane.b32.xlu0 %v1051, 64
    %v1054 = vpop.permute.xlu0 %1053
    %v1056 = vmul.f32 %v1038, %v1054
    %v1057 = vpack.c.bf16 %v984, %v984
    %1059 = vrot.lane.b32.xlu0 %v1057, 32
    %v1060 = vpop.permute.xlu0 %1059
    %v1062 = vsel %vm259, %v1060, 0
    %1064 = vmatprep.subr.bf16.mxu0 0
    %1065 = vmatpush1.bf16.msra.mxu0 %v340
    %1066 = vmatprep.subr.bf16.mxu0 0
    %1067 = vmatpush1.bf16.msra.mxu0 %v341
    %1068 = vmatprep.subr.bf16.mxu0 0
    %1069 = vmatpush1.bf16.msra.mxu0 0
    %1070 = vmatprep.subr.bf16.mxu0 0
    %1071 = vmatpush1.bf16.msra.mxu0 0
    %1072 = vmatprep.subr.bf16.mxu0 0
    %1073 = vmatpush1.bf16.msra.mxu0 0
    %1074 = vmatprep.subr.bf16.mxu0 0
    %1075 = vmatpush1.bf16.msra.mxu0 0
    %1076 = vmatprep.subr.bf16.mxu0 0
    %1077 = vmatpush1.bf16.msra.mxu0 0
    %1078 = vmatprep.subr.bf16.mxu0 0
    %1079 = vmatpush1.bf16.msra.mxu0 0
    %1080 = vmatprep.subr.bf16.mxu0 0
    %1081 = vmatpush1.bf16.msra.mxu0 0
    %1082 = vmatprep.subr.bf16.mxu0 0
    %1083 = vmatpush1.bf16.msra.mxu0 0
    %1084 = vmatprep.subr.bf16.mxu0 0
    %1085 = vmatpush1.bf16.msra.mxu0 0
    %1086 = vmatprep.subr.bf16.mxu0 0
    %1087 = vmatpush1.bf16.msra.mxu0 0
    %1088 = vmatprep.subr.bf16.mxu0 0
    %1089 = vmatpush1.bf16.msra.mxu0 0
    %1090 = vmatprep.subr.bf16.mxu0 0
    %1091 = vmatpush1.bf16.msra.mxu0 0
    %1092 = vmatprep.subr.bf16.mxu0 0
    %1093 = vmatpush1.bf16.msra.mxu0 0
    %1094 = vmatprep.subr.bf16.mxu0 0
    %1095 = vmatpush1.bf16.msra.mxu0 0
    %1096 = vmatprep.mubr.bf16.mxu0 0
    %1097 = vmatmul.mubr.bf16.gmra.mrb[0].mxu0 %v1062
    %v1098 = vpop.f32.mrb[0].mxu0
    %v1099 = vadd.f32 0.0, %v1098
    %v1100 = vpop.f32.mrb[0].mxu0
    %v1101 = vpop.f32.mrb[0].mxu0
    %v1102 = vpop.f32.mrb[0].mxu0
    %1103 = vdwg.mxu0
    %v1104 = vadd.f32 %v221, %v1099
    %v1105 = vxor.u32 %v1104, 2147483648
    %v1106 = vmul.f32 %v1105, 1.442695
    %v1107 = vpow.pop %v1106
    %v1108 = vadd.f32 %v1107, 1.0
    %v1109 = vrcp.pop %v1108
    %v1110 = vmul.f32 1.0, %v1109
    %v1111 = vtanh.pop %v1104
    %v1112 = vmul.f32 %v1110, %v978
    %1114 = vrot.lane.b32.xlu0 %v1111, 64
    %v1115 = vpop.permute.xlu0 %1114
    %v1117 = vmul.f32 %v1110, %v1115
    %1119 = vrot.lane.b32.xlu0 %v1117, 32
    %v1120 = vpop.permute.xlu0 %1119
    %v1122 = vadd.f32 %v1112, %v1120
    %v1123 = vtanh.pop %v1122
    %1125 = vrot.lane.b32.xlu0 %v1123, 64
    %v1126 = vpop.permute.xlu0 %1125
    %v1128 = vmul.f32 %v1110, %v1126
    %v1129 = vpack.c.bf16 %v1056, %v1056
    %1131 = vrot.lane.b32.xlu0 %v1129, 32
    %v1132 = vpop.permute.xlu0 %1131
    %v1134 = vsel %vm259, %v1132, 0
    %1136 = vmatprep.subr.bf16.mxu0 0
    %1137 = vmatpush1.bf16.msra.mxu0 %v255
    %1138 = vmatprep.subr.bf16.mxu0 0
    %1139 = vmatpush1.bf16.msra.mxu0 %v256
    %1140 = vmatprep.subr.bf16.mxu0 0
    %1141 = vmatpush1.bf16.msra.mxu0 0
    %1142 = vmatprep.subr.bf16.mxu0 0
    %1143 = vmatpush1.bf16.msra.mxu0 0
    %1144 = vmatprep.subr.bf16.mxu0 0
    %1145 = vmatpush1.bf16.msra.mxu0 0
    %1146 = vmatprep.subr.bf16.mxu0 0
    %1147 = vmatpush1.bf16.msra.mxu0 0
    %1148 = vmatprep.subr.bf16.mxu0 0
    %1149 = vmatpush1.bf16.msra.mxu0 0
    %1150 = vmatprep.subr.bf16.mxu0 0
    %1151 = vmatpush1.bf16.msra.mxu0 0
    %1152 = vmatprep.subr.bf16.mxu0 0
    %1153 = vmatpush1.bf16.msra.mxu0 0
    %1154 = vmatprep.subr.bf16.mxu0 0
    %1155 = vmatpush1.bf16.msra.mxu0 0
    %1156 = vmatprep.subr.bf16.mxu0 0
    %1157 = vmatpush1.bf16.msra.mxu0 0
    %1158 = vmatprep.subr.bf16.mxu0 0
    %1159 = vmatpush1.bf16.msra.mxu0 0
    %1160 = vmatprep.subr.bf16.mxu0 0
    %1161 = vmatpush1.bf16.msra.mxu0 0
    %1162 = vmatprep.subr.bf16.mxu0 0
    %1163 = vmatpush1.bf16.msra.mxu0 0
    %1164 = vmatprep.subr.bf16.mxu0 0
    %1165 = vmatpush1.bf16.msra.mxu0 0
    %1166 = vmatprep.subr.bf16.mxu0 0
    %1167 = vmatpush1.bf16.msra.mxu0 0
    %1168 = vmatprep.mubr.bf16.mxu0 0
    %1169 = vmatmul.mubr.bf16.gmra.mrb[0].mxu0 %v1134
    %v1170 = vpop.f32.mrb[0].mxu0
    %v1171 = vadd.f32 0.0, %v1170
    %v1172 = vpop.f32.mrb[0].mxu0
    %v1173 = vpop.f32.mrb[0].mxu0
    %v1174 = vpop.f32.mrb[0].mxu0
    %1175 = vdwg.mxu0
    %v1176 = vadd.f32 %v142, %v1171
    %v1177 = vxor.u32 %v1176, 2147483648
    %v1178 = vmul.f32 %v1177, 1.442695
    %v1179 = vpow.pop %v1178
    %v1180 = vadd.f32 %v1179, 1.0
    %v1181 = vrcp.pop %v1180
    %v1182 = vmul.f32 1.0, %v1181
    %v1183 = vtanh.pop %v1176
    %v1184 = vmul.f32 %v1182, %v1050
    %1186 = vrot.lane.b32.xlu0 %v1183, 64
    %v1187 = vpop.permute.xlu0 %1186
    %v1189 = vmul.f32 %v1182, %v1187
    %1191 = vrot.lane.b32.xlu0 %v1189, 32
    %v1192 = vpop.permute.xlu0 %1191
    %v1194 = vadd.f32 %v1184, %v1192
    %v1195 = vtanh.pop %v1194
    %1197 = vrot.lane.b32.xlu0 %v1195, 64
    %v1198 = vpop.permute.xlu0 %1197
    %v1200 = vmul.f32 %v1182, %v1198
    %v1201 = vpack.c.bf16 %v1128, %v1128
    %1203 = vrot.lane.b32.xlu0 %v1201, 32
    %v1204 = vpop.permute.xlu0 %1203
    %v1206 = vsel %vm259, %v1204, 0
    %1208 = vmatprep.subr.bf16.mxu0 0
    %1209 = vmatpush1.bf16.msra.mxu0 %v340
    %1210 = vmatprep.subr.bf16.mxu0 0
    %1211 = vmatpush1.bf16.msra.mxu0 %v341
    %1212 = vmatprep.subr.bf16.mxu0 0
    %1213 = vmatpush1.bf16.msra.mxu0 0
    %1214 = vmatprep.subr.bf16.mxu0 0
    %1215 = vmatpush1.bf16.msra.mxu0 0
    %1216 = vmatprep.subr.bf16.mxu0 0
    %1217 = vmatpush1.bf16.msra.mxu0 0
    %1218 = vmatprep.subr.bf16.mxu0 0
    %1219 = vmatpush1.bf16.msra.mxu0 0
    %1220 = vmatprep.subr.bf16.mxu0 0
    %1221 = vmatpush1.bf16.msra.mxu0 0
    %1222 = vmatprep.subr.bf16.mxu0 0
    %1223 = vmatpush1.bf16.msra.mxu0 0
    %1224 = vmatprep.subr.bf16.mxu0 0
    %1225 = vmatpush1.bf16.msra.mxu0 0
    %1226 = vmatprep.subr.bf16.mxu0 0
    %1227 = vmatpush1.bf16.msra.mxu0 0
    %1228 = vmatprep.subr.bf16.mxu0 0
    %1229 = vmatpush1.bf16.msra.mxu0 0
    %1230 = vmatprep.subr.bf16.mxu0 0
    %1231 = vmatpush1.bf16.msra.mxu0 0
    %1232 = vmatprep.subr.bf16.mxu0 0
    %1233 = vmatpush1.bf16.msra.mxu0 0
    %1234 = vmatprep.subr.bf16.mxu0 0
    %1235 = vmatpush1.bf16.msra.mxu0 0
    %1236 = vmatprep.subr.bf16.mxu0 0
    %1237 = vmatpush1.bf16.msra.mxu0 0
    %1238 = vmatprep.subr.bf16.mxu0 0
    %1239 = vmatpush1.bf16.msra.mxu0 0
    %1240 = vmatprep.mubr.bf16.mxu0 0
    %1241 = vmatmul.mubr.bf16.gmra.mrb[0].mxu0 %v1206
    %v1242 = vpop.f32.mrb[0].mxu0
    %v1243 = vadd.f32 0.0, %v1242
    %v1244 = vpop.f32.mrb[0].mxu0
    %v1245 = vpop.f32.mrb[0].mxu0
    %v1246 = vpop.f32.mrb[0].mxu0
    %1247 = vdwg.mxu0
    %v1248 = vadd.f32 %v216, %v1243
    %v1249 = vxor.u32 %v1248, 2147483648
    %v1250 = vmul.f32 %v1249, 1.442695
    %v1251 = vpow.pop %v1250
    %v1252 = vadd.f32 %v1251, 1.0
    %v1253 = vrcp.pop %v1252
    %v1254 = vmul.f32 1.0, %v1253
    %v1255 = vtanh.pop %v1248
    %v1256 = vmul.f32 %v1254, %v1122
    %1258 = vrot.lane.b32.xlu0 %v1255, 64
    %v1259 = vpop.permute.xlu0 %1258
    %v1261 = vmul.f32 %v1254, %v1259
    %1263 = vrot.lane.b32.xlu0 %v1261, 32
    %v1264 = vpop.permute.xlu0 %1263
    %v1266 = vadd.f32 %v1256, %v1264
    %v1267 = vtanh.pop %v1266
    %1269 = vrot.lane.b32.xlu0 %v1267, 64
    %v1270 = vpop.permute.xlu0 %1269
    %v1272 = vmul.f32 %v1254, %v1270
    %v1273 = vpack.c.bf16 %v1200, %v1200
    %1275 = vrot.lane.b32.xlu0 %v1273, 32
    %v1276 = vpop.permute.xlu0 %1275
    %v1278 = vsel %vm259, %v1276, 0
    %1280 = vmatprep.subr.bf16.mxu0 0
    %1281 = vmatpush1.bf16.msra.mxu0 %v255
    %1282 = vmatprep.subr.bf16.mxu0 0
    %1283 = vmatpush1.bf16.msra.mxu0 %v256
    %1284 = vmatprep.subr.bf16.mxu0 0
    %1285 = vmatpush1.bf16.msra.mxu0 0
    %1286 = vmatprep.subr.bf16.mxu0 0
    %1287 = vmatpush1.bf16.msra.mxu0 0
    %1288 = vmatprep.subr.bf16.mxu0 0
    %1289 = vmatpush1.bf16.msra.mxu0 0
    %1290 = vmatprep.subr.bf16.mxu0 0
    %1291 = vmatpush1.bf16.msra.mxu0 0
    %1292 = vmatprep.subr.bf16.mxu0 0
    %1293 = vmatpush1.bf16.msra.mxu0 0
    %1294 = vmatprep.subr.bf16.mxu0 0
    %1295 = vmatpush1.bf16.msra.mxu0 0
    %1296 = vmatprep.subr.bf16.mxu0 0
    %1297 = vmatpush1.bf16.msra.mxu0 0
    %1298 = vmatprep.subr.bf16.mxu0 0
    %1299 = vmatpush1.bf16.msra.mxu0 0
    %1300 = vmatprep.subr.bf16.mxu0 0
    %1301 = vmatpush1.bf16.msra.mxu0 0
    %1302 = vmatprep.subr.bf16.mxu0 0
    %1303 = vmatpush1.bf16.msra.mxu0 0
    %1304 = vmatprep.subr.bf16.mxu0 0
    %1305 = vmatpush1.bf16.msra.mxu0 0
    %1306 = vmatprep.subr.bf16.mxu0 0
    %1307 = vmatpush1.bf16.msra.mxu0 0
    %1308 = vmatprep.subr.bf16.mxu0 0
    %1309 = vmatpush1.bf16.msra.mxu0 0
    %1310 = vmatprep.subr.bf16.mxu0 0
    %1311 = vmatpush1.bf16.msra.mxu0 0
    %1312 = vmatprep.mubr.bf16.mxu0 0
    %1313 = vmatmul.mubr.bf16.gmra.mrb[0].mxu0 %v1278
    %v1314 = vpop.f32.mrb[0].mxu0
    %v1315 = vadd.f32 0.0, %v1314
    %v1316 = vpop.f32.mrb[0].mxu0
    %v1317 = vpop.f32.mrb[0].mxu0
    %v1318 = vpop.f32.mrb[0].mxu0
    %1319 = vdwg.mxu0
    %v1320 = vadd.f32 %v145, %v1315
    %v1321 = vxor.u32 %v1320, 2147483648
    %v1322 = vmul.f32 %v1321, 1.442695
    %v1323 = vpow.pop %v1322
    %v1324 = vadd.f32 %v1323, 1.0
    %v1325 = vrcp.pop %v1324
    %v1326 = vmul.f32 1.0, %v1325
    %v1327 = vtanh.pop %v1320
    %v1328 = vmul.f32 %v1326, %v1194
    %1330 = vrot.lane.b32.xlu0 %v1327, 64
    %v1331 = vpop.permute.xlu0 %1330
    %v1333 = vmul.f32 %v1326, %v1331
    %1335 = vrot.lane.b32.xlu0 %v1333, 32
    %v1336 = vpop.permute.xlu0 %1335
    %v1338 = vadd.f32 %v1328, %v1336
    %v1339 = vtanh.pop %v1338
    %1341 = vrot.lane.b32.xlu0 %v1339, 64
    %v1342 = vpop.permute.xlu0 %1341
    %v1344 = vmul.f32 %v1326, %v1342
    %v1345 = vpack.c.bf16 %v1272, %v1272
    %1347 = vrot.lane.b32.xlu0 %v1345, 32
    %v1348 = vpop.permute.xlu0 %1347
    %v1350 = vsel %vm259, %v1348, 0
    %1352 = vmatprep.subr.bf16.mxu0 0
    %1353 = vmatpush1.bf16.msra.mxu0 %v340
    %1354 = vmatprep.subr.bf16.mxu0 0
    %1355 = vmatpush1.bf16.msra.mxu0 %v341
    %1356 = vmatprep.subr.bf16.mxu0 0
    %1357 = vmatpush1.bf16.msra.mxu0 0
    %1358 = vmatprep.subr.bf16.mxu0 0
    %1359 = vmatpush1.bf16.msra.mxu0 0
    %1360 = vmatprep.subr.bf16.mxu0 0
    %1361 = vmatpush1.bf16.msra.mxu0 0
    %1362 = vmatprep.subr.bf16.mxu0 0
    %1363 = vmatpush1.bf16.msra.mxu0 0
    %1364 = vmatprep.subr.bf16.mxu0 0
    %1365 = vmatpush1.bf16.msra.mxu0 0
    %1366 = vmatprep.subr.bf16.mxu0 0
    %1367 = vmatpush1.bf16.msra.mxu0 0
    %1368 = vmatprep.subr.bf16.mxu0 0
    %1369 = vmatpush1.bf16.msra.mxu0 0
    %1370 = vmatprep.subr.bf16.mxu0 0
    %1371 = vmatpush1.bf16.msra.mxu0 0
    %1372 = vmatprep.subr.bf16.mxu0 0
    %1373 = vmatpush1.bf16.msra.mxu0 0
    %1374 = vmatprep.subr.bf16.mxu0 0
    %1375 = vmatpush1.bf16.msra.mxu0 0
    %1376 = vmatprep.subr.bf16.mxu0 0
    %1377 = vmatpush1.bf16.msra.mxu0 0
    %1378 = vmatprep.subr.bf16.mxu0 0
    %1379 = vmatpush1.bf16.msra.mxu0 0
    %1380 = vmatprep.subr.bf16.mxu0 0
    %1381 = vmatpush1.bf16.msra.mxu0 0
    %1382 = vmatprep.subr.bf16.mxu0 0
    %1383 = vmatpush1.bf16.msra.mxu0 0
    %1384 = vmatprep.mubr.bf16.mxu0 0
    %1385 = vmatmul.mubr.bf16.gmra.mrb[0].mxu0 %v1350
    %v1386 = vpop.f32.mrb[0].mxu0
    %v1387 = vadd.f32 0.0, %v1386
    %v1388 = vpop.f32.mrb[0].mxu0
    %v1389 = vpop.f32.mrb[0].mxu0
    %v1390 = vpop.f32.mrb[0].mxu0
    %1391 = vdwg.mxu0
    %v1392 = vadd.f32 %v213, %v1387
    %v1393 = vxor.u32 %v1392, 2147483648
    %v1394 = vmul.f32 %v1393, 1.442695
    %v1395 = vpow.pop %v1394
    %v1396 = vadd.f32 %v1395, 1.0
    %v1397 = vrcp.pop %v1396
    %v1398 = vmul.f32 1.0, %v1397
    %v1399 = vtanh.pop %v1392
    %v1400 = vmul.f32 %v1398, %v1266
    %1402 = vrot.lane.b32.xlu0 %v1399, 64
    %v1403 = vpop.permute.xlu0 %1402
    %v1405 = vmul.f32 %v1398, %v1403
    %1407 = vrot.lane.b32.xlu0 %v1405, 32
    %v1408 = vpop.permute.xlu0 %1407
    %v1410 = vadd.f32 %v1400, %v1408
    %v1411 = vtanh.pop %v1410
    %1413 = vrot.lane.b32.xlu0 %v1411, 64
    %v1414 = vpop.permute.xlu0 %1413
    %v1416 = vmul.f32 %v1398, %v1414
    %v1417 = vld [vmem:[#allocation2 + $0xc0] sm:$0xf]
    %v1418 = vld [vmem:[#allocation2 + $0xc8] sm:$0xf]
    %v1419 = vld [vmem:[#allocation2 + $0xd0] sm:$0xf]
    %v1420 = vld [vmem:[#allocation2 + $0xd8] sm:$0xf]
    %v1421 = vpack.c.bf16 %v1416, %v1416
    %v1422 = vld [vmem:[#allocation2 + $0xe0] sm:$0xf]
    %v1423 = vld [vmem:[#allocation2 + $0xe8] sm:$0xf]
    %v1424 = vld [vmem:[#allocation2 + $0xf0] sm:$0xf]
    %v1425 = vld [vmem:[#allocation2 + $0xf8] sm:$0xf]
    %v1426 = vpack.c.bf16 %v1344, %v1344
    %1428 = vrot.lane.b32.xlu0 %v1426, 32
    %v1429 = vpop.permute.xlu0 %1428
    %v1434 = vunpack.c.l.b16 %v1422
    %v1435 = vunpack.c.l.b16 %v1423
    %v1436 = vunpack.c.l.b16 %v1424
    %v1437 = vunpack.c.l.b16 %v1425
    %v1438 = vpack.c.b16 %v1435, %v1434
    %v1439 = vpack.c.b16 %v1437, %v1436
    %v1443 = vsel %vm259, %v1429, 0
    %1445 = vmatprep.subr.bf16.mxu0 0
    %1446 = vmatpush1.bf16.msra.mxu0 %v1438
    %1447 = vmatprep.subr.bf16.mxu0 0
    %1448 = vmatpush1.bf16.msra.mxu0 %v1439
    %1449 = vmatprep.subr.bf16.mxu0 0
    %1450 = vmatpush1.bf16.msra.mxu0 0
    %1451 = vmatprep.subr.bf16.mxu0 0
    %1452 = vmatpush1.bf16.msra.mxu0 0
    %1453 = vmatprep.subr.bf16.mxu0 0
    %1454 = vmatpush1.bf16.msra.mxu0 0
    %1455 = vmatprep.subr.bf16.mxu0 0
    %1456 = vmatpush1.bf16.msra.mxu0 0
    %1457 = vmatprep.subr.bf16.mxu0 0
    %1458 = vmatpush1.bf16.msra.mxu0 0
    %1459 = vmatprep.subr.bf16.mxu0 0
    %1460 = vmatpush1.bf16.msra.mxu0 0
    %1461 = vmatprep.subr.bf16.mxu0 0
    %1462 = vmatpush1.bf16.msra.mxu0 0
    %1463 = vmatprep.subr.bf16.mxu0 0
    %1464 = vmatpush1.bf16.msra.mxu0 0
    %1465 = vmatprep.subr.bf16.mxu0 0
    %1466 = vmatpush1.bf16.msra.mxu0 0
    %1467 = vmatprep.subr.bf16.mxu0 0
    %1468 = vmatpush1.bf16.msra.mxu0 0
    %1469 = vmatprep.subr.bf16.mxu0 0
    %1470 = vmatpush1.bf16.msra.mxu0 0
    %1471 = vmatprep.subr.bf16.mxu0 0
    %1472 = vmatpush1.bf16.msra.mxu0 0
    %1473 = vmatprep.subr.bf16.mxu0 0
    %1474 = vmatpush1.bf16.msra.mxu0 0
    %1475 = vmatprep.subr.bf16.mxu0 0
    %1476 = vmatpush1.bf16.msra.mxu0 0
    %1477 = vmatprep.mubr.bf16.mxu0 0
    %1478 = vmatmul.mubr.bf16.gmra.mrb[0].mxu0 %v1443
    %v1479 = vpop.f32.mrb[0].mxu0
    %v1480 = vadd.f32 0.0, %v1479
    %v1481 = vpop.f32.mrb[0].mxu0
    %v1482 = vpop.f32.mrb[0].mxu0
    %v1483 = vpop.f32.mrb[0].mxu0
    %1484 = vdwg.mxu0
    %1486 = vrot.lane.b32.xlu0 %v1421, 32
    %v1487 = vpop.permute.xlu0 %1486
    %v1492 = vunpack.c.l.b16 %v1417
    %v1493 = vunpack.c.l.b16 %v1418
    %v1494 = vunpack.c.l.b16 %v1419
    %v1495 = vunpack.c.l.b16 %v1420
    %v1496 = vpack.c.b16 %v1493, %v1492
    %v1497 = vpack.c.b16 %v1495, %v1494
    %v1501 = vsel %vm259, %v1487, 0
    %1503 = vmatprep.subr.bf16.mxu0 0
    %1504 = vmatpush1.bf16.msra.mxu0 %v1496
    %1505 = vmatprep.subr.bf16.mxu0 0
    %1506 = vmatpush1.bf16.msra.mxu0 %v1497
    %1507 = vmatprep.subr.bf16.mxu0 0
    %1508 = vmatpush1.bf16.msra.mxu0 0
    %1509 = vmatprep.subr.bf16.mxu0 0
    %1510 = vmatpush1.bf16.msra.mxu0 0
    %1511 = vmatprep.subr.bf16.mxu0 0
    %1512 = vmatpush1.bf16.msra.mxu0 0
    %1513 = vmatprep.subr.bf16.mxu0 0
    %1514 = vmatpush1.bf16.msra.mxu0 0
    %1515 = vmatprep.subr.bf16.mxu0 0
    %1516 = vmatpush1.bf16.msra.mxu0 0
    %1517 = vmatprep.subr.bf16.mxu0 0
    %1518 = vmatpush1.bf16.msra.mxu0 0
    %1519 = vmatprep.subr.bf16.mxu0 0
    %1520 = vmatpush1.bf16.msra.mxu0 0
    %1521 = vmatprep.subr.bf16.mxu0 0
    %1522 = vmatpush1.bf16.msra.mxu0 0
    %1523 = vmatprep.subr.bf16.mxu0 0
    %1524 = vmatpush1.bf16.msra.mxu0 0
    %1525 = vmatprep.subr.bf16.mxu0 0
    %1526 = vmatpush1.bf16.msra.mxu0 0
    %1527 = vmatprep.subr.bf16.mxu0 0
    %1528 = vmatpush1.bf16.msra.mxu0 0
    %1529 = vmatprep.subr.bf16.mxu0 0
    %1530 = vmatpush1.bf16.msra.mxu0 0
    %1531 = vmatprep.subr.bf16.mxu0 0
    %1532 = vmatpush1.bf16.msra.mxu0 0
    %1533 = vmatprep.subr.bf16.mxu0 0
    %1534 = vmatpush1.bf16.msra.mxu0 0
    %1535 = vmatprep.mubr.bf16.mxu0 0
    %1536 = vmatmul.mubr.bf16.gmra.mrb[0].mxu0 %v1501
    %v1537 = vpop.f32.mrb[0].mxu0
    %v1538 = vadd.f32 %v1480, %v1537
    %v1539 = vpop.f32.mrb[0].mxu0
    %v1540 = vpop.f32.mrb[0].mxu0
    %v1541 = vpop.f32.mrb[0].mxu0
    %1542 = vdwg.mxu0
    %v1543 = vld [vmem:[#allocation2 + $0x100] sm:$0x1]
    %v1544 = vunpack.c.l.bf16 %v1543
    %v1545 = vlaneseq
    %v1546 = vshrl.u32 %v1545, 7
    %v1547 = vsub.s32 0, %v1546
    %v1548 = vrot.slane %v1544, %v1547
    %v1549 = vadd.f32 %v1538, %v1548
    %v1550 = vld [vmem:[#allocation2 + $0x110] sm:$0xf]
    %v1551 = vld [vmem:[#allocation2 + $0x118] sm:$0xf]
    %v1552 = vld [vmem:[#allocation2 + $0x120] sm:$0xf]
    %v1553 = vld [vmem:[#allocation2 + $0x128] sm:$0xf]
    %v1554 = vpack.c.bf16 %v1549, %v1549
    %v1555 = vld [vmem:[#allocation2 + $0x130] sm:$0x1]
    %v1556 = vunpack.c.l.bf16 %v1555
    %v1557 = vlaneseq
    %v1558 = vshrl.u32 %v1557, 7
    %v1559 = vsub.s32 0, %v1558
    %v1560 = vrot.slane %v1556, %v1559
    %v1565 = vunpack.c.l.b16 %v1550
    %v1566 = vunpack.c.l.b16 %v1551
    %v1567 = vunpack.c.l.b16 %v1552
    %v1568 = vunpack.c.l.b16 %v1553
    %v1569 = vpack.c.b16 %v1566, %v1565
    %v1570 = vpack.c.b16 %v1568, %v1567
    %v1574 = vsel %vm259, %v1554, 0
    %1576 = vmatprep.subr.bf16.mxu0 0
    %1577 = vmatpush1.bf16.msra.mxu0 %v1569
    %1578 = vmatprep.subr.bf16.mxu0 0
    %1579 = vmatpush1.bf16.msra.mxu0 %v1570
    %1580 = vmatprep.subr.bf16.mxu0 0
    %1581 = vmatpush1.bf16.msra.mxu0 0
    %1582 = vmatprep.subr.bf16.mxu0 0
    %1583 = vmatpush1.bf16.msra.mxu0 0
    %1584 = vmatprep.subr.bf16.mxu0 0
    %1585 = vmatpush1.bf16.msra.mxu0 0
    %1586 = vmatprep.subr.bf16.mxu0 0
    %1587 = vmatpush1.bf16.msra.mxu0 0
    %1588 = vmatprep.subr.bf16.mxu0 0
    %1589 = vmatpush1.bf16.msra.mxu0 0
    %1590 = vmatprep.subr.bf16.mxu0 0
    %1591 = vmatpush1.bf16.msra.mxu0 0
    %1592 = vmatprep.subr.bf16.mxu0 0
    %1593 = vmatpush1.bf16.msra.mxu0 0
    %1594 = vmatprep.subr.bf16.mxu0 0
    %1595 = vmatpush1.bf16.msra.mxu0 0
    %1596 = vmatprep.subr.bf16.mxu0 0
    %1597 = vmatpush1.bf16.msra.mxu0 0
    %1598 = vmatprep.subr.bf16.mxu0 0
    %1599 = vmatpush1.bf16.msra.mxu0 0
    %1600 = vmatprep.subr.bf16.mxu0 0
    %1601 = vmatpush1.bf16.msra.mxu0 0
    %1602 = vmatprep.subr.bf16.mxu0 0
    %1603 = vmatpush1.bf16.msra.mxu0 0
    %1604 = vmatprep.subr.bf16.mxu0 0
    %1605 = vmatpush1.bf16.msra.mxu0 0
    %1606 = vmatprep.subr.bf16.mxu0 0
    %1607 = vmatpush1.bf16.msra.mxu0 0
    %1608 = vmatprep.mubr.bf16.mxu0 0
    %1609 = vmatmul.mubr.bf16.gmra.mrb[0].mxu0 %v1574
    %v1610 = vpop.f32.mrb[0].mxu0
    %v1611 = vadd.f32 %v1560, %v1610
    %v1612 = vpop.f32.mrb[0].mxu0
    %v1613 = vpop.f32.mrb[0].mxu0
    %v1614 = vpop.f32.mrb[0].mxu0
    %1615 = vdwg.mxu0
    %v1616 = vmul.f32 %v1611, %v1611
    %v1617 = vmul.f32 %v1611, 1.442695
    %v1618 = vpow.pop %v1617
    %1620 = vrot.lane.b32.xlu0 %v1618, 96
    %v1621 = vpop.permute.xlu0 %1620
    %v1623 = vadd.f32 %v1616, %v1621
    %1625 = vrot.lane.b32.xlu0 %v1611, 96
    %v1626 = vpop.permute.xlu0 %1625
    %v1628 = vsub.f32 %v1623, %v1626
    %v1629 = vsub.f32 %v1628, 1.0
    %v1630 = vsel %vm259, %v1629, 0.0
    %1631 = vadd.xlane.f32.xlu0 %v1630
    %v1632 = vpop.xlane.xlu0 %1631
    %v1633 = vrcp.pop 32.0
    %v1634 = vmul.f32 %v1632, %v1633
    %v1635 = vmul.f32 %v1634, 0.5
    %vm1636 = vcmask 482768
    %1637 = vst.msk [vmem:[%s2 + $0x8] sm:$0xff] %vm1636, %v1635
    %v1638 = vld [vmem:[#allocation2 + $0x140] sm:$0xff]
    %v1639 = vld [vmem:[#allocation2 + $0x148] sm:$0xff]
    %v1640 = vld [vmem:[#allocation2 + $0x150] sm:$0xff]
    %v1641 = vld [vmem:[#allocation2 + $0x158] sm:$0xff]
    %v1642 = vpack.c.bf16 %v1611, %v1611
    %v1643 = vld [vmem:[#allocation2 + $0x160] sm:$0x11]
    %v1644 = vunpack.c.l.bf16 %v1643
    %v1645 = vunpack.c.h.bf16 %v1643
    %v1646 = vlaneseq
    %v1647 = vshrl.u32 %v1646, 7
    %v1648 = vsub.s32 0, %v1647
    %v1649 = vrot.slane %v1644, %v1648
    %v1650 = vlaneseq
    %v1651 = vshrl.u32 %v1650, 7
    %v1652 = vsub.s32 0, %v1651
    %v1653 = vrot.slane %v1645, %v1652
    %v1658 = vunpack.c.l.b16 %v1638
    %v1659 = vunpack.c.h.b16 %v1638
    %v1660 = vunpack.c.l.b16 %v1639
    %v1661 = vunpack.c.h.b16 %v1639
    %v1662 = vunpack.c.l.b16 %v1640
    %v1663 = vunpack.c.h.b16 %v1640
    %v1664 = vunpack.c.l.b16 %v1641
    %v1665 = vunpack.c.h.b16 %v1641
    %v1666 = vpack.c.b16 %v1660, %v1658
    %v1667 = vpack.c.b16 %v1661, %v1659
    %v1668 = vpack.c.b16 %v1664, %v1662
    %v1669 = vpack.c.b16 %v1665, %v1663
    %v1675 = vsel %vm259, %v1642, 0
    %1677 = vmatprep.subr.bf16.mxu0 %v1667
    %1678 = vmatpush1.bf16.msra.mxu0 %v1666
    %1679 = vmatprep.subr.bf16.mxu0 %v1669
    %1680 = vmatpush1.bf16.msra.mxu0 %v1668
    %1681 = vmatprep.subr.bf16.mxu0 0
    %1682 = vmatpush1.bf16.msra.mxu0 0
    %1683 = vmatprep.subr.bf16.mxu0 0
    %1684 = vmatpush1.bf16.msra.mxu0 0
    %1685 = vmatprep.subr.bf16.mxu0 0
    %1686 = vmatpush1.bf16.msra.mxu0 0
    %1687 = vmatprep.subr.bf16.mxu0 0
    %1688 = vmatpush1.bf16.msra.mxu0 0
    %1689 = vmatprep.subr.bf16.mxu0 0
    %1690 = vmatpush1.bf16.msra.mxu0 0
    %1691 = vmatprep.subr.bf16.mxu0 0
    %1692 = vmatpush1.bf16.msra.mxu0 0
    %1693 = vmatprep.subr.bf16.mxu0 0
    %1694 = vmatpush1.bf16.msra.mxu0 0
    %1695 = vmatprep.subr.bf16.mxu0 0
    %1696 = vmatpush1.bf16.msra.mxu0 0
    %1697 = vmatprep.subr.bf16.mxu0 0
    %1698 = vmatpush1.bf16.msra.mxu0 0
    %1699 = vmatprep.subr.bf16.mxu0 0
    %1700 = vmatpush1.bf16.msra.mxu0 0
    %1701 = vmatprep.subr.bf16.mxu0 0
    %1702 = vmatpush1.bf16.msra.mxu0 0
    %1703 = vmatprep.subr.bf16.mxu0 0
    %1704 = vmatpush1.bf16.msra.mxu0 0
    %1705 = vmatprep.subr.bf16.mxu0 0
    %1706 = vmatpush1.bf16.msra.mxu0 0
    %1707 = vmatprep.subr.bf16.mxu0 0
    %1708 = vmatpush1.bf16.msra.mxu0 0
    %1709 = vmatprep.mubr.bf16.mxu0 0
    %1710 = vmatmul.mubr.bf16.gmra.mrb[0].mxu0 %v1675
    %v1711 = vpop.f32.mrb[0].mxu0
    %v1712 = vadd.f32 %v1649, %v1711
    %v1713 = vpop.f32.mrb[0].mxu0
    %v1714 = vadd.f32 %v1653, %v1713
    %v1715 = vpop.f32.mrb[0].mxu0
    %v1716 = vpop.f32.mrb[0].mxu0
    %1717 = vdwg.mxu0
    %v1718 = vmax.f32 %v1712, 0.0
    %v1719 = vmax.f32 %v1714, 0.0
    %v1720 = vld [vmem:[#allocation2 + $0x170] sm:$0xf]
    %v1721 = vld [vmem:[#allocation2 + $0x178] sm:$0xf]
    %v1722 = vld [vmem:[#allocation2 + $0x180] sm:$0xf]
    %v1723 = vld [vmem:[#allocation2 + $0x188] sm:$0xf]
    %v1724 = vpack.c.bf16 %v1718, %v1718
    %v1725 = vld [vmem:[#allocation2 + $0x190] sm:$0x1]
    %v1726 = vunpack.c.l.bf16 %v1725
    %v1727 = vlaneseq
    %v1728 = vshrl.u32 %v1727, 7
    %v1729 = vsub.s32 0, %v1728
    %v1730 = vrot.slane %v1726, %v1729
    %v1735 = vunpack.c.l.b16 %v1720
    %v1736 = vunpack.c.l.b16 %v1721
    %v1737 = vunpack.c.l.b16 %v1722
    %v1738 = vunpack.c.l.b16 %v1723
    %v1739 = vpack.c.b16 %v1736, %v1735
    %v1740 = vpack.c.b16 %v1738, %v1737
    %v1744 = vsel %vm259, %v1724, 0
    %1746 = vmatprep.subr.bf16.mxu0 0
    %1747 = vmatpush1.bf16.msra.mxu0 %v1739
    %1748 = vmatprep.subr.bf16.mxu0 0
    %1749 = vmatpush1.bf16.msra.mxu0 %v1740
    %1750 = vmatprep.subr.bf16.mxu0 0
    %1751 = vmatpush1.bf16.msra.mxu0 0
    %1752 = vmatprep.subr.bf16.mxu0 0
    %1753 = vmatpush1.bf16.msra.mxu0 0
    %1754 = vmatprep.subr.bf16.mxu0 0
    %1755 = vmatpush1.bf16.msra.mxu0 0
    %1756 = vmatprep.subr.bf16.mxu0 0
    %1757 = vmatpush1.bf16.msra.mxu0 0
    %1758 = vmatprep.subr.bf16.mxu0 0
    %1759 = vmatpush1.bf16.msra.mxu0 0
    %1760 = vmatprep.subr.bf16.mxu0 0
    %1761 = vmatpush1.bf16.msra.mxu0 0
    %1762 = vmatprep.subr.bf16.mxu0 0
    %1763 = vmatpush1.bf16.msra.mxu0 0
    %1764 = vmatprep.subr.bf16.mxu0 0
    %1765 = vmatpush1.bf16.msra.mxu0 0
    %1766 = vmatprep.subr.bf16.mxu0 0
    %1767 = vmatpush1.bf16.msra.mxu0 0
    %1768 = vmatprep.subr.bf16.mxu0 0
    %1769 = vmatpush1.bf16.msra.mxu0 0
    %1770 = vmatprep.subr.bf16.mxu0 0
    %1771 = vmatpush1.bf16.msra.mxu0 0
    %1772 = vmatprep.subr.bf16.mxu0 0
    %1773 = vmatpush1.bf16.msra.mxu0 0
    %1774 = vmatprep.subr.bf16.mxu0 0
    %1775 = vmatpush1.bf16.msra.mxu0 0
    %1776 = vmatprep.subr.bf16.mxu0 0
    %1777 = vmatpush1.bf16.msra.mxu0 0
    %1778 = vmatprep.mubr.bf16.mxu0 0
    %1779 = vmatmul.mubr.bf16.gmra.mrb[0].mxu0 %v1744
    %v1780 = vpop.f32.mrb[0].mxu0
    %v1781 = vadd.f32 %v1730, %v1780
    %v1782 = vpop.f32.mrb[0].mxu0
    %v1783 = vpop.f32.mrb[0].mxu0
    %v1784 = vpop.f32.mrb[0].mxu0
    %1785 = vdwg.mxu0
    %v1786 = vld [vmem:[#allocation2 + $0x1a0] sm:$0xf]
    %v1787 = vld [vmem:[#allocation2 + $0x1a8] sm:$0xf]
    %v1788 = vld [vmem:[#allocation2 + $0x1b0] sm:$0xf]
    %v1789 = vld [vmem:[#allocation2 + $0x1b8] sm:$0xf]
    %v1790 = vld [vmem:[#allocation2 + $0x1c0] sm:$0xf]
    %v1791 = vld [vmem:[#allocation2 + $0x1c8] sm:$0xf]
    %v1792 = vld [vmem:[#allocation2 + $0x1d0] sm:$0xf]
    %v1793 = vld [vmem:[#allocation2 + $0x1d8] sm:$0xf]
    %v1794 = vld [vmem:[#allocation2 + $0x1e0] sm:$0xf]
    %v1795 = vld [vmem:[#allocation2 + $0x1e8] sm:$0xf]
    %v1796 = vld [vmem:[#allocation2 + $0x1f0] sm:$0xf]
    %v1797 = vld [vmem:[#allocation2 + $0x1f8] sm:$0xf]
    %v1798 = vld [vmem:[#allocation2 + $0x200] sm:$0xf]
    %v1799 = vld [vmem:[#allocation2 + $0x208] sm:$0xf]
    %v1800 = vld [vmem:[#allocation2 + $0x210] sm:$0xf]
    %v1801 = vld [vmem:[#allocation2 + $0x218] sm:$0xf]
    %v1802 = vpack.c.bf16 %v1719, %v1719
    %v1803 = vld [vmem:[#allocation2 + $0x220] sm:$0x1]
    %v1804 = vunpack.c.l.bf16 %v1803
    %v1805 = vlaneseq
    %v1806 = vshrl.u32 %v1805, 7
    %v1807 = vsub.s32 0, %v1806
    %v1808 = vrot.slane %v1804, %v1807
    %1811 = vrot.lane.b32.xlu0 %v1724, 96
    %v1812 = vpop.permute.xlu0 %1811
    %1813 = vrot.lane.b32.xlu0 %v1802, 96
    %v1814 = vpop.permute.xlu0 %1813
    %vm1815 = vcmask 785408
    %v1816 = vsel %vm1815, %v1812, %v1814
    %v1834 = vunpack.c.l.b16 %v1786
    %v1835 = vunpack.c.l.b16 %v1787
    %v1836 = vunpack.c.l.b16 %v1788
    %v1837 = vunpack.c.l.b16 %v1789
    %v1838 = vunpack.c.l.b16 %v1790
    %v1839 = vunpack.c.l.b16 %v1791
    %v1840 = vunpack.c.l.b16 %v1792
    %v1841 = vunpack.c.l.b16 %v1793
    %v1842 = vunpack.c.l.b16 %v1794
    %v1843 = vunpack.c.l.b16 %v1795
    %v1844 = vunpack.c.l.b16 %v1796
    %v1845 = vunpack.c.l.b16 %v1797
    %v1846 = vunpack.c.l.b16 %v1798
    %v1847 = vunpack.c.l.b16 %v1799
    %v1848 = vunpack.c.l.b16 %v1800
    %v1849 = vunpack.c.l.b16 %v1801
    %v1850 = vpack.c.b16 %v1835, %v1834
    %v1851 = vpack.c.b16 %v1837, %v1836
    %v1852 = vpack.c.b16 %v1839, %v1838
    %v1853 = vpack.c.b16 %v1841, %v1840
    %v1854 = vpack.c.b16 %v1843, %v1842
    %v1855 = vpack.c.b16 %v1845, %v1844
    %v1856 = vpack.c.b16 %v1847, %v1846
    %v1857 = vpack.c.b16 %v1849, %v1848
    %1866 = vmatprep.subr.bf16.mxu0 0
    %1867 = vmatpush1.bf16.msra.mxu0 %v1850
    %1868 = vmatprep.subr.bf16.mxu0 0
    %1869 = vmatpush1.bf16.msra.mxu0 %v1851
    %1870 = vmatprep.subr.bf16.mxu0 0
    %1871 = vmatpush1.bf16.msra.mxu0 %v1852
    %1872 = vmatprep.subr.bf16.mxu0 0
    %1873 = vmatpush1.bf16.msra.mxu0 %v1853
    %1874 = vmatprep.subr.bf16.mxu0 0
    %1875 = vmatpush1.bf16.msra.mxu0 %v1854
    %1876 = vmatprep.subr.bf16.mxu0 0
    %1877 = vmatpush1.bf16.msra.mxu0 %v1855
    %1878 = vmatprep.subr.bf16.mxu0 0
    %1879 = vmatpush1.bf16.msra.mxu0 %v1856
    %1880 = vmatprep.subr.bf16.mxu0 0
    %1881 = vmatpush1.bf16.msra.mxu0 %v1857
    %1882 = vmatprep.subr.bf16.mxu0 0
    %1883 = vmatpush1.bf16.msra.mxu0 0
    %1884 = vmatprep.subr.bf16.mxu0 0
    %1885 = vmatpush1.bf16.msra.mxu0 0
    %1886 = vmatprep.subr.bf16.mxu0 0
    %1887 = vmatpush1.bf16.msra.mxu0 0
    %1888 = vmatprep.subr.bf16.mxu0 0
    %1889 = vmatpush1.bf16.msra.mxu0 0
    %1890 = vmatprep.subr.bf16.mxu0 0
    %1891 = vmatpush1.bf16.msra.mxu0 0
    %1892 = vmatprep.subr.bf16.mxu0 0
    %1893 = vmatpush1.bf16.msra.mxu0 0
    %1894 = vmatprep.subr.bf16.mxu0 0
    %1895 = vmatpush1.bf16.msra.mxu0 0
    %1896 = vmatprep.subr.bf16.mxu0 0
    %1897 = vmatpush1.bf16.msra.mxu0 0
    %1898 = vmatprep.mubr.bf16.mxu0 0
    %1899 = vmatmul.mubr.bf16.gmra.mrb[0].mxu0 %v1816
    %v1900 = vpop.f32.mrb[0].mxu0
    %v1901 = vadd.f32 %v1808, %v1900
    %v1902 = vpop.f32.mrb[0].mxu0
    %v1903 = vpop.f32.mrb[0].mxu0
    %v1904 = vpop.f32.mrb[0].mxu0
    %1905 = vdwg.mxu0
    %1907 = vrot.lane.b32.xlu0 %v1781, 36
    %v1908 = vpop.permute.xlu0 %1907
    %vm1910 = vcmask 392480
    %1911 = vst.msk [vmem:[%s2 + $0x8] sm:$0xff] %vm1910, %v1908
    %1913 = vrot.lane.b32.xlu0 %v1901, 48
    %v1914 = vpop.permute.xlu0 %1913
    %vm1916 = vcmask 474496
    %1917 = vst.msk [vmem:[%s2 + $0x8] sm:$0xff] %vm1916, %v1914
    %v1918 = vld [vmem:[#allocation2 + $0x230] sm:$0xf]
    %v1919 = vld [vmem:[#allocation2 + $0x238] sm:$0x1]
    %v1920 = vpack.c.bf16 %v1901, %v1901
    %v1921 = vld [vmem:[#allocation2 + $0x240] sm:$0x1]
    %v1922 = vunpack.c.l.bf16 %v1921
    %v1923 = vlaneseq
    %v1924 = vshrl.u32 %v1923, 7
    %v1925 = vsub.s32 0, %v1924
    %v1926 = vrot.slane %v1922, %v1925
    %v1929 = vunpack.c.l.b16 %v1918
    %v1930 = vunpack.c.l.b16 %v1919
    %v1931 = vpack.c.b16 %v1930, %v1929
    %vm1932 = vcmask 80896
    %v1934 = vsel %vm1932, %v1920, 0
    %vm1936 = vcmask 1044480
    %v1938 = vsel %vm1936, %v1931, 0
    %1940 = vmatprep.subr.bf16.mxu0 0
    %1941 = vmatpush1.bf16.msra.mxu0 %v1938
    %1942 = vmatprep.subr.bf16.mxu0 0
    %1943 = vmatpush1.bf16.msra.mxu0 0
    %1944 = vmatprep.subr.bf16.mxu0 0
    %1945 = vmatpush1.bf16.msra.mxu0 0
    %1946 = vmatprep.subr.bf16.mxu0 0
    %1947 = vmatpush1.bf16.msra.mxu0 0
    %1948 = vmatprep.subr.bf16.mxu0 0
    %1949 = vmatpush1.bf16.msra.mxu0 0
    %1950 = vmatprep.subr.bf16.mxu0 0
    %1951 = vmatpush1.bf16.msra.mxu0 0
    %1952 = vmatprep.subr.bf16.mxu0 0
    %1953 = vmatpush1.bf16.msra.mxu0 0
    %1954 = vmatprep.subr.bf16.mxu0 0
    %1955 = vmatpush1.bf16.msra.mxu0 0
    %1956 = vmatprep.subr.bf16.mxu0 0
    %1957 = vmatpush1.bf16.msra.mxu0 0
    %1958 = vmatprep.subr.bf16.mxu0 0
    %1959 = vmatpush1.bf16.msra.mxu0 0
    %1960 = vmatprep.subr.bf16.mxu0 0
    %1961 = vmatpush1.bf16.msra.mxu0 0
    %1962 = vmatprep.subr.bf16.mxu0 0
    %1963 = vmatpush1.bf16.msra.mxu0 0
    %1964 = vmatprep.subr.bf16.mxu0 0
    %1965 = vmatpush1.bf16.msra.mxu0 0
    %1966 = vmatprep.subr.bf16.mxu0 0
    %1967 = vmatpush1.bf16.msra.mxu0 0
    %1968 = vmatprep.subr.bf16.mxu0 0
    %1969 = vmatpush1.bf16.msra.mxu0 0
    %1970 = vmatprep.subr.bf16.mxu0 0
    %1971 = vmatpush1.bf16.msra.mxu0 0
    %1972 = vmatprep.mubr.bf16.mxu0 0
    %1973 = vmatmul.mubr.bf16.gmra.mrb[0].mxu0 %v1934
    %v1974 = vpop.f32.mrb[0].mxu0
    %v1975 = vadd.f32 %v1926, %v1974
    %v1976 = vpop.f32.mrb[0].mxu0
    %v1977 = vpop.f32.mrb[0].mxu0
    %v1978 = vpop.f32.mrb[0].mxu0
    %1979 = vdwg.mxu0
    %v1980 = vld [vmem:[#allocation2 + $0x250] sm:$0xf]
    %v1981 = vld [vmem:[#allocation2 + $0x258] sm:$0xf]
    %v1982 = vld [vmem:[#allocation2 + $0x260] sm:$0xf]
    %v1983 = vld [vmem:[#allocation2 + $0x268] sm:$0xf]
    %v1984 = vld [vmem:[#allocation2 + $0x270] sm:$0xf]
    %v1985 = vld [vmem:[#allocation2 + $0x278] sm:$0xf]
    %v1986 = vld [vmem:[#allocation2 + $0x280] sm:$0xf]
    %v1987 = vld [vmem:[#allocation2 + $0x288] sm:$0xf]
    %v1988 = vld [vmem:[#allocation2 + $0x290] sm:$0xf]
    %v1989 = vld [vmem:[#allocation2 + $0x298] sm:$0xf]
    %v1990 = vld [vmem:[#allocation2 + $0x2a0] sm:$0xf]
    %v1991 = vld [vmem:[#allocation2 + $0x2a8] sm:$0xf]
    %v1992 = vld [vmem:[#allocation2 + $0x2b0] sm:$0xf]
    %v1993 = vld [vmem:[#allocation2 + $0x2b8] sm:$0xf]
    %v1994 = vld [vmem:[#allocation2 + $0x2c0] sm:$0xf]
    %v1995 = vld [vmem:[#allocation2 + $0x2c8] sm:$0xf]
    %v1996 = vld [vmem:[#allocation2 + $0x2d0] sm:$0xf]
    %v1997 = vld [vmem:[#allocation2 + $0x2d8] sm:$0xf]
    %v1998 = vld [vmem:[#allocation2 + $0x2e0] sm:$0xf]
    %v1999 = vld [vmem:[#allocation2 + $0x2e8] sm:$0xf]
    %v2000 = vpack.c.bf16 %v1975, %v1975
    %v2017 = vunpack.c.l.b16 %v1984
    %v2018 = vunpack.c.l.b16 %v1985
    %v2019 = vunpack.c.l.b16 %v1986
    %v2020 = vunpack.c.l.b16 %v1987
    %v2021 = vunpack.c.l.b16 %v1988
    %v2022 = vunpack.c.l.b16 %v1989
    %v2023 = vunpack.c.l.b16 %v1990
    %v2024 = vunpack.c.l.b16 %v1991
    %v2025 = vunpack.c.l.b16 %v1992
    %v2026 = vunpack.c.l.b16 %v1993
    %v2027 = vunpack.c.l.b16 %v1994
    %v2028 = vunpack.c.l.b16 %v1995
    %v2029 = vunpack.c.l.b16 %v1996
    %v2030 = vunpack.c.l.b16 %v1997
    %v2031 = vunpack.c.l.b16 %v1998
    %v2032 = vunpack.c.l.b16 %v1999
    %v2033 = vpack.c.b16 %v2018, %v2017
    %v2034 = vpack.c.b16 %v2020, %v2019
    %v2035 = vpack.c.b16 %v2022, %v2021
    %v2036 = vpack.c.b16 %v2024, %v2023
    %v2037 = vpack.c.b16 %v2026, %v2025
    %v2038 = vpack.c.b16 %v2028, %v2027
    %v2039 = vpack.c.b16 %v2030, %v2029
    %v2040 = vpack.c.b16 %v2032, %v2031
    %2049 = vmatprep.subr.bf16.mxu0 0
    %2050 = vmatpush1.bf16.msra.mxu0 %v2033
    %2051 = vmatprep.subr.bf16.mxu0 0
    %2052 = vmatpush1.bf16.msra.mxu0 %v2034
    %2053 = vmatprep.subr.bf16.mxu0 0
    %2054 = vmatpush1.bf16.msra.mxu0 %v2035
    %2055 = vmatprep.subr.bf16.mxu0 0
    %2056 = vmatpush1.bf16.msra.mxu0 %v2036
    %2057 = vmatprep.subr.bf16.mxu0 0
    %2058 = vmatpush1.bf16.msra.mxu0 %v2037
    %2059 = vmatprep.subr.bf16.mxu0 0
    %2060 = vmatpush1.bf16.msra.mxu0 %v2038
    %2061 = vmatprep.subr.bf16.mxu0 0
    %2062 = vmatpush1.bf16.msra.mxu0 %v2039
    %2063 = vmatprep.subr.bf16.mxu0 0
    %2064 = vmatpush1.bf16.msra.mxu0 %v2040
    %2065 = vmatprep.subr.bf16.mxu0 0
    %2066 = vmatpush1.bf16.msra.mxu0 0
    %2067 = vmatprep.subr.bf16.mxu0 0
    %2068 = vmatpush1.bf16.msra.mxu0 0
    %2069 = vmatprep.subr.bf16.mxu0 0
    %2070 = vmatpush1.bf16.msra.mxu0 0
    %2071 = vmatprep.subr.bf16.mxu0 0
    %2072 = vmatpush1.bf16.msra.mxu0 0
    %2073 = vmatprep.subr.bf16.mxu0 0
    %2074 = vmatpush1.bf16.msra.mxu0 0
    %2075 = vmatprep.subr.bf16.mxu0 0
    %2076 = vmatpush1.bf16.msra.mxu0 0
    %2077 = vmatprep.subr.bf16.mxu0 0
    %2078 = vmatpush1.bf16.msra.mxu0 0
    %2079 = vmatprep.subr.bf16.mxu0 0
    %2080 = vmatpush1.bf16.msra.mxu0 0
    %2081 = vmatprep.mubr.bf16.mxu0 0
    %2082 = vmatmul.mubr.bf16.gmra.mrb[0].mxu0 %v2000
    %v2083 = vpop.f32.mrb[0].mxu0
    %v2084 = vadd.f32 0.0, %v2083
    %v2085 = vpop.f32.mrb[0].mxu0
    %v2086 = vpop.f32.mrb[0].mxu0
    %v2087 = vpop.f32.mrb[0].mxu0
    %2088 = vdwg.mxu0
    %v2093 = vunpack.c.l.b16 %v1980
    %v2094 = vunpack.c.l.b16 %v1981
    %v2095 = vunpack.c.l.b16 %v1982
    %v2096 = vunpack.c.l.b16 %v1983
    %v2097 = vpack.c.b16 %v2094, %v2093
    %v2098 = vpack.c.b16 %v2096, %v2095
    %2101 = vmatprep.subr.bf16.mxu0 0
    %2102 = vmatpush1.bf16.msra.mxu0 %v2097
    %2103 = vmatprep.subr.bf16.mxu0 0
    %2104 = vmatpush1.bf16.msra.mxu0 %v2098
    %2105 = vmatprep.subr.bf16.mxu0 0
    %2106 = vmatpush1.bf16.msra.mxu0 0
    %2107 = vmatprep.subr.bf16.mxu0 0
    %2108 = vmatpush1.bf16.msra.mxu0 0
    %2109 = vmatprep.subr.bf16.mxu0 0
    %2110 = vmatpush1.bf16.msra.mxu0 0
    %2111 = vmatprep.subr.bf16.mxu0 0
    %2112 = vmatpush1.bf16.msra.mxu0 0
    %2113 = vmatprep.subr.bf16.mxu0 0
    %2114 = vmatpush1.bf16.msra.mxu0 0
    %2115 = vmatprep.subr.bf16.mxu0 0
    %2116 = vmatpush1.bf16.msra.mxu0 0
    %2117 = vmatprep.subr.bf16.mxu0 0
    %2118 = vmatpush1.bf16.msra.mxu0 0
    %2119 = vmatprep.subr.bf16.mxu0 0
    %2120 = vmatpush1.bf16.msra.mxu0 0
    %2121 = vmatprep.subr.bf16.mxu0 0
    %2122 = vmatpush1.bf16.msra.mxu0 0
    %2123 = vmatprep.subr.bf16.mxu0 0
    %2124 = vmatpush1.bf16.msra.mxu0 0
    %2125 = vmatprep.subr.bf16.mxu0 0
    %2126 = vmatpush1.bf16.msra.mxu0 0
    %2127 = vmatprep.subr.bf16.mxu0 0
    %2128 = vmatpush1.bf16.msra.mxu0 0
    %2129 = vmatprep.subr.bf16.mxu0 0
    %2130 = vmatpush1.bf16.msra.mxu0 0
    %2131 = vmatprep.subr.bf16.mxu0 0
    %2132 = vmatpush1.bf16.msra.mxu0 0
    %2133 = vmatprep.mubr.bf16.mxu0 0
    %2134 = vmatmul.mubr.bf16.gmra.mrb[0].mxu0 %v1675
    %v2135 = vpop.f32.mrb[0].mxu0
    %v2136 = vadd.f32 %v2084, %v2135
    %v2137 = vpop.f32.mrb[0].mxu0
    %v2138 = vpop.f32.mrb[0].mxu0
    %v2139 = vpop.f32.mrb[0].mxu0
    %2140 = vdwg.mxu0
    %v2141 = vld [vmem:[#allocation2 + $0x2f0] sm:$0x1]
    %v2142 = vunpack.c.l.bf16 %v2141
    %v2143 = vlaneseq
    %v2144 = vshrl.u32 %v2143, 7
    %v2145 = vsub.s32 0, %v2144
    %v2146 = vrot.slane %v2142, %v2145
    %v2147 = vadd.f32 %v2136, %v2146
    %v2148 = vld [vmem:[#allocation2 + $0x3e0] sm:$0xf]
    %v2149 = vld [vmem:[#allocation2 + $0x3e8] sm:$0xf]
    %v2150 = vld [vmem:[#allocation2 + $0x3f0] sm:$0xf]
    %v2151 = vld [vmem:[#allocation2 + $0x3f8] sm:$0xf]
    %v2152 = vpack.c.bf16 %v2147, %v2147
    %v2153 = vld [vmem:[#allocation2 + $0x400] sm:$0x1]
    %v2154 = vunpack.c.l.bf16 %v2153
    %v2155 = vlaneseq
    %v2156 = vshrl.u32 %v2155, 7
    %v2157 = vsub.s32 0, %v2156
    %v2158 = vrot.slane %v2154, %v2157
    %v2163 = vunpack.c.l.b16 %v2148
    %v2164 = vunpack.c.l.b16 %v2149
    %v2165 = vunpack.c.l.b16 %v2150
    %v2166 = vunpack.c.l.b16 %v2151
    %v2167 = vpack.c.b16 %v2164, %v2163
    %v2168 = vpack.c.b16 %v2166, %v2165
    %v2172 = vsel %vm259, %v2152, 0
    %2174 = vmatprep.subr.bf16.mxu0 0
    %2175 = vmatpush1.bf16.msra.mxu0 %v2167
    %2176 = vmatprep.subr.bf16.mxu0 0
    %2177 = vmatpush1.bf16.msra.mxu0 %v2168
    %2178 = vmatprep.subr.bf16.mxu0 0
    %2179 = vmatpush1.bf16.msra.mxu0 0
    %2180 = vmatprep.subr.bf16.mxu0 0
    %2181 = vmatpush1.bf16.msra.mxu0 0
    %2182 = vmatprep.subr.bf16.mxu0 0
    %2183 = vmatpush1.bf16.msra.mxu0 0
    %2184 = vmatprep.subr.bf16.mxu0 0
    %2185 = vmatpush1.bf16.msra.mxu0 0
    %2186 = vmatprep.subr.bf16.mxu0 0
    %2187 = vmatpush1.bf16.msra.mxu0 0
    %2188 = vmatprep.subr.bf16.mxu0 0
    %2189 = vmatpush1.bf16.msra.mxu0 0
    %2190 = vmatprep.subr.bf16.mxu0 0
    %2191 = vmatpush1.bf16.msra.mxu0 0
    %2192 = vmatprep.subr.bf16.mxu0 0
    %2193 = vmatpush1.bf16.msra.mxu0 0
    %2194 = vmatprep.subr.bf16.mxu0 0
    %2195 = vmatpush1.bf16.msra.mxu0 0
    %2196 = vmatprep.subr.bf16.mxu0 0
    %2197 = vmatpush1.bf16.msra.mxu0 0
    %2198 = vmatprep.subr.bf16.mxu0 0
    %2199 = vmatpush1.bf16.msra.mxu0 0
    %2200 = vmatprep.subr.bf16.mxu0 0
    %2201 = vmatpush1.bf16.msra.mxu0 0
    %2202 = vmatprep.subr.bf16.mxu0 0
    %2203 = vmatpush1.bf16.msra.mxu0 0
    %2204 = vmatprep.subr.bf16.mxu0 0
    %2205 = vmatpush1.bf16.msra.mxu0 0
    %2206 = vmatprep.mubr.bf16.mxu0 0
    %2207 = vmatmul.mubr.bf16.gmra.mrb[0].mxu0 %v2172
    %v2208 = vpop.f32.mrb[0].mxu0
    %v2209 = vadd.f32 %v2158, %v2208
    %v2210 = vpop.f32.mrb[0].mxu0
    %v2211 = vpop.f32.mrb[0].mxu0
    %v2212 = vpop.f32.mrb[0].mxu0
    %2213 = vdwg.mxu0
    %v2214 = vld [vmem:[#allocation2 + $0x510] sm:$0xf]
    %v2215 = vld [vmem:[#allocation2 + $0x518] sm:$0xf]
    %v2216 = vld [vmem:[#allocation2 + $0x520] sm:$0xf]
    %v2217 = vld [vmem:[#allocation2 + $0x528] sm:$0xf]
    %v2218 = vld [vmem:[#allocation2 + $0x530] sm:$0x1]
    %v2219 = vunpack.c.l.bf16 %v2218
    %v2220 = vlaneseq
    %v2221 = vshrl.u32 %v2220, 7
    %v2222 = vsub.s32 0, %v2221
    %v2223 = vrot.slane %v2219, %v2222
    %v2228 = vunpack.c.l.b16 %v2214
    %v2229 = vunpack.c.l.b16 %v2215
    %v2230 = vunpack.c.l.b16 %v2216
    %v2231 = vunpack.c.l.b16 %v2217
    %v2232 = vpack.c.b16 %v2229, %v2228
    %v2233 = vpack.c.b16 %v2231, %v2230
    %2236 = vmatprep.subr.bf16.mxu0 0
    %2237 = vmatpush1.bf16.msra.mxu0 %v2232
    %2238 = vmatprep.subr.bf16.mxu0 0
    %2239 = vmatpush1.bf16.msra.mxu0 %v2233
    %2240 = vmatprep.subr.bf16.mxu0 0
    %2241 = vmatpush1.bf16.msra.mxu0 0
    %2242 = vmatprep.subr.bf16.mxu0 0
    %2243 = vmatpush1.bf16.msra.mxu0 0
    %2244 = vmatprep.subr.bf16.mxu0 0
    %2245 = vmatpush1.bf16.msra.mxu0 0
    %2246 = vmatprep.subr.bf16.mxu0 0
    %2247 = vmatpush1.bf16.msra.mxu0 0
    %2248 = vmatprep.subr.bf16.mxu0 0
    %2249 = vmatpush1.bf16.msra.mxu0 0
    %2250 = vmatprep.subr.bf16.mxu0 0
    %2251 = vmatpush1.bf16.msra.mxu0 0
    %2252 = vmatprep.subr.bf16.mxu0 0
    %2253 = vmatpush1.bf16.msra.mxu0 0
    %2254 = vmatprep.subr.bf16.mxu0 0
    %2255 = vmatpush1.bf16.msra.mxu0 0
    %2256 = vmatprep.subr.bf16.mxu0 0
    %2257 = vmatpush1.bf16.msra.mxu0 0
    %2258 = vmatprep.subr.bf16.mxu0 0
    %2259 = vmatpush1.bf16.msra.mxu0 0
    %2260 = vmatprep.subr.bf16.mxu0 0
    %2261 = vmatpush1.bf16.msra.mxu0 0
    %2262 = vmatprep.subr.bf16.mxu0 0
    %2263 = vmatpush1.bf16.msra.mxu0 0
    %2264 = vmatprep.subr.bf16.mxu0 0
    %2265 = vmatpush1.bf16.msra.mxu0 0
    %2266 = vmatprep.subr.bf16.mxu0 0
    %2267 = vmatpush1.bf16.msra.mxu0 0
    %2268 = vmatprep.mubr.bf16.mxu0 0
    %2269 = vmatmul.mubr.bf16.gmra.mrb[0].mxu0 %v2172
    %v2270 = vpop.f32.mrb[0].mxu0
    %v2271 = vadd.f32 %v2223, %v2270
    %v2272 = vpop.f32.mrb[0].mxu0
    %v2273 = vpop.f32.mrb[0].mxu0
    %v2274 = vpop.f32.mrb[0].mxu0
    %2275 = vdwg.mxu0
    %v2276 = vld [vmem:[#allocation2 + $0x300] sm:$0xf]
    %v2277 = vld [vmem:[#allocation2 + $0x308] sm:$0xf]
    %v2278 = vld [vmem:[#allocation2 + $0x310] sm:$0xf]
    %v2279 = vld [vmem:[#allocation2 + $0x318] sm:$0xf]
    %v2280 = vld [vmem:[#allocation2 + $0x320] sm:$0xf]
    %v2281 = vld [vmem:[#allocation2 + $0x328] sm:$0xf]
    %v2282 = vld [vmem:[#allocation2 + $0x330] sm:$0xf]
    %v2283 = vld [vmem:[#allocation2 + $0x338] sm:$0xf]
    %v2288 = vunpack.c.l.b16 %v2280
    %v2289 = vunpack.c.l.b16 %v2281
    %v2290 = vunpack.c.l.b16 %v2282
    %v2291 = vunpack.c.l.b16 %v2283
    %v2292 = vpack.c.b16 %v2289, %v2288
    %v2293 = vpack.c.b16 %v2291, %v2290
    %2296 = vmatprep.subr.bf16.mxu0 0
    %2297 = vmatpush1.bf16.msra.mxu0 %v2292
    %2298 = vmatprep.subr.bf16.mxu0 0
    %2299 = vmatpush1.bf16.msra.mxu0 %v2293
    %2300 = vmatprep.subr.bf16.mxu0 0
    %2301 = vmatpush1.bf16.msra.mxu0 0
    %2302 = vmatprep.subr.bf16.mxu0 0
    %2303 = vmatpush1.bf16.msra.mxu0 0
    %2304 = vmatprep.subr.bf16.mxu0 0
    %2305 = vmatpush1.bf16.msra.mxu0 0
    %2306 = vmatprep.subr.bf16.mxu0 0
    %2307 = vmatpush1.bf16.msra.mxu0 0
    %2308 = vmatprep.subr.bf16.mxu0 0
    %2309 = vmatpush1.bf16.msra.mxu0 0
    %2310 = vmatprep.subr.bf16.mxu0 0
    %2311 = vmatpush1.bf16.msra.mxu0 0
    %2312 = vmatprep.subr.bf16.mxu0 0
    %2313 = vmatpush1.bf16.msra.mxu0 0
    %2314 = vmatprep.subr.bf16.mxu0 0
    %2315 = vmatpush1.bf16.msra.mxu0 0
    %2316 = vmatprep.subr.bf16.mxu0 0
    %2317 = vmatpush1.bf16.msra.mxu0 0
    %2318 = vmatprep.subr.bf16.mxu0 0
    %2319 = vmatpush1.bf16.msra.mxu0 0
    %2320 = vmatprep.subr.bf16.mxu0 0
    %2321 = vmatpush1.bf16.msra.mxu0 0
    %2322 = vmatprep.subr.bf16.mxu0 0
    %2323 = vmatpush1.bf16.msra.mxu0 0
    %2324 = vmatprep.subr.bf16.mxu0 0
    %2325 = vmatpush1.bf16.msra.mxu0 0
    %2326 = vmatprep.subr.bf16.mxu0 0
    %2327 = vmatpush1.bf16.msra.mxu0 0
    %2328 = vmatprep.mubr.bf16.mxu0 0
    %2329 = vmatmul.mubr.bf16.gmra.mrb[0].mxu0 %v261
    %v2330 = vpop.f32.mrb[0].mxu0
    %v2331 = vadd.f32 0.0, %v2330
    %v2332 = vpop.f32.mrb[0].mxu0
    %v2333 = vpop.f32.mrb[0].mxu0
    %v2334 = vpop.f32.mrb[0].mxu0
    %2335 = vdwg.mxu0
    %v2340 = vunpack.c.l.b16 %v2276
    %v2341 = vunpack.c.l.b16 %v2277
    %v2342 = vunpack.c.l.b16 %v2278
    %v2343 = vunpack.c.l.b16 %v2279
    %v2344 = vpack.c.b16 %v2341, %v2340
    %v2345 = vpack.c.b16 %v2343, %v2342
    %2348 = vmatprep.subr.bf16.mxu0 0
    %2349 = vmatpush1.bf16.msra.mxu0 %v2344
    %2350 = vmatprep.subr.bf16.mxu0 0
    %2351 = vmatpush1.bf16.msra.mxu0 %v2345
    %2352 = vmatprep.subr.bf16.mxu0 0
    %2353 = vmatpush1.bf16.msra.mxu0 0
    %2354 = vmatprep.subr.bf16.mxu0 0
    %2355 = vmatpush1.bf16.msra.mxu0 0
    %2356 = vmatprep.subr.bf16.mxu0 0
    %2357 = vmatpush1.bf16.msra.mxu0 0
    %2358 = vmatprep.subr.bf16.mxu0 0
    %2359 = vmatpush1.bf16.msra.mxu0 0
    %2360 = vmatprep.subr.bf16.mxu0 0
    %2361 = vmatpush1.bf16.msra.mxu0 0
    %2362 = vmatprep.subr.bf16.mxu0 0
    %2363 = vmatpush1.bf16.msra.mxu0 0
    %2364 = vmatprep.subr.bf16.mxu0 0
    %2365 = vmatpush1.bf16.msra.mxu0 0
    %2366 = vmatprep.subr.bf16.mxu0 0
    %2367 = vmatpush1.bf16.msra.mxu0 0
    %2368 = vmatprep.subr.bf16.mxu0 0
    %2369 = vmatpush1.bf16.msra.mxu0 0
    %2370 = vmatprep.subr.bf16.mxu0 0
    %2371 = vmatpush1.bf16.msra.mxu0 0
    %2372 = vmatprep.subr.bf16.mxu0 0
    %2373 = vmatpush1.bf16.msra.mxu0 0
    %2374 = vmatprep.subr.bf16.mxu0 0
    %2375 = vmatpush1.bf16.msra.mxu0 0
    %2376 = vmatprep.subr.bf16.mxu0 0
    %2377 = vmatpush1.bf16.msra.mxu0 0
    %2378 = vmatprep.subr.bf16.mxu0 0
    %2379 = vmatpush1.bf16.msra.mxu0 0
    %2380 = vmatprep.mubr.bf16.mxu0 0
    %2381 = vmatmul.mubr.bf16.gmra.mrb[0].mxu0 %v2172
    %v2382 = vpop.f32.mrb[0].mxu0
    %v2383 = vadd.f32 %v2331, %v2382
    %v2384 = vpop.f32.mrb[0].mxu0
    %v2385 = vpop.f32.mrb[0].mxu0
    %v2386 = vpop.f32.mrb[0].mxu0
    %2387 = vdwg.mxu0
    %v2388 = vld [vmem:[#allocation2 + $0x340] sm:$0x1]
    %v2389 = vunpack.c.l.bf16 %v2388
    %v2390 = vlaneseq
    %v2391 = vshrl.u32 %v2390, 7
    %v2392 = vsub.s32 0, %v2391
    %v2393 = vrot.slane %v2389, %v2392
    %v2394 = vadd.f32 %v2383, %v2393
    %v2395 = vxor.u32 %v2394, 2147483648
    %v2396 = vmul.f32 %v2395, 1.442695
    %v2397 = vpow.pop %v2396
    %v2398 = vadd.f32 %v2397, 1.0
    %v2399 = vrcp.pop %v2398
    %v2400 = vmul.f32 1.0, %v2399
    %v2401 = vtanh.pop %v2394
    %v2402 = vmul.f32 %v2400, 0.0
    %2404 = vrot.lane.b32.xlu0 %v2401, 64
    %v2405 = vpop.permute.xlu0 %2404
    %v2407 = vmul.f32 %v2400, %v2405
    %2409 = vrot.lane.b32.xlu0 %v2407, 32
    %v2410 = vpop.permute.xlu0 %2409
    %v2412 = vadd.f32 %v2402, %v2410
    %v2413 = vtanh.pop %v2412
    %2415 = vrot.lane.b32.xlu0 %v2413, 64
    %v2416 = vpop.permute.xlu0 %2415
    %v2418 = vmul.f32 %v2400, %v2416
    %v2419 = vld [vmem:[#allocation2 + $0x350] sm:$0xf]
    %v2420 = vld [vmem:[#allocation2 + $0x358] sm:$0xf]
    %v2421 = vld [vmem:[#allocation2 + $0x360] sm:$0xf]
    %v2422 = vld [vmem:[#allocation2 + $0x368] sm:$0xf]
    %v2423 = vpack.c.bf16 %v2418, %v2418
    %v2424 = vld [vmem:[#allocation2 + $0x370] sm:$0x1]
    %v2425 = vunpack.c.l.bf16 %v2424
    %v2426 = vlaneseq
    %v2427 = vshrl.u32 %v2426, 7
    %v2428 = vsub.s32 0, %v2427
    %v2429 = vrot.slane %v2425, %v2428
    %2431 = vrot.lane.b32.xlu0 %v2423, 32
    %v2432 = vpop.permute.xlu0 %2431
    %v2437 = vunpack.c.l.b16 %v2419
    %v2438 = vunpack.c.l.b16 %v2420
    %v2439 = vunpack.c.l.b16 %v2421
    %v2440 = vunpack.c.l.b16 %v2422
    %v2441 = vpack.c.b16 %v2438, %v2437
    %v2442 = vpack.c.b16 %v2440, %v2439
    %v2446 = vsel %vm259, %v2432, 0
    %2448 = vmatprep.subr.bf16.mxu0 0
    %2449 = vmatpush1.bf16.msra.mxu0 %v2441
    %2450 = vmatprep.subr.bf16.mxu0 0
    %2451 = vmatpush1.bf16.msra.mxu0 %v2442
    %2452 = vmatprep.subr.bf16.mxu0 0
    %2453 = vmatpush1.bf16.msra.mxu0 0
    %2454 = vmatprep.subr.bf16.mxu0 0
    %2455 = vmatpush1.bf16.msra.mxu0 0
    %2456 = vmatprep.subr.bf16.mxu0 0
    %2457 = vmatpush1.bf16.msra.mxu0 0
    %2458 = vmatprep.subr.bf16.mxu0 0
    %2459 = vmatpush1.bf16.msra.mxu0 0
    %2460 = vmatprep.subr.bf16.mxu0 0
    %2461 = vmatpush1.bf16.msra.mxu0 0
    %2462 = vmatprep.subr.bf16.mxu0 0
    %2463 = vmatpush1.bf16.msra.mxu0 0
    %2464 = vmatprep.subr.bf16.mxu0 0
    %2465 = vmatpush1.bf16.msra.mxu0 0
    %2466 = vmatprep.subr.bf16.mxu0 0
    %2467 = vmatpush1.bf16.msra.mxu0 0
    %2468 = vmatprep.subr.bf16.mxu0 0
    %2469 = vmatpush1.bf16.msra.mxu0 0
    %2470 = vmatprep.subr.bf16.mxu0 0
    %2471 = vmatpush1.bf16.msra.mxu0 0
    %2472 = vmatprep.subr.bf16.mxu0 0
    %2473 = vmatpush1.bf16.msra.mxu0 0
    %2474 = vmatprep.subr.bf16.mxu0 0
    %2475 = vmatpush1.bf16.msra.mxu0 0
    %2476 = vmatprep.subr.bf16.mxu0 0
    %2477 = vmatpush1.bf16.msra.mxu0 0
    %2478 = vmatprep.subr.bf16.mxu0 0
    %2479 = vmatpush1.bf16.msra.mxu0 0
    %2480 = vmatprep.mubr.bf16.mxu0 0
    %2481 = vmatmul.mubr.bf16.gmra.mrb[0].mxu0 %v2446
    %v2482 = vpop.f32.mrb[0].mxu0
    %v2483 = vadd.f32 %v2429, %v2482
    %v2484 = vpop.f32.mrb[0].mxu0
    %v2485 = vpop.f32.mrb[0].mxu0
    %v2486 = vpop.f32.mrb[0].mxu0
    %2487 = vdwg.mxu0
    %v2488 = vmax.f32 %v2483, 0.0
    %v2489 = vld [vmem:[#allocation2 + $0x380] sm:$0xf]
    %v2490 = vld [vmem:[#allocation2 + $0x388] sm:$0xf]
    %v2491 = vld [vmem:[#allocation2 + $0x390] sm:$0xf]
    %v2492 = vld [vmem:[#allocation2 + $0x398] sm:$0xf]
    %v2493 = vpack.c.bf16 %v2488, %v2488
    %v2494 = vld [vmem:[#allocation2 + $0x3a0] sm:$0x1]
    %v2495 = vunpack.c.l.bf16 %v2494
    %v2496 = vlaneseq
    %v2497 = vshrl.u32 %v2496, 7
    %v2498 = vsub.s32 0, %v2497
    %v2499 = vrot.slane %v2495, %v2498
    %v2504 = vunpack.c.l.b16 %v2489
    %v2505 = vunpack.c.l.b16 %v2490
    %v2506 = vunpack.c.l.b16 %v2491
    %v2507 = vunpack.c.l.b16 %v2492
    %v2508 = vpack.c.b16 %v2505, %v2504
    %v2509 = vpack.c.b16 %v2507, %v2506
    %v2513 = vsel %vm259, %v2493, 0
    %2515 = vmatprep.subr.bf16.mxu0 0
    %2516 = vmatpush1.bf16.msra.mxu0 %v2508
    %2517 = vmatprep.subr.bf16.mxu0 0
    %2518 = vmatpush1.bf16.msra.mxu0 %v2509
    %2519 = vmatprep.subr.bf16.mxu0 0
    %2520 = vmatpush1.bf16.msra.mxu0 0
    %2521 = vmatprep.subr.bf16.mxu0 0
    %2522 = vmatpush1.bf16.msra.mxu0 0
    %2523 = vmatprep.subr.bf16.mxu0 0
    %2524 = vmatpush1.bf16.msra.mxu0 0
    %2525 = vmatprep.subr.bf16.mxu0 0
    %2526 = vmatpush1.bf16.msra.mxu0 0
    %2527 = vmatprep.subr.bf16.mxu0 0
    %2528 = vmatpush1.bf16.msra.mxu0 0
    %2529 = vmatprep.subr.bf16.mxu0 0
    %2530 = vmatpush1.bf16.msra.mxu0 0
    %2531 = vmatprep.subr.bf16.mxu0 0
    %2532 = vmatpush1.bf16.msra.mxu0 0
    %2533 = vmatprep.subr.bf16.mxu0 0
    %2534 = vmatpush1.bf16.msra.mxu0 0
    %2535 = vmatprep.subr.bf16.mxu0 0
    %2536 = vmatpush1.bf16.msra.mxu0 0
    %2537 = vmatprep.subr.bf16.mxu0 0
    %2538 = vmatpush1.bf16.msra.mxu0 0
    %2539 = vmatprep.subr.bf16.mxu0 0
    %2540 = vmatpush1.bf16.msra.mxu0 0
    %2541 = vmatprep.subr.bf16.mxu0 0
    %2542 = vmatpush1.bf16.msra.mxu0 0
    %2543 = vmatprep.subr.bf16.mxu0 0
    %2544 = vmatpush1.bf16.msra.mxu0 0
    %2545 = vmatprep.subr.bf16.mxu0 0
    %2546 = vmatpush1.bf16.msra.mxu0 0
    %2547 = vmatprep.mubr.bf16.mxu0 0
    %2548 = vmatmul.mubr.bf16.gmra.mrb[0].mxu0 %v2513
    %v2549 = vpop.f32.mrb[0].mxu0
    %v2550 = vadd.f32 %v2499, %v2549
    %v2551 = vpop.f32.mrb[0].mxu0
    %v2552 = vpop.f32.mrb[0].mxu0
    %v2553 = vpop.f32.mrb[0].mxu0
    %2554 = vdwg.mxu0
    %vm2555 = vcmask 72704
    %2556 = vst.msk [vmem:[%s2] sm:$0xff] %vm2555, %v2550
    %v2557 = vsel %vm2555, %v2550, -inf
    %2558 = vmax.xlane.f32.xlu0 %v2557
    %v2559 = vpop.xlane.xlu0 %2558
    %vm2560 = vcmp.eq.f32.partialorder %v2550, %v2559
    %v2561 = vld [vmem:[#allocation2 + $0x3b0] sm:$0xf]
    %v2562 = vld [vmem:[#allocation2 + $0x3b8] sm:$0x1]
    %v2563 = vsel %vm2560, 1, 0
    %v2564 = vcvt.s32.f32 %v2563
    %v2565 = vpack.c.bf16 %v2564, %v2564
    %v2568 = vunpack.c.l.b16 %v2561
    %v2569 = vunpack.c.l.b16 %v2562
    %v2570 = vpack.c.b16 %v2569, %v2568
    %v2572 = vsel %vm2555, %v2565, 0
    %vm2574 = vcmask 1043456
    %v2575 = vsel %vm2574, 4294967295, 65535
    %v2576 = vsel %vm1936, %v2575, 0
    %v2578 = vand.u32 %v2570, %v2576
    %2580 = vmatprep.subr.bf16.mxu0 0
    %2581 = vmatpush1.bf16.msra.mxu0 %v2578
    %2582 = vmatprep.subr.bf16.mxu0 0
    %2583 = vmatpush1.bf16.msra.mxu0 0
    %2584 = vmatprep.subr.bf16.mxu0 0
    %2585 = vmatpush1.bf16.msra.mxu0 0
    %2586 = vmatprep.subr.bf16.mxu0 0
    %2587 = vmatpush1.bf16.msra.mxu0 0
    %2588 = vmatprep.subr.bf16.mxu0 0
    %2589 = vmatpush1.bf16.msra.mxu0 0
    %2590 = vmatprep.subr.bf16.mxu0 0
    %2591 = vmatpush1.bf16.msra.mxu0 0
    %2592 = vmatprep.subr.bf16.mxu0 0
    %2593 = vmatpush1.bf16.msra.mxu0 0
    %2594 = vmatprep.subr.bf16.mxu0 0
    %2595 = vmatpush1.bf16.msra.mxu0 0
    %2596 = vmatprep.subr.bf16.mxu0 0
    %2597 = vmatpush1.bf16.msra.mxu0 0
    %2598 = vmatprep.subr.bf16.mxu0 0
    %2599 = vmatpush1.bf16.msra.mxu0 0
    %2600 = vmatprep.subr.bf16.mxu0 0
    %2601 = vmatpush1.bf16.msra.mxu0 0
    %2602 = vmatprep.subr.bf16.mxu0 0
    %2603 = vmatpush1.bf16.msra.mxu0 0
    %2604 = vmatprep.subr.bf16.mxu0 0
    %2605 = vmatpush1.bf16.msra.mxu0 0
    %2606 = vmatprep.subr.bf16.mxu0 0
    %2607 = vmatpush1.bf16.msra.mxu0 0
    %2608 = vmatprep.subr.bf16.mxu0 0
    %2609 = vmatpush1.bf16.msra.mxu0 0
    %2610 = vmatprep.subr.bf16.mxu0 0
    %2611 = vmatpush1.bf16.msra.mxu0 0
    %2612 = vmatprep.mubr.bf16.mxu0 0
    %2613 = vmatmul.mubr.bf16.gmra.mrb[0].mxu0 %v2572
    %v2614 = vpop.f32.mrb[0].mxu0
    %v2615 = vadd.f32 0.0, %v2614
    %v2616 = vpop.f32.mrb[0].mxu0
    %v2617 = vpop.f32.mrb[0].mxu0
    %v2618 = vpop.f32.mrb[0].mxu0
    %2619 = vdwg.mxu0
    %v2620 = vld [vmem:[#allocation2 + $0x3c0] sm:$0xf]
    %v2621 = vld [vmem:[#allocation2 + $0x3c8] sm:$0xf]
    %v2622 = vld [vmem:[#allocation2 + $0x3d0] sm:$0xf]
    %v2623 = vld [vmem:[#allocation2 + $0x3d8] sm:$0xf]
    %v2624 = vpack.c.bf16 %v2615, %v2615
    %v2629 = vunpack.c.l.b16 %v2620
    %v2630 = vunpack.c.l.b16 %v2621
    %v2631 = vunpack.c.l.b16 %v2622
    %v2632 = vunpack.c.l.b16 %v2623
    %v2633 = vpack.c.b16 %v2630, %v2629
    %v2634 = vpack.c.b16 %v2632, %v2631
    %v2638 = vsel %vm259, %v2624, 0
    %2640 = vmatprep.subr.bf16.mxu0 0
    %2641 = vmatpush1.bf16.msra.mxu0 %v2633
    %2642 = vmatprep.subr.bf16.mxu0 0
    %2643 = vmatpush1.bf16.msra.mxu0 %v2634
    %2644 = vmatprep.subr.bf16.mxu0 0
    %2645 = vmatpush1.bf16.msra.mxu0 0
    %2646 = vmatprep.subr.bf16.mxu0 0
    %2647 = vmatpush1.bf16.msra.mxu0 0
    %2648 = vmatprep.subr.bf16.mxu0 0
    %2649 = vmatpush1.bf16.msra.mxu0 0
    %2650 = vmatprep.subr.bf16.mxu0 0
    %2651 = vmatpush1.bf16.msra.mxu0 0
    %2652 = vmatprep.subr.bf16.mxu0 0
    %2653 = vmatpush1.bf16.msra.mxu0 0
    %2654 = vmatprep.subr.bf16.mxu0 0
    %2655 = vmatpush1.bf16.msra.mxu0 0
    %2656 = vmatprep.subr.bf16.mxu0 0
    %2657 = vmatpush1.bf16.msra.mxu0 0
    %2658 = vmatprep.subr.bf16.mxu0 0
    %2659 = vmatpush1.bf16.msra.mxu0 0
    %2660 = vmatprep.subr.bf16.mxu0 0
    %2661 = vmatpush1.bf16.msra.mxu0 0
    %2662 = vmatprep.subr.bf16.mxu0 0
    %2663 = vmatpush1.bf16.msra.mxu0 0
    %2664 = vmatprep.subr.bf16.mxu0 0
    %2665 = vmatpush1.bf16.msra.mxu0 0
    %2666 = vmatprep.subr.bf16.mxu0 0
    %2667 = vmatpush1.bf16.msra.mxu0 0
    %2668 = vmatprep.subr.bf16.mxu0 0
    %2669 = vmatpush1.bf16.msra.mxu0 0
    %2670 = vmatprep.subr.bf16.mxu0 0
    %2671 = vmatpush1.bf16.msra.mxu0 0
    %2672 = vmatprep.mubr.bf16.mxu0 0
    %2673 = vmatmul.mubr.bf16.gmra.mrb[0].mxu0 %v2638
    %v2674 = vpop.f32.mrb[0].mxu0
    %v2675 = vadd.f32 %v2209, %v2674
    %v2676 = vpop.f32.mrb[0].mxu0
    %v2677 = vpop.f32.mrb[0].mxu0
    %v2678 = vpop.f32.mrb[0].mxu0
    %2679 = vdwg.mxu0
    %v2680 = vld [vmem:[#allocation2 + $0x4f0] sm:$0xf]
    %v2681 = vld [vmem:[#allocation2 + $0x4f8] sm:$0xf]
    %v2682 = vld [vmem:[#allocation2 + $0x500] sm:$0xf]
    %v2683 = vld [vmem:[#allocation2 + $0x508] sm:$0xf]
    %v2684 = vpack.c.bf16 %v2675, %v2675
    %v2689 = vunpack.c.l.b16 %v2680
    %v2690 = vunpack.c.l.b16 %v2681
    %v2691 = vunpack.c.l.b16 %v2682
    %v2692 = vunpack.c.l.b16 %v2683
    %v2693 = vpack.c.b16 %v2690, %v2689
    %v2694 = vpack.c.b16 %v2692, %v2691
    %v2698 = vsel %vm259, %v2684, 0
    %2700 = vmatprep.subr.bf16.mxu0 0
    %2701 = vmatpush1.bf16.msra.mxu0 %v2693
    %2702 = vmatprep.subr.bf16.mxu0 0
    %2703 = vmatpush1.bf16.msra.mxu0 %v2694
    %2704 = vmatprep.subr.bf16.mxu0 0
    %2705 = vmatpush1.bf16.msra.mxu0 0
    %2706 = vmatprep.subr.bf16.mxu0 0
    %2707 = vmatpush1.bf16.msra.mxu0 0
    %2708 = vmatprep.subr.bf16.mxu0 0
    %2709 = vmatpush1.bf16.msra.mxu0 0
    %2710 = vmatprep.subr.bf16.mxu0 0
    %2711 = vmatpush1.bf16.msra.mxu0 0
    %2712 = vmatprep.subr.bf16.mxu0 0
    %2713 = vmatpush1.bf16.msra.mxu0 0
    %2714 = vmatprep.subr.bf16.mxu0 0
    %2715 = vmatpush1.bf16.msra.mxu0 0
    %2716 = vmatprep.subr.bf16.mxu0 0
    %2717 = vmatpush1.bf16.msra.mxu0 0
    %2718 = vmatprep.subr.bf16.mxu0 0
    %2719 = vmatpush1.bf16.msra.mxu0 0
    %2720 = vmatprep.subr.bf16.mxu0 0
    %2721 = vmatpush1.bf16.msra.mxu0 0
    %2722 = vmatprep.subr.bf16.mxu0 0
    %2723 = vmatpush1.bf16.msra.mxu0 0
    %2724 = vmatprep.subr.bf16.mxu0 0
    %2725 = vmatpush1.bf16.msra.mxu0 0
    %2726 = vmatprep.subr.bf16.mxu0 0
    %2727 = vmatpush1.bf16.msra.mxu0 0
    %2728 = vmatprep.subr.bf16.mxu0 0
    %2729 = vmatpush1.bf16.msra.mxu0 0
    %2730 = vmatprep.subr.bf16.mxu0 0
    %2731 = vmatpush1.bf16.msra.mxu0 0
    %2732 = vmatprep.mubr.bf16.mxu0 0
    %2733 = vmatmul.mubr.bf16.gmra.mrb[0].mxu0 %v2698
    %v2734 = vpop.f32.mrb[0].mxu0
    %v2735 = vadd.f32 %v2271, %v2734
    %v2736 = vpop.f32.mrb[0].mxu0
    %v2737 = vpop.f32.mrb[0].mxu0
    %v2738 = vpop.f32.mrb[0].mxu0
    %2739 = vdwg.mxu0
    %v2740 = vld [vmem:[#allocation2 + $0x410] sm:$0xf]
    %v2741 = vld [vmem:[#allocation2 + $0x418] sm:$0xf]
    %v2742 = vld [vmem:[#allocation2 + $0x420] sm:$0xf]
    %v2743 = vld [vmem:[#allocation2 + $0x428] sm:$0xf]
    %v2744 = vld [vmem:[#allocation2 + $0x430] sm:$0xf]
    %v2745 = vld [vmem:[#allocation2 + $0x438] sm:$0xf]
    %v2746 = vld [vmem:[#allocation2 + $0x440] sm:$0xf]
    %v2747 = vld [vmem:[#allocation2 + $0x448] sm:$0xf]
    %v2752 = vunpack.c.l.b16 %v2744
    %v2753 = vunpack.c.l.b16 %v2745
    %v2754 = vunpack.c.l.b16 %v2746
    %v2755 = vunpack.c.l.b16 %v2747
    %v2756 = vpack.c.b16 %v2753, %v2752
    %v2757 = vpack.c.b16 %v2755, %v2754
    %2760 = vmatprep.subr.bf16.mxu0 0
    %2761 = vmatpush1.bf16.msra.mxu0 %v2756
    %2762 = vmatprep.subr.bf16.mxu0 0
    %2763 = vmatpush1.bf16.msra.mxu0 %v2757
    %2764 = vmatprep.subr.bf16.mxu0 0
    %2765 = vmatpush1.bf16.msra.mxu0 0
    %2766 = vmatprep.subr.bf16.mxu0 0
    %2767 = vmatpush1.bf16.msra.mxu0 0
    %2768 = vmatprep.subr.bf16.mxu0 0
    %2769 = vmatpush1.bf16.msra.mxu0 0
    %2770 = vmatprep.subr.bf16.mxu0 0
    %2771 = vmatpush1.bf16.msra.mxu0 0
    %2772 = vmatprep.subr.bf16.mxu0 0
    %2773 = vmatpush1.bf16.msra.mxu0 0
    %2774 = vmatprep.subr.bf16.mxu0 0
    %2775 = vmatpush1.bf16.msra.mxu0 0
    %2776 = vmatprep.subr.bf16.mxu0 0
    %2777 = vmatpush1.bf16.msra.mxu0 0
    %2778 = vmatprep.subr.bf16.mxu0 0
    %2779 = vmatpush1.bf16.msra.mxu0 0
    %2780 = vmatprep.subr.bf16.mxu0 0
    %2781 = vmatpush1.bf16.msra.mxu0 0
    %2782 = vmatprep.subr.bf16.mxu0 0
    %2783 = vmatpush1.bf16.msra.mxu0 0
    %2784 = vmatprep.subr.bf16.mxu0 0
    %2785 = vmatpush1.bf16.msra.mxu0 0
    %2786 = vmatprep.subr.bf16.mxu0 0
    %2787 = vmatpush1.bf16.msra.mxu0 0
    %2788 = vmatprep.subr.bf16.mxu0 0
    %2789 = vmatpush1.bf16.msra.mxu0 0
    %2790 = vmatprep.subr.bf16.mxu0 0
    %2791 = vmatpush1.bf16.msra.mxu0 0
    %2792 = vmatprep.mubr.bf16.mxu0 0
    %2793 = vmatmul.mubr.bf16.gmra.mrb[0].mxu0 %v261
    %v2794 = vpop.f32.mrb[0].mxu0
    %v2795 = vadd.f32 0.0, %v2794
    %v2796 = vpop.f32.mrb[0].mxu0
    %v2797 = vpop.f32.mrb[0].mxu0
    %v2798 = vpop.f32.mrb[0].mxu0
    %2799 = vdwg.mxu0
    %v2804 = vunpack.c.l.b16 %v2740
    %v2805 = vunpack.c.l.b16 %v2741
    %v2806 = vunpack.c.l.b16 %v2742
    %v2807 = vunpack.c.l.b16 %v2743
    %v2808 = vpack.c.b16 %v2805, %v2804
    %v2809 = vpack.c.b16 %v2807, %v2806
    %2812 = vmatprep.subr.bf16.mxu0 0
    %2813 = vmatpush1.bf16.msra.mxu0 %v2808
    %2814 = vmatprep.subr.bf16.mxu0 0
    %2815 = vmatpush1.bf16.msra.mxu0 %v2809
    %2816 = vmatprep.subr.bf16.mxu0 0
    %2817 = vmatpush1.bf16.msra.mxu0 0
    %2818 = vmatprep.subr.bf16.mxu0 0
    %2819 = vmatpush1.bf16.msra.mxu0 0
    %2820 = vmatprep.subr.bf16.mxu0 0
    %2821 = vmatpush1.bf16.msra.mxu0 0
    %2822 = vmatprep.subr.bf16.mxu0 0
    %2823 = vmatpush1.bf16.msra.mxu0 0
    %2824 = vmatprep.subr.bf16.mxu0 0
    %2825 = vmatpush1.bf16.msra.mxu0 0
    %2826 = vmatprep.subr.bf16.mxu0 0
    %2827 = vmatpush1.bf16.msra.mxu0 0
    %2828 = vmatprep.subr.bf16.mxu0 0
    %2829 = vmatpush1.bf16.msra.mxu0 0
    %2830 = vmatprep.subr.bf16.mxu0 0
    %2831 = vmatpush1.bf16.msra.mxu0 0
    %2832 = vmatprep.subr.bf16.mxu0 0
    %2833 = vmatpush1.bf16.msra.mxu0 0
    %2834 = vmatprep.subr.bf16.mxu0 0
    %2835 = vmatpush1.bf16.msra.mxu0 0
    %2836 = vmatprep.subr.bf16.mxu0 0
    %2837 = vmatpush1.bf16.msra.mxu0 0
    %2838 = vmatprep.subr.bf16.mxu0 0
    %2839 = vmatpush1.bf16.msra.mxu0 0
    %2840 = vmatprep.subr.bf16.mxu0 0
    %2841 = vmatpush1.bf16.msra.mxu0 0
    %2842 = vmatprep.subr.bf16.mxu0 0
    %2843 = vmatpush1.bf16.msra.mxu0 0
    %2844 = vmatprep.mubr.bf16.mxu0 0
    %2845 = vmatmul.mubr.bf16.gmra.mrb[0].mxu0 %v2698
    %v2846 = vpop.f32.mrb[0].mxu0
    %v2847 = vadd.f32 %v2795, %v2846
    %v2848 = vpop.f32.mrb[0].mxu0
    %v2849 = vpop.f32.mrb[0].mxu0
    %v2850 = vpop.f32.mrb[0].mxu0
    %2851 = vdwg.mxu0
    %v2852 = vld [vmem:[#allocation2 + $0x450] sm:$0x1]
    %v2853 = vunpack.c.l.bf16 %v2852
    %v2854 = vlaneseq
    %v2855 = vshrl.u32 %v2854, 7
    %v2856 = vsub.s32 0, %v2855
    %v2857 = vrot.slane %v2853, %v2856
    %v2858 = vadd.f32 %v2847, %v2857
    %v2859 = vxor.u32 %v2858, 2147483648
    %v2860 = vmul.f32 %v2859, 1.442695
    %v2861 = vpow.pop %v2860
    %v2862 = vadd.f32 %v2861, 1.0
    %v2863 = vrcp.pop %v2862
    %v2864 = vmul.f32 1.0, %v2863
    %v2865 = vtanh.pop %v2858
    %v2866 = vmul.f32 %v2864, 0.0
    %2868 = vrot.lane.b32.xlu0 %v2865, 64
    %v2869 = vpop.permute.xlu0 %2868
    %v2871 = vmul.f32 %v2864, %v2869
    %2873 = vrot.lane.b32.xlu0 %v2871, 32
    %v2874 = vpop.permute.xlu0 %2873
    %v2876 = vadd.f32 %v2866, %v2874
    %v2877 = vtanh.pop %v2876
    %2879 = vrot.lane.b32.xlu0 %v2877, 64
    %v2880 = vpop.permute.xlu0 %2879
    %v2882 = vmul.f32 %v2864, %v2880
    %v2883 = vld [vmem:[#allocation2 + $0x460] sm:$0xf]
    %v2884 = vld [vmem:[#allocation2 + $0x468] sm:$0xf]
    %v2885 = vld [vmem:[#allocation2 + $0x470] sm:$0xf]
    %v2886 = vld [vmem:[#allocation2 + $0x478] sm:$0xf]
    %v2887 = vpack.c.bf16 %v2882, %v2882
    %v2888 = vld [vmem:[#allocation2 + $0x480] sm:$0x1]
    %v2889 = vunpack.c.l.bf16 %v2888
    %v2890 = vlaneseq
    %v2891 = vshrl.u32 %v2890, 7
    %v2892 = vsub.s32 0, %v2891
    %v2893 = vrot.slane %v2889, %v2892
    %2895 = vrot.lane.b32.xlu0 %v2887, 32
    %v2896 = vpop.permute.xlu0 %2895
    %v2901 = vunpack.c.l.b16 %v2883
    %v2902 = vunpack.c.l.b16 %v2884
    %v2903 = vunpack.c.l.b16 %v2885
    %v2904 = vunpack.c.l.b16 %v2886
    %v2905 = vpack.c.b16 %v2902, %v2901
    %v2906 = vpack.c.b16 %v2904, %v2903
    %v2910 = vsel %vm259, %v2896, 0
    %2912 = vmatprep.subr.bf16.mxu0 0
    %2913 = vmatpush1.bf16.msra.mxu0 %v2905
    %2914 = vmatprep.subr.bf16.mxu0 0
    %2915 = vmatpush1.bf16.msra.mxu0 %v2906
    %2916 = vmatprep.subr.bf16.mxu0 0
    %2917 = vmatpush1.bf16.msra.mxu0 0
    %2918 = vmatprep.subr.bf16.mxu0 0
    %2919 = vmatpush1.bf16.msra.mxu0 0
    %2920 = vmatprep.subr.bf16.mxu0 0
    %2921 = vmatpush1.bf16.msra.mxu0 0
    %2922 = vmatprep.subr.bf16.mxu0 0
    %2923 = vmatpush1.bf16.msra.mxu0 0
    %2924 = vmatprep.subr.bf16.mxu0 0
    %2925 = vmatpush1.bf16.msra.mxu0 0
    %2926 = vmatprep.subr.bf16.mxu0 0
    %2927 = vmatpush1.bf16.msra.mxu0 0
    %2928 = vmatprep.subr.bf16.mxu0 0
    %2929 = vmatpush1.bf16.msra.mxu0 0
    %2930 = vmatprep.subr.bf16.mxu0 0
    %2931 = vmatpush1.bf16.msra.mxu0 0
    %2932 = vmatprep.subr.bf16.mxu0 0
    %2933 = vmatpush1.bf16.msra.mxu0 0
    %2934 = vmatprep.subr.bf16.mxu0 0
    %2935 = vmatpush1.bf16.msra.mxu0 0
    %2936 = vmatprep.subr.bf16.mxu0 0
    %2937 = vmatpush1.bf16.msra.mxu0 0
    %2938 = vmatprep.subr.bf16.mxu0 0
    %2939 = vmatpush1.bf16.msra.mxu0 0
    %2940 = vmatprep.subr.bf16.mxu0 0
    %2941 = vmatpush1.bf16.msra.mxu0 0
    %2942 = vmatprep.subr.bf16.mxu0 0
    %2943 = vmatpush1.bf16.msra.mxu0 0
    %2944 = vmatprep.mubr.bf16.mxu0 0
    %2945 = vmatmul.mubr.bf16.gmra.mrb[0].mxu0 %v2910
    %v2946 = vpop.f32.mrb[0].mxu0
    %v2947 = vadd.f32 %v2893, %v2946
    %v2948 = vpop.f32.mrb[0].mxu0
    %v2949 = vpop.f32.mrb[0].mxu0
    %v2950 = vpop.f32.mrb[0].mxu0
    %2951 = vdwg.mxu0
    %v2952 = vmax.f32 %v2947, 0.0
    %v2953 = vld [vmem:[#allocation2 + $0x490] sm:$0xf]
    %v2954 = vld [vmem:[#allocation2 + $0x498] sm:$0xf]
    %v2955 = vld [vmem:[#allocation2 + $0x4a0] sm:$0xf]
    %v2956 = vld [vmem:[#allocation2 + $0x4a8] sm:$0xf]
    %v2957 = vpack.c.bf16 %v2952, %v2952
    %v2958 = vld [vmem:[#allocation2 + $0x4b0] sm:$0x1]
    %v2959 = vunpack.c.l.bf16 %v2958
    %v2960 = vlaneseq
    %v2961 = vshrl.u32 %v2960, 7
    %v2962 = vsub.s32 0, %v2961
    %v2963 = vrot.slane %v2959, %v2962
    %v2968 = vunpack.c.l.b16 %v2953
    %v2969 = vunpack.c.l.b16 %v2954
    %v2970 = vunpack.c.l.b16 %v2955
    %v2971 = vunpack.c.l.b16 %v2956
    %v2972 = vpack.c.b16 %v2969, %v2968
    %v2973 = vpack.c.b16 %v2971, %v2970
    %v2977 = vsel %vm259, %v2957, 0
    %2979 = vmatprep.subr.bf16.mxu0 0
    %2980 = vmatpush1.bf16.msra.mxu0 %v2972
    %2981 = vmatprep.subr.bf16.mxu0 0
    %2982 = vmatpush1.bf16.msra.mxu0 %v2973
    %2983 = vmatprep.subr.bf16.mxu0 0
    %2984 = vmatpush1.bf16.msra.mxu0 0
    %2985 = vmatprep.subr.bf16.mxu0 0
    %2986 = vmatpush1.bf16.msra.mxu0 0
    %2987 = vmatprep.subr.bf16.mxu0 0
    %2988 = vmatpush1.bf16.msra.mxu0 0
    %2989 = vmatprep.subr.bf16.mxu0 0
    %2990 = vmatpush1.bf16.msra.mxu0 0
    %2991 = vmatprep.subr.bf16.mxu0 0
    %2992 = vmatpush1.bf16.msra.mxu0 0
    %2993 = vmatprep.subr.bf16.mxu0 0
    %2994 = vmatpush1.bf16.msra.mxu0 0
    %2995 = vmatprep.subr.bf16.mxu0 0
    %2996 = vmatpush1.bf16.msra.mxu0 0
    %2997 = vmatprep.subr.bf16.mxu0 0
    %2998 = vmatpush1.bf16.msra.mxu0 0
    %2999 = vmatprep.subr.bf16.mxu0 0
    %3000 = vmatpush1.bf16.msra.mxu0 0
    %3001 = vmatprep.subr.bf16.mxu0 0
    %3002 = vmatpush1.bf16.msra.mxu0 0
    %3003 = vmatprep.subr.bf16.mxu0 0
    %3004 = vmatpush1.bf16.msra.mxu0 0
    %3005 = vmatprep.subr.bf16.mxu0 0
    %3006 = vmatpush1.bf16.msra.mxu0 0
    %3007 = vmatprep.subr.bf16.mxu0 0
    %3008 = vmatpush1.bf16.msra.mxu0 0
    %3009 = vmatprep.subr.bf16.mxu0 0
    %3010 = vmatpush1.bf16.msra.mxu0 0
    %3011 = vmatprep.mubr.bf16.mxu0 0
    %3012 = vmatmul.mubr.bf16.gmra.mrb[0].mxu0 %v2977
    %v3013 = vpop.f32.mrb[0].mxu0
    %v3014 = vadd.f32 %v2963, %v3013
    %v3015 = vpop.f32.mrb[0].mxu0
    %v3016 = vpop.f32.mrb[0].mxu0
    %v3017 = vpop.f32.mrb[0].mxu0
    %3018 = vdwg.mxu0
    %3020 = vrot.lane.b32.xlu0 %v3014, 36
    %v3021 = vpop.permute.xlu0 %3020
    %vm3023 = vcmask 425248
    %3024 = vst.msk [vmem:[%s2] sm:$0xff] %vm3023, %v3021
    %vm3025 = vcmask 130048
    %v3026 = vsel %vm3025, %v3014, -inf
    %3027 = vmax.xlane.f32.xlu0 %v3026
    %v3028 = vpop.xlane.xlu0 %3027
    %vm3029 = vcmp.eq.f32.partialorder %v3014, %v3028
    %v3030 = vld [vmem:[#allocation2 + $0x4c0] sm:$0xf]
    %v3031 = vld [vmem:[#allocation2 + $0x4c8] sm:$0xf]
    %v3032 = vsel %vm3029, 1, 0
    %v3033 = vcvt.s32.f32 %v3032
    %v3034 = vpack.c.bf16 %v3033, %v3033
    %v3037 = vunpack.c.l.b16 %v3030
    %v3038 = vunpack.c.l.b16 %v3031
    %v3039 = vpack.c.b16 %v3038, %v3037
    %v3042 = vsel %vm3025, %v3034, 0
    %3044 = vmatprep.subr.bf16.mxu0 0
    %3045 = vmatpush1.bf16.msra.mxu0 %v3039
    %3046 = vmatprep.subr.bf16.mxu0 0
    %3047 = vmatpush1.bf16.msra.mxu0 0
    %3048 = vmatprep.subr.bf16.mxu0 0
    %3049 = vmatpush1.bf16.msra.mxu0 0
    %3050 = vmatprep.subr.bf16.mxu0 0
    %3051 = vmatpush1.bf16.msra.mxu0 0
    %3052 = vmatprep.subr.bf16.mxu0 0
    %3053 = vmatpush1.bf16.msra.mxu0 0
    %3054 = vmatprep.subr.bf16.mxu0 0
    %3055 = vmatpush1.bf16.msra.mxu0 0
    %3056 = vmatprep.subr.bf16.mxu0 0
    %3057 = vmatpush1.bf16.msra.mxu0 0
    %3058 = vmatprep.subr.bf16.mxu0 0
    %3059 = vmatpush1.bf16.msra.mxu0 0
    %3060 = vmatprep.subr.bf16.mxu0 0
    %3061 = vmatpush1.bf16.msra.mxu0 0
    %3062 = vmatprep.subr.bf16.mxu0 0
    %3063 = vmatpush1.bf16.msra.mxu0 0
    %3064 = vmatprep.subr.bf16.mxu0 0
    %3065 = vmatpush1.bf16.msra.mxu0 0
    %3066 = vmatprep.subr.bf16.mxu0 0
    %3067 = vmatpush1.bf16.msra.mxu0 0
    %3068 = vmatprep.subr.bf16.mxu0 0
    %3069 = vmatpush1.bf16.msra.mxu0 0
    %3070 = vmatprep.subr.bf16.mxu0 0
    %3071 = vmatpush1.bf16.msra.mxu0 0
    %3072 = vmatprep.subr.bf16.mxu0 0
    %3073 = vmatpush1.bf16.msra.mxu0 0
    %3074 = vmatprep.subr.bf16.mxu0 0
    %3075 = vmatpush1.bf16.msra.mxu0 0
    %3076 = vmatprep.mubr.bf16.mxu0 0
    %3077 = vmatmul.mubr.bf16.gmra.mrb[0].mxu0 %v3042
    %v3078 = vpop.f32.mrb[0].mxu0
    %v3079 = vadd.f32 0.0, %v3078
    %v3080 = vpop.f32.mrb[0].mxu0
    %v3081 = vpop.f32.mrb[0].mxu0
    %v3082 = vpop.f32.mrb[0].mxu0
    %3083 = vdwg.mxu0
    %v3084 = vld [vmem:[#allocation2 + $0x4d0] sm:$0xf]
    %v3085 = vld [vmem:[#allocation2 + $0x4d8] sm:$0xf]
    %v3086 = vld [vmem:[#allocation2 + $0x4e0] sm:$0xf]
    %v3087 = vld [vmem:[#allocation2 + $0x4e8] sm:$0xf]
    %v3088 = vpack.c.bf16 %v3079, %v3079
    %v3093 = vunpack.c.l.b16 %v3084
    %v3094 = vunpack.c.l.b16 %v3085
    %v3095 = vunpack.c.l.b16 %v3086
    %v3096 = vunpack.c.l.b16 %v3087
    %v3097 = vpack.c.b16 %v3094, %v3093
    %v3098 = vpack.c.b16 %v3096, %v3095
    %v3102 = vsel %vm259, %v3088, 0
    %3104 = vmatprep.subr.bf16.mxu0 0
    %3105 = vmatpush1.bf16.msra.mxu0 %v3097
    %3106 = vmatprep.subr.bf16.mxu0 0
    %3107 = vmatpush1.bf16.msra.mxu0 %v3098
    %3108 = vmatprep.subr.bf16.mxu0 0
    %3109 = vmatpush1.bf16.msra.mxu0 0
    %3110 = vmatprep.subr.bf16.mxu0 0
    %3111 = vmatpush1.bf16.msra.mxu0 0
    %3112 = vmatprep.subr.bf16.mxu0 0
    %3113 = vmatpush1.bf16.msra.mxu0 0
    %3114 = vmatprep.subr.bf16.mxu0 0
    %3115 = vmatpush1.bf16.msra.mxu0 0
    %3116 = vmatprep.subr.bf16.mxu0 0
    %3117 = vmatpush1.bf16.msra.mxu0 0
    %3118 = vmatprep.subr.bf16.mxu0 0
    %3119 = vmatpush1.bf16.msra.mxu0 0
    %3120 = vmatprep.subr.bf16.mxu0 0
    %3121 = vmatpush1.bf16.msra.mxu0 0
    %3122 = vmatprep.subr.bf16.mxu0 0
    %3123 = vmatpush1.bf16.msra.mxu0 0
    %3124 = vmatprep.subr.bf16.mxu0 0
    %3125 = vmatpush1.bf16.msra.mxu0 0
    %3126 = vmatprep.subr.bf16.mxu0 0
    %3127 = vmatpush1.bf16.msra.mxu0 0
    %3128 = vmatprep.subr.bf16.mxu0 0
    %3129 = vmatpush1.bf16.msra.mxu0 0
    %3130 = vmatprep.subr.bf16.mxu0 0
    %3131 = vmatpush1.bf16.msra.mxu0 0
    %3132 = vmatprep.subr.bf16.mxu0 0
    %3133 = vmatpush1.bf16.msra.mxu0 0
    %3134 = vmatprep.subr.bf16.mxu0 0
    %3135 = vmatpush1.bf16.msra.mxu0 0
    %3136 = vmatprep.mubr.bf16.mxu0 0
    %3137 = vmatmul.mubr.bf16.gmra.mrb[0].mxu0 %v3102
    %v3138 = vpop.f32.mrb[0].mxu0
    %v3139 = vadd.f32 %v2735, %v3138
    %v3140 = vpop.f32.mrb[0].mxu0
    %v3141 = vpop.f32.mrb[0].mxu0
    %v3142 = vpop.f32.mrb[0].mxu0
    %3143 = vdwg.mxu0
    %v3144 = vld [vmem:[#allocation2 + $0x410] sm:$0xf]
    %v3145 = vld [vmem:[#allocation2 + $0x418] sm:$0xf]
    %v3146 = vld [vmem:[#allocation2 + $0x420] sm:$0xf]
    %v3147 = vld [vmem:[#allocation2 + $0x428] sm:$0xf]
    %v3148 = vpack.c.bf16 %v3139, %v3139
    %v3149 = vld [vmem:[#allocation2 + $0x430] sm:$0xf]
    %v3150 = vld [vmem:[#allocation2 + $0x438] sm:$0xf]
    %v3151 = vld [vmem:[#allocation2 + $0x440] sm:$0xf]
    %v3152 = vld [vmem:[#allocation2 + $0x448] sm:$0xf]
    %v3157 = vunpack.c.l.b16 %v3149
    %v3158 = vunpack.c.l.b16 %v3150
    %v3159 = vunpack.c.l.b16 %v3151
    %v3160 = vunpack.c.l.b16 %v3152
    %v3161 = vpack.c.b16 %v3158, %v3157
    %v3162 = vpack.c.b16 %v3160, %v3159
    %3165 = vmatprep.subr.bf16.mxu0 0
    %3166 = vmatpush1.bf16.msra.mxu0 %v3161
    %3167 = vmatprep.subr.bf16.mxu0 0
    %3168 = vmatpush1.bf16.msra.mxu0 %v3162
    %3169 = vmatprep.subr.bf16.mxu0 0
    %3170 = vmatpush1.bf16.msra.mxu0 0
    %3171 = vmatprep.subr.bf16.mxu0 0
    %3172 = vmatpush1.bf16.msra.mxu0 0
    %3173 = vmatprep.subr.bf16.mxu0 0
    %3174 = vmatpush1.bf16.msra.mxu0 0
    %3175 = vmatprep.subr.bf16.mxu0 0
    %3176 = vmatpush1.bf16.msra.mxu0 0
    %3177 = vmatprep.subr.bf16.mxu0 0
    %3178 = vmatpush1.bf16.msra.mxu0 0
    %3179 = vmatprep.subr.bf16.mxu0 0
    %3180 = vmatpush1.bf16.msra.mxu0 0
    %3181 = vmatprep.subr.bf16.mxu0 0
    %3182 = vmatpush1.bf16.msra.mxu0 0
    %3183 = vmatprep.subr.bf16.mxu0 0
    %3184 = vmatpush1.bf16.msra.mxu0 0
    %3185 = vmatprep.subr.bf16.mxu0 0
    %3186 = vmatpush1.bf16.msra.mxu0 0
    %3187 = vmatprep.subr.bf16.mxu0 0
    %3188 = vmatpush1.bf16.msra.mxu0 0
    %3189 = vmatprep.subr.bf16.mxu0 0
    %3190 = vmatpush1.bf16.msra.mxu0 0
    %3191 = vmatprep.subr.bf16.mxu0 0
    %3192 = vmatpush1.bf16.msra.mxu0 0
    %3193 = vmatprep.subr.bf16.mxu0 0
    %3194 = vmatpush1.bf16.msra.mxu0 0
    %3195 = vmatprep.subr.bf16.mxu0 0
    %3196 = vmatpush1.bf16.msra.mxu0 0
    %3197 = vmatprep.mubr.bf16.mxu0 0
    %3198 = vmatmul.mubr.bf16.gmra.mrb[0].mxu0 %v2910
    %v3199 = vpop.f32.mrb[0].mxu0
    %v3200 = vadd.f32 0.0, %v3199
    %v3201 = vpop.f32.mrb[0].mxu0
    %v3202 = vpop.f32.mrb[0].mxu0
    %v3203 = vpop.f32.mrb[0].mxu0
    %3204 = vdwg.mxu0
    %v3209 = vunpack.c.l.b16 %v3144
    %v3210 = vunpack.c.l.b16 %v3145
    %v3211 = vunpack.c.l.b16 %v3146
    %v3212 = vunpack.c.l.b16 %v3147
    %v3213 = vpack.c.b16 %v3210, %v3209
    %v3214 = vpack.c.b16 %v3212, %v3211
    %v3218 = vsel %vm259, %v3148, 0
    %3220 = vmatprep.subr.bf16.mxu0 0
    %3221 = vmatpush1.bf16.msra.mxu0 %v3213
    %3222 = vmatprep.subr.bf16.mxu0 0
    %3223 = vmatpush1.bf16.msra.mxu0 %v3214
    %3224 = vmatprep.subr.bf16.mxu0 0
    %3225 = vmatpush1.bf16.msra.mxu0 0
    %3226 = vmatprep.subr.bf16.mxu0 0
    %3227 = vmatpush1.bf16.msra.mxu0 0
    %3228 = vmatprep.subr.bf16.mxu0 0
    %3229 = vmatpush1.bf16.msra.mxu0 0
    %3230 = vmatprep.subr.bf16.mxu0 0
    %3231 = vmatpush1.bf16.msra.mxu0 0
    %3232 = vmatprep.subr.bf16.mxu0 0
    %3233 = vmatpush1.bf16.msra.mxu0 0
    %3234 = vmatprep.subr.bf16.mxu0 0
    %3235 = vmatpush1.bf16.msra.mxu0 0
    %3236 = vmatprep.subr.bf16.mxu0 0
    %3237 = vmatpush1.bf16.msra.mxu0 0
    %3238 = vmatprep.subr.bf16.mxu0 0
    %3239 = vmatpush1.bf16.msra.mxu0 0
    %3240 = vmatprep.subr.bf16.mxu0 0
    %3241 = vmatpush1.bf16.msra.mxu0 0
    %3242 = vmatprep.subr.bf16.mxu0 0
    %3243 = vmatpush1.bf16.msra.mxu0 0
    %3244 = vmatprep.subr.bf16.mxu0 0
    %3245 = vmatpush1.bf16.msra.mxu0 0
    %3246 = vmatprep.subr.bf16.mxu0 0
    %3247 = vmatpush1.bf16.msra.mxu0 0
    %3248 = vmatprep.subr.bf16.mxu0 0
    %3249 = vmatpush1.bf16.msra.mxu0 0
    %3250 = vmatprep.subr.bf16.mxu0 0
    %3251 = vmatpush1.bf16.msra.mxu0 0
    %3252 = vmatprep.mubr.bf16.mxu0 0
    %3253 = vmatmul.mubr.bf16.gmra.mrb[0].mxu0 %v3218
    %v3254 = vpop.f32.mrb[0].mxu0
    %v3255 = vadd.f32 %v3200, %v3254
    %v3256 = vpop.f32.mrb[0].mxu0
    %v3257 = vpop.f32.mrb[0].mxu0
    %v3258 = vpop.f32.mrb[0].mxu0
    %3259 = vdwg.mxu0
    %v3260 = vld [vmem:[#allocation2 + $0x450] sm:$0x1]
    %v3261 = vunpack.c.l.bf16 %v3260
    %v3262 = vlaneseq
    %v3263 = vshrl.u32 %v3262, 7
    %v3264 = vsub.s32 0, %v3263
    %v3265 = vrot.slane %v3261, %v3264
    %v3266 = vadd.f32 %v3255, %v3265
    %v3267 = vxor.u32 %v3266, 2147483648
    %v3268 = vmul.f32 %v3267, 1.442695
    %v3269 = vpow.pop %v3268
    %v3270 = vadd.f32 %v3269, 1.0
    %v3271 = vrcp.pop %v3270
    %v3272 = vmul.f32 1.0, %v3271
    %v3273 = vtanh.pop %v3266
    %v3274 = vmul.f32 %v3272, %v2876
    %3276 = vrot.lane.b32.xlu0 %v3273, 64
    %v3277 = vpop.permute.xlu0 %3276
    %v3279 = vmul.f32 %v3272, %v3277
    %3281 = vrot.lane.b32.xlu0 %v3279, 32
    %v3282 = vpop.permute.xlu0 %3281
    %v3284 = vadd.f32 %v3274, %v3282
    %v3285 = vtanh.pop %v3284
    %3287 = vrot.lane.b32.xlu0 %v3285, 64
    %v3288 = vpop.permute.xlu0 %3287
    %v3290 = vmul.f32 %v3272, %v3288
    %v3291 = vld [vmem:[#allocation2 + $0x460] sm:$0xf]
    %v3292 = vld [vmem:[#allocation2 + $0x468] sm:$0xf]
    %v3293 = vld [vmem:[#allocation2 + $0x470] sm:$0xf]
    %v3294 = vld [vmem:[#allocation2 + $0x478] sm:$0xf]
    %v3295 = vpack.c.bf16 %v3290, %v3290
    %v3296 = vld [vmem:[#allocation2 + $0x480] sm:$0x1]
    %v3297 = vunpack.c.l.bf16 %v3296
    %v3298 = vlaneseq
    %v3299 = vshrl.u32 %v3298, 7
    %v3300 = vsub.s32 0, %v3299
    %v3301 = vrot.slane %v3297, %v3300
    %3303 = vrot.lane.b32.xlu0 %v3295, 32
    %v3304 = vpop.permute.xlu0 %3303
    %v3309 = vunpack.c.l.b16 %v3291
    %v3310 = vunpack.c.l.b16 %v3292
    %v3311 = vunpack.c.l.b16 %v3293
    %v3312 = vunpack.c.l.b16 %v3294
    %v3313 = vpack.c.b16 %v3310, %v3309
    %v3314 = vpack.c.b16 %v3312, %v3311
    %v3318 = vsel %vm259, %v3304, 0
    %3320 = vmatprep.subr.bf16.mxu0 0
    %3321 = vmatpush1.bf16.msra.mxu0 %v3313
    %3322 = vmatprep.subr.bf16.mxu0 0
    %3323 = vmatpush1.bf16.msra.mxu0 %v3314
    %3324 = vmatprep.subr.bf16.mxu0 0
    %3325 = vmatpush1.bf16.msra.mxu0 0
    %3326 = vmatprep.subr.bf16.mxu0 0
    %3327 = vmatpush1.bf16.msra.mxu0 0
    %3328 = vmatprep.subr.bf16.mxu0 0
    %3329 = vmatpush1.bf16.msra.mxu0 0
    %3330 = vmatprep.subr.bf16.mxu0 0
    %3331 = vmatpush1.bf16.msra.mxu0 0
    %3332 = vmatprep.subr.bf16.mxu0 0
    %3333 = vmatpush1.bf16.msra.mxu0 0
    %3334 = vmatprep.subr.bf16.mxu0 0
    %3335 = vmatpush1.bf16.msra.mxu0 0
    %3336 = vmatprep.subr.bf16.mxu0 0
    %3337 = vmatpush1.bf16.msra.mxu0 0
    %3338 = vmatprep.subr.bf16.mxu0 0
    %3339 = vmatpush1.bf16.msra.mxu0 0
    %3340 = vmatprep.subr.bf16.mxu0 0
    %3341 = vmatpush1.bf16.msra.mxu0 0
    %3342 = vmatprep.subr.bf16.mxu0 0
    %3343 = vmatpush1.bf16.msra.mxu0 0
    %3344 = vmatprep.subr.bf16.mxu0 0
    %3345 = vmatpush1.bf16.msra.mxu0 0
    %3346 = vmatprep.subr.bf16.mxu0 0
    %3347 = vmatpush1.bf16.msra.mxu0 0
    %3348 = vmatprep.subr.bf16.mxu0 0
    %3349 = vmatpush1.bf16.msra.mxu0 0
    %3350 = vmatprep.subr.bf16.mxu0 0
    %3351 = vmatpush1.bf16.msra.mxu0 0
    %3352 = vmatprep.mubr.bf16.mxu0 0
    %3353 = vmatmul.mubr.bf16.gmra.mrb[0].mxu0 %v3318
    %v3354 = vpop.f32.mrb[0].mxu0
    %v3355 = vadd.f32 %v3301, %v3354
    %v3356 = vpop.f32.mrb[0].mxu0
    %v3357 = vpop.f32.mrb[0].mxu0
    %v3358 = vpop.f32.mrb[0].mxu0
    %3359 = vdwg.mxu0
    %v3360 = vmax.f32 %v3355, 0.0
    %v3361 = vld [vmem:[#allocation2 + $0x490] sm:$0xf]
    %v3362 = vld [vmem:[#allocation2 + $0x498] sm:$0xf]
    %v3363 = vld [vmem:[#allocation2 + $0x4a0] sm:$0xf]
    %v3364 = vld [vmem:[#allocation2 + $0x4a8] sm:$0xf]
    %v3365 = vpack.c.bf16 %v3360, %v3360
    %v3366 = vld [vmem:[#allocation2 + $0x4b0] sm:$0x1]
    %v3367 = vunpack.c.l.bf16 %v3366
    %v3368 = vlaneseq
    %v3369 = vshrl.u32 %v3368, 7
    %v3370 = vsub.s32 0, %v3369
    %v3371 = vrot.slane %v3367, %v3370
    %v3376 = vunpack.c.l.b16 %v3361
    %v3377 = vunpack.c.l.b16 %v3362
    %v3378 = vunpack.c.l.b16 %v3363
    %v3379 = vunpack.c.l.b16 %v3364
    %v3380 = vpack.c.b16 %v3377, %v3376
    %v3381 = vpack.c.b16 %v3379, %v3378
    %v3385 = vsel %vm259, %v3365, 0
    %3387 = vmatprep.subr.bf16.mxu0 0
    %3388 = vmatpush1.bf16.msra.mxu0 %v3380
    %3389 = vmatprep.subr.bf16.mxu0 0
    %3390 = vmatpush1.bf16.msra.mxu0 %v3381
    %3391 = vmatprep.subr.bf16.mxu0 0
    %3392 = vmatpush1.bf16.msra.mxu0 0
    %3393 = vmatprep.subr.bf16.mxu0 0
    %3394 = vmatpush1.bf16.msra.mxu0 0
    %3395 = vmatprep.subr.bf16.mxu0 0
    %3396 = vmatpush1.bf16.msra.mxu0 0
    %3397 = vmatprep.subr.bf16.mxu0 0
    %3398 = vmatpush1.bf16.msra.mxu0 0
    %3399 = vmatprep.subr.bf16.mxu0 0
    %3400 = vmatpush1.bf16.msra.mxu0 0
    %3401 = vmatprep.subr.bf16.mxu0 0
    %3402 = vmatpush1.bf16.msra.mxu0 0
    %3403 = vmatprep.subr.bf16.mxu0 0
    %3404 = vmatpush1.bf16.msra.mxu0 0
    %3405 = vmatprep.subr.bf16.mxu0 0
    %3406 = vmatpush1.bf16.msra.mxu0 0
    %3407 = vmatprep.subr.bf16.mxu0 0
    %3408 = vmatpush1.bf16.msra.mxu0 0
    %3409 = vmatprep.subr.bf16.mxu0 0
    %3410 = vmatpush1.bf16.msra.mxu0 0
    %3411 = vmatprep.subr.bf16.mxu0 0
    %3412 = vmatpush1.bf16.msra.mxu0 0
    %3413 = vmatprep.subr.bf16.mxu0 0
    %3414 = vmatpush1.bf16.msra.mxu0 0
    %3415 = vmatprep.subr.bf16.mxu0 0
    %3416 = vmatpush1.bf16.msra.mxu0 0
    %3417 = vmatprep.subr.bf16.mxu0 0
    %3418 = vmatpush1.bf16.msra.mxu0 0
    %3419 = vmatprep.mubr.bf16.mxu0 0
    %3420 = vmatmul.mubr.bf16.gmra.mrb[0].mxu0 %v3385
    %v3421 = vpop.f32.mrb[0].mxu0
    %v3422 = vadd.f32 %v3371, %v3421
    %v3423 = vpop.f32.mrb[0].mxu0
    %v3424 = vpop.f32.mrb[0].mxu0
    %v3425 = vpop.f32.mrb[0].mxu0
    %3426 = vdwg.mxu0
    %3428 = vrot.lane.b32.xlu0 %v3422, 52
    %v3429 = vpop.permute.xlu0 %3428
    %vm3431 = vcmask 556448
    %3432 = vst.msk [vmem:[%s2] sm:$0xff] %vm3431, %v3429
    %v3433 = vsel %vm3025, %v3422, -inf
    %3434 = vmax.xlane.f32.xlu0 %v3433
    %v3435 = vpop.xlane.xlu0 %3434
    %vm3436 = vcmp.eq.f32.partialorder %v3422, %v3435
    %v3437 = vld [vmem:[#allocation2 + $0x4c0] sm:$0xf]
    %v3438 = vld [vmem:[#allocation2 + $0x4c8] sm:$0xf]
    %v3439 = vsel %vm3436, 1, 0
    %v3440 = vcvt.s32.f32 %v3439
    %v3441 = vpack.c.bf16 %v3440, %v3440
    %v3444 = vunpack.c.l.b16 %v3437
    %v3445 = vunpack.c.l.b16 %v3438
    %v3446 = vpack.c.b16 %v3445, %v3444
    %v3449 = vsel %vm3025, %v3441, 0
    %3451 = vmatprep.subr.bf16.mxu0 0
    %3452 = vmatpush1.bf16.msra.mxu0 %v3446
    %3453 = vmatprep.subr.bf16.mxu0 0
    %3454 = vmatpush1.bf16.msra.mxu0 0
    %3455 = vmatprep.subr.bf16.mxu0 0
    %3456 = vmatpush1.bf16.msra.mxu0 0
    %3457 = vmatprep.subr.bf16.mxu0 0
    %3458 = vmatpush1.bf16.msra.mxu0 0
    %3459 = vmatprep.subr.bf16.mxu0 0
    %3460 = vmatpush1.bf16.msra.mxu0 0
    %3461 = vmatprep.subr.bf16.mxu0 0
    %3462 = vmatpush1.bf16.msra.mxu0 0
    %3463 = vmatprep.subr.bf16.mxu0 0
    %3464 = vmatpush1.bf16.msra.mxu0 0
    %3465 = vmatprep.subr.bf16.mxu0 0
    %3466 = vmatpush1.bf16.msra.mxu0 0
    %3467 = vmatprep.subr.bf16.mxu0 0
    %3468 = vmatpush1.bf16.msra.mxu0 0
    %3469 = vmatprep.subr.bf16.mxu0 0
    %3470 = vmatpush1.bf16.msra.mxu0 0
    %3471 = vmatprep.subr.bf16.mxu0 0
    %3472 = vmatpush1.bf16.msra.mxu0 0
    %3473 = vmatprep.subr.bf16.mxu0 0
    %3474 = vmatpush1.bf16.msra.mxu0 0
    %3475 = vmatprep.subr.bf16.mxu0 0
    %3476 = vmatpush1.bf16.msra.mxu0 0
    %3477 = vmatprep.subr.bf16.mxu0 0
    %3478 = vmatpush1.bf16.msra.mxu0 0
    %3479 = vmatprep.subr.bf16.mxu0 0
    %3480 = vmatpush1.bf16.msra.mxu0 0
    %3481 = vmatprep.subr.bf16.mxu0 0
    %3482 = vmatpush1.bf16.msra.mxu0 0
    %3483 = vmatprep.mubr.bf16.mxu0 0
    %3484 = vmatmul.mubr.bf16.gmra.mrb[0].mxu0 %v3449
    %v3485 = vpop.f32.mrb[0].mxu0
    %v3486 = vadd.f32 0.0, %v3485
    %v3487 = vpop.f32.mrb[0].mxu0
    %v3488 = vpop.f32.mrb[0].mxu0
    %v3489 = vpop.f32.mrb[0].mxu0
    %3490 = vdwg.mxu0
    %v3491 = vld [vmem:[#allocation2 + $0x4d0] sm:$0xf]
    %v3492 = vld [vmem:[#allocation2 + $0x4d8] sm:$0xf]
    %v3493 = vld [vmem:[#allocation2 + $0x4e0] sm:$0xf]
    %v3494 = vld [vmem:[#allocation2 + $0x4e8] sm:$0xf]
    %v3495 = vpack.c.bf16 %v3486, %v3486
    %v3500 = vunpack.c.l.b16 %v3491
    %v3501 = vunpack.c.l.b16 %v3492
    %v3502 = vunpack.c.l.b16 %v3493
    %v3503 = vunpack.c.l.b16 %v3494
    %v3504 = vpack.c.b16 %v3501, %v3500
    %v3505 = vpack.c.b16 %v3503, %v3502
    %v3509 = vsel %vm259, %v3495, 0
    %3511 = vmatprep.subr.bf16.mxu0 0
    %3512 = vmatpush1.bf16.msra.mxu0 %v3504
    %3513 = vmatprep.subr.bf16.mxu0 0
    %3514 = vmatpush1.bf16.msra.mxu0 %v3505
    %3515 = vmatprep.subr.bf16.mxu0 0
    %3516 = vmatpush1.bf16.msra.mxu0 0
    %3517 = vmatprep.subr.bf16.mxu0 0
    %3518 = vmatpush1.bf16.msra.mxu0 0
    %3519 = vmatprep.subr.bf16.mxu0 0
    %3520 = vmatpush1.bf16.msra.mxu0 0
    %3521 = vmatprep.subr.bf16.mxu0 0
    %3522 = vmatpush1.bf16.msra.mxu0 0
    %3523 = vmatprep.subr.bf16.mxu0 0
    %3524 = vmatpush1.bf16.msra.mxu0 0
    %3525 = vmatprep.subr.bf16.mxu0 0
    %3526 = vmatpush1.bf16.msra.mxu0 0
    %3527 = vmatprep.subr.bf16.mxu0 0
    %3528 = vmatpush1.bf16.msra.mxu0 0
    %3529 = vmatprep.subr.bf16.mxu0 0
    %3530 = vmatpush1.bf16.msra.mxu0 0
    %3531 = vmatprep.subr.bf16.mxu0 0
    %3532 = vmatpush1.bf16.msra.mxu0 0
    %3533 = vmatprep.subr.bf16.mxu0 0
    %3534 = vmatpush1.bf16.msra.mxu0 0
    %3535 = vmatprep.subr.bf16.mxu0 0
    %3536 = vmatpush1.bf16.msra.mxu0 0
    %3537 = vmatprep.subr.bf16.mxu0 0
    %3538 = vmatpush1.bf16.msra.mxu0 0
    %3539 = vmatprep.subr.bf16.mxu0 0
    %3540 = vmatpush1.bf16.msra.mxu0 0
    %3541 = vmatprep.subr.bf16.mxu0 0
    %3542 = vmatpush1.bf16.msra.mxu0 0
    %3543 = vmatprep.mubr.bf16.mxu0 0
    %3544 = vmatmul.mubr.bf16.gmra.mrb[0].mxu0 %v3509
    %v3545 = vpop.f32.mrb[0].mxu0
    %v3546 = vadd.f32 %v2735, %v3545
    %v3547 = vpop.f32.mrb[0].mxu0
    %v3548 = vpop.f32.mrb[0].mxu0
    %v3549 = vpop.f32.mrb[0].mxu0
    %3550 = vdwg.mxu0
    %v3551 = vld [vmem:[#allocation2 + $0x300] sm:$0xf]
    %v3552 = vld [vmem:[#allocation2 + $0x308] sm:$0xf]
    %v3553 = vld [vmem:[#allocation2 + $0x310] sm:$0xf]
    %v3554 = vld [vmem:[#allocation2 + $0x318] sm:$0xf]
    %v3555 = vld [vmem:[#allocation2 + $0x320] sm:$0xf]
    %v3556 = vld [vmem:[#allocation2 + $0x328] sm:$0xf]
    %v3557 = vld [vmem:[#allocation2 + $0x330] sm:$0xf]
    %v3558 = vld [vmem:[#allocation2 + $0x338] sm:$0xf]
    %v3563 = vunpack.c.l.b16 %v3555
    %v3564 = vunpack.c.l.b16 %v3556
    %v3565 = vunpack.c.l.b16 %v3557
    %v3566 = vunpack.c.l.b16 %v3558
    %v3567 = vpack.c.b16 %v3564, %v3563
    %v3568 = vpack.c.b16 %v3566, %v3565
    %3571 = vmatprep.subr.bf16.mxu0 0
    %3572 = vmatpush1.bf16.msra.mxu0 %v3567
    %3573 = vmatprep.subr.bf16.mxu0 0
    %3574 = vmatpush1.bf16.msra.mxu0 %v3568
    %3575 = vmatprep.subr.bf16.mxu0 0
    %3576 = vmatpush1.bf16.msra.mxu0 0
    %3577 = vmatprep.subr.bf16.mxu0 0
    %3578 = vmatpush1.bf16.msra.mxu0 0
    %3579 = vmatprep.subr.bf16.mxu0 0
    %3580 = vmatpush1.bf16.msra.mxu0 0
    %3581 = vmatprep.subr.bf16.mxu0 0
    %3582 = vmatpush1.bf16.msra.mxu0 0
    %3583 = vmatprep.subr.bf16.mxu0 0
    %3584 = vmatpush1.bf16.msra.mxu0 0
    %3585 = vmatprep.subr.bf16.mxu0 0
    %3586 = vmatpush1.bf16.msra.mxu0 0
    %3587 = vmatprep.subr.bf16.mxu0 0
    %3588 = vmatpush1.bf16.msra.mxu0 0
    %3589 = vmatprep.subr.bf16.mxu0 0
    %3590 = vmatpush1.bf16.msra.mxu0 0
    %3591 = vmatprep.subr.bf16.mxu0 0
    %3592 = vmatpush1.bf16.msra.mxu0 0
    %3593 = vmatprep.subr.bf16.mxu0 0
    %3594 = vmatpush1.bf16.msra.mxu0 0
    %3595 = vmatprep.subr.bf16.mxu0 0
    %3596 = vmatpush1.bf16.msra.mxu0 0
    %3597 = vmatprep.subr.bf16.mxu0 0
    %3598 = vmatpush1.bf16.msra.mxu0 0
    %3599 = vmatprep.subr.bf16.mxu0 0
    %3600 = vmatpush1.bf16.msra.mxu0 0
    %3601 = vmatprep.subr.bf16.mxu0 0
    %3602 = vmatpush1.bf16.msra.mxu0 0
    %3603 = vmatprep.mubr.bf16.mxu0 0
    %3604 = vmatmul.mubr.bf16.gmra.mrb[0].mxu0 %v2446
    %v3605 = vpop.f32.mrb[0].mxu0
    %v3606 = vadd.f32 0.0, %v3605
    %v3607 = vpop.f32.mrb[0].mxu0
    %v3608 = vpop.f32.mrb[0].mxu0
    %v3609 = vpop.f32.mrb[0].mxu0
    %3610 = vdwg.mxu0
    %v3615 = vunpack.c.l.b16 %v3551
    %v3616 = vunpack.c.l.b16 %v3552
    %v3617 = vunpack.c.l.b16 %v3553
    %v3618 = vunpack.c.l.b16 %v3554
    %v3619 = vpack.c.b16 %v3616, %v3615
    %v3620 = vpack.c.b16 %v3618, %v3617
    %3623 = vmatprep.subr.bf16.mxu0 0
    %3624 = vmatpush1.bf16.msra.mxu0 %v3619
    %3625 = vmatprep.subr.bf16.mxu0 0
    %3626 = vmatpush1.bf16.msra.mxu0 %v3620
    %3627 = vmatprep.subr.bf16.mxu0 0
    %3628 = vmatpush1.bf16.msra.mxu0 0
    %3629 = vmatprep.subr.bf16.mxu0 0
    %3630 = vmatpush1.bf16.msra.mxu0 0
    %3631 = vmatprep.subr.bf16.mxu0 0
    %3632 = vmatpush1.bf16.msra.mxu0 0
    %3633 = vmatprep.subr.bf16.mxu0 0
    %3634 = vmatpush1.bf16.msra.mxu0 0
    %3635 = vmatprep.subr.bf16.mxu0 0
    %3636 = vmatpush1.bf16.msra.mxu0 0
    %3637 = vmatprep.subr.bf16.mxu0 0
    %3638 = vmatpush1.bf16.msra.mxu0 0
    %3639 = vmatprep.subr.bf16.mxu0 0
    %3640 = vmatpush1.bf16.msra.mxu0 0
    %3641 = vmatprep.subr.bf16.mxu0 0
    %3642 = vmatpush1.bf16.msra.mxu0 0
    %3643 = vmatprep.subr.bf16.mxu0 0
    %3644 = vmatpush1.bf16.msra.mxu0 0
    %3645 = vmatprep.subr.bf16.mxu0 0
    %3646 = vmatpush1.bf16.msra.mxu0 0
    %3647 = vmatprep.subr.bf16.mxu0 0
    %3648 = vmatpush1.bf16.msra.mxu0 0
    %3649 = vmatprep.subr.bf16.mxu0 0
    %3650 = vmatpush1.bf16.msra.mxu0 0
    %3651 = vmatprep.subr.bf16.mxu0 0
    %3652 = vmatpush1.bf16.msra.mxu0 0
    %3653 = vmatprep.subr.bf16.mxu0 0
    %3654 = vmatpush1.bf16.msra.mxu0 0
    %3655 = vmatprep.mubr.bf16.mxu0 0
    %3656 = vmatmul.mubr.bf16.gmra.mrb[0].mxu0 %v2698
    %v3657 = vpop.f32.mrb[0].mxu0
    %v3658 = vadd.f32 %v3606, %v3657
    %v3659 = vpop.f32.mrb[0].mxu0
    %v3660 = vpop.f32.mrb[0].mxu0
    %v3661 = vpop.f32.mrb[0].mxu0
    %3662 = vdwg.mxu0
    %v3663 = vld [vmem:[#allocation2 + $0x340] sm:$0x1]
    %v3664 = vunpack.c.l.bf16 %v3663
    %v3665 = vlaneseq
    %v3666 = vshrl.u32 %v3665, 7
    %v3667 = vsub.s32 0, %v3666
    %v3668 = vrot.slane %v3664, %v3667
    %v3669 = vadd.f32 %v3658, %v3668
    %v3670 = vxor.u32 %v3669, 2147483648
    %v3671 = vmul.f32 %v3670, 1.442695
    %v3672 = vpow.pop %v3671
    %v3673 = vadd.f32 %v3672, 1.0
    %v3674 = vrcp.pop %v3673
    %v3675 = vmul.f32 1.0, %v3674
    %v3676 = vtanh.pop %v3669
    %v3677 = vmul.f32 %v3675, %v2412
    %3679 = vrot.lane.b32.xlu0 %v3676, 64
    %v3680 = vpop.permute.xlu0 %3679
    %v3682 = vmul.f32 %v3675, %v3680
    %3684 = vrot.lane.b32.xlu0 %v3682, 32
    %v3685 = vpop.permute.xlu0 %3684
    %v3687 = vadd.f32 %v3677, %v3685
    %v3688 = vtanh.pop %v3687
    %3690 = vrot.lane.b32.xlu0 %v3688, 64
    %v3691 = vpop.permute.xlu0 %3690
    %v3693 = vmul.f32 %v3675, %v3691
    %v3694 = vld [vmem:[#allocation2 + $0x350] sm:$0xf]
    %v3695 = vld [vmem:[#allocation2 + $0x358] sm:$0xf]
    %v3696 = vld [vmem:[#allocation2 + $0x360] sm:$0xf]
    %v3697 = vld [vmem:[#allocation2 + $0x368] sm:$0xf]
    %v3698 = vpack.c.bf16 %v3693, %v3693
    %v3699 = vld [vmem:[#allocation2 + $0x370] sm:$0x1]
    %v3700 = vunpack.c.l.bf16 %v3699
    %v3701 = vlaneseq
    %v3702 = vshrl.u32 %v3701, 7
    %v3703 = vsub.s32 0, %v3702
    %v3704 = vrot.slane %v3700, %v3703
    %3706 = vrot.lane.b32.xlu0 %v3698, 32
    %v3707 = vpop.permute.xlu0 %3706
    %v3712 = vunpack.c.l.b16 %v3694
    %v3713 = vunpack.c.l.b16 %v3695
    %v3714 = vunpack.c.l.b16 %v3696
    %v3715 = vunpack.c.l.b16 %v3697
    %v3716 = vpack.c.b16 %v3713, %v3712
    %v3717 = vpack.c.b16 %v3715, %v3714
    %v3721 = vsel %vm259, %v3707, 0
    %3723 = vmatprep.subr.bf16.mxu0 0
    %3724 = vmatpush1.bf16.msra.mxu0 %v3716
    %3725 = vmatprep.subr.bf16.mxu0 0
    %3726 = vmatpush1.bf16.msra.mxu0 %v3717
    %3727 = vmatprep.subr.bf16.mxu0 0
    %3728 = vmatpush1.bf16.msra.mxu0 0
    %3729 = vmatprep.subr.bf16.mxu0 0
    %3730 = vmatpush1.bf16.msra.mxu0 0
    %3731 = vmatprep.subr.bf16.mxu0 0
    %3732 = vmatpush1.bf16.msra.mxu0 0
    %3733 = vmatprep.subr.bf16.mxu0 0
    %3734 = vmatpush1.bf16.msra.mxu0 0
    %3735 = vmatprep.subr.bf16.mxu0 0
    %3736 = vmatpush1.bf16.msra.mxu0 0
    %3737 = vmatprep.subr.bf16.mxu0 0
    %3738 = vmatpush1.bf16.msra.mxu0 0
    %3739 = vmatprep.subr.bf16.mxu0 0
    %3740 = vmatpush1.bf16.msra.mxu0 0
    %3741 = vmatprep.subr.bf16.mxu0 0
    %3742 = vmatpush1.bf16.msra.mxu0 0
    %3743 = vmatprep.subr.bf16.mxu0 0
    %3744 = vmatpush1.bf16.msra.mxu0 0
    %3745 = vmatprep.subr.bf16.mxu0 0
    %3746 = vmatpush1.bf16.msra.mxu0 0
    %3747 = vmatprep.subr.bf16.mxu0 0
    %3748 = vmatpush1.bf16.msra.mxu0 0
    %3749 = vmatprep.subr.bf16.mxu0 0
    %3750 = vmatpush1.bf16.msra.mxu0 0
    %3751 = vmatprep.subr.bf16.mxu0 0
    %3752 = vmatpush1.bf16.msra.mxu0 0
    %3753 = vmatprep.subr.bf16.mxu0 0
    %3754 = vmatpush1.bf16.msra.mxu0 0
    %3755 = vmatprep.mubr.bf16.mxu0 0
    %3756 = vmatmul.mubr.bf16.gmra.mrb[0].mxu0 %v3721
    %v3757 = vpop.f32.mrb[0].mxu0
    %v3758 = vadd.f32 %v3704, %v3757
    %v3759 = vpop.f32.mrb[0].mxu0
    %v3760 = vpop.f32.mrb[0].mxu0
    %v3761 = vpop.f32.mrb[0].mxu0
    %3762 = vdwg.mxu0
    %v3763 = vmax.f32 %v3758, 0.0
    %v3764 = vld [vmem:[#allocation2 + $0x380] sm:$0xf]
    %v3765 = vld [vmem:[#allocation2 + $0x388] sm:$0xf]
    %v3766 = vld [vmem:[#allocation2 + $0x390] sm:$0xf]
    %v3767 = vld [vmem:[#allocation2 + $0x398] sm:$0xf]
    %v3768 = vpack.c.bf16 %v3763, %v3763
    %v3769 = vld [vmem:[#allocation2 + $0x3a0] sm:$0x1]
    %v3770 = vunpack.c.l.bf16 %v3769
    %v3771 = vlaneseq
    %v3772 = vshrl.u32 %v3771, 7
    %v3773 = vsub.s32 0, %v3772
    %v3774 = vrot.slane %v3770, %v3773
    %v3779 = vunpack.c.l.b16 %v3764
    %v3780 = vunpack.c.l.b16 %v3765
    %v3781 = vunpack.c.l.b16 %v3766
    %v3782 = vunpack.c.l.b16 %v3767
    %v3783 = vpack.c.b16 %v3780, %v3779
    %v3784 = vpack.c.b16 %v3782, %v3781
    %v3788 = vsel %vm259, %v3768, 0
    %3790 = vmatprep.subr.bf16.mxu0 0
    %3791 = vmatpush1.bf16.msra.mxu0 %v3783
    %3792 = vmatprep.subr.bf16.mxu0 0
    %3793 = vmatpush1.bf16.msra.mxu0 %v3784
    %3794 = vmatprep.subr.bf16.mxu0 0
    %3795 = vmatpush1.bf16.msra.mxu0 0
    %3796 = vmatprep.subr.bf16.mxu0 0
    %3797 = vmatpush1.bf16.msra.mxu0 0
    %3798 = vmatprep.subr.bf16.mxu0 0
    %3799 = vmatpush1.bf16.msra.mxu0 0
    %3800 = vmatprep.subr.bf16.mxu0 0
    %3801 = vmatpush1.bf16.msra.mxu0 0
    %3802 = vmatprep.subr.bf16.mxu0 0
    %3803 = vmatpush1.bf16.msra.mxu0 0
    %3804 = vmatprep.subr.bf16.mxu0 0
    %3805 = vmatpush1.bf16.msra.mxu0 0
    %3806 = vmatprep.subr.bf16.mxu0 0
    %3807 = vmatpush1.bf16.msra.mxu0 0
    %3808 = vmatprep.subr.bf16.mxu0 0
    %3809 = vmatpush1.bf16.msra.mxu0 0
    %3810 = vmatprep.subr.bf16.mxu0 0
    %3811 = vmatpush1.bf16.msra.mxu0 0
    %3812 = vmatprep.subr.bf16.mxu0 0
    %3813 = vmatpush1.bf16.msra.mxu0 0
    %3814 = vmatprep.subr.bf16.mxu0 0
    %3815 = vmatpush1.bf16.msra.mxu0 0
    %3816 = vmatprep.subr.bf16.mxu0 0
    %3817 = vmatpush1.bf16.msra.mxu0 0
    %3818 = vmatprep.subr.bf16.mxu0 0
    %3819 = vmatpush1.bf16.msra.mxu0 0
    %3820 = vmatprep.subr.bf16.mxu0 0
    %3821 = vmatpush1.bf16.msra.mxu0 0
    %3822 = vmatprep.mubr.bf16.mxu0 0
    %3823 = vmatmul.mubr.bf16.gmra.mrb[0].mxu0 %v3788
    %v3824 = vpop.f32.mrb[0].mxu0
    %v3825 = vadd.f32 %v3774, %v3824
    %v3826 = vpop.f32.mrb[0].mxu0
    %v3827 = vpop.f32.mrb[0].mxu0
    %v3828 = vpop.f32.mrb[0].mxu0
    %3829 = vdwg.mxu0
    %3831 = vrot.lane.b32.xlu0 %v3825, 9
    %v3832 = vpop.permute.xlu0 %3831
    %vm3834 = vcmask 146504
    %3835 = vst.msk [vmem:[%s2] sm:$0xff] %vm3834, %v3832
    %v3836 = vsel %vm2555, %v3825, -inf
    %3837 = vmax.xlane.f32.xlu0 %v3836
    %v3838 = vpop.xlane.xlu0 %3837
    %vm3839 = vcmp.eq.f32.partialorder %v3825, %v3838
    %v3840 = vld [vmem:[#allocation2 + $0x3b0] sm:$0xf]
    %v3841 = vld [vmem:[#allocation2 + $0x3b8] sm:$0x1]
    %v3842 = vsel %vm3839, 1, 0
    %v3843 = vcvt.s32.f32 %v3842
    %v3844 = vpack.c.bf16 %v3843, %v3843
    %v3847 = vunpack.c.l.b16 %v3840
    %v3848 = vunpack.c.l.b16 %v3841
    %v3849 = vpack.c.b16 %v3848, %v3847
    %v3851 = vsel %vm2555, %v3844, 0
    %v3854 = vand.u32 %v3849, %v2576
    %3856 = vmatprep.subr.bf16.mxu0 0
    %3857 = vmatpush1.bf16.msra.mxu0 %v3854
    %3858 = vmatprep.subr.bf16.mxu0 0
    %3859 = vmatpush1.bf16.msra.mxu0 0
    %3860 = vmatprep.subr.bf16.mxu0 0
    %3861 = vmatpush1.bf16.msra.mxu0 0
    %3862 = vmatprep.subr.bf16.mxu0 0
    %3863 = vmatpush1.bf16.msra.mxu0 0
    %3864 = vmatprep.subr.bf16.mxu0 0
    %3865 = vmatpush1.bf16.msra.mxu0 0
    %3866 = vmatprep.subr.bf16.mxu0 0
    %3867 = vmatpush1.bf16.msra.mxu0 0
    %3868 = vmatprep.subr.bf16.mxu0 0
    %3869 = vmatpush1.bf16.msra.mxu0 0
    %3870 = vmatprep.subr.bf16.mxu0 0
    %3871 = vmatpush1.bf16.msra.mxu0 0
    %3872 = vmatprep.subr.bf16.mxu0 0
    %3873 = vmatpush1.bf16.msra.mxu0 0
    %3874 = vmatprep.subr.bf16.mxu0 0
    %3875 = vmatpush1.bf16.msra.mxu0 0
    %3876 = vmatprep.subr.bf16.mxu0 0
    %3877 = vmatpush1.bf16.msra.mxu0 0
    %3878 = vmatprep.subr.bf16.mxu0 0
    %3879 = vmatpush1.bf16.msra.mxu0 0
    %3880 = vmatprep.subr.bf16.mxu0 0
    %3881 = vmatpush1.bf16.msra.mxu0 0
    %3882 = vmatprep.subr.bf16.mxu0 0
    %3883 = vmatpush1.bf16.msra.mxu0 0
    %3884 = vmatprep.subr.bf16.mxu0 0
    %3885 = vmatpush1.bf16.msra.mxu0 0
    %3886 = vmatprep.subr.bf16.mxu0 0
    %3887 = vmatpush1.bf16.msra.mxu0 0
    %3888 = vmatprep.mubr.bf16.mxu0 0
    %3889 = vmatmul.mubr.bf16.gmra.mrb[0].mxu0 %v3851
    %v3890 = vpop.f32.mrb[0].mxu0
    %v3891 = vadd.f32 0.0, %v3890
    %v3892 = vpop.f32.mrb[0].mxu0
    %v3893 = vpop.f32.mrb[0].mxu0
    %v3894 = vpop.f32.mrb[0].mxu0
    %3895 = vdwg.mxu0
    %v3896 = vld [vmem:[#allocation2 + $0x3c0] sm:$0xf]
    %v3897 = vld [vmem:[#allocation2 + $0x3c8] sm:$0xf]
    %v3898 = vld [vmem:[#allocation2 + $0x3d0] sm:$0xf]
    %v3899 = vld [vmem:[#allocation2 + $0x3d8] sm:$0xf]
    %v3900 = vpack.c.bf16 %v3891, %v3891
    %v3905 = vunpack.c.l.b16 %v3896
    %v3906 = vunpack.c.l.b16 %v3897
    %v3907 = vunpack.c.l.b16 %v3898
    %v3908 = vunpack.c.l.b16 %v3899
    %v3909 = vpack.c.b16 %v3906, %v3905
    %v3910 = vpack.c.b16 %v3908, %v3907
    %v3914 = vsel %vm259, %v3900, 0
    %3916 = vmatprep.subr.bf16.mxu0 0
    %3917 = vmatpush1.bf16.msra.mxu0 %v3909
    %3918 = vmatprep.subr.bf16.mxu0 0
    %3919 = vmatpush1.bf16.msra.mxu0 %v3910
    %3920 = vmatprep.subr.bf16.mxu0 0
    %3921 = vmatpush1.bf16.msra.mxu0 0
    %3922 = vmatprep.subr.bf16.mxu0 0
    %3923 = vmatpush1.bf16.msra.mxu0 0
    %3924 = vmatprep.subr.bf16.mxu0 0
    %3925 = vmatpush1.bf16.msra.mxu0 0
    %3926 = vmatprep.subr.bf16.mxu0 0
    %3927 = vmatpush1.bf16.msra.mxu0 0
    %3928 = vmatprep.subr.bf16.mxu0 0
    %3929 = vmatpush1.bf16.msra.mxu0 0
    %3930 = vmatprep.subr.bf16.mxu0 0
    %3931 = vmatpush1.bf16.msra.mxu0 0
    %3932 = vmatprep.subr.bf16.mxu0 0
    %3933 = vmatpush1.bf16.msra.mxu0 0
    %3934 = vmatprep.subr.bf16.mxu0 0
    %3935 = vmatpush1.bf16.msra.mxu0 0
    %3936 = vmatprep.subr.bf16.mxu0 0
    %3937 = vmatpush1.bf16.msra.mxu0 0
    %3938 = vmatprep.subr.bf16.mxu0 0
    %3939 = vmatpush1.bf16.msra.mxu0 0
    %3940 = vmatprep.subr.bf16.mxu0 0
    %3941 = vmatpush1.bf16.msra.mxu0 0
    %3942 = vmatprep.subr.bf16.mxu0 0
    %3943 = vmatpush1.bf16.msra.mxu0 0
    %3944 = vmatprep.subr.bf16.mxu0 0
    %3945 = vmatpush1.bf16.msra.mxu0 0
    %3946 = vmatprep.subr.bf16.mxu0 0
    %3947 = vmatpush1.bf16.msra.mxu0 0
    %3948 = vmatprep.mubr.bf16.mxu0 0
    %3949 = vmatmul.mubr.bf16.gmra.mrb[0].mxu0 %v3914
    %v3950 = vpop.f32.mrb[0].mxu0
    %v3951 = vadd.f32 %v2209, %v3950
    %v3952 = vpop.f32.mrb[0].mxu0
    %v3953 = vpop.f32.mrb[0].mxu0
    %v3954 = vpop.f32.mrb[0].mxu0
    %3955 = vdwg.mxu0
    %v3956 = vld [vmem:[#allocation2 + $0x4f0] sm:$0xf]
    %v3957 = vld [vmem:[#allocation2 + $0x4f8] sm:$0xf]
    %v3958 = vld [vmem:[#allocation2 + $0x500] sm:$0xf]
    %v3959 = vld [vmem:[#allocation2 + $0x508] sm:$0xf]
    %v3960 = vpack.c.bf16 %v3951, %v3951
    %v3965 = vunpack.c.l.b16 %v3956
    %v3966 = vunpack.c.l.b16 %v3957
    %v3967 = vunpack.c.l.b16 %v3958
    %v3968 = vunpack.c.l.b16 %v3959
    %v3969 = vpack.c.b16 %v3966, %v3965
    %v3970 = vpack.c.b16 %v3968, %v3967
    %v3974 = vsel %vm259, %v3960, 0
    %3976 = vmatprep.subr.bf16.mxu0 0
    %3977 = vmatpush1.bf16.msra.mxu0 %v3969
    %3978 = vmatprep.subr.bf16.mxu0 0
    %3979 = vmatpush1.bf16.msra.mxu0 %v3970
    %3980 = vmatprep.subr.bf16.mxu0 0
    %3981 = vmatpush1.bf16.msra.mxu0 0
    %3982 = vmatprep.subr.bf16.mxu0 0
    %3983 = vmatpush1.bf16.msra.mxu0 0
    %3984 = vmatprep.subr.bf16.mxu0 0
    %3985 = vmatpush1.bf16.msra.mxu0 0
    %3986 = vmatprep.subr.bf16.mxu0 0
    %3987 = vmatpush1.bf16.msra.mxu0 0
    %3988 = vmatprep.subr.bf16.mxu0 0
    %3989 = vmatpush1.bf16.msra.mxu0 0
    %3990 = vmatprep.subr.bf16.mxu0 0
    %3991 = vmatpush1.bf16.msra.mxu0 0
    %3992 = vmatprep.subr.bf16.mxu0 0
    %3993 = vmatpush1.bf16.msra.mxu0 0
    %3994 = vmatprep.subr.bf16.mxu0 0
    %3995 = vmatpush1.bf16.msra.mxu0 0
    %3996 = vmatprep.subr.bf16.mxu0 0
    %3997 = vmatpush1.bf16.msra.mxu0 0
    %3998 = vmatprep.subr.bf16.mxu0 0
    %3999 = vmatpush1.bf16.msra.mxu0 0
    %4000 = vmatprep.subr.bf16.mxu0 0
    %4001 = vmatpush1.bf16.msra.mxu0 0
    %4002 = vmatprep.subr.bf16.mxu0 0
    %4003 = vmatpush1.bf16.msra.mxu0 0
    %4004 = vmatprep.subr.bf16.mxu0 0
    %4005 = vmatpush1.bf16.msra.mxu0 0
    %4006 = vmatprep.subr.bf16.mxu0 0
    %4007 = vmatpush1.bf16.msra.mxu0 0
    %4008 = vmatprep.mubr.bf16.mxu0 0
    %4009 = vmatmul.mubr.bf16.gmra.mrb[0].mxu0 %v3974
    %v4010 = vpop.f32.mrb[0].mxu0
    %v4011 = vadd.f32 %v2271, %v4010
    %v4012 = vpop.f32.mrb[0].mxu0
    %v4013 = vpop.f32.mrb[0].mxu0
    %v4014 = vpop.f32.mrb[0].mxu0
    %4015 = vdwg.mxu0
    %v4016 = vld [vmem:[#allocation2 + $0x410] sm:$0xf]
    %v4017 = vld [vmem:[#allocation2 + $0x418] sm:$0xf]
    %v4018 = vld [vmem:[#allocation2 + $0x420] sm:$0xf]
    %v4019 = vld [vmem:[#allocation2 + $0x428] sm:$0xf]
    %v4020 = vpack.c.bf16 %v3546, %v3546
    %v4021 = vld [vmem:[#allocation2 + $0x430] sm:$0xf]
    %v4022 = vld [vmem:[#allocation2 + $0x438] sm:$0xf]
    %v4023 = vld [vmem:[#allocation2 + $0x440] sm:$0xf]
    %v4024 = vld [vmem:[#allocation2 + $0x448] sm:$0xf]
    %v4029 = vunpack.c.l.b16 %v4021
    %v4030 = vunpack.c.l.b16 %v4022
    %v4031 = vunpack.c.l.b16 %v4023
    %v4032 = vunpack.c.l.b16 %v4024
    %v4033 = vpack.c.b16 %v4030, %v4029
    %v4034 = vpack.c.b16 %v4032, %v4031
    %4037 = vmatprep.subr.bf16.mxu0 0
    %4038 = vmatpush1.bf16.msra.mxu0 %v4033
    %4039 = vmatprep.subr.bf16.mxu0 0
    %4040 = vmatpush1.bf16.msra.mxu0 %v4034
    %4041 = vmatprep.subr.bf16.mxu0 0
    %4042 = vmatpush1.bf16.msra.mxu0 0
    %4043 = vmatprep.subr.bf16.mxu0 0
    %4044 = vmatpush1.bf16.msra.mxu0 0
    %4045 = vmatprep.subr.bf16.mxu0 0
    %4046 = vmatpush1.bf16.msra.mxu0 0
    %4047 = vmatprep.subr.bf16.mxu0 0
    %4048 = vmatpush1.bf16.msra.mxu0 0
    %4049 = vmatprep.subr.bf16.mxu0 0
    %4050 = vmatpush1.bf16.msra.mxu0 0
    %4051 = vmatprep.subr.bf16.mxu0 0
    %4052 = vmatpush1.bf16.msra.mxu0 0
    %4053 = vmatprep.subr.bf16.mxu0 0
    %4054 = vmatpush1.bf16.msra.mxu0 0
    %4055 = vmatprep.subr.bf16.mxu0 0
    %4056 = vmatpush1.bf16.msra.mxu0 0
    %4057 = vmatprep.subr.bf16.mxu0 0
    %4058 = vmatpush1.bf16.msra.mxu0 0
    %4059 = vmatprep.subr.bf16.mxu0 0
    %4060 = vmatpush1.bf16.msra.mxu0 0
    %4061 = vmatprep.subr.bf16.mxu0 0
    %4062 = vmatpush1.bf16.msra.mxu0 0
    %4063 = vmatprep.subr.bf16.mxu0 0
    %4064 = vmatpush1.bf16.msra.mxu0 0
    %4065 = vmatprep.subr.bf16.mxu0 0
    %4066 = vmatpush1.bf16.msra.mxu0 0
    %4067 = vmatprep.subr.bf16.mxu0 0
    %4068 = vmatpush1.bf16.msra.mxu0 0
    %4069 = vmatprep.mubr.bf16.mxu0 0
    %4070 = vmatmul.mubr.bf16.gmra.mrb[0].mxu0 %v3318
    %v4071 = vpop.f32.mrb[0].mxu0
    %v4072 = vadd.f32 0.0, %v4071
    %v4073 = vpop.f32.mrb[0].mxu0
    %v4074 = vpop.f32.mrb[0].mxu0
    %v4075 = vpop.f32.mrb[0].mxu0
    %4076 = vdwg.mxu0
    %v4081 = vunpack.c.l.b16 %v4016
    %v4082 = vunpack.c.l.b16 %v4017
    %v4083 = vunpack.c.l.b16 %v4018
    %v4084 = vunpack.c.l.b16 %v4019
    %v4085 = vpack.c.b16 %v4082, %v4081
    %v4086 = vpack.c.b16 %v4084, %v4083
    %v4090 = vsel %vm259, %v4020, 0
    %4092 = vmatprep.subr.bf16.mxu0 0
    %4093 = vmatpush1.bf16.msra.mxu0 %v4085
    %4094 = vmatprep.subr.bf16.mxu0 0
    %4095 = vmatpush1.bf16.msra.mxu0 %v4086
    %4096 = vmatprep.subr.bf16.mxu0 0
    %4097 = vmatpush1.bf16.msra.mxu0 0
    %4098 = vmatprep.subr.bf16.mxu0 0
    %4099 = vmatpush1.bf16.msra.mxu0 0
    %4100 = vmatprep.subr.bf16.mxu0 0
    %4101 = vmatpush1.bf16.msra.mxu0 0
    %4102 = vmatprep.subr.bf16.mxu0 0
    %4103 = vmatpush1.bf16.msra.mxu0 0
    %4104 = vmatprep.subr.bf16.mxu0 0
    %4105 = vmatpush1.bf16.msra.mxu0 0
    %4106 = vmatprep.subr.bf16.mxu0 0
    %4107 = vmatpush1.bf16.msra.mxu0 0
    %4108 = vmatprep.subr.bf16.mxu0 0
    %4109 = vmatpush1.bf16.msra.mxu0 0
    %4110 = vmatprep.subr.bf16.mxu0 0
    %4111 = vmatpush1.bf16.msra.mxu0 0
    %4112 = vmatprep.subr.bf16.mxu0 0
    %4113 = vmatpush1.bf16.msra.mxu0 0
    %4114 = vmatprep.subr.bf16.mxu0 0
    %4115 = vmatpush1.bf16.msra.mxu0 0
    %4116 = vmatprep.subr.bf16.mxu0 0
    %4117 = vmatpush1.bf16.msra.mxu0 0
    %4118 = vmatprep.subr.bf16.mxu0 0
    %4119 = vmatpush1.bf16.msra.mxu0 0
    %4120 = vmatprep.subr.bf16.mxu0 0
    %4121 = vmatpush1.bf16.msra.mxu0 0
    %4122 = vmatprep.subr.bf16.mxu0 0
    %4123 = vmatpush1.bf16.msra.mxu0 0
    %4124 = vmatprep.mubr.bf16.mxu0 0
    %4125 = vmatmul.mubr.bf16.gmra.mrb[0].mxu0 %v4090
    %v4126 = vpop.f32.mrb[0].mxu0
    %v4127 = vadd.f32 %v4072, %v4126
    %v4128 = vpop.f32.mrb[0].mxu0
    %v4129 = vpop.f32.mrb[0].mxu0
    %v4130 = vpop.f32.mrb[0].mxu0
    %4131 = vdwg.mxu0
    %v4132 = vld [vmem:[#allocation2 + $0x450] sm:$0x1]
    %v4133 = vunpack.c.l.bf16 %v4132
    %v4134 = vlaneseq
    %v4135 = vshrl.u32 %v4134, 7
    %v4136 = vsub.s32 0, %v4135
    %v4137 = vrot.slane %v4133, %v4136
    %v4138 = vadd.f32 %v4127, %v4137
    %v4139 = vxor.u32 %v4138, 2147483648
    %v4140 = vmul.f32 %v4139, 1.442695
    %v4141 = vpow.pop %v4140
    %v4142 = vadd.f32 %v4141, 1.0
    %v4143 = vrcp.pop %v4142
    %v4144 = vmul.f32 1.0, %v4143
    %v4145 = vtanh.pop %v4138
    %v4146 = vmul.f32 %v4144, %v3284
    %4148 = vrot.lane.b32.xlu0 %v4145, 64
    %v4149 = vpop.permute.xlu0 %4148
    %v4151 = vmul.f32 %v4144, %v4149
    %4153 = vrot.lane.b32.xlu0 %v4151, 32
    %v4154 = vpop.permute.xlu0 %4153
    %v4156 = vadd.f32 %v4146, %v4154
    %v4157 = vtanh.pop %v4156
    %4159 = vrot.lane.b32.xlu0 %v4157, 64
    %v4160 = vpop.permute.xlu0 %4159
    %v4162 = vmul.f32 %v4144, %v4160
    %v4163 = vld [vmem:[#allocation2 + $0x460] sm:$0xf]
    %v4164 = vld [vmem:[#allocation2 + $0x468] sm:$0xf]
    %v4165 = vld [vmem:[#allocation2 + $0x470] sm:$0xf]
    %v4166 = vld [vmem:[#allocation2 + $0x478] sm:$0xf]
    %v4167 = vpack.c.bf16 %v4162, %v4162
    %v4168 = vld [vmem:[#allocation2 + $0x480] sm:$0x1]
    %v4169 = vunpack.c.l.bf16 %v4168
    %v4170 = vlaneseq
    %v4171 = vshrl.u32 %v4170, 7
    %v4172 = vsub.s32 0, %v4171
    %v4173 = vrot.slane %v4169, %v4172
    %4175 = vrot.lane.b32.xlu0 %v4167, 32
    %v4176 = vpop.permute.xlu0 %4175
    %v4181 = vunpack.c.l.b16 %v4163
    %v4182 = vunpack.c.l.b16 %v4164
    %v4183 = vunpack.c.l.b16 %v4165
    %v4184 = vunpack.c.l.b16 %v4166
    %v4185 = vpack.c.b16 %v4182, %v4181
    %v4186 = vpack.c.b16 %v4184, %v4183
    %v4190 = vsel %vm259, %v4176, 0
    %4192 = vmatprep.subr.bf16.mxu0 0
    %4193 = vmatpush1.bf16.msra.mxu0 %v4185
    %4194 = vmatprep.subr.bf16.mxu0 0
    %4195 = vmatpush1.bf16.msra.mxu0 %v4186
    %4196 = vmatprep.subr.bf16.mxu0 0
    %4197 = vmatpush1.bf16.msra.mxu0 0
    %4198 = vmatprep.subr.bf16.mxu0 0
    %4199 = vmatpush1.bf16.msra.mxu0 0
    %4200 = vmatprep.subr.bf16.mxu0 0
    %4201 = vmatpush1.bf16.msra.mxu0 0
    %4202 = vmatprep.subr.bf16.mxu0 0
    %4203 = vmatpush1.bf16.msra.mxu0 0
    %4204 = vmatprep.subr.bf16.mxu0 0
    %4205 = vmatpush1.bf16.msra.mxu0 0
    %4206 = vmatprep.subr.bf16.mxu0 0
    %4207 = vmatpush1.bf16.msra.mxu0 0
    %4208 = vmatprep.subr.bf16.mxu0 0
    %4209 = vmatpush1.bf16.msra.mxu0 0
    %4210 = vmatprep.subr.bf16.mxu0 0
    %4211 = vmatpush1.bf16.msra.mxu0 0
    %4212 = vmatprep.subr.bf16.mxu0 0
    %4213 = vmatpush1.bf16.msra.mxu0 0
    %4214 = vmatprep.subr.bf16.mxu0 0
    %4215 = vmatpush1.bf16.msra.mxu0 0
    %4216 = vmatprep.subr.bf16.mxu0 0
    %4217 = vmatpush1.bf16.msra.mxu0 0
    %4218 = vmatprep.subr.bf16.mxu0 0
    %4219 = vmatpush1.bf16.msra.mxu0 0
    %4220 = vmatprep.subr.bf16.mxu0 0
    %4221 = vmatpush1.bf16.msra.mxu0 0
    %4222 = vmatprep.subr.bf16.mxu0 0
    %4223 = vmatpush1.bf16.msra.mxu0 0
    %4224 = vmatprep.mubr.bf16.mxu0 0
    %4225 = vmatmul.mubr.bf16.gmra.mrb[0].mxu0 %v4190
    %v4226 = vpop.f32.mrb[0].mxu0
    %v4227 = vadd.f32 %v4173, %v4226
    %v4228 = vpop.f32.mrb[0].mxu0
    %v4229 = vpop.f32.mrb[0].mxu0
    %v4230 = vpop.f32.mrb[0].mxu0
    %4231 = vdwg.mxu0
    %v4232 = vmax.f32 %v4227, 0.0
    %v4233 = vld [vmem:[#allocation2 + $0x490] sm:$0xf]
    %v4234 = vld [vmem:[#allocation2 + $0x498] sm:$0xf]
    %v4235 = vld [vmem:[#allocation2 + $0x4a0] sm:$0xf]
    %v4236 = vld [vmem:[#allocation2 + $0x4a8] sm:$0xf]
    %v4237 = vpack.c.bf16 %v4232, %v4232
    %v4238 = vld [vmem:[#allocation2 + $0x4b0] sm:$0x1]
    %v4239 = vunpack.c.l.bf16 %v4238
    %v4240 = vlaneseq
    %v4241 = vshrl.u32 %v4240, 7
    %v4242 = vsub.s32 0, %v4241
    %v4243 = vrot.slane %v4239, %v4242
    %v4248 = vunpack.c.l.b16 %v4233
    %v4249 = vunpack.c.l.b16 %v4234
    %v4250 = vunpack.c.l.b16 %v4235
    %v4251 = vunpack.c.l.b16 %v4236
    %v4252 = vpack.c.b16 %v4249, %v4248
    %v4253 = vpack.c.b16 %v4251, %v4250
    %v4257 = vsel %vm259, %v4237, 0
    %4259 = vmatprep.subr.bf16.mxu0 0
    %4260 = vmatpush1.bf16.msra.mxu0 %v4252
    %4261 = vmatprep.subr.bf16.mxu0 0
    %4262 = vmatpush1.bf16.msra.mxu0 %v4253
    %4263 = vmatprep.subr.bf16.mxu0 0
    %4264 = vmatpush1.bf16.msra.mxu0 0
    %4265 = vmatprep.subr.bf16.mxu0 0
    %4266 = vmatpush1.bf16.msra.mxu0 0
    %4267 = vmatprep.subr.bf16.mxu0 0
    %4268 = vmatpush1.bf16.msra.mxu0 0
    %4269 = vmatprep.subr.bf16.mxu0 0
    %4270 = vmatpush1.bf16.msra.mxu0 0
    %4271 = vmatprep.subr.bf16.mxu0 0
    %4272 = vmatpush1.bf16.msra.mxu0 0
    %4273 = vmatprep.subr.bf16.mxu0 0
    %4274 = vmatpush1.bf16.msra.mxu0 0
    %4275 = vmatprep.subr.bf16.mxu0 0
    %4276 = vmatpush1.bf16.msra.mxu0 0
    %4277 = vmatprep.subr.bf16.mxu0 0
    %4278 = vmatpush1.bf16.msra.mxu0 0
    %4279 = vmatprep.subr.bf16.mxu0 0
    %4280 = vmatpush1.bf16.msra.mxu0 0
    %4281 = vmatprep.subr.bf16.mxu0 0
    %4282 = vmatpush1.bf16.msra.mxu0 0
    %4283 = vmatprep.subr.bf16.mxu0 0
    %4284 = vmatpush1.bf16.msra.mxu0 0
    %4285 = vmatprep.subr.bf16.mxu0 0
    %4286 = vmatpush1.bf16.msra.mxu0 0
    %4287 = vmatprep.subr.bf16.mxu0 0
    %4288 = vmatpush1.bf16.msra.mxu0 0
    %4289 = vmatprep.subr.bf16.mxu0 0
    %4290 = vmatpush1.bf16.msra.mxu0 0
    %4291 = vmatprep.mubr.bf16.mxu0 0
    %4292 = vmatmul.mubr.bf16.gmra.mrb[0].mxu0 %v4257
    %v4293 = vpop.f32.mrb[0].mxu0
    %v4294 = vadd.f32 %v4243, %v4293
    %v4295 = vpop.f32.mrb[0].mxu0
    %v4296 = vpop.f32.mrb[0].mxu0
    %v4297 = vpop.f32.mrb[0].mxu0
    %4298 = vdwg.mxu0
    %4300 = vrot.lane.b32.xlu0 %v4294, 68
    %v4301 = vpop.permute.xlu0 %4300
    %vm4303 = vcmask 687648
    %4304 = vst.msk [vmem:[%s2] sm:$0xff] %vm4303, %v4301
    %v4305 = vsel %vm3025, %v4294, -inf
    %4306 = vmax.xlane.f32.xlu0 %v4305
    %v4307 = vpop.xlane.xlu0 %4306
    %vm4308 = vcmp.eq.f32.partialorder %v4294, %v4307
    %v4309 = vld [vmem:[#allocation2 + $0x4c0] sm:$0xf]
    %v4310 = vld [vmem:[#allocation2 + $0x4c8] sm:$0xf]
    %v4311 = vsel %vm4308, 1, 0
    %v4312 = vcvt.s32.f32 %v4311
    %v4313 = vpack.c.bf16 %v4312, %v4312
    %v4316 = vunpack.c.l.b16 %v4309
    %v4317 = vunpack.c.l.b16 %v4310
    %v4318 = vpack.c.b16 %v4317, %v4316
    %v4321 = vsel %vm3025, %v4313, 0
    %4323 = vmatprep.subr.bf16.mxu0 0
    %4324 = vmatpush1.bf16.msra.mxu0 %v4318
    %4325 = vmatprep.subr.bf16.mxu0 0
    %4326 = vmatpush1.bf16.msra.mxu0 0
    %4327 = vmatprep.subr.bf16.mxu0 0
    %4328 = vmatpush1.bf16.msra.mxu0 0
    %4329 = vmatprep.subr.bf16.mxu0 0
    %4330 = vmatpush1.bf16.msra.mxu0 0
    %4331 = vmatprep.subr.bf16.mxu0 0
    %4332 = vmatpush1.bf16.msra.mxu0 0
    %4333 = vmatprep.subr.bf16.mxu0 0
    %4334 = vmatpush1.bf16.msra.mxu0 0
    %4335 = vmatprep.subr.bf16.mxu0 0
    %4336 = vmatpush1.bf16.msra.mxu0 0
    %4337 = vmatprep.subr.bf16.mxu0 0
    %4338 = vmatpush1.bf16.msra.mxu0 0
    %4339 = vmatprep.subr.bf16.mxu0 0
    %4340 = vmatpush1.bf16.msra.mxu0 0
    %4341 = vmatprep.subr.bf16.mxu0 0
    %4342 = vmatpush1.bf16.msra.mxu0 0
    %4343 = vmatprep.subr.bf16.mxu0 0
    %4344 = vmatpush1.bf16.msra.mxu0 0
    %4345 = vmatprep.subr.bf16.mxu0 0
    %4346 = vmatpush1.bf16.msra.mxu0 0
    %4347 = vmatprep.subr.bf16.mxu0 0
    %4348 = vmatpush1.bf16.msra.mxu0 0
    %4349 = vmatprep.subr.bf16.mxu0 0
    %4350 = vmatpush1.bf16.msra.mxu0 0
    %4351 = vmatprep.subr.bf16.mxu0 0
    %4352 = vmatpush1.bf16.msra.mxu0 0
    %4353 = vmatprep.subr.bf16.mxu0 0
    %4354 = vmatpush1.bf16.msra.mxu0 0
    %4355 = vmatprep.mubr.bf16.mxu0 0
    %4356 = vmatmul.mubr.bf16.gmra.mrb[0].mxu0 %v4321
    %v4357 = vpop.f32.mrb[0].mxu0
    %v4358 = vadd.f32 0.0, %v4357
    %v4359 = vpop.f32.mrb[0].mxu0
    %v4360 = vpop.f32.mrb[0].mxu0
    %v4361 = vpop.f32.mrb[0].mxu0
    %4362 = vdwg.mxu0
    %v4363 = vld [vmem:[#allocation2 + $0x4d0] sm:$0xf]
    %v4364 = vld [vmem:[#allocation2 + $0x4d8] sm:$0xf]
    %v4365 = vld [vmem:[#allocation2 + $0x4e0] sm:$0xf]
    %v4366 = vld [vmem:[#allocation2 + $0x4e8] sm:$0xf]
    %v4367 = vpack.c.bf16 %v4358, %v4358
    %v4372 = vunpack.c.l.b16 %v4363
    %v4373 = vunpack.c.l.b16 %v4364
    %v4374 = vunpack.c.l.b16 %v4365
    %v4375 = vunpack.c.l.b16 %v4366
    %v4376 = vpack.c.b16 %v4373, %v4372
    %v4377 = vpack.c.b16 %v4375, %v4374
    %v4381 = vsel %vm259, %v4367, 0
    %4383 = vmatprep.subr.bf16.mxu0 0
    %4384 = vmatpush1.bf16.msra.mxu0 %v4376
    %4385 = vmatprep.subr.bf16.mxu0 0
    %4386 = vmatpush1.bf16.msra.mxu0 %v4377
    %4387 = vmatprep.subr.bf16.mxu0 0
    %4388 = vmatpush1.bf16.msra.mxu0 0
    %4389 = vmatprep.subr.bf16.mxu0 0
    %4390 = vmatpush1.bf16.msra.mxu0 0
    %4391 = vmatprep.subr.bf16.mxu0 0
    %4392 = vmatpush1.bf16.msra.mxu0 0
    %4393 = vmatprep.subr.bf16.mxu0 0
    %4394 = vmatpush1.bf16.msra.mxu0 0
    %4395 = vmatprep.subr.bf16.mxu0 0
    %4396 = vmatpush1.bf16.msra.mxu0 0
    %4397 = vmatprep.subr.bf16.mxu0 0
    %4398 = vmatpush1.bf16.msra.mxu0 0
    %4399 = vmatprep.subr.bf16.mxu0 0
    %4400 = vmatpush1.bf16.msra.mxu0 0
    %4401 = vmatprep.subr.bf16.mxu0 0
    %4402 = vmatpush1.bf16.msra.mxu0 0
    %4403 = vmatprep.subr.bf16.mxu0 0
    %4404 = vmatpush1.bf16.msra.mxu0 0
    %4405 = vmatprep.subr.bf16.mxu0 0
    %4406 = vmatpush1.bf16.msra.mxu0 0
    %4407 = vmatprep.subr.bf16.mxu0 0
    %4408 = vmatpush1.bf16.msra.mxu0 0
    %4409 = vmatprep.subr.bf16.mxu0 0
    %4410 = vmatpush1.bf16.msra.mxu0 0
    %4411 = vmatprep.subr.bf16.mxu0 0
    %4412 = vmatpush1.bf16.msra.mxu0 0
    %4413 = vmatprep.subr.bf16.mxu0 0
    %4414 = vmatpush1.bf16.msra.mxu0 0
    %4415 = vmatprep.mubr.bf16.mxu0 0
    %4416 = vmatmul.mubr.bf16.gmra.mrb[0].mxu0 %v4381
    %v4417 = vpop.f32.mrb[0].mxu0
    %v4418 = vadd.f32 %v4011, %v4417
    %v4419 = vpop.f32.mrb[0].mxu0
    %v4420 = vpop.f32.mrb[0].mxu0
    %v4421 = vpop.f32.mrb[0].mxu0
    %4422 = vdwg.mxu0
    %v4423 = vld [vmem:[#allocation2 + $0x410] sm:$0xf]
    %v4424 = vld [vmem:[#allocation2 + $0x418] sm:$0xf]
    %v4425 = vld [vmem:[#allocation2 + $0x420] sm:$0xf]
    %v4426 = vld [vmem:[#allocation2 + $0x428] sm:$0xf]
    %v4427 = vpack.c.bf16 %v4418, %v4418
    %v4428 = vld [vmem:[#allocation2 + $0x430] sm:$0xf]
    %v4429 = vld [vmem:[#allocation2 + $0x438] sm:$0xf]
    %v4430 = vld [vmem:[#allocation2 + $0x440] sm:$0xf]
    %v4431 = vld [vmem:[#allocation2 + $0x448] sm:$0xf]
    %v4436 = vunpack.c.l.b16 %v4428
    %v4437 = vunpack.c.l.b16 %v4429
    %v4438 = vunpack.c.l.b16 %v4430
    %v4439 = vunpack.c.l.b16 %v4431
    %v4440 = vpack.c.b16 %v4437, %v4436
    %v4441 = vpack.c.b16 %v4439, %v4438
    %4444 = vmatprep.subr.bf16.mxu0 0
    %4445 = vmatpush1.bf16.msra.mxu0 %v4440
    %4446 = vmatprep.subr.bf16.mxu0 0
    %4447 = vmatpush1.bf16.msra.mxu0 %v4441
    %4448 = vmatprep.subr.bf16.mxu0 0
    %4449 = vmatpush1.bf16.msra.mxu0 0
    %4450 = vmatprep.subr.bf16.mxu0 0
    %4451 = vmatpush1.bf16.msra.mxu0 0
    %4452 = vmatprep.subr.bf16.mxu0 0
    %4453 = vmatpush1.bf16.msra.mxu0 0
    %4454 = vmatprep.subr.bf16.mxu0 0
    %4455 = vmatpush1.bf16.msra.mxu0 0
    %4456 = vmatprep.subr.bf16.mxu0 0
    %4457 = vmatpush1.bf16.msra.mxu0 0
    %4458 = vmatprep.subr.bf16.mxu0 0
    %4459 = vmatpush1.bf16.msra.mxu0 0
    %4460 = vmatprep.subr.bf16.mxu0 0
    %4461 = vmatpush1.bf16.msra.mxu0 0
    %4462 = vmatprep.subr.bf16.mxu0 0
    %4463 = vmatpush1.bf16.msra.mxu0 0
    %4464 = vmatprep.subr.bf16.mxu0 0
    %4465 = vmatpush1.bf16.msra.mxu0 0
    %4466 = vmatprep.subr.bf16.mxu0 0
    %4467 = vmatpush1.bf16.msra.mxu0 0
    %4468 = vmatprep.subr.bf16.mxu0 0
    %4469 = vmatpush1.bf16.msra.mxu0 0
    %4470 = vmatprep.subr.bf16.mxu0 0
    %4471 = vmatpush1.bf16.msra.mxu0 0
    %4472 = vmatprep.subr.bf16.mxu0 0
    %4473 = vmatpush1.bf16.msra.mxu0 0
    %4474 = vmatprep.subr.bf16.mxu0 0
    %4475 = vmatpush1.bf16.msra.mxu0 0
    %4476 = vmatprep.mubr.bf16.mxu0 0
    %4477 = vmatmul.mubr.bf16.gmra.mrb[0].mxu0 %v4190
    %v4478 = vpop.f32.mrb[0].mxu0
    %v4479 = vadd.f32 0.0, %v4478
    %v4480 = vpop.f32.mrb[0].mxu0
    %v4481 = vpop.f32.mrb[0].mxu0
    %v4482 = vpop.f32.mrb[0].mxu0
    %4483 = vdwg.mxu0
    %v4488 = vunpack.c.l.b16 %v4423
    %v4489 = vunpack.c.l.b16 %v4424
    %v4490 = vunpack.c.l.b16 %v4425
    %v4491 = vunpack.c.l.b16 %v4426
    %v4492 = vpack.c.b16 %v4489, %v4488
    %v4493 = vpack.c.b16 %v4491, %v4490
    %v4497 = vsel %vm259, %v4427, 0
    %4499 = vmatprep.subr.bf16.mxu0 0
    %4500 = vmatpush1.bf16.msra.mxu0 %v4492
    %4501 = vmatprep.subr.bf16.mxu0 0
    %4502 = vmatpush1.bf16.msra.mxu0 %v4493
    %4503 = vmatprep.subr.bf16.mxu0 0
    %4504 = vmatpush1.bf16.msra.mxu0 0
    %4505 = vmatprep.subr.bf16.mxu0 0
    %4506 = vmatpush1.bf16.msra.mxu0 0
    %4507 = vmatprep.subr.bf16.mxu0 0
    %4508 = vmatpush1.bf16.msra.mxu0 0
    %4509 = vmatprep.subr.bf16.mxu0 0
    %4510 = vmatpush1.bf16.msra.mxu0 0
    %4511 = vmatprep.subr.bf16.mxu0 0
    %4512 = vmatpush1.bf16.msra.mxu0 0
    %4513 = vmatprep.subr.bf16.mxu0 0
    %4514 = vmatpush1.bf16.msra.mxu0 0
    %4515 = vmatprep.subr.bf16.mxu0 0
    %4516 = vmatpush1.bf16.msra.mxu0 0
    %4517 = vmatprep.subr.bf16.mxu0 0
    %4518 = vmatpush1.bf16.msra.mxu0 0
    %4519 = vmatprep.subr.bf16.mxu0 0
    %4520 = vmatpush1.bf16.msra.mxu0 0
    %4521 = vmatprep.subr.bf16.mxu0 0
    %4522 = vmatpush1.bf16.msra.mxu0 0
    %4523 = vmatprep.subr.bf16.mxu0 0
    %4524 = vmatpush1.bf16.msra.mxu0 0
    %4525 = vmatprep.subr.bf16.mxu0 0
    %4526 = vmatpush1.bf16.msra.mxu0 0
    %4527 = vmatprep.subr.bf16.mxu0 0
    %4528 = vmatpush1.bf16.msra.mxu0 0
    %4529 = vmatprep.subr.bf16.mxu0 0
    %4530 = vmatpush1.bf16.msra.mxu0 0
    %4531 = vmatprep.mubr.bf16.mxu0 0
    %4532 = vmatmul.mubr.bf16.gmra.mrb[0].mxu0 %v4497
    %v4533 = vpop.f32.mrb[0].mxu0
    %v4534 = vadd.f32 %v4479, %v4533
    %v4535 = vpop.f32.mrb[0].mxu0
    %v4536 = vpop.f32.mrb[0].mxu0
    %v4537 = vpop.f32.mrb[0].mxu0
    %4538 = vdwg.mxu0
    %v4539 = vld [vmem:[#allocation2 + $0x450] sm:$0x1]
    %v4540 = vunpack.c.l.bf16 %v4539
    %v4541 = vlaneseq
    %v4542 = vshrl.u32 %v4541, 7
    %v4543 = vsub.s32 0, %v4542
    %v4544 = vrot.slane %v4540, %v4543
    %v4545 = vadd.f32 %v4534, %v4544
    %v4546 = vxor.u32 %v4545, 2147483648
    %v4547 = vmul.f32 %v4546, 1.442695
    %v4548 = vpow.pop %v4547
    %v4549 = vadd.f32 %v4548, 1.0
    %v4550 = vrcp.pop %v4549
    %v4551 = vmul.f32 1.0, %v4550
    %v4552 = vtanh.pop %v4545
    %v4553 = vmul.f32 %v4551, %v4156
    %4555 = vrot.lane.b32.xlu0 %v4552, 64
    %v4556 = vpop.permute.xlu0 %4555
    %v4558 = vmul.f32 %v4551, %v4556
    %4560 = vrot.lane.b32.xlu0 %v4558, 32
    %v4561 = vpop.permute.xlu0 %4560
    %v4563 = vadd.f32 %v4553, %v4561
    %v4564 = vtanh.pop %v4563
    %4566 = vrot.lane.b32.xlu0 %v4564, 64
    %v4567 = vpop.permute.xlu0 %4566
    %v4569 = vmul.f32 %v4551, %v4567
    %v4570 = vld [vmem:[#allocation2 + $0x460] sm:$0xf]
    %v4571 = vld [vmem:[#allocation2 + $0x468] sm:$0xf]
    %v4572 = vld [vmem:[#allocation2 + $0x470] sm:$0xf]
    %v4573 = vld [vmem:[#allocation2 + $0x478] sm:$0xf]
    %v4574 = vpack.c.bf16 %v4569, %v4569
    %v4575 = vld [vmem:[#allocation2 + $0x480] sm:$0x1]
    %v4576 = vunpack.c.l.bf16 %v4575
    %v4577 = vlaneseq
    %v4578 = vshrl.u32 %v4577, 7
    %v4579 = vsub.s32 0, %v4578
    %v4580 = vrot.slane %v4576, %v4579
    %4582 = vrot.lane.b32.xlu0 %v4574, 32
    %v4583 = vpop.permute.xlu0 %4582
    %v4588 = vunpack.c.l.b16 %v4570
    %v4589 = vunpack.c.l.b16 %v4571
    %v4590 = vunpack.c.l.b16 %v4572
    %v4591 = vunpack.c.l.b16 %v4573
    %v4592 = vpack.c.b16 %v4589, %v4588
    %v4593 = vpack.c.b16 %v4591, %v4590
    %v4597 = vsel %vm259, %v4583, 0
    %4599 = vmatprep.subr.bf16.mxu0 0
    %4600 = vmatpush1.bf16.msra.mxu0 %v4592
    %4601 = vmatprep.subr.bf16.mxu0 0
    %4602 = vmatpush1.bf16.msra.mxu0 %v4593
    %4603 = vmatprep.subr.bf16.mxu0 0
    %4604 = vmatpush1.bf16.msra.mxu0 0
    %4605 = vmatprep.subr.bf16.mxu0 0
    %4606 = vmatpush1.bf16.msra.mxu0 0
    %4607 = vmatprep.subr.bf16.mxu0 0
    %4608 = vmatpush1.bf16.msra.mxu0 0
    %4609 = vmatprep.subr.bf16.mxu0 0
    %4610 = vmatpush1.bf16.msra.mxu0 0
    %4611 = vmatprep.subr.bf16.mxu0 0
    %4612 = vmatpush1.bf16.msra.mxu0 0
    %4613 = vmatprep.subr.bf16.mxu0 0
    %4614 = vmatpush1.bf16.msra.mxu0 0
    %4615 = vmatprep.subr.bf16.mxu0 0
    %4616 = vmatpush1.bf16.msra.mxu0 0
    %4617 = vmatprep.subr.bf16.mxu0 0
    %4618 = vmatpush1.bf16.msra.mxu0 0
    %4619 = vmatprep.subr.bf16.mxu0 0
    %4620 = vmatpush1.bf16.msra.mxu0 0
    %4621 = vmatprep.subr.bf16.mxu0 0
    %4622 = vmatpush1.bf16.msra.mxu0 0
    %4623 = vmatprep.subr.bf16.mxu0 0
    %4624 = vmatpush1.bf16.msra.mxu0 0
    %4625 = vmatprep.subr.bf16.mxu0 0
    %4626 = vmatpush1.bf16.msra.mxu0 0
    %4627 = vmatprep.subr.bf16.mxu0 0
    %4628 = vmatpush1.bf16.msra.mxu0 0
    %4629 = vmatprep.subr.bf16.mxu0 0
    %4630 = vmatpush1.bf16.msra.mxu0 0
    %4631 = vmatprep.mubr.bf16.mxu0 0
    %4632 = vmatmul.mubr.bf16.gmra.mrb[0].mxu0 %v4597
    %v4633 = vpop.f32.mrb[0].mxu0
    %v4634 = vadd.f32 %v4580, %v4633
    %v4635 = vpop.f32.mrb[0].mxu0
    %v4636 = vpop.f32.mrb[0].mxu0
    %v4637 = vpop.f32.mrb[0].mxu0
    %4638 = vdwg.mxu0
    %v4639 = vmax.f32 %v4634, 0.0
    %v4640 = vld [vmem:[#allocation2 + $0x490] sm:$0xf]
    %v4641 = vld [vmem:[#allocation2 + $0x498] sm:$0xf]
    %v4642 = vld [vmem:[#allocation2 + $0x4a0] sm:$0xf]
    %v4643 = vld [vmem:[#allocation2 + $0x4a8] sm:$0xf]
    %v4644 = vpack.c.bf16 %v4639, %v4639
    %v4645 = vld [vmem:[#allocation2 + $0x4b0] sm:$0x1]
    %v4646 = vunpack.c.l.bf16 %v4645
    %v4647 = vlaneseq
    %v4648 = vshrl.u32 %v4647, 7
    %v4649 = vsub.s32 0, %v4648
    %v4650 = vrot.slane %v4646, %v4649
    %v4655 = vunpack.c.l.b16 %v4640
    %v4656 = vunpack.c.l.b16 %v4641
    %v4657 = vunpack.c.l.b16 %v4642
    %v4658 = vunpack.c.l.b16 %v4643
    %v4659 = vpack.c.b16 %v4656, %v4655
    %v4660 = vpack.c.b16 %v4658, %v4657
    %v4664 = vsel %vm259, %v4644, 0
    %4666 = vmatprep.subr.bf16.mxu0 0
    %4667 = vmatpush1.bf16.msra.mxu0 %v4659
    %4668 = vmatprep.subr.bf16.mxu0 0
    %4669 = vmatpush1.bf16.msra.mxu0 %v4660
    %4670 = vmatprep.subr.bf16.mxu0 0
    %4671 = vmatpush1.bf16.msra.mxu0 0
    %4672 = vmatprep.subr.bf16.mxu0 0
    %4673 = vmatpush1.bf16.msra.mxu0 0
    %4674 = vmatprep.subr.bf16.mxu0 0
    %4675 = vmatpush1.bf16.msra.mxu0 0
    %4676 = vmatprep.subr.bf16.mxu0 0
    %4677 = vmatpush1.bf16.msra.mxu0 0
    %4678 = vmatprep.subr.bf16.mxu0 0
    %4679 = vmatpush1.bf16.msra.mxu0 0
    %4680 = vmatprep.subr.bf16.mxu0 0
    %4681 = vmatpush1.bf16.msra.mxu0 0
    %4682 = vmatprep.subr.bf16.mxu0 0
    %4683 = vmatpush1.bf16.msra.mxu0 0
    %4684 = vmatprep.subr.bf16.mxu0 0
    %4685 = vmatpush1.bf16.msra.mxu0 0
    %4686 = vmatprep.subr.bf16.mxu0 0
    %4687 = vmatpush1.bf16.msra.mxu0 0
    %4688 = vmatprep.subr.bf16.mxu0 0
    %4689 = vmatpush1.bf16.msra.mxu0 0
    %4690 = vmatprep.subr.bf16.mxu0 0
    %4691 = vmatpush1.bf16.msra.mxu0 0
    %4692 = vmatprep.subr.bf16.mxu0 0
    %4693 = vmatpush1.bf16.msra.mxu0 0
    %4694 = vmatprep.subr.bf16.mxu0 0
    %4695 = vmatpush1.bf16.msra.mxu0 0
    %4696 = vmatprep.subr.bf16.mxu0 0
    %4697 = vmatpush1.bf16.msra.mxu0 0
    %4698 = vmatprep.mubr.bf16.mxu0 0
    %4699 = vmatmul.mubr.bf16.gmra.mrb[0].mxu0 %v4664
    %v4700 = vpop.f32.mrb[0].mxu0
    %v4701 = vadd.f32 %v4650, %v4700
    %v4702 = vpop.f32.mrb[0].mxu0
    %v4703 = vpop.f32.mrb[0].mxu0
    %v4704 = vpop.f32.mrb[0].mxu0
    %4705 = vdwg.mxu0
    %4707 = vrot.lane.b32.xlu0 %v4701, 84
    %v4708 = vpop.permute.xlu0 %4707
    %vm4710 = vcmask 818848
    %4711 = vst.msk [vmem:[%s2] sm:$0xff] %vm4710, %v4708
    %v4712 = vsel %vm3025, %v4701, -inf
    %4713 = vmax.xlane.f32.xlu0 %v4712
    %v4714 = vpop.xlane.xlu0 %4713
    %vm4715 = vcmp.eq.f32.partialorder %v4701, %v4714
    %v4716 = vld [vmem:[#allocation2 + $0x4c0] sm:$0xf]
    %v4717 = vld [vmem:[#allocation2 + $0x4c8] sm:$0xf]
    %v4718 = vsel %vm4715, 1, 0
    %v4719 = vcvt.s32.f32 %v4718
    %v4720 = vpack.c.bf16 %v4719, %v4719
    %v4723 = vunpack.c.l.b16 %v4716
    %v4724 = vunpack.c.l.b16 %v4717
    %v4725 = vpack.c.b16 %v4724, %v4723
    %v4728 = vsel %vm3025, %v4720, 0
    %4730 = vmatprep.subr.bf16.mxu0 0
    %4731 = vmatpush1.bf16.msra.mxu0 %v4725
    %4732 = vmatprep.subr.bf16.mxu0 0
    %4733 = vmatpush1.bf16.msra.mxu0 0
    %4734 = vmatprep.subr.bf16.mxu0 0
    %4735 = vmatpush1.bf16.msra.mxu0 0
    %4736 = vmatprep.subr.bf16.mxu0 0
    %4737 = vmatpush1.bf16.msra.mxu0 0
    %4738 = vmatprep.subr.bf16.mxu0 0
    %4739 = vmatpush1.bf16.msra.mxu0 0
    %4740 = vmatprep.subr.bf16.mxu0 0
    %4741 = vmatpush1.bf16.msra.mxu0 0
    %4742 = vmatprep.subr.bf16.mxu0 0
    %4743 = vmatpush1.bf16.msra.mxu0 0
    %4744 = vmatprep.subr.bf16.mxu0 0
    %4745 = vmatpush1.bf16.msra.mxu0 0
    %4746 = vmatprep.subr.bf16.mxu0 0
    %4747 = vmatpush1.bf16.msra.mxu0 0
    %4748 = vmatprep.subr.bf16.mxu0 0
    %4749 = vmatpush1.bf16.msra.mxu0 0
    %4750 = vmatprep.subr.bf16.mxu0 0
    %4751 = vmatpush1.bf16.msra.mxu0 0
    %4752 = vmatprep.subr.bf16.mxu0 0
    %4753 = vmatpush1.bf16.msra.mxu0 0
    %4754 = vmatprep.subr.bf16.mxu0 0
    %4755 = vmatpush1.bf16.msra.mxu0 0
    %4756 = vmatprep.subr.bf16.mxu0 0
    %4757 = vmatpush1.bf16.msra.mxu0 0
    %4758 = vmatprep.subr.bf16.mxu0 0
    %4759 = vmatpush1.bf16.msra.mxu0 0
    %4760 = vmatprep.subr.bf16.mxu0 0
    %4761 = vmatpush1.bf16.msra.mxu0 0
    %4762 = vmatprep.mubr.bf16.mxu0 0
    %4763 = vmatmul.mubr.bf16.gmra.mrb[0].mxu0 %v4728
    %v4764 = vpop.f32.mrb[0].mxu0
    %v4765 = vadd.f32 0.0, %v4764
    %v4766 = vpop.f32.mrb[0].mxu0
    %v4767 = vpop.f32.mrb[0].mxu0
    %v4768 = vpop.f32.mrb[0].mxu0
    %4769 = vdwg.mxu0
    %v4770 = vld [vmem:[#allocation2 + $0x4d0] sm:$0xf]
    %v4771 = vld [vmem:[#allocation2 + $0x4d8] sm:$0xf]
    %v4772 = vld [vmem:[#allocation2 + $0x4e0] sm:$0xf]
    %v4773 = vld [vmem:[#allocation2 + $0x4e8] sm:$0xf]
    %v4774 = vpack.c.bf16 %v4765, %v4765
    %v4779 = vunpack.c.l.b16 %v4770
    %v4780 = vunpack.c.l.b16 %v4771
    %v4781 = vunpack.c.l.b16 %v4772
    %v4782 = vunpack.c.l.b16 %v4773
    %v4783 = vpack.c.b16 %v4780, %v4779
    %v4784 = vpack.c.b16 %v4782, %v4781
    %v4788 = vsel %vm259, %v4774, 0
    %4790 = vmatprep.subr.bf16.mxu0 0
    %4791 = vmatpush1.bf16.msra.mxu0 %v4783
    %4792 = vmatprep.subr.bf16.mxu0 0
    %4793 = vmatpush1.bf16.msra.mxu0 %v4784
    %4794 = vmatprep.subr.bf16.mxu0 0
    %4795 = vmatpush1.bf16.msra.mxu0 0
    %4796 = vmatprep.subr.bf16.mxu0 0
    %4797 = vmatpush1.bf16.msra.mxu0 0
    %4798 = vmatprep.subr.bf16.mxu0 0
    %4799 = vmatpush1.bf16.msra.mxu0 0
    %4800 = vmatprep.subr.bf16.mxu0 0
    %4801 = vmatpush1.bf16.msra.mxu0 0
    %4802 = vmatprep.subr.bf16.mxu0 0
    %4803 = vmatpush1.bf16.msra.mxu0 0
    %4804 = vmatprep.subr.bf16.mxu0 0
    %4805 = vmatpush1.bf16.msra.mxu0 0
    %4806 = vmatprep.subr.bf16.mxu0 0
    %4807 = vmatpush1.bf16.msra.mxu0 0
    %4808 = vmatprep.subr.bf16.mxu0 0
    %4809 = vmatpush1.bf16.msra.mxu0 0
    %4810 = vmatprep.subr.bf16.mxu0 0
    %4811 = vmatpush1.bf16.msra.mxu0 0
    %4812 = vmatprep.subr.bf16.mxu0 0
    %4813 = vmatpush1.bf16.msra.mxu0 0
    %4814 = vmatprep.subr.bf16.mxu0 0
    %4815 = vmatpush1.bf16.msra.mxu0 0
    %4816 = vmatprep.subr.bf16.mxu0 0
    %4817 = vmatpush1.bf16.msra.mxu0 0
    %4818 = vmatprep.subr.bf16.mxu0 0
    %4819 = vmatpush1.bf16.msra.mxu0 0
    %4820 = vmatprep.subr.bf16.mxu0 0
    %4821 = vmatpush1.bf16.msra.mxu0 0
    %4822 = vmatprep.mubr.bf16.mxu0 0
    %4823 = vmatmul.mubr.bf16.gmra.mrb[0].mxu0 %v4788
    %v4824 = vpop.f32.mrb[0].mxu0
    %v4825 = vadd.f32 %v4011, %v4824
    %v4826 = vpop.f32.mrb[0].mxu0
    %v4827 = vpop.f32.mrb[0].mxu0
    %v4828 = vpop.f32.mrb[0].mxu0
    %4829 = vdwg.mxu0
    %v4830 = vld [vmem:[#allocation2 + $0x300] sm:$0xf]
    %v4831 = vld [vmem:[#allocation2 + $0x308] sm:$0xf]
    %v4832 = vld [vmem:[#allocation2 + $0x310] sm:$0xf]
    %v4833 = vld [vmem:[#allocation2 + $0x318] sm:$0xf]
    %v4834 = vld [vmem:[#allocation2 + $0x320] sm:$0xf]
    %v4835 = vld [vmem:[#allocation2 + $0x328] sm:$0xf]
    %v4836 = vld [vmem:[#allocation2 + $0x330] sm:$0xf]
    %v4837 = vld [vmem:[#allocation2 + $0x338] sm:$0xf]
    %v4842 = vunpack.c.l.b16 %v4834
    %v4843 = vunpack.c.l.b16 %v4835
    %v4844 = vunpack.c.l.b16 %v4836
    %v4845 = vunpack.c.l.b16 %v4837
    %v4846 = vpack.c.b16 %v4843, %v4842
    %v4847 = vpack.c.b16 %v4845, %v4844
    %4850 = vmatprep.subr.bf16.mxu0 0
    %4851 = vmatpush1.bf16.msra.mxu0 %v4846
    %4852 = vmatprep.subr.bf16.mxu0 0
    %4853 = vmatpush1.bf16.msra.mxu0 %v4847
    %4854 = vmatprep.subr.bf16.mxu0 0
    %4855 = vmatpush1.bf16.msra.mxu0 0
    %4856 = vmatprep.subr.bf16.mxu0 0
    %4857 = vmatpush1.bf16.msra.mxu0 0
    %4858 = vmatprep.subr.bf16.mxu0 0
    %4859 = vmatpush1.bf16.msra.mxu0 0
    %4860 = vmatprep.subr.bf16.mxu0 0
    %4861 = vmatpush1.bf16.msra.mxu0 0
    %4862 = vmatprep.subr.bf16.mxu0 0
    %4863 = vmatpush1.bf16.msra.mxu0 0
    %4864 = vmatprep.subr.bf16.mxu0 0
    %4865 = vmatpush1.bf16.msra.mxu0 0
    %4866 = vmatprep.subr.bf16.mxu0 0
    %4867 = vmatpush1.bf16.msra.mxu0 0
    %4868 = vmatprep.subr.bf16.mxu0 0
    %4869 = vmatpush1.bf16.msra.mxu0 0
    %4870 = vmatprep.subr.bf16.mxu0 0
    %4871 = vmatpush1.bf16.msra.mxu0 0
    %4872 = vmatprep.subr.bf16.mxu0 0
    %4873 = vmatpush1.bf16.msra.mxu0 0
    %4874 = vmatprep.subr.bf16.mxu0 0
    %4875 = vmatpush1.bf16.msra.mxu0 0
    %4876 = vmatprep.subr.bf16.mxu0 0
    %4877 = vmatpush1.bf16.msra.mxu0 0
    %4878 = vmatprep.subr.bf16.mxu0 0
    %4879 = vmatpush1.bf16.msra.mxu0 0
    %4880 = vmatprep.subr.bf16.mxu0 0
    %4881 = vmatpush1.bf16.msra.mxu0 0
    %4882 = vmatprep.mubr.bf16.mxu0 0
    %4883 = vmatmul.mubr.bf16.gmra.mrb[0].mxu0 %v3721
    %v4884 = vpop.f32.mrb[0].mxu0
    %v4885 = vadd.f32 0.0, %v4884
    %v4886 = vpop.f32.mrb[0].mxu0
    %v4887 = vpop.f32.mrb[0].mxu0
    %v4888 = vpop.f32.mrb[0].mxu0
    %4889 = vdwg.mxu0
    %v4894 = vunpack.c.l.b16 %v4830
    %v4895 = vunpack.c.l.b16 %v4831
    %v4896 = vunpack.c.l.b16 %v4832
    %v4897 = vunpack.c.l.b16 %v4833
    %v4898 = vpack.c.b16 %v4895, %v4894
    %v4899 = vpack.c.b16 %v4897, %v4896
    %4902 = vmatprep.subr.bf16.mxu0 0
    %4903 = vmatpush1.bf16.msra.mxu0 %v4898
    %4904 = vmatprep.subr.bf16.mxu0 0
    %4905 = vmatpush1.bf16.msra.mxu0 %v4899
    %4906 = vmatprep.subr.bf16.mxu0 0
    %4907 = vmatpush1.bf16.msra.mxu0 0
    %4908 = vmatprep.subr.bf16.mxu0 0
    %4909 = vmatpush1.bf16.msra.mxu0 0
    %4910 = vmatprep.subr.bf16.mxu0 0
    %4911 = vmatpush1.bf16.msra.mxu0 0
    %4912 = vmatprep.subr.bf16.mxu0 0
    %4913 = vmatpush1.bf16.msra.mxu0 0
    %4914 = vmatprep.subr.bf16.mxu0 0
    %4915 = vmatpush1.bf16.msra.mxu0 0
    %4916 = vmatprep.subr.bf16.mxu0 0
    %4917 = vmatpush1.bf16.msra.mxu0 0
    %4918 = vmatprep.subr.bf16.mxu0 0
    %4919 = vmatpush1.bf16.msra.mxu0 0
    %4920 = vmatprep.subr.bf16.mxu0 0
    %4921 = vmatpush1.bf16.msra.mxu0 0
    %4922 = vmatprep.subr.bf16.mxu0 0
    %4923 = vmatpush1.bf16.msra.mxu0 0
    %4924 = vmatprep.subr.bf16.mxu0 0
    %4925 = vmatpush1.bf16.msra.mxu0 0
    %4926 = vmatprep.subr.bf16.mxu0 0
    %4927 = vmatpush1.bf16.msra.mxu0 0
    %4928 = vmatprep.subr.bf16.mxu0 0
    %4929 = vmatpush1.bf16.msra.mxu0 0
    %4930 = vmatprep.subr.bf16.mxu0 0
    %4931 = vmatpush1.bf16.msra.mxu0 0
    %4932 = vmatprep.subr.bf16.mxu0 0
    %4933 = vmatpush1.bf16.msra.mxu0 0
    %4934 = vmatprep.mubr.bf16.mxu0 0
    %4935 = vmatmul.mubr.bf16.gmra.mrb[0].mxu0 %v3974
    %v4936 = vpop.f32.mrb[0].mxu0
    %v4937 = vadd.f32 %v4885, %v4936
    %v4938 = vpop.f32.mrb[0].mxu0
    %v4939 = vpop.f32.mrb[0].mxu0
    %v4940 = vpop.f32.mrb[0].mxu0
    %4941 = vdwg.mxu0
    %v4942 = vld [vmem:[#allocation2 + $0x340] sm:$0x1]
    %v4943 = vunpack.c.l.bf16 %v4942
    %v4944 = vlaneseq
    %v4945 = vshrl.u32 %v4944, 7
    %v4946 = vsub.s32 0, %v4945
    %v4947 = vrot.slane %v4943, %v4946
    %v4948 = vadd.f32 %v4937, %v4947
    %v4949 = vxor.u32 %v4948, 2147483648
    %v4950 = vmul.f32 %v4949, 1.442695
    %v4951 = vpow.pop %v4950
    %v4952 = vadd.f32 %v4951, 1.0
    %v4953 = vrcp.pop %v4952
    %v4954 = vmul.f32 1.0, %v4953
    %v4955 = vtanh.pop %v4948
    %v4956 = vmul.f32 %v4954, %v3687
    %4958 = vrot.lane.b32.xlu0 %v4955, 64
    %v4959 = vpop.permute.xlu0 %4958
    %v4961 = vmul.f32 %v4954, %v4959
    %4963 = vrot.lane.b32.xlu0 %v4961, 32
    %v4964 = vpop.permute.xlu0 %4963
    %v4966 = vadd.f32 %v4956, %v4964
    %v4967 = vtanh.pop %v4966
    %4969 = vrot.lane.b32.xlu0 %v4967, 64
    %v4970 = vpop.permute.xlu0 %4969
    %v4972 = vmul.f32 %v4954, %v4970
    %v4973 = vld [vmem:[#allocation2 + $0x350] sm:$0xf]
    %v4974 = vld [vmem:[#allocation2 + $0x358] sm:$0xf]
    %v4975 = vld [vmem:[#allocation2 + $0x360] sm:$0xf]
    %v4976 = vld [vmem:[#allocation2 + $0x368] sm:$0xf]
    %v4977 = vpack.c.bf16 %v4972, %v4972
    %v4978 = vld [vmem:[#allocation2 + $0x370] sm:$0x1]
    %v4979 = vunpack.c.l.bf16 %v4978
    %v4980 = vlaneseq
    %v4981 = vshrl.u32 %v4980, 7
    %v4982 = vsub.s32 0, %v4981
    %v4983 = vrot.slane %v4979, %v4982
    %4985 = vrot.lane.b32.xlu0 %v4977, 32
    %v4986 = vpop.permute.xlu0 %4985
    %v4991 = vunpack.c.l.b16 %v4973
    %v4992 = vunpack.c.l.b16 %v4974
    %v4993 = vunpack.c.l.b16 %v4975
    %v4994 = vunpack.c.l.b16 %v4976
    %v4995 = vpack.c.b16 %v4992, %v4991
    %v4996 = vpack.c.b16 %v4994, %v4993
    %v5000 = vsel %vm259, %v4986, 0
    %5002 = vmatprep.subr.bf16.mxu0 0
    %5003 = vmatpush1.bf16.msra.mxu0 %v4995
    %5004 = vmatprep.subr.bf16.mxu0 0
    %5005 = vmatpush1.bf16.msra.mxu0 %v4996
    %5006 = vmatprep.subr.bf16.mxu0 0
    %5007 = vmatpush1.bf16.msra.mxu0 0
    %5008 = vmatprep.subr.bf16.mxu0 0
    %5009 = vmatpush1.bf16.msra.mxu0 0
    %5010 = vmatprep.subr.bf16.mxu0 0
    %5011 = vmatpush1.bf16.msra.mxu0 0
    %5012 = vmatprep.subr.bf16.mxu0 0
    %5013 = vmatpush1.bf16.msra.mxu0 0
    %5014 = vmatprep.subr.bf16.mxu0 0
    %5015 = vmatpush1.bf16.msra.mxu0 0
    %5016 = vmatprep.subr.bf16.mxu0 0
    %5017 = vmatpush1.bf16.msra.mxu0 0
    %5018 = vmatprep.subr.bf16.mxu0 0
    %5019 = vmatpush1.bf16.msra.mxu0 0
    %5020 = vmatprep.subr.bf16.mxu0 0
    %5021 = vmatpush1.bf16.msra.mxu0 0
    %5022 = vmatprep.subr.bf16.mxu0 0
    %5023 = vmatpush1.bf16.msra.mxu0 0
    %5024 = vmatprep.subr.bf16.mxu0 0
    %5025 = vmatpush1.bf16.msra.mxu0 0
    %5026 = vmatprep.subr.bf16.mxu0 0
    %5027 = vmatpush1.bf16.msra.mxu0 0
    %5028 = vmatprep.subr.bf16.mxu0 0
    %5029 = vmatpush1.bf16.msra.mxu0 0
    %5030 = vmatprep.subr.bf16.mxu0 0
    %5031 = vmatpush1.bf16.msra.mxu0 0
    %5032 = vmatprep.subr.bf16.mxu0 0
    %5033 = vmatpush1.bf16.msra.mxu0 0
    %5034 = vmatprep.mubr.bf16.mxu0 0
    %5035 = vmatmul.mubr.bf16.gmra.mrb[0].mxu0 %v5000
    %v5036 = vpop.f32.mrb[0].mxu0
    %v5037 = vadd.f32 %v4983, %v5036
    %v5038 = vpop.f32.mrb[0].mxu0
    %v5039 = vpop.f32.mrb[0].mxu0
    %v5040 = vpop.f32.mrb[0].mxu0
    %5041 = vdwg.mxu0
    %v5042 = vmax.f32 %v5037, 0.0
    %v5043 = vld [vmem:[#allocation2 + $0x380] sm:$0xf]
    %v5044 = vld [vmem:[#allocation2 + $0x388] sm:$0xf]
    %v5045 = vld [vmem:[#allocation2 + $0x390] sm:$0xf]
    %v5046 = vld [vmem:[#allocation2 + $0x398] sm:$0xf]
    %v5047 = vpack.c.bf16 %v5042, %v5042
    %v5048 = vld [vmem:[#allocation2 + $0x3a0] sm:$0x1]
    %v5049 = vunpack.c.l.bf16 %v5048
    %v5050 = vlaneseq
    %v5051 = vshrl.u32 %v5050, 7
    %v5052 = vsub.s32 0, %v5051
    %v5053 = vrot.slane %v5049, %v5052
    %v5058 = vunpack.c.l.b16 %v5043
    %v5059 = vunpack.c.l.b16 %v5044
    %v5060 = vunpack.c.l.b16 %v5045
    %v5061 = vunpack.c.l.b16 %v5046
    %v5062 = vpack.c.b16 %v5059, %v5058
    %v5063 = vpack.c.b16 %v5061, %v5060
    %v5067 = vsel %vm259, %v5047, 0
    %5069 = vmatprep.subr.bf16.mxu0 0
    %5070 = vmatpush1.bf16.msra.mxu0 %v5062
    %5071 = vmatprep.subr.bf16.mxu0 0
    %5072 = vmatpush1.bf16.msra.mxu0 %v5063
    %5073 = vmatprep.subr.bf16.mxu0 0
    %5074 = vmatpush1.bf16.msra.mxu0 0
    %5075 = vmatprep.subr.bf16.mxu0 0
    %5076 = vmatpush1.bf16.msra.mxu0 0
    %5077 = vmatprep.subr.bf16.mxu0 0
    %5078 = vmatpush1.bf16.msra.mxu0 0
    %5079 = vmatprep.subr.bf16.mxu0 0
    %5080 = vmatpush1.bf16.msra.mxu0 0
    %5081 = vmatprep.subr.bf16.mxu0 0
    %5082 = vmatpush1.bf16.msra.mxu0 0
    %5083 = vmatprep.subr.bf16.mxu0 0
    %5084 = vmatpush1.bf16.msra.mxu0 0
    %5085 = vmatprep.subr.bf16.mxu0 0
    %5086 = vmatpush1.bf16.msra.mxu0 0
    %5087 = vmatprep.subr.bf16.mxu0 0
    %5088 = vmatpush1.bf16.msra.mxu0 0
    %5089 = vmatprep.subr.bf16.mxu0 0
    %5090 = vmatpush1.bf16.msra.mxu0 0
    %5091 = vmatprep.subr.bf16.mxu0 0
    %5092 = vmatpush1.bf16.msra.mxu0 0
    %5093 = vmatprep.subr.bf16.mxu0 0
    %5094 = vmatpush1.bf16.msra.mxu0 0
    %5095 = vmatprep.subr.bf16.mxu0 0
    %5096 = vmatpush1.bf16.msra.mxu0 0
    %5097 = vmatprep.subr.bf16.mxu0 0
    %5098 = vmatpush1.bf16.msra.mxu0 0
    %5099 = vmatprep.subr.bf16.mxu0 0
    %5100 = vmatpush1.bf16.msra.mxu0 0
    %5101 = vmatprep.mubr.bf16.mxu0 0
    %5102 = vmatmul.mubr.bf16.gmra.mrb[0].mxu0 %v5067
    %v5103 = vpop.f32.mrb[0].mxu0
    %v5104 = vadd.f32 %v5053, %v5103
    %v5105 = vpop.f32.mrb[0].mxu0
    %v5106 = vpop.f32.mrb[0].mxu0
    %v5107 = vpop.f32.mrb[0].mxu0
    %5108 = vdwg.mxu0
    %5110 = vrot.lane.b32.xlu0 %v5104, 18
    %v5111 = vpop.permute.xlu0 %5110
    %vm5113 = vcmask 220304
    %5114 = vst.msk [vmem:[%s2] sm:$0xff] %vm5113, %v5111
    %v5115 = vsel %vm2555, %v5104, -inf
    %5116 = vmax.xlane.f32.xlu0 %v5115
    %v5117 = vpop.xlane.xlu0 %5116
    %vm5118 = vcmp.eq.f32.partialorder %v5104, %v5117
    %v5119 = vld [vmem:[#allocation2 + $0x3b0] sm:$0xf]
    %v5120 = vld [vmem:[#allocation2 + $0x3b8] sm:$0x1]
    %v5121 = vsel %vm5118, 1, 0
    %v5122 = vcvt.s32.f32 %v5121
    %v5123 = vpack.c.bf16 %v5122, %v5122
    %v5126 = vunpack.c.l.b16 %v5119
    %v5127 = vunpack.c.l.b16 %v5120
    %v5128 = vpack.c.b16 %v5127, %v5126
    %v5130 = vsel %vm2555, %v5123, 0
    %v5133 = vand.u32 %v5128, %v2576
    %5135 = vmatprep.subr.bf16.mxu0 0
    %5136 = vmatpush1.bf16.msra.mxu0 %v5133
    %5137 = vmatprep.subr.bf16.mxu0 0
    %5138 = vmatpush1.bf16.msra.mxu0 0
    %5139 = vmatprep.subr.bf16.mxu0 0
    %5140 = vmatpush1.bf16.msra.mxu0 0
    %5141 = vmatprep.subr.bf16.mxu0 0
    %5142 = vmatpush1.bf16.msra.mxu0 0
    %5143 = vmatprep.subr.bf16.mxu0 0
    %5144 = vmatpush1.bf16.msra.mxu0 0
    %5145 = vmatprep.subr.bf16.mxu0 0
    %5146 = vmatpush1.bf16.msra.mxu0 0
    %5147 = vmatprep.subr.bf16.mxu0 0
    %5148 = vmatpush1.bf16.msra.mxu0 0
    %5149 = vmatprep.subr.bf16.mxu0 0
    %5150 = vmatpush1.bf16.msra.mxu0 0
    %5151 = vmatprep.subr.bf16.mxu0 0
    %5152 = vmatpush1.bf16.msra.mxu0 0
    %5153 = vmatprep.subr.bf16.mxu0 0
    %5154 = vmatpush1.bf16.msra.mxu0 0
    %5155 = vmatprep.subr.bf16.mxu0 0
    %5156 = vmatpush1.bf16.msra.mxu0 0
    %5157 = vmatprep.subr.bf16.mxu0 0
    %5158 = vmatpush1.bf16.msra.mxu0 0
    %5159 = vmatprep.subr.bf16.mxu0 0
    %5160 = vmatpush1.bf16.msra.mxu0 0
    %5161 = vmatprep.subr.bf16.mxu0 0
    %5162 = vmatpush1.bf16.msra.mxu0 0
    %5163 = vmatprep.subr.bf16.mxu0 0
    %5164 = vmatpush1.bf16.msra.mxu0 0
    %5165 = vmatprep.subr.bf16.mxu0 0
    %5166 = vmatpush1.bf16.msra.mxu0 0
    %5167 = vmatprep.mubr.bf16.mxu0 0
    %5168 = vmatmul.mubr.bf16.gmra.mrb[0].mxu0 %v5130
    %v5169 = vpop.f32.mrb[0].mxu0
    %v5170 = vadd.f32 0.0, %v5169
    %v5171 = vpop.f32.mrb[0].mxu0
    %v5172 = vpop.f32.mrb[0].mxu0
    %v5173 = vpop.f32.mrb[0].mxu0
    %5174 = vdwg.mxu0
    %v5175 = vld [vmem:[#allocation2 + $0x3c0] sm:$0xf]
    %v5176 = vld [vmem:[#allocation2 + $0x3c8] sm:$0xf]
    %v5177 = vld [vmem:[#allocation2 + $0x3d0] sm:$0xf]
    %v5178 = vld [vmem:[#allocation2 + $0x3d8] sm:$0xf]
    %v5179 = vpack.c.bf16 %v5170, %v5170
    %v5184 = vunpack.c.l.b16 %v5175
    %v5185 = vunpack.c.l.b16 %v5176
    %v5186 = vunpack.c.l.b16 %v5177
    %v5187 = vunpack.c.l.b16 %v5178
    %v5188 = vpack.c.b16 %v5185, %v5184
    %v5189 = vpack.c.b16 %v5187, %v5186
    %v5193 = vsel %vm259, %v5179, 0
    %5195 = vmatprep.subr.bf16.mxu0 0
    %5196 = vmatpush1.bf16.msra.mxu0 %v5188
    %5197 = vmatprep.subr.bf16.mxu0 0
    %5198 = vmatpush1.bf16.msra.mxu0 %v5189
    %5199 = vmatprep.subr.bf16.mxu0 0
    %5200 = vmatpush1.bf16.msra.mxu0 0
    %5201 = vmatprep.subr.bf16.mxu0 0
    %5202 = vmatpush1.bf16.msra.mxu0 0
    %5203 = vmatprep.subr.bf16.mxu0 0
    %5204 = vmatpush1.bf16.msra.mxu0 0
    %5205 = vmatprep.subr.bf16.mxu0 0
    %5206 = vmatpush1.bf16.msra.mxu0 0
    %5207 = vmatprep.subr.bf16.mxu0 0
    %5208 = vmatpush1.bf16.msra.mxu0 0
    %5209 = vmatprep.subr.bf16.mxu0 0
    %5210 = vmatpush1.bf16.msra.mxu0 0
    %5211 = vmatprep.subr.bf16.mxu0 0
    %5212 = vmatpush1.bf16.msra.mxu0 0
    %5213 = vmatprep.subr.bf16.mxu0 0
    %5214 = vmatpush1.bf16.msra.mxu0 0
    %5215 = vmatprep.subr.bf16.mxu0 0
    %5216 = vmatpush1.bf16.msra.mxu0 0
    %5217 = vmatprep.subr.bf16.mxu0 0
    %5218 = vmatpush1.bf16.msra.mxu0 0
    %5219 = vmatprep.subr.bf16.mxu0 0
    %5220 = vmatpush1.bf16.msra.mxu0 0
    %5221 = vmatprep.subr.bf16.mxu0 0
    %5222 = vmatpush1.bf16.msra.mxu0 0
    %5223 = vmatprep.subr.bf16.mxu0 0
    %5224 = vmatpush1.bf16.msra.mxu0 0
    %5225 = vmatprep.subr.bf16.mxu0 0
    %5226 = vmatpush1.bf16.msra.mxu0 0
    %5227 = vmatprep.mubr.bf16.mxu0 0
    %5228 = vmatmul.mubr.bf16.gmra.mrb[0].mxu0 %v5193
    %v5229 = vpop.f32.mrb[0].mxu0
    %v5230 = vadd.f32 %v2209, %v5229
    %v5231 = vpop.f32.mrb[0].mxu0
    %v5232 = vpop.f32.mrb[0].mxu0
    %v5233 = vpop.f32.mrb[0].mxu0
    %5234 = vdwg.mxu0
    %v5235 = vld [vmem:[#allocation2 + $0x4f0] sm:$0xf]
    %v5236 = vld [vmem:[#allocation2 + $0x4f8] sm:$0xf]
    %v5237 = vld [vmem:[#allocation2 + $0x500] sm:$0xf]
    %v5238 = vld [vmem:[#allocation2 + $0x508] sm:$0xf]
    %v5239 = vpack.c.bf16 %v5230, %v5230
    %v5244 = vunpack.c.l.b16 %v5235
    %v5245 = vunpack.c.l.b16 %v5236
    %v5246 = vunpack.c.l.b16 %v5237
    %v5247 = vunpack.c.l.b16 %v5238
    %v5248 = vpack.c.b16 %v5245, %v5244
    %v5249 = vpack.c.b16 %v5247, %v5246
    %v5253 = vsel %vm259, %v5239, 0
    %5255 = vmatprep.subr.bf16.mxu0 0
    %5256 = vmatpush1.bf16.msra.mxu0 %v5248
    %5257 = vmatprep.subr.bf16.mxu0 0
    %5258 = vmatpush1.bf16.msra.mxu0 %v5249
    %5259 = vmatprep.subr.bf16.mxu0 0
    %5260 = vmatpush1.bf16.msra.mxu0 0
    %5261 = vmatprep.subr.bf16.mxu0 0
    %5262 = vmatpush1.bf16.msra.mxu0 0
    %5263 = vmatprep.subr.bf16.mxu0 0
    %5264 = vmatpush1.bf16.msra.mxu0 0
    %5265 = vmatprep.subr.bf16.mxu0 0
    %5266 = vmatpush1.bf16.msra.mxu0 0
    %5267 = vmatprep.subr.bf16.mxu0 0
    %5268 = vmatpush1.bf16.msra.mxu0 0
    %5269 = vmatprep.subr.bf16.mxu0 0
    %5270 = vmatpush1.bf16.msra.mxu0 0
    %5271 = vmatprep.subr.bf16.mxu0 0
    %5272 = vmatpush1.bf16.msra.mxu0 0
    %5273 = vmatprep.subr.bf16.mxu0 0
    %5274 = vmatpush1.bf16.msra.mxu0 0
    %5275 = vmatprep.subr.bf16.mxu0 0
    %5276 = vmatpush1.bf16.msra.mxu0 0
    %5277 = vmatprep.subr.bf16.mxu0 0
    %5278 = vmatpush1.bf16.msra.mxu0 0
    %5279 = vmatprep.subr.bf16.mxu0 0
    %5280 = vmatpush1.bf16.msra.mxu0 0
    %5281 = vmatprep.subr.bf16.mxu0 0
    %5282 = vmatpush1.bf16.msra.mxu0 0
    %5283 = vmatprep.subr.bf16.mxu0 0
    %5284 = vmatpush1.bf16.msra.mxu0 0
    %5285 = vmatprep.subr.bf16.mxu0 0
    %5286 = vmatpush1.bf16.msra.mxu0 0
    %5287 = vmatprep.mubr.bf16.mxu0 0
    %5288 = vmatmul.mubr.bf16.gmra.mrb[0].mxu0 %v5253
    %v5289 = vpop.f32.mrb[0].mxu0
    %v5290 = vadd.f32 %v2271, %v5289
    %v5291 = vpop.f32.mrb[0].mxu0
    %v5292 = vpop.f32.mrb[0].mxu0
    %v5293 = vpop.f32.mrb[0].mxu0
    %5294 = vdwg.mxu0
    %v5295 = vld [vmem:[#allocation2 + $0x410] sm:$0xf]
    %v5296 = vld [vmem:[#allocation2 + $0x418] sm:$0xf]
    %v5297 = vld [vmem:[#allocation2 + $0x420] sm:$0xf]
    %v5298 = vld [vmem:[#allocation2 + $0x428] sm:$0xf]
    %v5299 = vpack.c.bf16 %v4825, %v4825
    %v5300 = vld [vmem:[#allocation2 + $0x430] sm:$0xf]
    %v5301 = vld [vmem:[#allocation2 + $0x438] sm:$0xf]
    %v5302 = vld [vmem:[#allocation2 + $0x440] sm:$0xf]
    %v5303 = vld [vmem:[#allocation2 + $0x448] sm:$0xf]
    %v5308 = vunpack.c.l.b16 %v5300
    %v5309 = vunpack.c.l.b16 %v5301
    %v5310 = vunpack.c.l.b16 %v5302
    %v5311 = vunpack.c.l.b16 %v5303
    %v5312 = vpack.c.b16 %v5309, %v5308
    %v5313 = vpack.c.b16 %v5311, %v5310
    %5316 = vmatprep.subr.bf16.mxu0 0
    %5317 = vmatpush1.bf16.msra.mxu0 %v5312
    %5318 = vmatprep.subr.bf16.mxu0 0
    %5319 = vmatpush1.bf16.msra.mxu0 %v5313
    %5320 = vmatprep.subr.bf16.mxu0 0
    %5321 = vmatpush1.bf16.msra.mxu0 0
    %5322 = vmatprep.subr.bf16.mxu0 0
    %5323 = vmatpush1.bf16.msra.mxu0 0
    %5324 = vmatprep.subr.bf16.mxu0 0
    %5325 = vmatpush1.bf16.msra.mxu0 0
    %5326 = vmatprep.subr.bf16.mxu0 0
    %5327 = vmatpush1.bf16.msra.mxu0 0
    %5328 = vmatprep.subr.bf16.mxu0 0
    %5329 = vmatpush1.bf16.msra.mxu0 0
    %5330 = vmatprep.subr.bf16.mxu0 0
    %5331 = vmatpush1.bf16.msra.mxu0 0
    %5332 = vmatprep.subr.bf16.mxu0 0
    %5333 = vmatpush1.bf16.msra.mxu0 0
    %5334 = vmatprep.subr.bf16.mxu0 0
    %5335 = vmatpush1.bf16.msra.mxu0 0
    %5336 = vmatprep.subr.bf16.mxu0 0
    %5337 = vmatpush1.bf16.msra.mxu0 0
    %5338 = vmatprep.subr.bf16.mxu0 0
    %5339 = vmatpush1.bf16.msra.mxu0 0
    %5340 = vmatprep.subr.bf16.mxu0 0
    %5341 = vmatpush1.bf16.msra.mxu0 0
    %5342 = vmatprep.subr.bf16.mxu0 0
    %5343 = vmatpush1.bf16.msra.mxu0 0
    %5344 = vmatprep.subr.bf16.mxu0 0
    %5345 = vmatpush1.bf16.msra.mxu0 0
    %5346 = vmatprep.subr.bf16.mxu0 0
    %5347 = vmatpush1.bf16.msra.mxu0 0
    %5348 = vmatprep.mubr.bf16.mxu0 0
    %5349 = vmatmul.mubr.bf16.gmra.mrb[0].mxu0 %v4597
    %v5350 = vpop.f32.mrb[0].mxu0
    %v5351 = vadd.f32 0.0, %v5350
    %v5352 = vpop.f32.mrb[0].mxu0
    %v5353 = vpop.f32.mrb[0].mxu0
    %v5354 = vpop.f32.mrb[0].mxu0
    %5355 = vdwg.mxu0
    %v5360 = vunpack.c.l.b16 %v5295
    %v5361 = vunpack.c.l.b16 %v5296
    %v5362 = vunpack.c.l.b16 %v5297
    %v5363 = vunpack.c.l.b16 %v5298
    %v5364 = vpack.c.b16 %v5361, %v5360
    %v5365 = vpack.c.b16 %v5363, %v5362
    %v5369 = vsel %vm259, %v5299, 0
    %5371 = vmatprep.subr.bf16.mxu0 0
    %5372 = vmatpush1.bf16.msra.mxu0 %v5364
    %5373 = vmatprep.subr.bf16.mxu0 0
    %5374 = vmatpush1.bf16.msra.mxu0 %v5365
    %5375 = vmatprep.subr.bf16.mxu0 0
    %5376 = vmatpush1.bf16.msra.mxu0 0
    %5377 = vmatprep.subr.bf16.mxu0 0
    %5378 = vmatpush1.bf16.msra.mxu0 0
    %5379 = vmatprep.subr.bf16.mxu0 0
    %5380 = vmatpush1.bf16.msra.mxu0 0
    %5381 = vmatprep.subr.bf16.mxu0 0
    %5382 = vmatpush1.bf16.msra.mxu0 0
    %5383 = vmatprep.subr.bf16.mxu0 0
    %5384 = vmatpush1.bf16.msra.mxu0 0
    %5385 = vmatprep.subr.bf16.mxu0 0
    %5386 = vmatpush1.bf16.msra.mxu0 0
    %5387 = vmatprep.subr.bf16.mxu0 0
    %5388 = vmatpush1.bf16.msra.mxu0 0
    %5389 = vmatprep.subr.bf16.mxu0 0
    %5390 = vmatpush1.bf16.msra.mxu0 0
    %5391 = vmatprep.subr.bf16.mxu0 0
    %5392 = vmatpush1.bf16.msra.mxu0 0
    %5393 = vmatprep.subr.bf16.mxu0 0
    %5394 = vmatpush1.bf16.msra.mxu0 0
    %5395 = vmatprep.subr.bf16.mxu0 0
    %5396 = vmatpush1.bf16.msra.mxu0 0
    %5397 = vmatprep.subr.bf16.mxu0 0
    %5398 = vmatpush1.bf16.msra.mxu0 0
    %5399 = vmatprep.subr.bf16.mxu0 0
    %5400 = vmatpush1.bf16.msra.mxu0 0
    %5401 = vmatprep.subr.bf16.mxu0 0
    %5402 = vmatpush1.bf16.msra.mxu0 0
    %5403 = vmatprep.mubr.bf16.mxu0 0
    %5404 = vmatmul.mubr.bf16.gmra.mrb[0].mxu0 %v5369
    %v5405 = vpop.f32.mrb[0].mxu0
    %v5406 = vadd.f32 %v5351, %v5405
    %v5407 = vpop.f32.mrb[0].mxu0
    %v5408 = vpop.f32.mrb[0].mxu0
    %v5409 = vpop.f32.mrb[0].mxu0
    %5410 = vdwg.mxu0
    %v5411 = vld [vmem:[#allocation2 + $0x450] sm:$0x1]
    %v5412 = vunpack.c.l.bf16 %v5411
    %v5413 = vlaneseq
    %v5414 = vshrl.u32 %v5413, 7
    %v5415 = vsub.s32 0, %v5414
    %v5416 = vrot.slane %v5412, %v5415
    %v5417 = vadd.f32 %v5406, %v5416
    %v5418 = vxor.u32 %v5417, 2147483648
    %v5419 = vmul.f32 %v5418, 1.442695
    %v5420 = vpow.pop %v5419
    %v5421 = vadd.f32 %v5420, 1.0
    %v5422 = vrcp.pop %v5421
    %v5423 = vmul.f32 1.0, %v5422
    %v5424 = vtanh.pop %v5417
    %v5425 = vmul.f32 %v5423, %v4563
    %5427 = vrot.lane.b32.xlu0 %v5424, 64
    %v5428 = vpop.permute.xlu0 %5427
    %v5430 = vmul.f32 %v5423, %v5428
    %5432 = vrot.lane.b32.xlu0 %v5430, 32
    %v5433 = vpop.permute.xlu0 %5432
    %v5435 = vadd.f32 %v5425, %v5433
    %v5436 = vtanh.pop %v5435
    %5438 = vrot.lane.b32.xlu0 %v5436, 64
    %v5439 = vpop.permute.xlu0 %5438
    %v5441 = vmul.f32 %v5423, %v5439
    %v5442 = vld [vmem:[#allocation2 + $0x460] sm:$0xf]
    %v5443 = vld [vmem:[#allocation2 + $0x468] sm:$0xf]
    %v5444 = vld [vmem:[#allocation2 + $0x470] sm:$0xf]
    %v5445 = vld [vmem:[#allocation2 + $0x478] sm:$0xf]
    %v5446 = vpack.c.bf16 %v5441, %v5441
    %v5447 = vld [vmem:[#allocation2 + $0x480] sm:$0x1]
    %v5448 = vunpack.c.l.bf16 %v5447
    %v5449 = vlaneseq
    %v5450 = vshrl.u32 %v5449, 7
    %v5451 = vsub.s32 0, %v5450
    %v5452 = vrot.slane %v5448, %v5451
    %5454 = vrot.lane.b32.xlu0 %v5446, 32
    %v5455 = vpop.permute.xlu0 %5454
    %v5460 = vunpack.c.l.b16 %v5442
    %v5461 = vunpack.c.l.b16 %v5443
    %v5462 = vunpack.c.l.b16 %v5444
    %v5463 = vunpack.c.l.b16 %v5445
    %v5464 = vpack.c.b16 %v5461, %v5460
    %v5465 = vpack.c.b16 %v5463, %v5462
    %v5469 = vsel %vm259, %v5455, 0
    %5471 = vmatprep.subr.bf16.mxu0 0
    %5472 = vmatpush1.bf16.msra.mxu0 %v5464
    %5473 = vmatprep.subr.bf16.mxu0 0
    %5474 = vmatpush1.bf16.msra.mxu0 %v5465
    %5475 = vmatprep.subr.bf16.mxu0 0
    %5476 = vmatpush1.bf16.msra.mxu0 0
    %5477 = vmatprep.subr.bf16.mxu0 0
    %5478 = vmatpush1.bf16.msra.mxu0 0
    %5479 = vmatprep.subr.bf16.mxu0 0
    %5480 = vmatpush1.bf16.msra.mxu0 0
    %5481 = vmatprep.subr.bf16.mxu0 0
    %5482 = vmatpush1.bf16.msra.mxu0 0
    %5483 = vmatprep.subr.bf16.mxu0 0
    %5484 = vmatpush1.bf16.msra.mxu0 0
    %5485 = vmatprep.subr.bf16.mxu0 0
    %5486 = vmatpush1.bf16.msra.mxu0 0
    %5487 = vmatprep.subr.bf16.mxu0 0
    %5488 = vmatpush1.bf16.msra.mxu0 0
    %5489 = vmatprep.subr.bf16.mxu0 0
    %5490 = vmatpush1.bf16.msra.mxu0 0
    %5491 = vmatprep.subr.bf16.mxu0 0
    %5492 = vmatpush1.bf16.msra.mxu0 0
    %5493 = vmatprep.subr.bf16.mxu0 0
    %5494 = vmatpush1.bf16.msra.mxu0 0
    %5495 = vmatprep.subr.bf16.mxu0 0
    %5496 = vmatpush1.bf16.msra.mxu0 0
    %5497 = vmatprep.subr.bf16.mxu0 0
    %5498 = vmatpush1.bf16.msra.mxu0 0
    %5499 = vmatprep.subr.bf16.mxu0 0
    %5500 = vmatpush1.bf16.msra.mxu0 0
    %5501 = vmatprep.subr.bf16.mxu0 0
    %5502 = vmatpush1.bf16.msra.mxu0 0
    %5503 = vmatprep.mubr.bf16.mxu0 0
    %5504 = vmatmul.mubr.bf16.gmra.mrb[0].mxu0 %v5469
    %v5505 = vpop.f32.mrb[0].mxu0
    %v5506 = vadd.f32 %v5452, %v5505
    %v5507 = vpop.f32.mrb[0].mxu0
    %v5508 = vpop.f32.mrb[0].mxu0
    %v5509 = vpop.f32.mrb[0].mxu0
    %5510 = vdwg.mxu0
    %v5511 = vmax.f32 %v5506, 0.0
    %v5512 = vld [vmem:[#allocation2 + $0x490] sm:$0xf]
    %v5513 = vld [vmem:[#allocation2 + $0x498] sm:$0xf]
    %v5514 = vld [vmem:[#allocation2 + $0x4a0] sm:$0xf]
    %v5515 = vld [vmem:[#allocation2 + $0x4a8] sm:$0xf]
    %v5516 = vpack.c.bf16 %v5511, %v5511
    %v5517 = vld [vmem:[#allocation2 + $0x4b0] sm:$0x1]
    %v5518 = vunpack.c.l.bf16 %v5517
    %v5519 = vlaneseq
    %v5520 = vshrl.u32 %v5519, 7
    %v5521 = vsub.s32 0, %v5520
    %v5522 = vrot.slane %v5518, %v5521
    %v5527 = vunpack.c.l.b16 %v5512
    %v5528 = vunpack.c.l.b16 %v5513
    %v5529 = vunpack.c.l.b16 %v5514
    %v5530 = vunpack.c.l.b16 %v5515
    %v5531 = vpack.c.b16 %v5528, %v5527
    %v5532 = vpack.c.b16 %v5530, %v5529
    %v5536 = vsel %vm259, %v5516, 0
    %5538 = vmatprep.subr.bf16.mxu0 0
    %5539 = vmatpush1.bf16.msra.mxu0 %v5531
    %5540 = vmatprep.subr.bf16.mxu0 0
    %5541 = vmatpush1.bf16.msra.mxu0 %v5532
    %5542 = vmatprep.subr.bf16.mxu0 0
    %5543 = vmatpush1.bf16.msra.mxu0 0
    %5544 = vmatprep.subr.bf16.mxu0 0
    %5545 = vmatpush1.bf16.msra.mxu0 0
    %5546 = vmatprep.subr.bf16.mxu0 0
    %5547 = vmatpush1.bf16.msra.mxu0 0
    %5548 = vmatprep.subr.bf16.mxu0 0
    %5549 = vmatpush1.bf16.msra.mxu0 0
    %5550 = vmatprep.subr.bf16.mxu0 0
    %5551 = vmatpush1.bf16.msra.mxu0 0
    %5552 = vmatprep.subr.bf16.mxu0 0
    %5553 = vmatpush1.bf16.msra.mxu0 0
    %5554 = vmatprep.subr.bf16.mxu0 0
    %5555 = vmatpush1.bf16.msra.mxu0 0
    %5556 = vmatprep.subr.bf16.mxu0 0
    %5557 = vmatpush1.bf16.msra.mxu0 0
    %5558 = vmatprep.subr.bf16.mxu0 0
    %5559 = vmatpush1.bf16.msra.mxu0 0
    %5560 = vmatprep.subr.bf16.mxu0 0
    %5561 = vmatpush1.bf16.msra.mxu0 0
    %5562 = vmatprep.subr.bf16.mxu0 0
    %5563 = vmatpush1.bf16.msra.mxu0 0
    %5564 = vmatprep.subr.bf16.mxu0 0
    %5565 = vmatpush1.bf16.msra.mxu0 0
    %5566 = vmatprep.subr.bf16.mxu0 0
    %5567 = vmatpush1.bf16.msra.mxu0 0
    %5568 = vmatprep.subr.bf16.mxu0 0
    %5569 = vmatpush1.bf16.msra.mxu0 0
    %5570 = vmatprep.mubr.bf16.mxu0 0
    %5571 = vmatmul.mubr.bf16.gmra.mrb[0].mxu0 %v5536
    %v5572 = vpop.f32.mrb[0].mxu0
    %v5573 = vadd.f32 %v5522, %v5572
    %v5574 = vpop.f32.mrb[0].mxu0
    %v5575 = vpop.f32.mrb[0].mxu0
    %v5576 = vpop.f32.mrb[0].mxu0
    %5577 = vdwg.mxu0
    %5579 = vrot.lane.b32.xlu0 %v5573, 100
    %v5580 = vpop.permute.xlu0 %5579
    %vm5582 = vcmask 950048
    %5583 = vst.msk [vmem:[%s2] sm:$0xff] %vm5582, %v5580
    %v5584 = vsel %vm3025, %v5573, -inf
    %5585 = vmax.xlane.f32.xlu0 %v5584
    %v5586 = vpop.xlane.xlu0 %5585
    %vm5587 = vcmp.eq.f32.partialorder %v5573, %v5586
    %v5588 = vld [vmem:[#allocation2 + $0x4c0] sm:$0xf]
    %v5589 = vld [vmem:[#allocation2 + $0x4c8] sm:$0xf]
    %v5590 = vsel %vm5587, 1, 0
    %v5591 = vcvt.s32.f32 %v5590
    %v5592 = vpack.c.bf16 %v5591, %v5591
    %v5595 = vunpack.c.l.b16 %v5588
    %v5596 = vunpack.c.l.b16 %v5589
    %v5597 = vpack.c.b16 %v5596, %v5595
    %v5600 = vsel %vm3025, %v5592, 0
    %5602 = vmatprep.subr.bf16.mxu0 0
    %5603 = vmatpush1.bf16.msra.mxu0 %v5597
    %5604 = vmatprep.subr.bf16.mxu0 0
    %5605 = vmatpush1.bf16.msra.mxu0 0
    %5606 = vmatprep.subr.bf16.mxu0 0
    %5607 = vmatpush1.bf16.msra.mxu0 0
    %5608 = vmatprep.subr.bf16.mxu0 0
    %5609 = vmatpush1.bf16.msra.mxu0 0
    %5610 = vmatprep.subr.bf16.mxu0 0
    %5611 = vmatpush1.bf16.msra.mxu0 0
    %5612 = vmatprep.subr.bf16.mxu0 0
    %5613 = vmatpush1.bf16.msra.mxu0 0
    %5614 = vmatprep.subr.bf16.mxu0 0
    %5615 = vmatpush1.bf16.msra.mxu0 0
    %5616 = vmatprep.subr.bf16.mxu0 0
    %5617 = vmatpush1.bf16.msra.mxu0 0
    %5618 = vmatprep.subr.bf16.mxu0 0
    %5619 = vmatpush1.bf16.msra.mxu0 0
    %5620 = vmatprep.subr.bf16.mxu0 0
    %5621 = vmatpush1.bf16.msra.mxu0 0
    %5622 = vmatprep.subr.bf16.mxu0 0
    %5623 = vmatpush1.bf16.msra.mxu0 0
    %5624 = vmatprep.subr.bf16.mxu0 0
    %5625 = vmatpush1.bf16.msra.mxu0 0
    %5626 = vmatprep.subr.bf16.mxu0 0
    %5627 = vmatpush1.bf16.msra.mxu0 0
    %5628 = vmatprep.subr.bf16.mxu0 0
    %5629 = vmatpush1.bf16.msra.mxu0 0
    %5630 = vmatprep.subr.bf16.mxu0 0
    %5631 = vmatpush1.bf16.msra.mxu0 0
    %5632 = vmatprep.subr.bf16.mxu0 0
    %5633 = vmatpush1.bf16.msra.mxu0 0
    %5634 = vmatprep.mubr.bf16.mxu0 0
    %5635 = vmatmul.mubr.bf16.gmra.mrb[0].mxu0 %v5600
    %v5636 = vpop.f32.mrb[0].mxu0
    %v5637 = vadd.f32 0.0, %v5636
    %v5638 = vpop.f32.mrb[0].mxu0
    %v5639 = vpop.f32.mrb[0].mxu0
    %v5640 = vpop.f32.mrb[0].mxu0
    %5641 = vdwg.mxu0
    %v5642 = vld [vmem:[#allocation2 + $0x4d0] sm:$0xf]
    %v5643 = vld [vmem:[#allocation2 + $0x4d8] sm:$0xf]
    %v5644 = vld [vmem:[#allocation2 + $0x4e0] sm:$0xf]
    %v5645 = vld [vmem:[#allocation2 + $0x4e8] sm:$0xf]
    %v5646 = vpack.c.bf16 %v5637, %v5637
    %v5651 = vunpack.c.l.b16 %v5642
    %v5652 = vunpack.c.l.b16 %v5643
    %v5653 = vunpack.c.l.b16 %v5644
    %v5654 = vunpack.c.l.b16 %v5645
    %v5655 = vpack.c.b16 %v5652, %v5651
    %v5656 = vpack.c.b16 %v5654, %v5653
    %v5660 = vsel %vm259, %v5646, 0
    %5662 = vmatprep.subr.bf16.mxu0 0
    %5663 = vmatpush1.bf16.msra.mxu0 %v5655
    %5664 = vmatprep.subr.bf16.mxu0 0
    %5665 = vmatpush1.bf16.msra.mxu0 %v5656
    %5666 = vmatprep.subr.bf16.mxu0 0
    %5667 = vmatpush1.bf16.msra.mxu0 0
    %5668 = vmatprep.subr.bf16.mxu0 0
    %5669 = vmatpush1.bf16.msra.mxu0 0
    %5670 = vmatprep.subr.bf16.mxu0 0
    %5671 = vmatpush1.bf16.msra.mxu0 0
    %5672 = vmatprep.subr.bf16.mxu0 0
    %5673 = vmatpush1.bf16.msra.mxu0 0
    %5674 = vmatprep.subr.bf16.mxu0 0
    %5675 = vmatpush1.bf16.msra.mxu0 0
    %5676 = vmatprep.subr.bf16.mxu0 0
    %5677 = vmatpush1.bf16.msra.mxu0 0
    %5678 = vmatprep.subr.bf16.mxu0 0
    %5679 = vmatpush1.bf16.msra.mxu0 0
    %5680 = vmatprep.subr.bf16.mxu0 0
    %5681 = vmatpush1.bf16.msra.mxu0 0
    %5682 = vmatprep.subr.bf16.mxu0 0
    %5683 = vmatpush1.bf16.msra.mxu0 0
    %5684 = vmatprep.subr.bf16.mxu0 0
    %5685 = vmatpush1.bf16.msra.mxu0 0
    %5686 = vmatprep.subr.bf16.mxu0 0
    %5687 = vmatpush1.bf16.msra.mxu0 0
    %5688 = vmatprep.subr.bf16.mxu0 0
    %5689 = vmatpush1.bf16.msra.mxu0 0
    %5690 = vmatprep.subr.bf16.mxu0 0
    %5691 = vmatpush1.bf16.msra.mxu0 0
    %5692 = vmatprep.subr.bf16.mxu0 0
    %5693 = vmatpush1.bf16.msra.mxu0 0
    %5694 = vmatprep.mubr.bf16.mxu0 0
    %5695 = vmatmul.mubr.bf16.gmra.mrb[0].mxu0 %v5660
    %v5696 = vpop.f32.mrb[0].mxu0
    %v5697 = vadd.f32 %v5290, %v5696
    %v5698 = vpop.f32.mrb[0].mxu0
    %v5699 = vpop.f32.mrb[0].mxu0
    %v5700 = vpop.f32.mrb[0].mxu0
    %5701 = vdwg.mxu0
    %v5702 = vld [vmem:[#allocation2 + $0x410] sm:$0xf]
    %v5703 = vld [vmem:[#allocation2 + $0x418] sm:$0xf]
    %v5704 = vld [vmem:[#allocation2 + $0x420] sm:$0xf]
    %v5705 = vld [vmem:[#allocation2 + $0x428] sm:$0xf]
    %v5706 = vpack.c.bf16 %v5697, %v5697
    %v5707 = vld [vmem:[#allocation2 + $0x430] sm:$0xf]
    %v5708 = vld [vmem:[#allocation2 + $0x438] sm:$0xf]
    %v5709 = vld [vmem:[#allocation2 + $0x440] sm:$0xf]
    %v5710 = vld [vmem:[#allocation2 + $0x448] sm:$0xf]
    %v5715 = vunpack.c.l.b16 %v5707
    %v5716 = vunpack.c.l.b16 %v5708
    %v5717 = vunpack.c.l.b16 %v5709
    %v5718 = vunpack.c.l.b16 %v5710
    %v5719 = vpack.c.b16 %v5716, %v5715
    %v5720 = vpack.c.b16 %v5718, %v5717
    %5723 = vmatprep.subr.bf16.mxu0 0
    %5724 = vmatpush1.bf16.msra.mxu0 %v5719
    %5725 = vmatprep.subr.bf16.mxu0 0
    %5726 = vmatpush1.bf16.msra.mxu0 %v5720
    %5727 = vmatprep.subr.bf16.mxu0 0
    %5728 = vmatpush1.bf16.msra.mxu0 0
    %5729 = vmatprep.subr.bf16.mxu0 0
    %5730 = vmatpush1.bf16.msra.mxu0 0
    %5731 = vmatprep.subr.bf16.mxu0 0
    %5732 = vmatpush1.bf16.msra.mxu0 0
    %5733 = vmatprep.subr.bf16.mxu0 0
    %5734 = vmatpush1.bf16.msra.mxu0 0
    %5735 = vmatprep.subr.bf16.mxu0 0
    %5736 = vmatpush1.bf16.msra.mxu0 0
    %5737 = vmatprep.subr.bf16.mxu0 0
    %5738 = vmatpush1.bf16.msra.mxu0 0
    %5739 = vmatprep.subr.bf16.mxu0 0
    %5740 = vmatpush1.bf16.msra.mxu0 0
    %5741 = vmatprep.subr.bf16.mxu0 0
    %5742 = vmatpush1.bf16.msra.mxu0 0
    %5743 = vmatprep.subr.bf16.mxu0 0
    %5744 = vmatpush1.bf16.msra.mxu0 0
    %5745 = vmatprep.subr.bf16.mxu0 0
    %5746 = vmatpush1.bf16.msra.mxu0 0
    %5747 = vmatprep.subr.bf16.mxu0 0
    %5748 = vmatpush1.bf16.msra.mxu0 0
    %5749 = vmatprep.subr.bf16.mxu0 0
    %5750 = vmatpush1.bf16.msra.mxu0 0
    %5751 = vmatprep.subr.bf16.mxu0 0
    %5752 = vmatpush1.bf16.msra.mxu0 0
    %5753 = vmatprep.subr.bf16.mxu0 0
    %5754 = vmatpush1.bf16.msra.mxu0 0
    %5755 = vmatprep.mubr.bf16.mxu0 0
    %5756 = vmatmul.mubr.bf16.gmra.mrb[0].mxu0 %v5469
    %v5757 = vpop.f32.mrb[0].mxu0
    %v5758 = vadd.f32 0.0, %v5757
    %v5759 = vpop.f32.mrb[0].mxu0
    %v5760 = vpop.f32.mrb[0].mxu0
    %v5761 = vpop.f32.mrb[0].mxu0
    %5762 = vdwg.mxu0
    %v5767 = vunpack.c.l.b16 %v5702
    %v5768 = vunpack.c.l.b16 %v5703
    %v5769 = vunpack.c.l.b16 %v5704
    %v5770 = vunpack.c.l.b16 %v5705
    %v5771 = vpack.c.b16 %v5768, %v5767
    %v5772 = vpack.c.b16 %v5770, %v5769
    %v5776 = vsel %vm259, %v5706, 0
    %5778 = vmatprep.subr.bf16.mxu0 0
    %5779 = vmatpush1.bf16.msra.mxu0 %v5771
    %5780 = vmatprep.subr.bf16.mxu0 0
    %5781 = vmatpush1.bf16.msra.mxu0 %v5772
    %5782 = vmatprep.subr.bf16.mxu0 0
    %5783 = vmatpush1.bf16.msra.mxu0 0
    %5784 = vmatprep.subr.bf16.mxu0 0
    %5785 = vmatpush1.bf16.msra.mxu0 0
    %5786 = vmatprep.subr.bf16.mxu0 0
    %5787 = vmatpush1.bf16.msra.mxu0 0
    %5788 = vmatprep.subr.bf16.mxu0 0
    %5789 = vmatpush1.bf16.msra.mxu0 0
    %5790 = vmatprep.subr.bf16.mxu0 0
    %5791 = vmatpush1.bf16.msra.mxu0 0
    %5792 = vmatprep.subr.bf16.mxu0 0
    %5793 = vmatpush1.bf16.msra.mxu0 0
    %5794 = vmatprep.subr.bf16.mxu0 0
    %5795 = vmatpush1.bf16.msra.mxu0 0
    %5796 = vmatprep.subr.bf16.mxu0 0
    %5797 = vmatpush1.bf16.msra.mxu0 0
    %5798 = vmatprep.subr.bf16.mxu0 0
    %5799 = vmatpush1.bf16.msra.mxu0 0
    %5800 = vmatprep.subr.bf16.mxu0 0
    %5801 = vmatpush1.bf16.msra.mxu0 0
    %5802 = vmatprep.subr.bf16.mxu0 0
    %5803 = vmatpush1.bf16.msra.mxu0 0
    %5804 = vmatprep.subr.bf16.mxu0 0
    %5805 = vmatpush1.bf16.msra.mxu0 0
    %5806 = vmatprep.subr.bf16.mxu0 0
    %5807 = vmatpush1.bf16.msra.mxu0 0
    %5808 = vmatprep.subr.bf16.mxu0 0
    %5809 = vmatpush1.bf16.msra.mxu0 0
    %5810 = vmatprep.mubr.bf16.mxu0 0
    %5811 = vmatmul.mubr.bf16.gmra.mrb[0].mxu0 %v5776
    %v5812 = vpop.f32.mrb[0].mxu0
    %v5813 = vadd.f32 %v5758, %v5812
    %v5814 = vpop.f32.mrb[0].mxu0
    %v5815 = vpop.f32.mrb[0].mxu0
    %v5816 = vpop.f32.mrb[0].mxu0
    %5817 = vdwg.mxu0
    %v5818 = vld [vmem:[#allocation2 + $0x450] sm:$0x1]
    %v5819 = vunpack.c.l.bf16 %v5818
    %v5820 = vlaneseq
    %v5821 = vshrl.u32 %v5820, 7
    %v5822 = vsub.s32 0, %v5821
    %v5823 = vrot.slane %v5819, %v5822
    %v5824 = vadd.f32 %v5813, %v5823
    %v5825 = vxor.u32 %v5824, 2147483648
    %v5826 = vmul.f32 %v5825, 1.442695
    %v5827 = vpow.pop %v5826
    %v5828 = vadd.f32 %v5827, 1.0
    %v5829 = vrcp.pop %v5828
    %v5830 = vmul.f32 1.0, %v5829
    %v5831 = vtanh.pop %v5824
    %v5832 = vmul.f32 %v5830, %v5435
    %5834 = vrot.lane.b32.xlu0 %v5831, 64
    %v5835 = vpop.permute.xlu0 %5834
    %v5837 = vmul.f32 %v5830, %v5835
    %5839 = vrot.lane.b32.xlu0 %v5837, 32
    %v5840 = vpop.permute.xlu0 %5839
    %v5842 = vadd.f32 %v5832, %v5840
    %v5843 = vtanh.pop %v5842
    %5845 = vrot.lane.b32.xlu0 %v5843, 64
    %v5846 = vpop.permute.xlu0 %5845
    %v5848 = vmul.f32 %v5830, %v5846
    %v5849 = vld [vmem:[#allocation2 + $0x460] sm:$0xf]
    %v5850 = vld [vmem:[#allocation2 + $0x468] sm:$0xf]
    %v5851 = vld [vmem:[#allocation2 + $0x470] sm:$0xf]
    %v5852 = vld [vmem:[#allocation2 + $0x478] sm:$0xf]
    %v5853 = vpack.c.bf16 %v5848, %v5848
    %v5854 = vld [vmem:[#allocation2 + $0x480] sm:$0x1]
    %v5855 = vunpack.c.l.bf16 %v5854
    %v5856 = vlaneseq
    %v5857 = vshrl.u32 %v5856, 7
    %v5858 = vsub.s32 0, %v5857
    %v5859 = vrot.slane %v5855, %v5858
    %5861 = vrot.lane.b32.xlu0 %v5853, 32
    %v5862 = vpop.permute.xlu0 %5861
    %v5867 = vunpack.c.l.b16 %v5849
    %v5868 = vunpack.c.l.b16 %v5850
    %v5869 = vunpack.c.l.b16 %v5851
    %v5870 = vunpack.c.l.b16 %v5852
    %v5871 = vpack.c.b16 %v5868, %v5867
    %v5872 = vpack.c.b16 %v5870, %v5869
    %v5876 = vsel %vm259, %v5862, 0
    %5878 = vmatprep.subr.bf16.mxu0 0
    %5879 = vmatpush1.bf16.msra.mxu0 %v5871
    %5880 = vmatprep.subr.bf16.mxu0 0
    %5881 = vmatpush1.bf16.msra.mxu0 %v5872
    %5882 = vmatprep.subr.bf16.mxu0 0
    %5883 = vmatpush1.bf16.msra.mxu0 0
    %5884 = vmatprep.subr.bf16.mxu0 0
    %5885 = vmatpush1.bf16.msra.mxu0 0
    %5886 = vmatprep.subr.bf16.mxu0 0
    %5887 = vmatpush1.bf16.msra.mxu0 0
    %5888 = vmatprep.subr.bf16.mxu0 0
    %5889 = vmatpush1.bf16.msra.mxu0 0
    %5890 = vmatprep.subr.bf16.mxu0 0
    %5891 = vmatpush1.bf16.msra.mxu0 0
    %5892 = vmatprep.subr.bf16.mxu0 0
    %5893 = vmatpush1.bf16.msra.mxu0 0
    %5894 = vmatprep.subr.bf16.mxu0 0
    %5895 = vmatpush1.bf16.msra.mxu0 0
    %5896 = vmatprep.subr.bf16.mxu0 0
    %5897 = vmatpush1.bf16.msra.mxu0 0
    %5898 = vmatprep.subr.bf16.mxu0 0
    %5899 = vmatpush1.bf16.msra.mxu0 0
    %5900 = vmatprep.subr.bf16.mxu0 0
    %5901 = vmatpush1.bf16.msra.mxu0 0
    %5902 = vmatprep.subr.bf16.mxu0 0
    %5903 = vmatpush1.bf16.msra.mxu0 0
    %5904 = vmatprep.subr.bf16.mxu0 0
    %5905 = vmatpush1.bf16.msra.mxu0 0
    %5906 = vmatprep.subr.bf16.mxu0 0
    %5907 = vmatpush1.bf16.msra.mxu0 0
    %5908 = vmatprep.subr.bf16.mxu0 0
    %5909 = vmatpush1.bf16.msra.mxu0 0
    %5910 = vmatprep.mubr.bf16.mxu0 0
    %5911 = vmatmul.mubr.bf16.gmra.mrb[0].mxu0 %v5876
    %v5912 = vpop.f32.mrb[0].mxu0
    %v5913 = vadd.f32 %v5859, %v5912
    %v5914 = vpop.f32.mrb[0].mxu0
    %v5915 = vpop.f32.mrb[0].mxu0
    %v5916 = vpop.f32.mrb[0].mxu0
    %5917 = vdwg.mxu0
    %v5918 = vmax.f32 %v5913, 0.0
    %v5919 = vld [vmem:[#allocation2 + $0x490] sm:$0xf]
    %v5920 = vld [vmem:[#allocation2 + $0x498] sm:$0xf]
    %v5921 = vld [vmem:[#allocation2 + $0x4a0] sm:$0xf]
    %v5922 = vld [vmem:[#allocation2 + $0x4a8] sm:$0xf]
    %v5923 = vpack.c.bf16 %v5918, %v5918
    %v5924 = vld [vmem:[#allocation2 + $0x4b0] sm:$0x1]
    %v5925 = vunpack.c.l.bf16 %v5924
    %v5926 = vlaneseq
    %v5927 = vshrl.u32 %v5926, 7
    %v5928 = vsub.s32 0, %v5927
    %v5929 = vrot.slane %v5925, %v5928
    %v5934 = vunpack.c.l.b16 %v5919
    %v5935 = vunpack.c.l.b16 %v5920
    %v5936 = vunpack.c.l.b16 %v5921
    %v5937 = vunpack.c.l.b16 %v5922
    %v5938 = vpack.c.b16 %v5935, %v5934
    %v5939 = vpack.c.b16 %v5937, %v5936
    %v5943 = vsel %vm259, %v5923, 0
    %5945 = vmatprep.subr.bf16.mxu0 0
    %5946 = vmatpush1.bf16.msra.mxu0 %v5938
    %5947 = vmatprep.subr.bf16.mxu0 0
    %5948 = vmatpush1.bf16.msra.mxu0 %v5939
    %5949 = vmatprep.subr.bf16.mxu0 0
    %5950 = vmatpush1.bf16.msra.mxu0 0
    %5951 = vmatprep.subr.bf16.mxu0 0
    %5952 = vmatpush1.bf16.msra.mxu0 0
    %5953 = vmatprep.subr.bf16.mxu0 0
    %5954 = vmatpush1.bf16.msra.mxu0 0
    %5955 = vmatprep.subr.bf16.mxu0 0
    %5956 = vmatpush1.bf16.msra.mxu0 0
    %5957 = vmatprep.subr.bf16.mxu0 0
    %5958 = vmatpush1.bf16.msra.mxu0 0
    %5959 = vmatprep.subr.bf16.mxu0 0
    %5960 = vmatpush1.bf16.msra.mxu0 0
    %5961 = vmatprep.subr.bf16.mxu0 0
    %5962 = vmatpush1.bf16.msra.mxu0 0
    %5963 = vmatprep.subr.bf16.mxu0 0
    %5964 = vmatpush1.bf16.msra.mxu0 0
    %5965 = vmatprep.subr.bf16.mxu0 0
    %5966 = vmatpush1.bf16.msra.mxu0 0
    %5967 = vmatprep.subr.bf16.mxu0 0
    %5968 = vmatpush1.bf16.msra.mxu0 0
    %5969 = vmatprep.subr.bf16.mxu0 0
    %5970 = vmatpush1.bf16.msra.mxu0 0
    %5971 = vmatprep.subr.bf16.mxu0 0
    %5972 = vmatpush1.bf16.msra.mxu0 0
    %5973 = vmatprep.subr.bf16.mxu0 0
    %5974 = vmatpush1.bf16.msra.mxu0 0
    %5975 = vmatprep.subr.bf16.mxu0 0
    %5976 = vmatpush1.bf16.msra.mxu0 0
    %5977 = vmatprep.mubr.bf16.mxu0 0
    %5978 = vmatmul.mubr.bf16.gmra.mrb[0].mxu0 %v5943
    %v5979 = vpop.f32.mrb[0].mxu0
    %v5980 = vadd.f32 %v5929, %v5979
    %v5981 = vpop.f32.mrb[0].mxu0
    %v5982 = vpop.f32.mrb[0].mxu0
    %v5983 = vpop.f32.mrb[0].mxu0
    %5984 = vdwg.mxu0
    %5986 = vrot.lane.b32.xlu0 %v5980, 116
    %v5987 = vpop.permute.xlu0 %5986
    %vm5989 = vcmask 1048480
    %5990 = vst.msk [vmem:[%s2] sm:$0xff] %vm5989, %v5987
    %vm5991 = vcmask 31744
    %5992 = vst.msk [vmem:[%s2 + $0x8] sm:$0xff] %vm5991, %v5987
    %v5993 = vsel %vm3025, %v5980, -inf
    %5994 = vmax.xlane.f32.xlu0 %v5993
    %v5995 = vpop.xlane.xlu0 %5994
    %vm5996 = vcmp.eq.f32.partialorder %v5980, %v5995
    %v5997 = vld [vmem:[#allocation2 + $0x4c0] sm:$0xf]
    %v5998 = vld [vmem:[#allocation2 + $0x4c8] sm:$0xf]
    %v5999 = vsel %vm5996, 1, 0
    %v6000 = vcvt.s32.f32 %v5999
    %v6001 = vpack.c.bf16 %v6000, %v6000
    %v6004 = vunpack.c.l.b16 %v5997
    %v6005 = vunpack.c.l.b16 %v5998
    %v6006 = vpack.c.b16 %v6005, %v6004
    %v6009 = vsel %vm3025, %v6001, 0
    %6011 = vmatprep.subr.bf16.mxu0 0
    %6012 = vmatpush1.bf16.msra.mxu0 %v6006
    %6013 = vmatprep.subr.bf16.mxu0 0
    %6014 = vmatpush1.bf16.msra.mxu0 0
    %6015 = vmatprep.subr.bf16.mxu0 0
    %6016 = vmatpush1.bf16.msra.mxu0 0
    %6017 = vmatprep.subr.bf16.mxu0 0
    %6018 = vmatpush1.bf16.msra.mxu0 0
    %6019 = vmatprep.subr.bf16.mxu0 0
    %6020 = vmatpush1.bf16.msra.mxu0 0
    %6021 = vmatprep.subr.bf16.mxu0 0
    %6022 = vmatpush1.bf16.msra.mxu0 0
    %6023 = vmatprep.subr.bf16.mxu0 0
    %6024 = vmatpush1.bf16.msra.mxu0 0
    %6025 = vmatprep.subr.bf16.mxu0 0
    %6026 = vmatpush1.bf16.msra.mxu0 0
    %6027 = vmatprep.subr.bf16.mxu0 0
    %6028 = vmatpush1.bf16.msra.mxu0 0
    %6029 = vmatprep.subr.bf16.mxu0 0
    %6030 = vmatpush1.bf16.msra.mxu0 0
    %6031 = vmatprep.subr.bf16.mxu0 0
    %6032 = vmatpush1.bf16.msra.mxu0 0
    %6033 = vmatprep.subr.bf16.mxu0 0
    %6034 = vmatpush1.bf16.msra.mxu0 0
    %6035 = vmatprep.subr.bf16.mxu0 0
    %6036 = vmatpush1.bf16.msra.mxu0 0
    %6037 = vmatprep.subr.bf16.mxu0 0
    %6038 = vmatpush1.bf16.msra.mxu0 0
    %6039 = vmatprep.subr.bf16.mxu0 0
    %6040 = vmatpush1.bf16.msra.mxu0 0
    %6041 = vmatprep.subr.bf16.mxu0 0
    %6042 = vmatpush1.bf16.msra.mxu0 0
    %6043 = vmatprep.mubr.bf16.mxu0 0
    %6044 = vmatmul.mubr.bf16.gmra.mrb[0].mxu0 %v6009
    %v6045 = vpop.f32.mrb[0].mxu0
    %v6046 = vadd.f32 0.0, %v6045
    %v6047 = vpop.f32.mrb[0].mxu0
    %v6048 = vpop.f32.mrb[0].mxu0
    %v6049 = vpop.f32.mrb[0].mxu0
    %6050 = vdwg.mxu0
    %v6051 = vld [vmem:[#allocation2 + $0x4d0] sm:$0xf]
    %v6052 = vld [vmem:[#allocation2 + $0x4d8] sm:$0xf]
    %v6053 = vld [vmem:[#allocation2 + $0x4e0] sm:$0xf]
    %v6054 = vld [vmem:[#allocation2 + $0x4e8] sm:$0xf]
    %v6055 = vpack.c.bf16 %v6046, %v6046
    %v6060 = vunpack.c.l.b16 %v6051
    %v6061 = vunpack.c.l.b16 %v6052
    %v6062 = vunpack.c.l.b16 %v6053
    %v6063 = vunpack.c.l.b16 %v6054
    %v6064 = vpack.c.b16 %v6061, %v6060
    %v6065 = vpack.c.b16 %v6063, %v6062
    %v6069 = vsel %vm259, %v6055, 0
    %6071 = vmatprep.subr.bf16.mxu0 0
    %6072 = vmatpush1.bf16.msra.mxu0 %v6064
    %6073 = vmatprep.subr.bf16.mxu0 0
    %6074 = vmatpush1.bf16.msra.mxu0 %v6065
    %6075 = vmatprep.subr.bf16.mxu0 0
    %6076 = vmatpush1.bf16.msra.mxu0 0
    %6077 = vmatprep.subr.bf16.mxu0 0
    %6078 = vmatpush1.bf16.msra.mxu0 0
    %6079 = vmatprep.subr.bf16.mxu0 0
    %6080 = vmatpush1.bf16.msra.mxu0 0
    %6081 = vmatprep.subr.bf16.mxu0 0
    %6082 = vmatpush1.bf16.msra.mxu0 0
    %6083 = vmatprep.subr.bf16.mxu0 0
    %6084 = vmatpush1.bf16.msra.mxu0 0
    %6085 = vmatprep.subr.bf16.mxu0 0
    %6086 = vmatpush1.bf16.msra.mxu0 0
    %6087 = vmatprep.subr.bf16.mxu0 0
    %6088 = vmatpush1.bf16.msra.mxu0 0
    %6089 = vmatprep.subr.bf16.mxu0 0
    %6090 = vmatpush1.bf16.msra.mxu0 0
    %6091 = vmatprep.subr.bf16.mxu0 0
    %6092 = vmatpush1.bf16.msra.mxu0 0
    %6093 = vmatprep.subr.bf16.mxu0 0
    %6094 = vmatpush1.bf16.msra.mxu0 0
    %6095 = vmatprep.subr.bf16.mxu0 0
    %6096 = vmatpush1.bf16.msra.mxu0 0
    %6097 = vmatprep.subr.bf16.mxu0 0
    %6098 = vmatpush1.bf16.msra.mxu0 0
    %6099 = vmatprep.subr.bf16.mxu0 0
    %6100 = vmatpush1.bf16.msra.mxu0 0
    %6101 = vmatprep.subr.bf16.mxu0 0
    %6102 = vmatpush1.bf16.msra.mxu0 0
    %6103 = vmatprep.mubr.bf16.mxu0 0
    %6104 = vmatmul.mubr.bf16.gmra.mrb[0].mxu0 %v6069
    %v6105 = vpop.f32.mrb[0].mxu0
    %v6106 = vadd.f32 %v5290, %v6105
    %v6107 = vpop.f32.mrb[0].mxu0
    %v6108 = vpop.f32.mrb[0].mxu0
    %v6109 = vpop.f32.mrb[0].mxu0
    %6110 = vdwg.mxu0
    %v6111 = vld [vmem:[#allocation2 + $0x300] sm:$0xf]
    %v6112 = vld [vmem:[#allocation2 + $0x308] sm:$0xf]
    %v6113 = vld [vmem:[#allocation2 + $0x310] sm:$0xf]
    %v6114 = vld [vmem:[#allocation2 + $0x318] sm:$0xf]
    %v6115 = vld [vmem:[#allocation2 + $0x320] sm:$0xf]
    %v6116 = vld [vmem:[#allocation2 + $0x328] sm:$0xf]
    %v6117 = vld [vmem:[#allocation2 + $0x330] sm:$0xf]
    %v6118 = vld [vmem:[#allocation2 + $0x338] sm:$0xf]
    %v6123 = vunpack.c.l.b16 %v6115
    %v6124 = vunpack.c.l.b16 %v6116
    %v6125 = vunpack.c.l.b16 %v6117
    %v6126 = vunpack.c.l.b16 %v6118
    %v6127 = vpack.c.b16 %v6124, %v6123
    %v6128 = vpack.c.b16 %v6126, %v6125
    %6131 = vmatprep.subr.bf16.mxu0 0
    %6132 = vmatpush1.bf16.msra.mxu0 %v6127
    %6133 = vmatprep.subr.bf16.mxu0 0
    %6134 = vmatpush1.bf16.msra.mxu0 %v6128
    %6135 = vmatprep.subr.bf16.mxu0 0
    %6136 = vmatpush1.bf16.msra.mxu0 0
    %6137 = vmatprep.subr.bf16.mxu0 0
    %6138 = vmatpush1.bf16.msra.mxu0 0
    %6139 = vmatprep.subr.bf16.mxu0 0
    %6140 = vmatpush1.bf16.msra.mxu0 0
    %6141 = vmatprep.subr.bf16.mxu0 0
    %6142 = vmatpush1.bf16.msra.mxu0 0
    %6143 = vmatprep.subr.bf16.mxu0 0
    %6144 = vmatpush1.bf16.msra.mxu0 0
    %6145 = vmatprep.subr.bf16.mxu0 0
    %6146 = vmatpush1.bf16.msra.mxu0 0
    %6147 = vmatprep.subr.bf16.mxu0 0
    %6148 = vmatpush1.bf16.msra.mxu0 0
    %6149 = vmatprep.subr.bf16.mxu0 0
    %6150 = vmatpush1.bf16.msra.mxu0 0
    %6151 = vmatprep.subr.bf16.mxu0 0
    %6152 = vmatpush1.bf16.msra.mxu0 0
    %6153 = vmatprep.subr.bf16.mxu0 0
    %6154 = vmatpush1.bf16.msra.mxu0 0
    %6155 = vmatprep.subr.bf16.mxu0 0
    %6156 = vmatpush1.bf16.msra.mxu0 0
    %6157 = vmatprep.subr.bf16.mxu0 0
    %6158 = vmatpush1.bf16.msra.mxu0 0
    %6159 = vmatprep.subr.bf16.mxu0 0
    %6160 = vmatpush1.bf16.msra.mxu0 0
    %6161 = vmatprep.subr.bf16.mxu0 0
    %6162 = vmatpush1.bf16.msra.mxu0 0
    %6163 = vmatprep.mubr.bf16.mxu0 0
    %6164 = vmatmul.mubr.bf16.gmra.mrb[0].mxu0 %v5000
    %v6165 = vpop.f32.mrb[0].mxu0
    %v6166 = vadd.f32 0.0, %v6165
    %v6167 = vpop.f32.mrb[0].mxu0
    %v6168 = vpop.f32.mrb[0].mxu0
    %v6169 = vpop.f32.mrb[0].mxu0
    %6170 = vdwg.mxu0
    %v6175 = vunpack.c.l.b16 %v6111
    %v6176 = vunpack.c.l.b16 %v6112
    %v6177 = vunpack.c.l.b16 %v6113
    %v6178 = vunpack.c.l.b16 %v6114
    %v6179 = vpack.c.b16 %v6176, %v6175
    %v6180 = vpack.c.b16 %v6178, %v6177
    %6183 = vmatprep.subr.bf16.mxu0 0
    %6184 = vmatpush1.bf16.msra.mxu0 %v6179
    %6185 = vmatprep.subr.bf16.mxu0 0
    %6186 = vmatpush1.bf16.msra.mxu0 %v6180
    %6187 = vmatprep.subr.bf16.mxu0 0
    %6188 = vmatpush1.bf16.msra.mxu0 0
    %6189 = vmatprep.subr.bf16.mxu0 0
    %6190 = vmatpush1.bf16.msra.mxu0 0
    %6191 = vmatprep.subr.bf16.mxu0 0
    %6192 = vmatpush1.bf16.msra.mxu0 0
    %6193 = vmatprep.subr.bf16.mxu0 0
    %6194 = vmatpush1.bf16.msra.mxu0 0
    %6195 = vmatprep.subr.bf16.mxu0 0
    %6196 = vmatpush1.bf16.msra.mxu0 0
    %6197 = vmatprep.subr.bf16.mxu0 0
    %6198 = vmatpush1.bf16.msra.mxu0 0
    %6199 = vmatprep.subr.bf16.mxu0 0
    %6200 = vmatpush1.bf16.msra.mxu0 0
    %6201 = vmatprep.subr.bf16.mxu0 0
    %6202 = vmatpush1.bf16.msra.mxu0 0
    %6203 = vmatprep.subr.bf16.mxu0 0
    %6204 = vmatpush1.bf16.msra.mxu0 0
    %6205 = vmatprep.subr.bf16.mxu0 0
    %6206 = vmatpush1.bf16.msra.mxu0 0
    %6207 = vmatprep.subr.bf16.mxu0 0
    %6208 = vmatpush1.bf16.msra.mxu0 0
    %6209 = vmatprep.subr.bf16.mxu0 0
    %6210 = vmatpush1.bf16.msra.mxu0 0
    %6211 = vmatprep.subr.bf16.mxu0 0
    %6212 = vmatpush1.bf16.msra.mxu0 0
    %6213 = vmatprep.subr.bf16.mxu0 0
    %6214 = vmatpush1.bf16.msra.mxu0 0
    %6215 = vmatprep.mubr.bf16.mxu0 0
    %6216 = vmatmul.mubr.bf16.gmra.mrb[0].mxu0 %v5253
    %v6217 = vpop.f32.mrb[0].mxu0
    %v6218 = vadd.f32 %v6166, %v6217
    %v6219 = vpop.f32.mrb[0].mxu0
    %v6220 = vpop.f32.mrb[0].mxu0
    %v6221 = vpop.f32.mrb[0].mxu0
    %6222 = vdwg.mxu0
    %v6223 = vld [vmem:[#allocation2 + $0x340] sm:$0x1]
    %v6224 = vunpack.c.l.bf16 %v6223
    %v6225 = vlaneseq
    %v6226 = vshrl.u32 %v6225, 7
    %v6227 = vsub.s32 0, %v6226
    %v6228 = vrot.slane %v6224, %v6227
    %v6229 = vadd.f32 %v6218, %v6228
    %v6230 = vxor.u32 %v6229, 2147483648
    %v6231 = vmul.f32 %v6230, 1.442695
    %v6232 = vpow.pop %v6231
    %v6233 = vadd.f32 %v6232, 1.0
    %v6234 = vrcp.pop %v6233
    %v6235 = vmul.f32 1.0, %v6234
    %v6236 = vtanh.pop %v6229
    %v6237 = vmul.f32 %v6235, %v4966
    %6239 = vrot.lane.b32.xlu0 %v6236, 64
    %v6240 = vpop.permute.xlu0 %6239
    %v6242 = vmul.f32 %v6235, %v6240
    %6244 = vrot.lane.b32.xlu0 %v6242, 32
    %v6245 = vpop.permute.xlu0 %6244
    %v6247 = vadd.f32 %v6237, %v6245
    %v6248 = vtanh.pop %v6247
    %6250 = vrot.lane.b32.xlu0 %v6248, 64
    %v6251 = vpop.permute.xlu0 %6250
    %v6253 = vmul.f32 %v6235, %v6251
    %v6254 = vld [vmem:[#allocation2 + $0x350] sm:$0xf]
    %v6255 = vld [vmem:[#allocation2 + $0x358] sm:$0xf]
    %v6256 = vld [vmem:[#allocation2 + $0x360] sm:$0xf]
    %v6257 = vld [vmem:[#allocation2 + $0x368] sm:$0xf]
    %v6258 = vpack.c.bf16 %v6253, %v6253
    %v6259 = vld [vmem:[#allocation2 + $0x370] sm:$0x1]
    %v6260 = vunpack.c.l.bf16 %v6259
    %v6261 = vlaneseq
    %v6262 = vshrl.u32 %v6261, 7
    %v6263 = vsub.s32 0, %v6262
    %v6264 = vrot.slane %v6260, %v6263
    %6266 = vrot.lane.b32.xlu0 %v6258, 32
    %v6267 = vpop.permute.xlu0 %6266
    %v6272 = vunpack.c.l.b16 %v6254
    %v6273 = vunpack.c.l.b16 %v6255
    %v6274 = vunpack.c.l.b16 %v6256
    %v6275 = vunpack.c.l.b16 %v6257
    %v6276 = vpack.c.b16 %v6273, %v6272
    %v6277 = vpack.c.b16 %v6275, %v6274
    %v6281 = vsel %vm259, %v6267, 0
    %6283 = vmatprep.subr.bf16.mxu0 0
    %6284 = vmatpush1.bf16.msra.mxu0 %v6276
    %6285 = vmatprep.subr.bf16.mxu0 0
    %6286 = vmatpush1.bf16.msra.mxu0 %v6277
    %6287 = vmatprep.subr.bf16.mxu0 0
    %6288 = vmatpush1.bf16.msra.mxu0 0
    %6289 = vmatprep.subr.bf16.mxu0 0
    %6290 = vmatpush1.bf16.msra.mxu0 0
    %6291 = vmatprep.subr.bf16.mxu0 0
    %6292 = vmatpush1.bf16.msra.mxu0 0
    %6293 = vmatprep.subr.bf16.mxu0 0
    %6294 = vmatpush1.bf16.msra.mxu0 0
    %6295 = vmatprep.subr.bf16.mxu0 0
    %6296 = vmatpush1.bf16.msra.mxu0 0
    %6297 = vmatprep.subr.bf16.mxu0 0
    %6298 = vmatpush1.bf16.msra.mxu0 0
    %6299 = vmatprep.subr.bf16.mxu0 0
    %6300 = vmatpush1.bf16.msra.mxu0 0
    %6301 = vmatprep.subr.bf16.mxu0 0
    %6302 = vmatpush1.bf16.msra.mxu0 0
    %6303 = vmatprep.subr.bf16.mxu0 0
    %6304 = vmatpush1.bf16.msra.mxu0 0
    %6305 = vmatprep.subr.bf16.mxu0 0
    %6306 = vmatpush1.bf16.msra.mxu0 0
    %6307 = vmatprep.subr.bf16.mxu0 0
    %6308 = vmatpush1.bf16.msra.mxu0 0
    %6309 = vmatprep.subr.bf16.mxu0 0
    %6310 = vmatpush1.bf16.msra.mxu0 0
    %6311 = vmatprep.subr.bf16.mxu0 0
    %6312 = vmatpush1.bf16.msra.mxu0 0
    %6313 = vmatprep.subr.bf16.mxu0 0
    %6314 = vmatpush1.bf16.msra.mxu0 0
    %6315 = vmatprep.mubr.bf16.mxu0 0
    %6316 = vmatmul.mubr.bf16.gmra.mrb[0].mxu0 %v6281
    %v6317 = vpop.f32.mrb[0].mxu0
    %v6318 = vadd.f32 %v6264, %v6317
    %v6319 = vpop.f32.mrb[0].mxu0
    %v6320 = vpop.f32.mrb[0].mxu0
    %v6321 = vpop.f32.mrb[0].mxu0
    %6322 = vdwg.mxu0
    %v6323 = vmax.f32 %v6318, 0.0
    %v6324 = vld [vmem:[#allocation2 + $0x380] sm:$0xf]
    %v6325 = vld [vmem:[#allocation2 + $0x388] sm:$0xf]
    %v6326 = vld [vmem:[#allocation2 + $0x390] sm:$0xf]
    %v6327 = vld [vmem:[#allocation2 + $0x398] sm:$0xf]
    %v6328 = vpack.c.bf16 %v6323, %v6323
    %v6329 = vld [vmem:[#allocation2 + $0x3a0] sm:$0x1]
    %v6330 = vunpack.c.l.bf16 %v6329
    %v6331 = vlaneseq
    %v6332 = vshrl.u32 %v6331, 7
    %v6333 = vsub.s32 0, %v6332
    %v6334 = vrot.slane %v6330, %v6333
    %v6339 = vunpack.c.l.b16 %v6324
    %v6340 = vunpack.c.l.b16 %v6325
    %v6341 = vunpack.c.l.b16 %v6326
    %v6342 = vunpack.c.l.b16 %v6327
    %v6343 = vpack.c.b16 %v6340, %v6339
    %v6344 = vpack.c.b16 %v6342, %v6341
    %v6348 = vsel %vm259, %v6328, 0
    %6350 = vmatprep.subr.bf16.mxu0 0
    %6351 = vmatpush1.bf16.msra.mxu0 %v6343
    %6352 = vmatprep.subr.bf16.mxu0 0
    %6353 = vmatpush1.bf16.msra.mxu0 %v6344
    %6354 = vmatprep.subr.bf16.mxu0 0
    %6355 = vmatpush1.bf16.msra.mxu0 0
    %6356 = vmatprep.subr.bf16.mxu0 0
    %6357 = vmatpush1.bf16.msra.mxu0 0
    %6358 = vmatprep.subr.bf16.mxu0 0
    %6359 = vmatpush1.bf16.msra.mxu0 0
    %6360 = vmatprep.subr.bf16.mxu0 0
    %6361 = vmatpush1.bf16.msra.mxu0 0
    %6362 = vmatprep.subr.bf16.mxu0 0
    %6363 = vmatpush1.bf16.msra.mxu0 0
    %6364 = vmatprep.subr.bf16.mxu0 0
    %6365 = vmatpush1.bf16.msra.mxu0 0
    %6366 = vmatprep.subr.bf16.mxu0 0
    %6367 = vmatpush1.bf16.msra.mxu0 0
    %6368 = vmatprep.subr.bf16.mxu0 0
    %6369 = vmatpush1.bf16.msra.mxu0 0
    %6370 = vmatprep.subr.bf16.mxu0 0
    %6371 = vmatpush1.bf16.msra.mxu0 0
    %6372 = vmatprep.subr.bf16.mxu0 0
    %6373 = vmatpush1.bf16.msra.mxu0 0
    %6374 = vmatprep.subr.bf16.mxu0 0
    %6375 = vmatpush1.bf16.msra.mxu0 0
    %6376 = vmatprep.subr.bf16.mxu0 0
    %6377 = vmatpush1.bf16.msra.mxu0 0
    %6378 = vmatprep.subr.bf16.mxu0 0
    %6379 = vmatpush1.bf16.msra.mxu0 0
    %6380 = vmatprep.subr.bf16.mxu0 0
    %6381 = vmatpush1.bf16.msra.mxu0 0
    %6382 = vmatprep.mubr.bf16.mxu0 0
    %6383 = vmatmul.mubr.bf16.gmra.mrb[0].mxu0 %v6348
    %v6384 = vpop.f32.mrb[0].mxu0
    %v6385 = vadd.f32 %v6334, %v6384
    %v6386 = vpop.f32.mrb[0].mxu0
    %v6387 = vpop.f32.mrb[0].mxu0
    %v6388 = vpop.f32.mrb[0].mxu0
    %6389 = vdwg.mxu0
    %6391 = vrot.lane.b32.xlu0 %v6385, 27
    %v6392 = vpop.permute.xlu0 %6391
    %vm6394 = vcmask 294104
    %6395 = vst.msk [vmem:[%s2] sm:$0xff] %vm6394, %v6392
    %v6396 = vsel %vm2555, %v6385, -inf
    %6397 = vmax.xlane.f32.xlu0 %v6396
    %v6398 = vpop.xlane.xlu0 %6397
    %vm6399 = vcmp.eq.f32.partialorder %v6385, %v6398
    %v6400 = vld [vmem:[#allocation2 + $0x3b0] sm:$0xf]
    %v6401 = vld [vmem:[#allocation2 + $0x3b8] sm:$0x1]
    %v6402 = vsel %vm6399, 1, 0
    %v6403 = vcvt.s32.f32 %v6402
    %v6404 = vpack.c.bf16 %v6403, %v6403
    %v6407 = vunpack.c.l.b16 %v6400
    %v6408 = vunpack.c.l.b16 %v6401
    %v6409 = vpack.c.b16 %v6408, %v6407
    %v6411 = vsel %vm2555, %v6404, 0
    %v6414 = vand.u32 %v6409, %v2576
    %6416 = vmatprep.subr.bf16.mxu0 0
    %6417 = vmatpush1.bf16.msra.mxu0 %v6414
    %6418 = vmatprep.subr.bf16.mxu0 0
    %6419 = vmatpush1.bf16.msra.mxu0 0
    %6420 = vmatprep.subr.bf16.mxu0 0
    %6421 = vmatpush1.bf16.msra.mxu0 0
    %6422 = vmatprep.subr.bf16.mxu0 0
    %6423 = vmatpush1.bf16.msra.mxu0 0
    %6424 = vmatprep.subr.bf16.mxu0 0
    %6425 = vmatpush1.bf16.msra.mxu0 0
    %6426 = vmatprep.subr.bf16.mxu0 0
    %6427 = vmatpush1.bf16.msra.mxu0 0
    %6428 = vmatprep.subr.bf16.mxu0 0
    %6429 = vmatpush1.bf16.msra.mxu0 0
    %6430 = vmatprep.subr.bf16.mxu0 0
    %6431 = vmatpush1.bf16.msra.mxu0 0
    %6432 = vmatprep.subr.bf16.mxu0 0
    %6433 = vmatpush1.bf16.msra.mxu0 0
    %6434 = vmatprep.subr.bf16.mxu0 0
    %6435 = vmatpush1.bf16.msra.mxu0 0
    %6436 = vmatprep.subr.bf16.mxu0 0
    %6437 = vmatpush1.bf16.msra.mxu0 0
    %6438 = vmatprep.subr.bf16.mxu0 0
    %6439 = vmatpush1.bf16.msra.mxu0 0
    %6440 = vmatprep.subr.bf16.mxu0 0
    %6441 = vmatpush1.bf16.msra.mxu0 0
    %6442 = vmatprep.subr.bf16.mxu0 0
    %6443 = vmatpush1.bf16.msra.mxu0 0
    %6444 = vmatprep.subr.bf16.mxu0 0
    %6445 = vmatpush1.bf16.msra.mxu0 0
    %6446 = vmatprep.subr.bf16.mxu0 0
    %6447 = vmatpush1.bf16.msra.mxu0 0
    %6448 = vmatprep.mubr.bf16.mxu0 0
    %6449 = vmatmul.mubr.bf16.gmra.mrb[0].mxu0 %v6411
    %v6450 = vpop.f32.mrb[0].mxu0
    %v6451 = vadd.f32 0.0, %v6450
    %v6452 = vpop.f32.mrb[0].mxu0
    %v6453 = vpop.f32.mrb[0].mxu0
    %v6454 = vpop.f32.mrb[0].mxu0
    %6455 = vdwg.mxu0
    %v6456 = vld [vmem:[#allocation2 + $0x3c0] sm:$0xf]
    %v6457 = vld [vmem:[#allocation2 + $0x3c8] sm:$0xf]
    %v6458 = vld [vmem:[#allocation2 + $0x3d0] sm:$0xf]
    %v6459 = vld [vmem:[#allocation2 + $0x3d8] sm:$0xf]
    %v6460 = vpack.c.bf16 %v6451, %v6451
    %v6465 = vunpack.c.l.b16 %v6456
    %v6466 = vunpack.c.l.b16 %v6457
    %v6467 = vunpack.c.l.b16 %v6458
    %v6468 = vunpack.c.l.b16 %v6459
    %v6469 = vpack.c.b16 %v6466, %v6465
    %v6470 = vpack.c.b16 %v6468, %v6467
    %v6474 = vsel %vm259, %v6460, 0
    %6476 = vmatprep.subr.bf16.mxu0 0
    %6477 = vmatpush1.bf16.msra.mxu0 %v6469
    %6478 = vmatprep.subr.bf16.mxu0 0
    %6479 = vmatpush1.bf16.msra.mxu0 %v6470
    %6480 = vmatprep.subr.bf16.mxu0 0
    %6481 = vmatpush1.bf16.msra.mxu0 0
    %6482 = vmatprep.subr.bf16.mxu0 0
    %6483 = vmatpush1.bf16.msra.mxu0 0
    %6484 = vmatprep.subr.bf16.mxu0 0
    %6485 = vmatpush1.bf16.msra.mxu0 0
    %6486 = vmatprep.subr.bf16.mxu0 0
    %6487 = vmatpush1.bf16.msra.mxu0 0
    %6488 = vmatprep.subr.bf16.mxu0 0
    %6489 = vmatpush1.bf16.msra.mxu0 0
    %6490 = vmatprep.subr.bf16.mxu0 0
    %6491 = vmatpush1.bf16.msra.mxu0 0
    %6492 = vmatprep.subr.bf16.mxu0 0
    %6493 = vmatpush1.bf16.msra.mxu0 0
    %6494 = vmatprep.subr.bf16.mxu0 0
    %6495 = vmatpush1.bf16.msra.mxu0 0
    %6496 = vmatprep.subr.bf16.mxu0 0
    %6497 = vmatpush1.bf16.msra.mxu0 0
    %6498 = vmatprep.subr.bf16.mxu0 0
    %6499 = vmatpush1.bf16.msra.mxu0 0
    %6500 = vmatprep.subr.bf16.mxu0 0
    %6501 = vmatpush1.bf16.msra.mxu0 0
    %6502 = vmatprep.subr.bf16.mxu0 0
    %6503 = vmatpush1.bf16.msra.mxu0 0
    %6504 = vmatprep.subr.bf16.mxu0 0
    %6505 = vmatpush1.bf16.msra.mxu0 0
    %6506 = vmatprep.subr.bf16.mxu0 0
    %6507 = vmatpush1.bf16.msra.mxu0 0
    %6508 = vmatprep.mubr.bf16.mxu0 0
    %6509 = vmatmul.mubr.bf16.gmra.mrb[0].mxu0 %v6474
    %v6510 = vpop.f32.mrb[0].mxu0
    %v6511 = vadd.f32 %v2209, %v6510
    %v6512 = vpop.f32.mrb[0].mxu0
    %v6513 = vpop.f32.mrb[0].mxu0
    %v6514 = vpop.f32.mrb[0].mxu0
    %6515 = vdwg.mxu0
    %v6516 = vld [vmem:[#allocation2 + $0x4f0] sm:$0xf]
    %v6517 = vld [vmem:[#allocation2 + $0x4f8] sm:$0xf]
    %v6518 = vld [vmem:[#allocation2 + $0x500] sm:$0xf]
    %v6519 = vld [vmem:[#allocation2 + $0x508] sm:$0xf]
    %v6520 = vpack.c.bf16 %v6511, %v6511
    %v6525 = vunpack.c.l.b16 %v6516
    %v6526 = vunpack.c.l.b16 %v6517
    %v6527 = vunpack.c.l.b16 %v6518
    %v6528 = vunpack.c.l.b16 %v6519
    %v6529 = vpack.c.b16 %v6526, %v6525
    %v6530 = vpack.c.b16 %v6528, %v6527
    %v6534 = vsel %vm259, %v6520, 0
    %6536 = vmatprep.subr.bf16.mxu0 0
    %6537 = vmatpush1.bf16.msra.mxu0 %v6529
    %6538 = vmatprep.subr.bf16.mxu0 0
    %6539 = vmatpush1.bf16.msra.mxu0 %v6530
    %6540 = vmatprep.subr.bf16.mxu0 0
    %6541 = vmatpush1.bf16.msra.mxu0 0
    %6542 = vmatprep.subr.bf16.mxu0 0
    %6543 = vmatpush1.bf16.msra.mxu0 0
    %6544 = vmatprep.subr.bf16.mxu0 0
    %6545 = vmatpush1.bf16.msra.mxu0 0
    %6546 = vmatprep.subr.bf16.mxu0 0
    %6547 = vmatpush1.bf16.msra.mxu0 0
    %6548 = vmatprep.subr.bf16.mxu0 0
    %6549 = vmatpush1.bf16.msra.mxu0 0
    %6550 = vmatprep.subr.bf16.mxu0 0
    %6551 = vmatpush1.bf16.msra.mxu0 0
    %6552 = vmatprep.subr.bf16.mxu0 0
    %6553 = vmatpush1.bf16.msra.mxu0 0
    %6554 = vmatprep.subr.bf16.mxu0 0
    %6555 = vmatpush1.bf16.msra.mxu0 0
    %6556 = vmatprep.subr.bf16.mxu0 0
    %6557 = vmatpush1.bf16.msra.mxu0 0
    %6558 = vmatprep.subr.bf16.mxu0 0
    %6559 = vmatpush1.bf16.msra.mxu0 0
    %6560 = vmatprep.subr.bf16.mxu0 0
    %6561 = vmatpush1.bf16.msra.mxu0 0
    %6562 = vmatprep.subr.bf16.mxu0 0
    %6563 = vmatpush1.bf16.msra.mxu0 0
    %6564 = vmatprep.subr.bf16.mxu0 0
    %6565 = vmatpush1.bf16.msra.mxu0 0
    %6566 = vmatprep.subr.bf16.mxu0 0
    %6567 = vmatpush1.bf16.msra.mxu0 0
    %6568 = vmatprep.mubr.bf16.mxu0 0
    %6569 = vmatmul.mubr.bf16.gmra.mrb[0].mxu0 %v6534
    %v6570 = vpop.f32.mrb[0].mxu0
    %v6571 = vadd.f32 %v2271, %v6570
    %v6572 = vpop.f32.mrb[0].mxu0
    %v6573 = vpop.f32.mrb[0].mxu0
    %v6574 = vpop.f32.mrb[0].mxu0
    %6575 = vdwg.mxu0
    %v6576 = vld [vmem:[#allocation2 + $0x410] sm:$0xf]
    %v6577 = vld [vmem:[#allocation2 + $0x418] sm:$0xf]
    %v6578 = vld [vmem:[#allocation2 + $0x420] sm:$0xf]
    %v6579 = vld [vmem:[#allocation2 + $0x428] sm:$0xf]
    %v6580 = vpack.c.bf16 %v6106, %v6106
    %v6581 = vld [vmem:[#allocation2 + $0x430] sm:$0xf]
    %v6582 = vld [vmem:[#allocation2 + $0x438] sm:$0xf]
    %v6583 = vld [vmem:[#allocation2 + $0x440] sm:$0xf]
    %v6584 = vld [vmem:[#allocation2 + $0x448] sm:$0xf]
    %v6589 = vunpack.c.l.b16 %v6581
    %v6590 = vunpack.c.l.b16 %v6582
    %v6591 = vunpack.c.l.b16 %v6583
    %v6592 = vunpack.c.l.b16 %v6584
    %v6593 = vpack.c.b16 %v6590, %v6589
    %v6594 = vpack.c.b16 %v6592, %v6591
    %6597 = vmatprep.subr.bf16.mxu0 0
    %6598 = vmatpush1.bf16.msra.mxu0 %v6593
    %6599 = vmatprep.subr.bf16.mxu0 0
    %6600 = vmatpush1.bf16.msra.mxu0 %v6594
    %6601 = vmatprep.subr.bf16.mxu0 0
    %6602 = vmatpush1.bf16.msra.mxu0 0
    %6603 = vmatprep.subr.bf16.mxu0 0
    %6604 = vmatpush1.bf16.msra.mxu0 0
    %6605 = vmatprep.subr.bf16.mxu0 0
    %6606 = vmatpush1.bf16.msra.mxu0 0
    %6607 = vmatprep.subr.bf16.mxu0 0
    %6608 = vmatpush1.bf16.msra.mxu0 0
    %6609 = vmatprep.subr.bf16.mxu0 0
    %6610 = vmatpush1.bf16.msra.mxu0 0
    %6611 = vmatprep.subr.bf16.mxu0 0
    %6612 = vmatpush1.bf16.msra.mxu0 0
    %6613 = vmatprep.subr.bf16.mxu0 0
    %6614 = vmatpush1.bf16.msra.mxu0 0
    %6615 = vmatprep.subr.bf16.mxu0 0
    %6616 = vmatpush1.bf16.msra.mxu0 0
    %6617 = vmatprep.subr.bf16.mxu0 0
    %6618 = vmatpush1.bf16.msra.mxu0 0
    %6619 = vmatprep.subr.bf16.mxu0 0
    %6620 = vmatpush1.bf16.msra.mxu0 0
    %6621 = vmatprep.subr.bf16.mxu0 0
    %6622 = vmatpush1.bf16.msra.mxu0 0
    %6623 = vmatprep.subr.bf16.mxu0 0
    %6624 = vmatpush1.bf16.msra.mxu0 0
    %6625 = vmatprep.subr.bf16.mxu0 0
    %6626 = vmatpush1.bf16.msra.mxu0 0
    %6627 = vmatprep.subr.bf16.mxu0 0
    %6628 = vmatpush1.bf16.msra.mxu0 0
    %6629 = vmatprep.mubr.bf16.mxu0 0
    %6630 = vmatmul.mubr.bf16.gmra.mrb[0].mxu0 %v5876
    %v6631 = vpop.f32.mrb[0].mxu0
    %v6632 = vadd.f32 0.0, %v6631
    %v6633 = vpop.f32.mrb[0].mxu0
    %v6634 = vpop.f32.mrb[0].mxu0
    %v6635 = vpop.f32.mrb[0].mxu0
    %6636 = vdwg.mxu0
    %v6641 = vunpack.c.l.b16 %v6576
    %v6642 = vunpack.c.l.b16 %v6577
    %v6643 = vunpack.c.l.b16 %v6578
    %v6644 = vunpack.c.l.b16 %v6579
    %v6645 = vpack.c.b16 %v6642, %v6641
    %v6646 = vpack.c.b16 %v6644, %v6643
    %v6650 = vsel %vm259, %v6580, 0
    %6652 = vmatprep.subr.bf16.mxu0 0
    %6653 = vmatpush1.bf16.msra.mxu0 %v6645
    %6654 = vmatprep.subr.bf16.mxu0 0
    %6655 = vmatpush1.bf16.msra.mxu0 %v6646
    %6656 = vmatprep.subr.bf16.mxu0 0
    %6657 = vmatpush1.bf16.msra.mxu0 0
    %6658 = vmatprep.subr.bf16.mxu0 0
    %6659 = vmatpush1.bf16.msra.mxu0 0
    %6660 = vmatprep.subr.bf16.mxu0 0
    %6661 = vmatpush1.bf16.msra.mxu0 0
    %6662 = vmatprep.subr.bf16.mxu0 0
    %6663 = vmatpush1.bf16.msra.mxu0 0
    %6664 = vmatprep.subr.bf16.mxu0 0
    %6665 = vmatpush1.bf16.msra.mxu0 0
    %6666 = vmatprep.subr.bf16.mxu0 0
    %6667 = vmatpush1.bf16.msra.mxu0 0
    %6668 = vmatprep.subr.bf16.mxu0 0
    %6669 = vmatpush1.bf16.msra.mxu0 0
    %6670 = vmatprep.subr.bf16.mxu0 0
    %6671 = vmatpush1.bf16.msra.mxu0 0
    %6672 = vmatprep.subr.bf16.mxu0 0
    %6673 = vmatpush1.bf16.msra.mxu0 0
    %6674 = vmatprep.subr.bf16.mxu0 0
    %6675 = vmatpush1.bf16.msra.mxu0 0
    %6676 = vmatprep.subr.bf16.mxu0 0
    %6677 = vmatpush1.bf16.msra.mxu0 0
    %6678 = vmatprep.subr.bf16.mxu0 0
    %6679 = vmatpush1.bf16.msra.mxu0 0
    %6680 = vmatprep.subr.bf16.mxu0 0
    %6681 = vmatpush1.bf16.msra.mxu0 0
    %6682 = vmatprep.subr.bf16.mxu0 0
    %6683 = vmatpush1.bf16.msra.mxu0 0
    %6684 = vmatprep.mubr.bf16.mxu0 0
    %6685 = vmatmul.mubr.bf16.gmra.mrb[0].mxu0 %v6650
    %v6686 = vpop.f32.mrb[0].mxu0
    %v6687 = vadd.f32 %v6632, %v6686
    %v6688 = vpop.f32.mrb[0].mxu0
    %v6689 = vpop.f32.mrb[0].mxu0
    %v6690 = vpop.f32.mrb[0].mxu0
    %6691 = vdwg.mxu0
    %v6692 = vld [vmem:[#allocation2 + $0x450] sm:$0x1]
    %v6693 = vunpack.c.l.bf16 %v6692
    %v6694 = vlaneseq
    %v6695 = vshrl.u32 %v6694, 7
    %v6696 = vsub.s32 0, %v6695
    %v6697 = vrot.slane %v6693, %v6696
    %v6698 = vadd.f32 %v6687, %v6697
    %v6699 = vxor.u32 %v6698, 2147483648
    %v6700 = vmul.f32 %v6699, 1.442695
    %v6701 = vpow.pop %v6700
    %v6702 = vadd.f32 %v6701, 1.0
    %v6703 = vrcp.pop %v6702
    %v6704 = vmul.f32 1.0, %v6703
    %v6705 = vtanh.pop %v6698
    %v6706 = vmul.f32 %v6704, %v5842
    %6708 = vrot.lane.b32.xlu0 %v6705, 64
    %v6709 = vpop.permute.xlu0 %6708
    %v6711 = vmul.f32 %v6704, %v6709
    %6713 = vrot.lane.b32.xlu0 %v6711, 32
    %v6714 = vpop.permute.xlu0 %6713
    %v6716 = vadd.f32 %v6706, %v6714
    %v6717 = vtanh.pop %v6716
    %6719 = vrot.lane.b32.xlu0 %v6717, 64
    %v6720 = vpop.permute.xlu0 %6719
    %v6722 = vmul.f32 %v6704, %v6720
    %v6723 = vld [vmem:[#allocation2 + $0x460] sm:$0xf]
    %v6724 = vld [vmem:[#allocation2 + $0x468] sm:$0xf]
    %v6725 = vld [vmem:[#allocation2 + $0x470] sm:$0xf]
    %v6726 = vld [vmem:[#allocation2 + $0x478] sm:$0xf]
    %v6727 = vpack.c.bf16 %v6722, %v6722
    %v6728 = vld [vmem:[#allocation2 + $0x480] sm:$0x1]
    %v6729 = vunpack.c.l.bf16 %v6728
    %v6730 = vlaneseq
    %v6731 = vshrl.u32 %v6730, 7
    %v6732 = vsub.s32 0, %v6731
    %v6733 = vrot.slane %v6729, %v6732
    %6735 = vrot.lane.b32.xlu0 %v6727, 32
    %v6736 = vpop.permute.xlu0 %6735
    %v6741 = vunpack.c.l.b16 %v6723
    %v6742 = vunpack.c.l.b16 %v6724
    %v6743 = vunpack.c.l.b16 %v6725
    %v6744 = vunpack.c.l.b16 %v6726
    %v6745 = vpack.c.b16 %v6742, %v6741
    %v6746 = vpack.c.b16 %v6744, %v6743
    %v6750 = vsel %vm259, %v6736, 0
    %6752 = vmatprep.subr.bf16.mxu0 0
    %6753 = vmatpush1.bf16.msra.mxu0 %v6745
    %6754 = vmatprep.subr.bf16.mxu0 0
    %6755 = vmatpush1.bf16.msra.mxu0 %v6746
    %6756 = vmatprep.subr.bf16.mxu0 0
    %6757 = vmatpush1.bf16.msra.mxu0 0
    %6758 = vmatprep.subr.bf16.mxu0 0
    %6759 = vmatpush1.bf16.msra.mxu0 0
    %6760 = vmatprep.subr.bf16.mxu0 0
    %6761 = vmatpush1.bf16.msra.mxu0 0
    %6762 = vmatprep.subr.bf16.mxu0 0
    %6763 = vmatpush1.bf16.msra.mxu0 0
    %6764 = vmatprep.subr.bf16.mxu0 0
    %6765 = vmatpush1.bf16.msra.mxu0 0
    %6766 = vmatprep.subr.bf16.mxu0 0
    %6767 = vmatpush1.bf16.msra.mxu0 0
    %6768 = vmatprep.subr.bf16.mxu0 0
    %6769 = vmatpush1.bf16.msra.mxu0 0
    %6770 = vmatprep.subr.bf16.mxu0 0
    %6771 = vmatpush1.bf16.msra.mxu0 0
    %6772 = vmatprep.subr.bf16.mxu0 0
    %6773 = vmatpush1.bf16.msra.mxu0 0
    %6774 = vmatprep.subr.bf16.mxu0 0
    %6775 = vmatpush1.bf16.msra.mxu0 0
    %6776 = vmatprep.subr.bf16.mxu0 0
    %6777 = vmatpush1.bf16.msra.mxu0 0
    %6778 = vmatprep.subr.bf16.mxu0 0
    %6779 = vmatpush1.bf16.msra.mxu0 0
    %6780 = vmatprep.subr.bf16.mxu0 0
    %6781 = vmatpush1.bf16.msra.mxu0 0
    %6782 = vmatprep.subr.bf16.mxu0 0
    %6783 = vmatpush1.bf16.msra.mxu0 0
    %6784 = vmatprep.mubr.bf16.mxu0 0
    %6785 = vmatmul.mubr.bf16.gmra.mrb[0].mxu0 %v6750
    %v6786 = vpop.f32.mrb[0].mxu0
    %v6787 = vadd.f32 %v6733, %v6786
    %v6788 = vpop.f32.mrb[0].mxu0
    %v6789 = vpop.f32.mrb[0].mxu0
    %v6790 = vpop.f32.mrb[0].mxu0
    %6791 = vdwg.mxu0
    %v6792 = vmax.f32 %v6787, 0.0
    %v6793 = vld [vmem:[#allocation2 + $0x490] sm:$0xf]
    %v6794 = vld [vmem:[#allocation2 + $0x498] sm:$0xf]
    %v6795 = vld [vmem:[#allocation2 + $0x4a0] sm:$0xf]
    %v6796 = vld [vmem:[#allocation2 + $0x4a8] sm:$0xf]
    %v6797 = vpack.c.bf16 %v6792, %v6792
    %v6798 = vld [vmem:[#allocation2 + $0x4b0] sm:$0x1]
    %v6799 = vunpack.c.l.bf16 %v6798
    %v6800 = vlaneseq
    %v6801 = vshrl.u32 %v6800, 7
    %v6802 = vsub.s32 0, %v6801
    %v6803 = vrot.slane %v6799, %v6802
    %v6808 = vunpack.c.l.b16 %v6793
    %v6809 = vunpack.c.l.b16 %v6794
    %v6810 = vunpack.c.l.b16 %v6795
    %v6811 = vunpack.c.l.b16 %v6796
    %v6812 = vpack.c.b16 %v6809, %v6808
    %v6813 = vpack.c.b16 %v6811, %v6810
    %v6817 = vsel %vm259, %v6797, 0
    %6819 = vmatprep.subr.bf16.mxu0 0
    %6820 = vmatpush1.bf16.msra.mxu0 %v6812
    %6821 = vmatprep.subr.bf16.mxu0 0
    %6822 = vmatpush1.bf16.msra.mxu0 %v6813
    %6823 = vmatprep.subr.bf16.mxu0 0
    %6824 = vmatpush1.bf16.msra.mxu0 0
    %6825 = vmatprep.subr.bf16.mxu0 0
    %6826 = vmatpush1.bf16.msra.mxu0 0
    %6827 = vmatprep.subr.bf16.mxu0 0
    %6828 = vmatpush1.bf16.msra.mxu0 0
    %6829 = vmatprep.subr.bf16.mxu0 0
    %6830 = vmatpush1.bf16.msra.mxu0 0
    %6831 = vmatprep.subr.bf16.mxu0 0
    %6832 = vmatpush1.bf16.msra.mxu0 0
    %6833 = vmatprep.subr.bf16.mxu0 0
    %6834 = vmatpush1.bf16.msra.mxu0 0
    %6835 = vmatprep.subr.bf16.mxu0 0
    %6836 = vmatpush1.bf16.msra.mxu0 0
    %6837 = vmatprep.subr.bf16.mxu0 0
    %6838 = vmatpush1.bf16.msra.mxu0 0
    %6839 = vmatprep.subr.bf16.mxu0 0
    %6840 = vmatpush1.bf16.msra.mxu0 0
    %6841 = vmatprep.subr.bf16.mxu0 0
    %6842 = vmatpush1.bf16.msra.mxu0 0
    %6843 = vmatprep.subr.bf16.mxu0 0
    %6844 = vmatpush1.bf16.msra.mxu0 0
    %6845 = vmatprep.subr.bf16.mxu0 0
    %6846 = vmatpush1.bf16.msra.mxu0 0
    %6847 = vmatprep.subr.bf16.mxu0 0
    %6848 = vmatpush1.bf16.msra.mxu0 0
    %6849 = vmatprep.subr.bf16.mxu0 0
    %6850 = vmatpush1.bf16.msra.mxu0 0
    %6851 = vmatprep.mubr.bf16.mxu0 0
    %6852 = vmatmul.mubr.bf16.gmra.mrb[0].mxu0 %v6817
    %v6853 = vpop.f32.mrb[0].mxu0
    %v6854 = vadd.f32 %v6803, %v6853
    %v6855 = vpop.f32.mrb[0].mxu0
    %v6856 = vpop.f32.mrb[0].mxu0
    %v6857 = vpop.f32.mrb[0].mxu0
    %6858 = vdwg.mxu0
    %6860 = vrot.lane.b32.xlu0 %v6854, 4
    %v6861 = vpop.permute.xlu0 %6860
    %vm6863 = vcmask 162848
    %6864 = vst.msk [vmem:[%s2 + $0x8] sm:$0xff] %vm6863, %v6861
    %v6865 = vsel %vm3025, %v6854, -inf
    %6866 = vmax.xlane.f32.xlu0 %v6865
    %v6867 = vpop.xlane.xlu0 %6866
    %vm6868 = vcmp.eq.f32.partialorder %v6854, %v6867
    %v6869 = vld [vmem:[#allocation2 + $0x4c0] sm:$0xf]
    %v6870 = vld [vmem:[#allocation2 + $0x4c8] sm:$0xf]
    %v6871 = vsel %vm6868, 1, 0
    %v6872 = vcvt.s32.f32 %v6871
    %v6873 = vpack.c.bf16 %v6872, %v6872
    %v6876 = vunpack.c.l.b16 %v6869
    %v6877 = vunpack.c.l.b16 %v6870
    %v6878 = vpack.c.b16 %v6877, %v6876
    %v6881 = vsel %vm3025, %v6873, 0
    %6883 = vmatprep.subr.bf16.mxu0 0
    %6884 = vmatpush1.bf16.msra.mxu0 %v6878
    %6885 = vmatprep.subr.bf16.mxu0 0
    %6886 = vmatpush1.bf16.msra.mxu0 0
    %6887 = vmatprep.subr.bf16.mxu0 0
    %6888 = vmatpush1.bf16.msra.mxu0 0
    %6889 = vmatprep.subr.bf16.mxu0 0
    %6890 = vmatpush1.bf16.msra.mxu0 0
    %6891 = vmatprep.subr.bf16.mxu0 0
    %6892 = vmatpush1.bf16.msra.mxu0 0
    %6893 = vmatprep.subr.bf16.mxu0 0
    %6894 = vmatpush1.bf16.msra.mxu0 0
    %6895 = vmatprep.subr.bf16.mxu0 0
    %6896 = vmatpush1.bf16.msra.mxu0 0
    %6897 = vmatprep.subr.bf16.mxu0 0
    %6898 = vmatpush1.bf16.msra.mxu0 0
    %6899 = vmatprep.subr.bf16.mxu0 0
    %6900 = vmatpush1.bf16.msra.mxu0 0
    %6901 = vmatprep.subr.bf16.mxu0 0
    %6902 = vmatpush1.bf16.msra.mxu0 0
    %6903 = vmatprep.subr.bf16.mxu0 0
    %6904 = vmatpush1.bf16.msra.mxu0 0
    %6905 = vmatprep.subr.bf16.mxu0 0
    %6906 = vmatpush1.bf16.msra.mxu0 0
    %6907 = vmatprep.subr.bf16.mxu0 0
    %6908 = vmatpush1.bf16.msra.mxu0 0
    %6909 = vmatprep.subr.bf16.mxu0 0
    %6910 = vmatpush1.bf16.msra.mxu0 0
    %6911 = vmatprep.subr.bf16.mxu0 0
    %6912 = vmatpush1.bf16.msra.mxu0 0
    %6913 = vmatprep.subr.bf16.mxu0 0
    %6914 = vmatpush1.bf16.msra.mxu0 0
    %6915 = vmatprep.mubr.bf16.mxu0 0
    %6916 = vmatmul.mubr.bf16.gmra.mrb[0].mxu0 %v6881
    %v6917 = vpop.f32.mrb[0].mxu0
    %v6918 = vadd.f32 0.0, %v6917
    %v6919 = vpop.f32.mrb[0].mxu0
    %v6920 = vpop.f32.mrb[0].mxu0
    %v6921 = vpop.f32.mrb[0].mxu0
    %6922 = vdwg.mxu0
    %v6923 = vld [vmem:[#allocation2 + $0x4d0] sm:$0xf]
    %v6924 = vld [vmem:[#allocation2 + $0x4d8] sm:$0xf]
    %v6925 = vld [vmem:[#allocation2 + $0x4e0] sm:$0xf]
    %v6926 = vld [vmem:[#allocation2 + $0x4e8] sm:$0xf]
    %v6927 = vpack.c.bf16 %v6918, %v6918
    %v6932 = vunpack.c.l.b16 %v6923
    %v6933 = vunpack.c.l.b16 %v6924
    %v6934 = vunpack.c.l.b16 %v6925
    %v6935 = vunpack.c.l.b16 %v6926
    %v6936 = vpack.c.b16 %v6933, %v6932
    %v6937 = vpack.c.b16 %v6935, %v6934
    %v6941 = vsel %vm259, %v6927, 0
    %6943 = vmatprep.subr.bf16.mxu0 0
    %6944 = vmatpush1.bf16.msra.mxu0 %v6936
    %6945 = vmatprep.subr.bf16.mxu0 0
    %6946 = vmatpush1.bf16.msra.mxu0 %v6937
    %6947 = vmatprep.subr.bf16.mxu0 0
    %6948 = vmatpush1.bf16.msra.mxu0 0
    %6949 = vmatprep.subr.bf16.mxu0 0
    %6950 = vmatpush1.bf16.msra.mxu0 0
    %6951 = vmatprep.subr.bf16.mxu0 0
    %6952 = vmatpush1.bf16.msra.mxu0 0
    %6953 = vmatprep.subr.bf16.mxu0 0
    %6954 = vmatpush1.bf16.msra.mxu0 0
    %6955 = vmatprep.subr.bf16.mxu0 0
    %6956 = vmatpush1.bf16.msra.mxu0 0
    %6957 = vmatprep.subr.bf16.mxu0 0
    %6958 = vmatpush1.bf16.msra.mxu0 0
    %6959 = vmatprep.subr.bf16.mxu0 0
    %6960 = vmatpush1.bf16.msra.mxu0 0
    %6961 = vmatprep.subr.bf16.mxu0 0
    %6962 = vmatpush1.bf16.msra.mxu0 0
    %6963 = vmatprep.subr.bf16.mxu0 0
    %6964 = vmatpush1.bf16.msra.mxu0 0
    %6965 = vmatprep.subr.bf16.mxu0 0
    %6966 = vmatpush1.bf16.msra.mxu0 0
    %6967 = vmatprep.subr.bf16.mxu0 0
    %6968 = vmatpush1.bf16.msra.mxu0 0
    %6969 = vmatprep.subr.bf16.mxu0 0
    %6970 = vmatpush1.bf16.msra.mxu0 0
    %6971 = vmatprep.subr.bf16.mxu0 0
    %6972 = vmatpush1.bf16.msra.mxu0 0
    %6973 = vmatprep.subr.bf16.mxu0 0
    %6974 = vmatpush1.bf16.msra.mxu0 0
    %6975 = vmatprep.mubr.bf16.mxu0 0
    %6976 = vmatmul.mubr.bf16.gmra.mrb[0].mxu0 %v6941
    %v6977 = vpop.f32.mrb[0].mxu0
    %v6978 = vadd.f32 %v6571, %v6977
    %v6979 = vpop.f32.mrb[0].mxu0
    %v6980 = vpop.f32.mrb[0].mxu0
    %v6981 = vpop.f32.mrb[0].mxu0
    %6982 = vdwg.mxu0
    %v6983 = vld [vmem:[#allocation2 + $0x410] sm:$0xf]
    %v6984 = vld [vmem:[#allocation2 + $0x418] sm:$0xf]
    %v6985 = vld [vmem:[#allocation2 + $0x420] sm:$0xf]
    %v6986 = vld [vmem:[#allocation2 + $0x428] sm:$0xf]
    %v6987 = vpack.c.bf16 %v6978, %v6978
    %v6988 = vld [vmem:[#allocation2 + $0x430] sm:$0xf]
    %v6989 = vld [vmem:[#allocation2 + $0x438] sm:$0xf]
    %v6990 = vld [vmem:[#allocation2 + $0x440] sm:$0xf]
    %v6991 = vld [vmem:[#allocation2 + $0x448] sm:$0xf]
    %v6996 = vunpack.c.l.b16 %v6988
    %v6997 = vunpack.c.l.b16 %v6989
    %v6998 = vunpack.c.l.b16 %v6990
    %v6999 = vunpack.c.l.b16 %v6991
    %v7000 = vpack.c.b16 %v6997, %v6996
    %v7001 = vpack.c.b16 %v6999, %v6998
    %7004 = vmatprep.subr.bf16.mxu0 0
    %7005 = vmatpush1.bf16.msra.mxu0 %v7000
    %7006 = vmatprep.subr.bf16.mxu0 0
    %7007 = vmatpush1.bf16.msra.mxu0 %v7001
    %7008 = vmatprep.subr.bf16.mxu0 0
    %7009 = vmatpush1.bf16.msra.mxu0 0
    %7010 = vmatprep.subr.bf16.mxu0 0
    %7011 = vmatpush1.bf16.msra.mxu0 0
    %7012 = vmatprep.subr.bf16.mxu0 0
    %7013 = vmatpush1.bf16.msra.mxu0 0
    %7014 = vmatprep.subr.bf16.mxu0 0
    %7015 = vmatpush1.bf16.msra.mxu0 0
    %7016 = vmatprep.subr.bf16.mxu0 0
    %7017 = vmatpush1.bf16.msra.mxu0 0
    %7018 = vmatprep.subr.bf16.mxu0 0
    %7019 = vmatpush1.bf16.msra.mxu0 0
    %7020 = vmatprep.subr.bf16.mxu0 0
    %7021 = vmatpush1.bf16.msra.mxu0 0
    %7022 = vmatprep.subr.bf16.mxu0 0
    %7023 = vmatpush1.bf16.msra.mxu0 0
    %7024 = vmatprep.subr.bf16.mxu0 0
    %7025 = vmatpush1.bf16.msra.mxu0 0
    %7026 = vmatprep.subr.bf16.mxu0 0
    %7027 = vmatpush1.bf16.msra.mxu0 0
    %7028 = vmatprep.subr.bf16.mxu0 0
    %7029 = vmatpush1.bf16.msra.mxu0 0
    %7030 = vmatprep.subr.bf16.mxu0 0
    %7031 = vmatpush1.bf16.msra.mxu0 0
    %7032 = vmatprep.subr.bf16.mxu0 0
    %7033 = vmatpush1.bf16.msra.mxu0 0
    %7034 = vmatprep.subr.bf16.mxu0 0
    %7035 = vmatpush1.bf16.msra.mxu0 0
    %7036 = vmatprep.mubr.bf16.mxu0 0
    %7037 = vmatmul.mubr.bf16.gmra.mrb[0].mxu0 %v6750
    %v7038 = vpop.f32.mrb[0].mxu0
    %v7039 = vadd.f32 0.0, %v7038
    %v7040 = vpop.f32.mrb[0].mxu0
    %v7041 = vpop.f32.mrb[0].mxu0
    %v7042 = vpop.f32.mrb[0].mxu0
    %7043 = vdwg.mxu0
    %v7048 = vunpack.c.l.b16 %v6983
    %v7049 = vunpack.c.l.b16 %v6984
    %v7050 = vunpack.c.l.b16 %v6985
    %v7051 = vunpack.c.l.b16 %v6986
    %v7052 = vpack.c.b16 %v7049, %v7048
    %v7053 = vpack.c.b16 %v7051, %v7050
    %v7057 = vsel %vm259, %v6987, 0
    %7059 = vmatprep.subr.bf16.mxu0 0
    %7060 = vmatpush1.bf16.msra.mxu0 %v7052
    %7061 = vmatprep.subr.bf16.mxu0 0
    %7062 = vmatpush1.bf16.msra.mxu0 %v7053
    %7063 = vmatprep.subr.bf16.mxu0 0
    %7064 = vmatpush1.bf16.msra.mxu0 0
    %7065 = vmatprep.subr.bf16.mxu0 0
    %7066 = vmatpush1.bf16.msra.mxu0 0
    %7067 = vmatprep.subr.bf16.mxu0 0
    %7068 = vmatpush1.bf16.msra.mxu0 0
    %7069 = vmatprep.subr.bf16.mxu0 0
    %7070 = vmatpush1.bf16.msra.mxu0 0
    %7071 = vmatprep.subr.bf16.mxu0 0
    %7072 = vmatpush1.bf16.msra.mxu0 0
    %7073 = vmatprep.subr.bf16.mxu0 0
    %7074 = vmatpush1.bf16.msra.mxu0 0
    %7075 = vmatprep.subr.bf16.mxu0 0
    %7076 = vmatpush1.bf16.msra.mxu0 0
    %7077 = vmatprep.subr.bf16.mxu0 0
    %7078 = vmatpush1.bf16.msra.mxu0 0
    %7079 = vmatprep.subr.bf16.mxu0 0
    %7080 = vmatpush1.bf16.msra.mxu0 0
    %7081 = vmatprep.subr.bf16.mxu0 0
    %7082 = vmatpush1.bf16.msra.mxu0 0
    %7083 = vmatprep.subr.bf16.mxu0 0
    %7084 = vmatpush1.bf16.msra.mxu0 0
    %7085 = vmatprep.subr.bf16.mxu0 0
    %7086 = vmatpush1.bf16.msra.mxu0 0
    %7087 = vmatprep.subr.bf16.mxu0 0
    %7088 = vmatpush1.bf16.msra.mxu0 0
    %7089 = vmatprep.subr.bf16.mxu0 0
    %7090 = vmatpush1.bf16.msra.mxu0 0
    %7091 = vmatprep.mubr.bf16.mxu0 0
    %7092 = vmatmul.mubr.bf16.gmra.mrb[0].mxu0 %v7057
    %v7093 = vpop.f32.mrb[0].mxu0
    %v7094 = vadd.f32 %v7039, %v7093
    %v7095 = vpop.f32.mrb[0].mxu0
    %v7096 = vpop.f32.mrb[0].mxu0
    %v7097 = vpop.f32.mrb[0].mxu0
    %7098 = vdwg.mxu0
    %v7099 = vld [vmem:[#allocation2 + $0x450] sm:$0x1]
    %v7100 = vunpack.c.l.bf16 %v7099
    %v7101 = vlaneseq
    %v7102 = vshrl.u32 %v7101, 7
    %v7103 = vsub.s32 0, %v7102
    %v7104 = vrot.slane %v7100, %v7103
    %v7105 = vadd.f32 %v7094, %v7104
    %v7106 = vxor.u32 %v7105, 2147483648
    %v7107 = vmul.f32 %v7106, 1.442695
    %v7108 = vpow.pop %v7107
    %v7109 = vadd.f32 %v7108, 1.0
    %v7110 = vrcp.pop %v7109
    %v7111 = vmul.f32 1.0, %v7110
    %v7112 = vtanh.pop %v7105
    %v7113 = vmul.f32 %v7111, %v6716
    %7115 = vrot.lane.b32.xlu0 %v7112, 64
    %v7116 = vpop.permute.xlu0 %7115
    %v7118 = vmul.f32 %v7111, %v7116
    %7120 = vrot.lane.b32.xlu0 %v7118, 32
    %v7121 = vpop.permute.xlu0 %7120
    %v7123 = vadd.f32 %v7113, %v7121
    %v7124 = vtanh.pop %v7123
    %7126 = vrot.lane.b32.xlu0 %v7124, 64
    %v7127 = vpop.permute.xlu0 %7126
    %v7129 = vmul.f32 %v7111, %v7127
    %v7130 = vld [vmem:[#allocation2 + $0x460] sm:$0xf]
    %v7131 = vld [vmem:[#allocation2 + $0x468] sm:$0xf]
    %v7132 = vld [vmem:[#allocation2 + $0x470] sm:$0xf]
    %v7133 = vld [vmem:[#allocation2 + $0x478] sm:$0xf]
    %v7134 = vpack.c.bf16 %v7129, %v7129
    %v7135 = vld [vmem:[#allocation2 + $0x480] sm:$0x1]
    %v7136 = vunpack.c.l.bf16 %v7135
    %v7137 = vlaneseq
    %v7138 = vshrl.u32 %v7137, 7
    %v7139 = vsub.s32 0, %v7138
    %v7140 = vrot.slane %v7136, %v7139
    %7142 = vrot.lane.b32.xlu0 %v7134, 32
    %v7143 = vpop.permute.xlu0 %7142
    %v7148 = vunpack.c.l.b16 %v7130
    %v7149 = vunpack.c.l.b16 %v7131
    %v7150 = vunpack.c.l.b16 %v7132
    %v7151 = vunpack.c.l.b16 %v7133
    %v7152 = vpack.c.b16 %v7149, %v7148
    %v7153 = vpack.c.b16 %v7151, %v7150
    %v7157 = vsel %vm259, %v7143, 0
    %7159 = vmatprep.subr.bf16.mxu0 0
    %7160 = vmatpush1.bf16.msra.mxu0 %v7152
    %7161 = vmatprep.subr.bf16.mxu0 0
    %7162 = vmatpush1.bf16.msra.mxu0 %v7153
    %7163 = vmatprep.subr.bf16.mxu0 0
    %7164 = vmatpush1.bf16.msra.mxu0 0
    %7165 = vmatprep.subr.bf16.mxu0 0
    %7166 = vmatpush1.bf16.msra.mxu0 0
    %7167 = vmatprep.subr.bf16.mxu0 0
    %7168 = vmatpush1.bf16.msra.mxu0 0
    %7169 = vmatprep.subr.bf16.mxu0 0
    %7170 = vmatpush1.bf16.msra.mxu0 0
    %7171 = vmatprep.subr.bf16.mxu0 0
    %7172 = vmatpush1.bf16.msra.mxu0 0
    %7173 = vmatprep.subr.bf16.mxu0 0
    %7174 = vmatpush1.bf16.msra.mxu0 0
    %7175 = vmatprep.subr.bf16.mxu0 0
    %7176 = vmatpush1.bf16.msra.mxu0 0
    %7177 = vmatprep.subr.bf16.mxu0 0
    %7178 = vmatpush1.bf16.msra.mxu0 0
    %7179 = vmatprep.subr.bf16.mxu0 0
    %7180 = vmatpush1.bf16.msra.mxu0 0
    %7181 = vmatprep.subr.bf16.mxu0 0
    %7182 = vmatpush1.bf16.msra.mxu0 0
    %7183 = vmatprep.subr.bf16.mxu0 0
    %7184 = vmatpush1.bf16.msra.mxu0 0
    %7185 = vmatprep.subr.bf16.mxu0 0
    %7186 = vmatpush1.bf16.msra.mxu0 0
    %7187 = vmatprep.subr.bf16.mxu0 0
    %7188 = vmatpush1.bf16.msra.mxu0 0
    %7189 = vmatprep.subr.bf16.mxu0 0
    %7190 = vmatpush1.bf16.msra.mxu0 0
    %7191 = vmatprep.mubr.bf16.mxu0 0
    %7192 = vmatmul.mubr.bf16.gmra.mrb[0].mxu0 %v7157
    %v7193 = vpop.f32.mrb[0].mxu0
    %v7194 = vadd.f32 %v7140, %v7193
    %v7195 = vpop.f32.mrb[0].mxu0
    %v7196 = vpop.f32.mrb[0].mxu0
    %v7197 = vpop.f32.mrb[0].mxu0
    %7198 = vdwg.mxu0
    %v7199 = vmax.f32 %v7194, 0.0
    %v7200 = vld [vmem:[#allocation2 + $0x490] sm:$0xf]
    %v7201 = vld [vmem:[#allocation2 + $0x498] sm:$0xf]
    %v7202 = vld [vmem:[#allocation2 + $0x4a0] sm:$0xf]
    %v7203 = vld [vmem:[#allocation2 + $0x4a8] sm:$0xf]
    %v7204 = vpack.c.bf16 %v7199, %v7199
    %v7205 = vld [vmem:[#allocation2 + $0x4b0] sm:$0x1]
    %v7206 = vunpack.c.l.bf16 %v7205
    %v7207 = vlaneseq
    %v7208 = vshrl.u32 %v7207, 7
    %v7209 = vsub.s32 0, %v7208
    %v7210 = vrot.slane %v7206, %v7209
    %v7215 = vunpack.c.l.b16 %v7200
    %v7216 = vunpack.c.l.b16 %v7201
    %v7217 = vunpack.c.l.b16 %v7202
    %v7218 = vunpack.c.l.b16 %v7203
    %v7219 = vpack.c.b16 %v7216, %v7215
    %v7220 = vpack.c.b16 %v7218, %v7217
    %v7224 = vsel %vm259, %v7204, 0
    %7226 = vmatprep.subr.bf16.mxu0 0
    %7227 = vmatpush1.bf16.msra.mxu0 %v7219
    %7228 = vmatprep.subr.bf16.mxu0 0
    %7229 = vmatpush1.bf16.msra.mxu0 %v7220
    %7230 = vmatprep.subr.bf16.mxu0 0
    %7231 = vmatpush1.bf16.msra.mxu0 0
    %7232 = vmatprep.subr.bf16.mxu0 0
    %7233 = vmatpush1.bf16.msra.mxu0 0
    %7234 = vmatprep.subr.bf16.mxu0 0
    %7235 = vmatpush1.bf16.msra.mxu0 0
    %7236 = vmatprep.subr.bf16.mxu0 0
    %7237 = vmatpush1.bf16.msra.mxu0 0
    %7238 = vmatprep.subr.bf16.mxu0 0
    %7239 = vmatpush1.bf16.msra.mxu0 0
    %7240 = vmatprep.subr.bf16.mxu0 0
    %7241 = vmatpush1.bf16.msra.mxu0 0
    %7242 = vmatprep.subr.bf16.mxu0 0
    %7243 = vmatpush1.bf16.msra.mxu0 0
    %7244 = vmatprep.subr.bf16.mxu0 0
    %7245 = vmatpush1.bf16.msra.mxu0 0
    %7246 = vmatprep.subr.bf16.mxu0 0
    %7247 = vmatpush1.bf16.msra.mxu0 0
    %7248 = vmatprep.subr.bf16.mxu0 0
    %7249 = vmatpush1.bf16.msra.mxu0 0
    %7250 = vmatprep.subr.bf16.mxu0 0
    %7251 = vmatpush1.bf16.msra.mxu0 0
    %7252 = vmatprep.subr.bf16.mxu0 0
    %7253 = vmatpush1.bf16.msra.mxu0 0
    %7254 = vmatprep.subr.bf16.mxu0 0
    %7255 = vmatpush1.bf16.msra.mxu0 0
    %7256 = vmatprep.subr.bf16.mxu0 0
    %7257 = vmatpush1.bf16.msra.mxu0 0
    %7258 = vmatprep.mubr.bf16.mxu0 0
    %7259 = vmatmul.mubr.bf16.gmra.mrb[0].mxu0 %v7224
    %v7260 = vpop.f32.mrb[0].mxu0
    %v7261 = vadd.f32 %v7210, %v7260
    %v7262 = vpop.f32.mrb[0].mxu0
    %v7263 = vpop.f32.mrb[0].mxu0
    %v7264 = vpop.f32.mrb[0].mxu0
    %7265 = vdwg.mxu0
    %7267 = vrot.lane.b32.xlu0 %v7261, 20
    %v7268 = vpop.permute.xlu0 %7267
    %vm7270 = vcmask 294048
    %7271 = vst.msk [vmem:[%s2 + $0x8] sm:$0xff] %vm7270, %v7268
    // Predicated region
    $region14: #{forward.1} parent=1 // pred_check
      _
    $region15: #{forward.1} parent=1 // pred_check_branch
      %7273 = sbr.rel (0) target = $region17
    $region16: #{forward.1} parent=1 // pred_region
      _
    $region17: #{forward.1} parent=1 // pred_fallthru
      _
    // Predicated region
    $region18: #{forward.1} parent=1 // pred_check
      _
    $region19: #{forward.1} parent=1 // pred_check_branch
      %7275 = sbr.rel (0) target = $region21
    $region20: #{forward.1} parent=1 // pred_region
      _
    $region21: #{forward.1} parent=1 // pred_fallthru
      _
    %7276 = vsyncpa [#allocation3], 1

</llo_original>
